<compile_context>
chip_gen: v7x
topology: tpu7x:2x2x1
jax: 0.10.0
libtpu: 0.0.40
codegen_flags: <defaults>
</compile_context>

<pallas_src>
import functools

import numpy as np
import jax
import jax.numpy as jnp
from jax.experimental import pallas as pl
from jax.experimental.pallas import tpu as pltpu


# ----------------------------------------------------------------------------
# BlockSpec helper: a single whole-array block (grid=(1,)).
# ----------------------------------------------------------------------------
def full_spec(shape):
    return pl.BlockSpec(shape, lambda *_: (0,) * len(shape))


# ----------------------------------------------------------------------------
# Plain-JAX glue: im2col of the raw input image only (layer 0).
#   row index = n*Ho*Wo + ho*Wo + wo ;  column index = c*9 + di*3 + dj
# ----------------------------------------------------------------------------
def im2col_input(x_nchw, ho, wo):
    n, c, _, _ = x_nchw.shape
    xp = jnp.pad(x_nchw, ((0, 0), (0, 0), (1, 1), (1, 1)))
    cols = jnp.stack(
        [xp[:, :, i:i + 2 * ho:2, j:j + 2 * wo:2]
         for i in range(3) for j in range(3)],
        axis=2,
    )  # (N, C, 9, Ho, Wo)
    return cols.reshape(n, c * 9, ho, wo).transpose(0, 2, 3, 1).reshape(
        n * ho * wo, c * 9)


# ----------------------------------------------------------------------------
# Static 0/1 gather ("im2col") matrices for conv layers 1..num_conv-1.
# P[t, m_out, m_in] = 1 iff output row m_out, tap t=(di,dj) reads input row
# m_in; rows falling into the zero-padding ring are all-zero.
# ----------------------------------------------------------------------------
def build_selection_matrices(batch, h_in, w_in, h_out, w_out):
    m_in = batch * h_in * w_in
    m_out = batch * h_out * w_out
    p = np.zeros((9, m_out, m_in), np.float32)
    for di in range(3):
        for dj in range(3):
            t = di * 3 + dj
            for n in range(batch):
                for ho in range(h_out):
                    h = 2 * ho - 1 + di
                    if h < 0 or h >= h_in:
                        continue
                    for wo in range(w_out):
                        w = 2 * wo - 1 + dj
                        if w < 0 or w >= w_in:
                            continue
                        p[t, (n * h_out + ho) * w_out + wo,
                          (n * h_in + h) * w_in + w] = 1.0
    # bf16 is exact for 0/1 and halves the (dominant) HBM read of these tables.
    return jnp.asarray(p, jnp.bfloat16)


# ----------------------------------------------------------------------------
# The single fused forward kernel.
# ----------------------------------------------------------------------------
def fused_forward_kernel(num_conv, batch, *refs):
    idx = 0

    def nxt():
        nonlocal idx
        r = refs[idx]
        idx += 1
        return r

    patches0_ref = nxt()               # (M1, 9*C0)  f32
    w0_ref = nxt()                     # (9*C0, C1)  f32
    p_refs, w_refs = [], []
    for _ in range(1, num_conv):
        p_refs.append(nxt())           # (9, M_out, M_in)  bf16 0/1 gather
        w_refs.append(nxt())           # (9, C_in, C_out)  f32
    bn_refs = [(nxt(), nxt()) for _ in range(num_conv)]       # (gamma, beta)
    wif_ref, bif_ref, whf_ref, bhf_ref = nxt(), nxt(), nxt(), nxt()
    wib_ref, bib_ref, whb_ref, bhb_ref = nxt(), nxt(), nxt(), nxt()
    wtop_ref, wbot_ref, bemb_ref = nxt(), nxt(), nxt()
    out_ref = refs[idx]

    # Folded training-mode BatchNorm (batch stats, eps=1e-5) + ReLU.
    # Conv bias omitted on purpose: a per-channel constant cancels exactly
    # under batch-statistics BN.
    def bn_relu(y, layer):
        gamma = bn_refs[layer][0][...]
        beta = bn_refs[layer][1][...]
        m = y.shape[0]
        inv_m = 1.0 / m
        mean = jnp.sum(y, axis=0, keepdims=True) * inv_m
        meansq = jnp.sum(y * y, axis=0, keepdims=True) * inv_m
        var = jnp.maximum(meansq - mean * mean, 0.0)       # biased, like BN
        scale = gamma * jax.lax.rsqrt(var + 1e-5)
        shift = beta - mean * scale
        return jnp.maximum(y * scale + shift, 0.0)

    # ---- conv stack (activations never leave VMEM) -------------------------
    a = bn_relu(
        jnp.dot(patches0_ref[...], w0_ref[...],
                preferred_element_type=jnp.float32), 0)
    for layer in range(1, num_conv):
        p_ref = p_refs[layer - 1]
        w_ref = w_refs[layer - 1]
        m_out = p_ref.shape[1]
        c_out = w_ref.shape[2]
        acc = jnp.zeros((m_out, c_out), jnp.float32)
        for t in range(9):                         # static unroll over taps
            sel = p_ref[t].astype(jnp.float32)     # 0/1 gather matrix (exact)
            gathered = jnp.dot(sel, a, preferred_element_type=jnp.float32)
            acc = acc + jnp.dot(gathered, w_ref[t],
                                preferred_element_type=jnp.float32)
        a = bn_relu(acc, layer)

    # ---- spatial mean per sample (x.view(N, C, -1).mean(2)) -----------------
    m_last = a.shape[0]
    s = m_last // batch
    row = jax.lax.broadcasted_iota(jnp.int32, (batch, m_last), 0)
    col = jax.lax.broadcasted_iota(jnp.int32, (batch, m_last), 1)
    mavg = jnp.where((col >= row * s) & (col < (row + 1) * s), 1.0 / s, 0.0)
    feat = jnp.dot(mavg, a, preferred_element_type=jnp.float32)   # (T, D)

    # ---- bidirectional GRU (batch=1, h0=0), PyTorch gate order [r, z, n] ----
    hdim = whf_ref.shape[0]
    # hoisted input projections (one dense matmul per direction)
    gi_f = jnp.dot(feat, wif_ref[...],
                   preferred_element_type=jnp.float32) + bif_ref[...]
    gi_b = jnp.dot(feat, wib_ref[...],
                   preferred_element_type=jnp.float32) + bib_ref[...]
    whf, bhf = whf_ref[...], bhf_ref[...]
    whb, bhb = whb_ref[...], bhb_ref[...]

    def sigmoid(v):
        return 1.0 / (1.0 + jnp.exp(-v))

    def gru_step(gi, h, wh, bh):
        gh = jnp.dot(h, wh, preferred_element_type=jnp.float32) + bh
        r = sigmoid(gi[:, 0:hdim] + gh[:, 0:hdim])
        z = sigmoid(gi[:, hdim:2 * hdim] + gh[:, hdim:2 * hdim])
        n = jnp.tanh(gi[:, 2 * hdim:3 * hdim] + r * gh[:, 2 * hdim:3 * hdim])
        return (1.0 - z) * n + z * h

    h_f = jnp.zeros((1, hdim), jnp.float32)
    h_b = jnp.zeros((1, hdim), jnp.float32)
    for t in range(batch):           # seq_len == batch; static unrolled loop,
        h_f = gru_step(gi_f[t:t + 1, :], h_f, whf, bhf)            # fwd + bwd
        h_b = gru_step(gi_b[batch - 1 - t:batch - t, :], h_b, whb, bhb)

    # ---- fused embedding heads:  [h_f | h_b] @ W_emb + b --------------------
    out_ref[...] = (
        jnp.dot(h_f, wtop_ref[...], preferred_element_type=jnp.float32)
        + jnp.dot(h_b, wbot_ref[...], preferred_element_type=jnp.float32)
        + bemb_ref[...]
    )


# ----------------------------------------------------------------------------
# Parameter init (deterministic, PyTorch-like shapes).
# conv{i}_b is kept for parameter parity but is not used by the kernel: a
# per-channel constant is exactly cancelled by the batch-statistics BatchNorm.
# ----------------------------------------------------------------------------
def init_params(key, in_ch, num_conv, num_channels, hidden, emb_dims):
    params = {}
    chs = [in_ch] + [num_channels * 2 ** i for i in range(num_conv)]
    for i in range(num_conv):
        key, k1, k2 = jax.random.split(key, 3)
        cin, cout = chs[i], chs[i + 1]
        params[f"conv{i}_w"] = 0.1 * jax.random.normal(k1, (cout, cin, 3, 3), jnp.float32)
        params[f"conv{i}_b"] = 0.1 * jax.random.normal(k2, (cout,), jnp.float32)
        params[f"bn{i}_gamma"] = jnp.ones((cout,), jnp.float32)
        params[f"bn{i}_beta"] = jnp.zeros((cout,), jnp.float32)
    D = chs[-1]
    for d in ("fwd", "bwd"):
        key, k1, k2, k3, k4 = jax.random.split(key, 5)
        params[f"gru_{d}_w_ih"] = 0.1 * jax.random.normal(k1, (3 * hidden, D), jnp.float32)
        params[f"gru_{d}_w_hh"] = 0.1 * jax.random.normal(k2, (3 * hidden, hidden), jnp.float32)
        params[f"gru_{d}_b_ih"] = 0.1 * jax.random.normal(k3, (3 * hidden,), jnp.float32)
        params[f"gru_{d}_b_hh"] = 0.1 * jax.random.normal(k4, (3 * hidden,), jnp.float32)
    for idx, dim in enumerate(emb_dims):
        key, k1, k2 = jax.random.split(key, 3)
        params[f"emb{idx}_w"] = 0.1 * jax.random.normal(k1, (dim, 2 * hidden), jnp.float32)
        params[f"emb{idx}_b"] = 0.1 * jax.random.normal(k2, (dim,), jnp.float32)
    return params


# ----------------------------------------------------------------------------
# Build the fused forward: pre-pack all parameters / gather tables once.
# ----------------------------------------------------------------------------
def build_forward(params, *, num_conv, num_channels, in_ch, img_hw, hidden,
                  emb_dims, batch):
    H, W = img_hw
    chans = [in_ch] + [num_channels * 2 ** i for i in range(num_conv)]
    spat = [(H, W)]
    for _ in range(num_conv):
        h, w = spat[-1]
        spat.append(((h - 1) // 2 + 1, (w - 1) // 2 + 1))

    kargs = []
    # layer 0 conv weight as (9*C0, C1) -- matches im2col_input column order.
    kargs.append(params["conv0_w"].reshape(chans[1], chans[0] * 9).T
                 .astype(jnp.float32))
    # layers 1..: gather tables + per-tap weights (9, Cin, Cout).
    for l in range(1, num_conv):
        h_in, w_in = spat[l]
        h_out, w_out = spat[l + 1]
        kargs.append(build_selection_matrices(batch, h_in, w_in, h_out, w_out))
        wl = params[f"conv{l}_w"].transpose(2, 3, 1, 0).reshape(
            9, chans[l], chans[l + 1])
        kargs.append(wl.astype(jnp.float32))
    # BN affine params.
    for l in range(num_conv):
        c = chans[l + 1]
        kargs.append(params[f"bn{l}_gamma"].reshape(1, c))
        kargs.append(params[f"bn{l}_beta"].reshape(1, c))
    # GRU weights, pre-transposed once (PyTorch gate order [r, z, n]).
    for d in ("fwd", "bwd"):
        kargs.append(params[f"gru_{d}_w_ih"].T)                       # (D, 3H)
        kargs.append(params[f"gru_{d}_b_ih"].reshape(1, 3 * hidden))
        kargs.append(params[f"gru_{d}_w_hh"].T)                       # (H, 3H)
        kargs.append(params[f"gru_{d}_b_hh"].reshape(1, 3 * hidden))
    # Embedding heads fused into one matmul, split into fwd/bwd halves so the
    # kernel never has to concatenate h_f/h_b.
    w_cat = jnp.concatenate([params[f"emb{i}_w"].T
                             for i in range(len(emb_dims))], axis=1)  # (2H, E)
    b_cat = jnp.concatenate([params[f"emb{i}_b"]
                             for i in range(len(emb_dims))]).reshape(1, -1)
    kargs.append(w_cat[:hidden])
    kargs.append(w_cat[hidden:])
    kargs.append(b_cat)

    e_sum = int(sum(emb_dims))
    ho0, wo0 = spat[1]
    kernel = functools.partial(fused_forward_kernel, num_conv, batch)

    def forward(x, kernel_args):
        patches0 = im2col_input(x, ho0, wo0)
        all_args = (patches0,) + tuple(kernel_args)
        emb = pl.pallas_call(
            kernel,
            grid=(1,),
            in_specs=[full_spec(a.shape) for a in all_args],
            out_specs=full_spec((1, e_sum)),
            out_shape=jax.ShapeDtypeStruct((1, e_sum), jnp.float32),
            compiler_params=pltpu.CompilerParams(
                dimension_semantics=("arbitrary",)),
        )(*all_args)
        # split fused head output back into the per-head list (tiny slices)
        outs, off = [], 0
        for d in emb_dims:
            outs.append(emb[:, off:off + d])
            off += d
        return outs

    return jax.jit(forward), tuple(kargs)


# ----------------------------------------------------------------------------
if __name__ == "__main__":
    key = jax.random.PRNGKey(0)
    N = 2
    img_size = (1, 28, 28)          # default img_size of the module
    num_conv = 4
    num_channels = 4                # small channel base for the demo
    hidden = 32
    emb_dims = (8, 16)

    kx, kp = jax.random.split(key)
    x = jax.random.normal(kx, (N,) + img_size, jnp.float32)
    params = init_params(kp, img_size[0], num_conv, num_channels, hidden,
                         list(emb_dims))

    fwd, kernel_args = build_forward(
        params, num_conv=num_conv, num_channels=num_channels,
        in_ch=img_size[0], img_hw=img_size[1:], hidden=hidden,
        emb_dims=emb_dims, batch=N)

    outs = fwd(x, kernel_args)
    outs = jax.block_until_ready(outs)
    assert [o.shape for o in outs] == [(1, d) for d in emb_dims]
    assert all(bool(jnp.all(jnp.isfinite(o))) for o in outs)
    print("KERNEL_OK")
</pallas_src>

<mosaic_0001>
module attributes {stable_mosaic.version = 11 : i64} {
  func.func @fused_forward_kernel(%arg0: i32, %arg1: memref<392x9xf32, #tpu.memory_space<vmem>>, %arg2: memref<9x4xf32, #tpu.memory_space<vmem>>, %arg3: memref<9x98x392xbf16, #tpu.memory_space<vmem>>, %arg4: memref<9x4x8xf32, #tpu.memory_space<vmem>>, %arg5: memref<9x32x98xbf16, #tpu.memory_space<vmem>>, %arg6: memref<9x8x16xf32, #tpu.memory_space<vmem>>, %arg7: memref<9x8x32xbf16, #tpu.memory_space<vmem>>, %arg8: memref<9x16x32xf32, #tpu.memory_space<vmem>>, %arg9: memref<1x4xf32, #tpu.memory_space<vmem>>, %arg10: memref<1x4xf32, #tpu.memory_space<vmem>>, %arg11: memref<1x8xf32, #tpu.memory_space<vmem>>, %arg12: memref<1x8xf32, #tpu.memory_space<vmem>>, %arg13: memref<1x16xf32, #tpu.memory_space<vmem>>, %arg14: memref<1x16xf32, #tpu.memory_space<vmem>>, %arg15: memref<1x32xf32, #tpu.memory_space<vmem>>, %arg16: memref<1x32xf32, #tpu.memory_space<vmem>>, %arg17: memref<32x96xf32, #tpu.memory_space<vmem>>, %arg18: memref<1x96xf32, #tpu.memory_space<vmem>>, %arg19: memref<32x96xf32, #tpu.memory_space<vmem>>, %arg20: memref<1x96xf32, #tpu.memory_space<vmem>>, %arg21: memref<32x96xf32, #tpu.memory_space<vmem>>, %arg22: memref<1x96xf32, #tpu.memory_space<vmem>>, %arg23: memref<32x96xf32, #tpu.memory_space<vmem>>, %arg24: memref<1x96xf32, #tpu.memory_space<vmem>>, %arg25: memref<32x24xf32, #tpu.memory_space<vmem>>, %arg26: memref<32x24xf32, #tpu.memory_space<vmem>>, %arg27: memref<1x24xf32, #tpu.memory_space<vmem>>, %arg28: memref<1x24xf32, #tpu.memory_space<vmem>>) attributes {dimension_semantics = [#tpu.dimension_semantics<arbitrary>], iteration_bounds = array<i64: 1>, scalar_prefetch = 0 : i64, scratch_operands = 0 : i64, tpu.core_type = #tpu.core_type<tc>, window_params = [{pipeline_mode = #tpu.pipeline_mode<synchronous>, transform_indices = @transform_0, window_bounds = array<i64: 392, 9>}, {pipeline_mode = #tpu.pipeline_mode<synchronous>, transform_indices = @transform_1, window_bounds = array<i64: 9, 4>}, {pipeline_mode = #tpu.pipeline_mode<synchronous>, transform_indices = @transform_2, window_bounds = array<i64: 9, 98, 392>}, {pipeline_mode = #tpu.pipeline_mode<synchronous>, transform_indices = @transform_3, window_bounds = array<i64: 9, 4, 8>}, {pipeline_mode = #tpu.pipeline_mode<synchronous>, transform_indices = @transform_4, window_bounds = array<i64: 9, 32, 98>}, {pipeline_mode = #tpu.pipeline_mode<synchronous>, transform_indices = @transform_5, window_bounds = array<i64: 9, 8, 16>}, {pipeline_mode = #tpu.pipeline_mode<synchronous>, transform_indices = @transform_6, window_bounds = array<i64: 9, 8, 32>}, {pipeline_mode = #tpu.pipeline_mode<synchronous>, transform_indices = @transform_7, window_bounds = array<i64: 9, 16, 32>}, {pipeline_mode = #tpu.pipeline_mode<synchronous>, transform_indices = @transform_8, window_bounds = array<i64: 1, 4>}, {pipeline_mode = #tpu.pipeline_mode<synchronous>, transform_indices = @transform_9, window_bounds = array<i64: 1, 4>}, {pipeline_mode = #tpu.pipeline_mode<synchronous>, transform_indices = @transform_10, window_bounds = array<i64: 1, 8>}, {pipeline_mode = #tpu.pipeline_mode<synchronous>, transform_indices = @transform_11, window_bounds = array<i64: 1, 8>}, {pipeline_mode = #tpu.pipeline_mode<synchronous>, transform_indices = @transform_12, window_bounds = array<i64: 1, 16>}, {pipeline_mode = #tpu.pipeline_mode<synchronous>, transform_indices = @transform_13, window_bounds = array<i64: 1, 16>}, {pipeline_mode = #tpu.pipeline_mode<synchronous>, transform_indices = @transform_14, window_bounds = array<i64: 1, 32>}, {pipeline_mode = #tpu.pipeline_mode<synchronous>, transform_indices = @transform_15, window_bounds = array<i64: 1, 32>}, {pipeline_mode = #tpu.pipeline_mode<synchronous>, transform_indices = @transform_16, window_bounds = array<i64: 32, 96>}, {pipeline_mode = #tpu.pipeline_mode<synchronous>, transform_indices = @transform_17, window_bounds = array<i64: 1, 96>}, {pipeline_mode = #tpu.pipeline_mode<synchronous>, transform_indices = @transform_18, window_bounds = array<i64: 32, 96>}, {pipeline_mode = #tpu.pipeline_mode<synchronous>, transform_indices = @transform_19, window_bounds = array<i64: 1, 96>}, {pipeline_mode = #tpu.pipeline_mode<synchronous>, transform_indices = @transform_20, window_bounds = array<i64: 32, 96>}, {pipeline_mode = #tpu.pipeline_mode<synchronous>, transform_indices = @transform_21, window_bounds = array<i64: 1, 96>}, {pipeline_mode = #tpu.pipeline_mode<synchronous>, transform_indices = @transform_22, window_bounds = array<i64: 32, 96>}, {pipeline_mode = #tpu.pipeline_mode<synchronous>, transform_indices = @transform_23, window_bounds = array<i64: 1, 96>}, {pipeline_mode = #tpu.pipeline_mode<synchronous>, transform_indices = @transform_24, window_bounds = array<i64: 32, 24>}, {pipeline_mode = #tpu.pipeline_mode<synchronous>, transform_indices = @transform_25, window_bounds = array<i64: 32, 24>}, {pipeline_mode = #tpu.pipeline_mode<synchronous>, transform_indices = @transform_26, window_bounds = array<i64: 1, 24>}, {pipeline_mode = #tpu.pipeline_mode<synchronous>, transform_indices = @transform_27, window_bounds = array<i64: 1, 24>}]} {
    %c0 = arith.constant 0 : index
    %c0_0 = arith.constant 0 : index
    %0 = vector.load %arg1[%c0, %c0_0] : memref<392x9xf32, #tpu.memory_space<vmem>>, vector<392x9xf32>
    %c0_1 = arith.constant 0 : index
    %c0_2 = arith.constant 0 : index
    %1 = vector.load %arg2[%c0_1, %c0_2] : memref<9x4xf32, #tpu.memory_space<vmem>>, vector<9x4xf32>
    %cst = arith.constant dense<0.000000e+00> : vector<392x4xf32>
    %2 = tpu.matmul %0, %1, %cst {dimension_numbers = #tpu.dot_dimension_numbers<[1], [0], [0], [1], [0, 0, 1, 1], [], []>} : vector<392x9xf32>, vector<9x4xf32>, vector<392x4xf32> -> vector<392x4xf32>
    %c0_3 = arith.constant 0 : index
    %c0_4 = arith.constant 0 : index
    %3 = vector.load %arg9[%c0_3, %c0_4] : memref<1x4xf32, #tpu.memory_space<vmem>>, vector<1x4xf32>
    %c0_5 = arith.constant 0 : index
    %c0_6 = arith.constant 0 : index
    %4 = vector.load %arg10[%c0_5, %c0_6] : memref<1x4xf32, #tpu.memory_space<vmem>>, vector<1x4xf32>
    %cst_7 = arith.constant dense<0.000000e+00> : vector<4xf32>
    %5 = vector.multi_reduction <add>, %2, %cst_7 [0] : vector<392x4xf32> to vector<4xf32>
    %6 = vector.shape_cast %5 : vector<4xf32> to vector<1x4xf32>
    %cst_8 = arith.constant 0.00255102036 : f32
    %7 = vector.broadcast %cst_8 : f32 to vector<1x4xf32>
    %8 = arith.mulf %6, %7 : vector<1x4xf32>
    %9 = arith.mulf %2, %2 : vector<392x4xf32>
    %cst_9 = arith.constant dense<0.000000e+00> : vector<4xf32>
    %10 = vector.multi_reduction <add>, %9, %cst_9 [0] : vector<392x4xf32> to vector<4xf32>
    %11 = vector.shape_cast %10 : vector<4xf32> to vector<1x4xf32>
    %cst_10 = arith.constant 0.00255102036 : f32
    %12 = vector.broadcast %cst_10 : f32 to vector<1x4xf32>
    %13 = arith.mulf %11, %12 : vector<1x4xf32>
    %14 = arith.mulf %8, %8 : vector<1x4xf32>
    %15 = arith.subf %13, %14 : vector<1x4xf32>
    %cst_11 = arith.constant 0.000000e+00 : f32
    %16 = vector.broadcast %cst_11 : f32 to vector<1x4xf32>
    %17 = arith.maximumf %15, %16 : vector<1x4xf32>
    %cst_12 = arith.constant 9.99999974E-6 : f32
    %18 = vector.broadcast %cst_12 : f32 to vector<1x4xf32>
    %19 = arith.addf %17, %18 : vector<1x4xf32>
    %20 = math.rsqrt %19 : vector<1x4xf32>
    %21 = arith.mulf %3, %20 : vector<1x4xf32>
    %22 = arith.mulf %8, %21 : vector<1x4xf32>
    %23 = arith.subf %4, %22 : vector<1x4xf32>
    %24 = vector.broadcast %21 : vector<1x4xf32> to vector<392x4xf32>
    %25 = arith.mulf %2, %24 : vector<392x4xf32>
    %26 = vector.broadcast %23 : vector<1x4xf32> to vector<392x4xf32>
    %27 = arith.addf %25, %26 : vector<392x4xf32>
    %cst_13 = arith.constant 0.000000e+00 : f32
    %28 = vector.broadcast %cst_13 : f32 to vector<392x4xf32>
    %29 = arith.maximumf %27, %28 : vector<392x4xf32>
    %cst_14 = arith.constant 0.000000e+00 : f32
    %30 = vector.broadcast %cst_14 : f32 to vector<98x8xf32>
    %c0_15 = arith.constant 0 : index
    %c0_16 = arith.constant 0 : index
    %c0_17 = arith.constant 0 : index
    %31 = vector.load %arg3[%c0_15, %c0_16, %c0_17] : memref<9x98x392xbf16, #tpu.memory_space<vmem>>, vector<1x98x392xbf16>
    %32 = vector.shape_cast %31 : vector<1x98x392xbf16> to vector<98x392xbf16>
    %33 = arith.extf %32 : vector<98x392xbf16> to vector<98x392xf32>
    %cst_18 = arith.constant dense<0.000000e+00> : vector<98x4xf32>
    %34 = tpu.matmul %33, %29, %cst_18 {dimension_numbers = #tpu.dot_dimension_numbers<[1], [0], [0], [1], [0, 0, 1, 1], [], []>} : vector<98x392xf32>, vector<392x4xf32>, vector<98x4xf32> -> vector<98x4xf32>
    %c0_19 = arith.constant 0 : index
    %c0_20 = arith.constant 0 : index
    %c0_21 = arith.constant 0 : index
    %35 = vector.load %arg4[%c0_19, %c0_20, %c0_21] : memref<9x4x8xf32, #tpu.memory_space<vmem>>, vector<1x4x8xf32>
    %36 = vector.shape_cast %35 : vector<1x4x8xf32> to vector<4x8xf32>
    %cst_22 = arith.constant dense<0.000000e+00> : vector<98x8xf32>
    %37 = tpu.matmul %34, %36, %cst_22 {dimension_numbers = #tpu.dot_dimension_numbers<[1], [0], [0], [1], [0, 0, 1, 1], [], []>} : vector<98x4xf32>, vector<4x8xf32>, vector<98x8xf32> -> vector<98x8xf32>
    %38 = arith.addf %30, %37 : vector<98x8xf32>
    %c1 = arith.constant 1 : index
    %c0_23 = arith.constant 0 : index
    %c0_24 = arith.constant 0 : index
    %39 = vector.load %arg3[%c1, %c0_23, %c0_24] : memref<9x98x392xbf16, #tpu.memory_space<vmem>>, vector<1x98x392xbf16>
    %40 = vector.shape_cast %39 : vector<1x98x392xbf16> to vector<98x392xbf16>
    %41 = arith.extf %40 : vector<98x392xbf16> to vector<98x392xf32>
    %cst_25 = arith.constant dense<0.000000e+00> : vector<98x4xf32>
    %42 = tpu.matmul %41, %29, %cst_25 {dimension_numbers = #tpu.dot_dimension_numbers<[1], [0], [0], [1], [0, 0, 1, 1], [], []>} : vector<98x392xf32>, vector<392x4xf32>, vector<98x4xf32> -> vector<98x4xf32>
    %c1_26 = arith.constant 1 : index
    %c0_27 = arith.constant 0 : index
    %c0_28 = arith.constant 0 : index
    %43 = vector.load %arg4[%c1_26, %c0_27, %c0_28] : memref<9x4x8xf32, #tpu.memory_space<vmem>>, vector<1x4x8xf32>
    %44 = vector.shape_cast %43 : vector<1x4x8xf32> to vector<4x8xf32>
    %cst_29 = arith.constant dense<0.000000e+00> : vector<98x8xf32>
    %45 = tpu.matmul %42, %44, %cst_29 {dimension_numbers = #tpu.dot_dimension_numbers<[1], [0], [0], [1], [0, 0, 1, 1], [], []>} : vector<98x4xf32>, vector<4x8xf32>, vector<98x8xf32> -> vector<98x8xf32>
    %46 = arith.addf %38, %45 : vector<98x8xf32>
    %c2 = arith.constant 2 : index
    %c0_30 = arith.constant 0 : index
    %c0_31 = arith.constant 0 : index
    %47 = vector.load %arg3[%c2, %c0_30, %c0_31] : memref<9x98x392xbf16, #tpu.memory_space<vmem>>, vector<1x98x392xbf16>
    %48 = vector.shape_cast %47 : vector<1x98x392xbf16> to vector<98x392xbf16>
    %49 = arith.extf %48 : vector<98x392xbf16> to vector<98x392xf32>
    %cst_32 = arith.constant dense<0.000000e+00> : vector<98x4xf32>
    %50 = tpu.matmul %49, %29, %cst_32 {dimension_numbers = #tpu.dot_dimension_numbers<[1], [0], [0], [1], [0, 0, 1, 1], [], []>} : vector<98x392xf32>, vector<392x4xf32>, vector<98x4xf32> -> vector<98x4xf32>
    %c2_33 = arith.constant 2 : index
    %c0_34 = arith.constant 0 : index
    %c0_35 = arith.constant 0 : index
    %51 = vector.load %arg4[%c2_33, %c0_34, %c0_35] : memref<9x4x8xf32, #tpu.memory_space<vmem>>, vector<1x4x8xf32>
    %52 = vector.shape_cast %51 : vector<1x4x8xf32> to vector<4x8xf32>
    %cst_36 = arith.constant dense<0.000000e+00> : vector<98x8xf32>
    %53 = tpu.matmul %50, %52, %cst_36 {dimension_numbers = #tpu.dot_dimension_numbers<[1], [0], [0], [1], [0, 0, 1, 1], [], []>} : vector<98x4xf32>, vector<4x8xf32>, vector<98x8xf32> -> vector<98x8xf32>
    %54 = arith.addf %46, %53 : vector<98x8xf32>
    %c3 = arith.constant 3 : index
    %c0_37 = arith.constant 0 : index
    %c0_38 = arith.constant 0 : index
    %55 = vector.load %arg3[%c3, %c0_37, %c0_38] : memref<9x98x392xbf16, #tpu.memory_space<vmem>>, vector<1x98x392xbf16>
    %56 = vector.shape_cast %55 : vector<1x98x392xbf16> to vector<98x392xbf16>
    %57 = arith.extf %56 : vector<98x392xbf16> to vector<98x392xf32>
    %cst_39 = arith.constant dense<0.000000e+00> : vector<98x4xf32>
    %58 = tpu.matmul %57, %29, %cst_39 {dimension_numbers = #tpu.dot_dimension_numbers<[1], [0], [0], [1], [0, 0, 1, 1], [], []>} : vector<98x392xf32>, vector<392x4xf32>, vector<98x4xf32> -> vector<98x4xf32>
    %c3_40 = arith.constant 3 : index
    %c0_41 = arith.constant 0 : index
    %c0_42 = arith.constant 0 : index
    %59 = vector.load %arg4[%c3_40, %c0_41, %c0_42] : memref<9x4x8xf32, #tpu.memory_space<vmem>>, vector<1x4x8xf32>
    %60 = vector.shape_cast %59 : vector<1x4x8xf32> to vector<4x8xf32>
    %cst_43 = arith.constant dense<0.000000e+00> : vector<98x8xf32>
    %61 = tpu.matmul %58, %60, %cst_43 {dimension_numbers = #tpu.dot_dimension_numbers<[1], [0], [0], [1], [0, 0, 1, 1], [], []>} : vector<98x4xf32>, vector<4x8xf32>, vector<98x8xf32> -> vector<98x8xf32>
    %62 = arith.addf %54, %61 : vector<98x8xf32>
    %c4 = arith.constant 4 : index
    %c0_44 = arith.constant 0 : index
    %c0_45 = arith.constant 0 : index
    %63 = vector.load %arg3[%c4, %c0_44, %c0_45] : memref<9x98x392xbf16, #tpu.memory_space<vmem>>, vector<1x98x392xbf16>
    %64 = vector.shape_cast %63 : vector<1x98x392xbf16> to vector<98x392xbf16>
    %65 = arith.extf %64 : vector<98x392xbf16> to vector<98x392xf32>
    %cst_46 = arith.constant dense<0.000000e+00> : vector<98x4xf32>
    %66 = tpu.matmul %65, %29, %cst_46 {dimension_numbers = #tpu.dot_dimension_numbers<[1], [0], [0], [1], [0, 0, 1, 1], [], []>} : vector<98x392xf32>, vector<392x4xf32>, vector<98x4xf32> -> vector<98x4xf32>
    %c4_47 = arith.constant 4 : index
    %c0_48 = arith.constant 0 : index
    %c0_49 = arith.constant 0 : index
    %67 = vector.load %arg4[%c4_47, %c0_48, %c0_49] : memref<9x4x8xf32, #tpu.memory_space<vmem>>, vector<1x4x8xf32>
    %68 = vector.shape_cast %67 : vector<1x4x8xf32> to vector<4x8xf32>
    %cst_50 = arith.constant dense<0.000000e+00> : vector<98x8xf32>
    %69 = tpu.matmul %66, %68, %cst_50 {dimension_numbers = #tpu.dot_dimension_numbers<[1], [0], [0], [1], [0, 0, 1, 1], [], []>} : vector<98x4xf32>, vector<4x8xf32>, vector<98x8xf32> -> vector<98x8xf32>
    %70 = arith.addf %62, %69 : vector<98x8xf32>
    %c5 = arith.constant 5 : index
    %c0_51 = arith.constant 0 : index
    %c0_52 = arith.constant 0 : index
    %71 = vector.load %arg3[%c5, %c0_51, %c0_52] : memref<9x98x392xbf16, #tpu.memory_space<vmem>>, vector<1x98x392xbf16>
    %72 = vector.shape_cast %71 : vector<1x98x392xbf16> to vector<98x392xbf16>
    %73 = arith.extf %72 : vector<98x392xbf16> to vector<98x392xf32>
    %cst_53 = arith.constant dense<0.000000e+00> : vector<98x4xf32>
    %74 = tpu.matmul %73, %29, %cst_53 {dimension_numbers = #tpu.dot_dimension_numbers<[1], [0], [0], [1], [0, 0, 1, 1], [], []>} : vector<98x392xf32>, vector<392x4xf32>, vector<98x4xf32> -> vector<98x4xf32>
    %c5_54 = arith.constant 5 : index
    %c0_55 = arith.constant 0 : index
    %c0_56 = arith.constant 0 : index
    %75 = vector.load %arg4[%c5_54, %c0_55, %c0_56] : memref<9x4x8xf32, #tpu.memory_space<vmem>>, vector<1x4x8xf32>
    %76 = vector.shape_cast %75 : vector<1x4x8xf32> to vector<4x8xf32>
    %cst_57 = arith.constant dense<0.000000e+00> : vector<98x8xf32>
    %77 = tpu.matmul %74, %76, %cst_57 {dimension_numbers = #tpu.dot_dimension_numbers<[1], [0], [0], [1], [0, 0, 1, 1], [], []>} : vector<98x4xf32>, vector<4x8xf32>, vector<98x8xf32> -> vector<98x8xf32>
    %78 = arith.addf %70, %77 : vector<98x8xf32>
    %c6 = arith.constant 6 : index
    %c0_58 = arith.constant 0 : index
    %c0_59 = arith.constant 0 : index
    %79 = vector.load %arg3[%c6, %c0_58, %c0_59] : memref<9x98x392xbf16, #tpu.memory_space<vmem>>, vector<1x98x392xbf16>
    %80 = vector.shape_cast %79 : vector<1x98x392xbf16> to vector<98x392xbf16>
    %81 = arith.extf %80 : vector<98x392xbf16> to vector<98x392xf32>
    %cst_60 = arith.constant dense<0.000000e+00> : vector<98x4xf32>
    %82 = tpu.matmul %81, %29, %cst_60 {dimension_numbers = #tpu.dot_dimension_numbers<[1], [0], [0], [1], [0, 0, 1, 1], [], []>} : vector<98x392xf32>, vector<392x4xf32>, vector<98x4xf32> -> vector<98x4xf32>
    %c6_61 = arith.constant 6 : index
    %c0_62 = arith.constant 0 : index
    %c0_63 = arith.constant 0 : index
    %83 = vector.load %arg4[%c6_61, %c0_62, %c0_63] : memref<9x4x8xf32, #tpu.memory_space<vmem>>, vector<1x4x8xf32>
    %84 = vector.shape_cast %83 : vector<1x4x8xf32> to vector<4x8xf32>
    %cst_64 = arith.constant dense<0.000000e+00> : vector<98x8xf32>
    %85 = tpu.matmul %82, %84, %cst_64 {dimension_numbers = #tpu.dot_dimension_numbers<[1], [0], [0], [1], [0, 0, 1, 1], [], []>} : vector<98x4xf32>, vector<4x8xf32>, vector<98x8xf32> -> vector<98x8xf32>
    %86 = arith.addf %78, %85 : vector<98x8xf32>
    %c7 = arith.constant 7 : index
    %c0_65 = arith.constant 0 : index
    %c0_66 = arith.constant 0 : index
    %87 = vector.load %arg3[%c7, %c0_65, %c0_66] : memref<9x98x392xbf16, #tpu.memory_space<vmem>>, vector<1x98x392xbf16>
    %88 = vector.shape_cast %87 : vector<1x98x392xbf16> to vector<98x392xbf16>
    %89 = arith.extf %88 : vector<98x392xbf16> to vector<98x392xf32>
    %cst_67 = arith.constant dense<0.000000e+00> : vector<98x4xf32>
    %90 = tpu.matmul %89, %29, %cst_67 {dimension_numbers = #tpu.dot_dimension_numbers<[1], [0], [0], [1], [0, 0, 1, 1], [], []>} : vector<98x392xf32>, vector<392x4xf32>, vector<98x4xf32> -> vector<98x4xf32>
    %c7_68 = arith.constant 7 : index
    %c0_69 = arith.constant 0 : index
    %c0_70 = arith.constant 0 : index
    %91 = vector.load %arg4[%c7_68, %c0_69, %c0_70] : memref<9x4x8xf32, #tpu.memory_space<vmem>>, vector<1x4x8xf32>
    %92 = vector.shape_cast %91 : vector<1x4x8xf32> to vector<4x8xf32>
    %cst_71 = arith.constant dense<0.000000e+00> : vector<98x8xf32>
    %93 = tpu.matmul %90, %92, %cst_71 {dimension_numbers = #tpu.dot_dimension_numbers<[1], [0], [0], [1], [0, 0, 1, 1], [], []>} : vector<98x4xf32>, vector<4x8xf32>, vector<98x8xf32> -> vector<98x8xf32>
    %94 = arith.addf %86, %93 : vector<98x8xf32>
    %c8 = arith.constant 8 : index
    %c0_72 = arith.constant 0 : index
    %c0_73 = arith.constant 0 : index
    %95 = vector.load %arg3[%c8, %c0_72, %c0_73] : memref<9x98x392xbf16, #tpu.memory_space<vmem>>, vector<1x98x392xbf16>
    %96 = vector.shape_cast %95 : vector<1x98x392xbf16> to vector<98x392xbf16>
    %97 = arith.extf %96 : vector<98x392xbf16> to vector<98x392xf32>
    %cst_74 = arith.constant dense<0.000000e+00> : vector<98x4xf32>
    %98 = tpu.matmul %97, %29, %cst_74 {dimension_numbers = #tpu.dot_dimension_numbers<[1], [0], [0], [1], [0, 0, 1, 1], [], []>} : vector<98x392xf32>, vector<392x4xf32>, vector<98x4xf32> -> vector<98x4xf32>
    %c8_75 = arith.constant 8 : index
    %c0_76 = arith.constant 0 : index
    %c0_77 = arith.constant 0 : index
    %99 = vector.load %arg4[%c8_75, %c0_76, %c0_77] : memref<9x4x8xf32, #tpu.memory_space<vmem>>, vector<1x4x8xf32>
    %100 = vector.shape_cast %99 : vector<1x4x8xf32> to vector<4x8xf32>
    %cst_78 = arith.constant dense<0.000000e+00> : vector<98x8xf32>
    %101 = tpu.matmul %98, %100, %cst_78 {dimension_numbers = #tpu.dot_dimension_numbers<[1], [0], [0], [1], [0, 0, 1, 1], [], []>} : vector<98x4xf32>, vector<4x8xf32>, vector<98x8xf32> -> vector<98x8xf32>
    %102 = arith.addf %94, %101 : vector<98x8xf32>
    %c0_79 = arith.constant 0 : index
    %c0_80 = arith.constant 0 : index
    %103 = vector.load %arg11[%c0_79, %c0_80] : memref<1x8xf32, #tpu.memory_space<vmem>>, vector<1x8xf32>
    %c0_81 = arith.constant 0 : index
    %c0_82 = arith.constant 0 : index
    %104 = vector.load %arg12[%c0_81, %c0_82] : memref<1x8xf32, #tpu.memory_space<vmem>>, vector<1x8xf32>
    %cst_83 = arith.constant dense<0.000000e+00> : vector<8xf32>
    %105 = vector.multi_reduction <add>, %102, %cst_83 [0] : vector<98x8xf32> to vector<8xf32>
    %106 = vector.shape_cast %105 : vector<8xf32> to vector<1x8xf32>
    %cst_84 = arith.constant 0.0102040814 : f32
    %107 = vector.broadcast %cst_84 : f32 to vector<1x8xf32>
    %108 = arith.mulf %106, %107 : vector<1x8xf32>
    %109 = arith.mulf %102, %102 : vector<98x8xf32>
    %cst_85 = arith.constant dense<0.000000e+00> : vector<8xf32>
    %110 = vector.multi_reduction <add>, %109, %cst_85 [0] : vector<98x8xf32> to vector<8xf32>
    %111 = vector.shape_cast %110 : vector<8xf32> to vector<1x8xf32>
    %cst_86 = arith.constant 0.0102040814 : f32
    %112 = vector.broadcast %cst_86 : f32 to vector<1x8xf32>
    %113 = arith.mulf %111, %112 : vector<1x8xf32>
    %114 = arith.mulf %108, %108 : vector<1x8xf32>
    %115 = arith.subf %113, %114 : vector<1x8xf32>
    %cst_87 = arith.constant 0.000000e+00 : f32
    %116 = vector.broadcast %cst_87 : f32 to vector<1x8xf32>
    %117 = arith.maximumf %115, %116 : vector<1x8xf32>
    %cst_88 = arith.constant 9.99999974E-6 : f32
    %118 = vector.broadcast %cst_88 : f32 to vector<1x8xf32>
    %119 = arith.addf %117, %118 : vector<1x8xf32>
    %120 = math.rsqrt %119 : vector<1x8xf32>
    %121 = arith.mulf %103, %120 : vector<1x8xf32>
    %122 = arith.mulf %108, %121 : vector<1x8xf32>
    %123 = arith.subf %104, %122 : vector<1x8xf32>
    %124 = vector.broadcast %121 : vector<1x8xf32> to vector<98x8xf32>
    %125 = arith.mulf %102, %124 : vector<98x8xf32>
    %126 = vector.broadcast %123 : vector<1x8xf32> to vector<98x8xf32>
    %127 = arith.addf %125, %126 : vector<98x8xf32>
    %cst_89 = arith.constant 0.000000e+00 : f32
    %128 = vector.broadcast %cst_89 : f32 to vector<98x8xf32>
    %129 = arith.maximumf %127, %128 : vector<98x8xf32>
    %cst_90 = arith.constant 0.000000e+00 : f32
    %130 = vector.broadcast %cst_90 : f32 to vector<32x16xf32>
    %c0_91 = arith.constant 0 : index
    %c0_92 = arith.constant 0 : index
    %c0_93 = arith.constant 0 : index
    %131 = vector.load %arg5[%c0_91, %c0_92, %c0_93] : memref<9x32x98xbf16, #tpu.memory_space<vmem>>, vector<1x32x98xbf16>
    %132 = vector.shape_cast %131 : vector<1x32x98xbf16> to vector<32x98xbf16>
    %133 = arith.extf %132 : vector<32x98xbf16> to vector<32x98xf32>
    %cst_94 = arith.constant dense<0.000000e+00> : vector<32x8xf32>
    %134 = tpu.matmul %133, %129, %cst_94 {dimension_numbers = #tpu.dot_dimension_numbers<[1], [0], [0], [1], [0, 0, 1, 1], [], []>} : vector<32x98xf32>, vector<98x8xf32>, vector<32x8xf32> -> vector<32x8xf32>
    %c0_95 = arith.constant 0 : index
    %c0_96 = arith.constant 0 : index
    %c0_97 = arith.constant 0 : index
    %135 = vector.load %arg6[%c0_95, %c0_96, %c0_97] : memref<9x8x16xf32, #tpu.memory_space<vmem>>, vector<1x8x16xf32>
    %136 = vector.shape_cast %135 : vector<1x8x16xf32> to vector<8x16xf32>
    %cst_98 = arith.constant dense<0.000000e+00> : vector<32x16xf32>
    %137 = tpu.matmul %134, %136, %cst_98 {dimension_numbers = #tpu.dot_dimension_numbers<[1], [0], [0], [1], [0, 0, 1, 1], [], []>} : vector<32x8xf32>, vector<8x16xf32>, vector<32x16xf32> -> vector<32x16xf32>
    %138 = arith.addf %130, %137 : vector<32x16xf32>
    %c1_99 = arith.constant 1 : index
    %c0_100 = arith.constant 0 : index
    %c0_101 = arith.constant 0 : index
    %139 = vector.load %arg5[%c1_99, %c0_100, %c0_101] : memref<9x32x98xbf16, #tpu.memory_space<vmem>>, vector<1x32x98xbf16>
    %140 = vector.shape_cast %139 : vector<1x32x98xbf16> to vector<32x98xbf16>
    %141 = arith.extf %140 : vector<32x98xbf16> to vector<32x98xf32>
    %cst_102 = arith.constant dense<0.000000e+00> : vector<32x8xf32>
    %142 = tpu.matmul %141, %129, %cst_102 {dimension_numbers = #tpu.dot_dimension_numbers<[1], [0], [0], [1], [0, 0, 1, 1], [], []>} : vector<32x98xf32>, vector<98x8xf32>, vector<32x8xf32> -> vector<32x8xf32>
    %c1_103 = arith.constant 1 : index
    %c0_104 = arith.constant 0 : index
    %c0_105 = arith.constant 0 : index
    %143 = vector.load %arg6[%c1_103, %c0_104, %c0_105] : memref<9x8x16xf32, #tpu.memory_space<vmem>>, vector<1x8x16xf32>
    %144 = vector.shape_cast %143 : vector<1x8x16xf32> to vector<8x16xf32>
    %cst_106 = arith.constant dense<0.000000e+00> : vector<32x16xf32>
    %145 = tpu.matmul %142, %144, %cst_106 {dimension_numbers = #tpu.dot_dimension_numbers<[1], [0], [0], [1], [0, 0, 1, 1], [], []>} : vector<32x8xf32>, vector<8x16xf32>, vector<32x16xf32> -> vector<32x16xf32>
    %146 = arith.addf %138, %145 : vector<32x16xf32>
    %c2_107 = arith.constant 2 : index
    %c0_108 = arith.constant 0 : index
    %c0_109 = arith.constant 0 : index
    %147 = vector.load %arg5[%c2_107, %c0_108, %c0_109] : memref<9x32x98xbf16, #tpu.memory_space<vmem>>, vector<1x32x98xbf16>
    %148 = vector.shape_cast %147 : vector<1x32x98xbf16> to vector<32x98xbf16>
    %149 = arith.extf %148 : vector<32x98xbf16> to vector<32x98xf32>
    %cst_110 = arith.constant dense<0.000000e+00> : vector<32x8xf32>
    %150 = tpu.matmul %149, %129, %cst_110 {dimension_numbers = #tpu.dot_dimension_numbers<[1], [0], [0], [1], [0, 0, 1, 1], [], []>} : vector<32x98xf32>, vector<98x8xf32>, vector<32x8xf32> -> vector<32x8xf32>
    %c2_111 = arith.constant 2 : index
    %c0_112 = arith.constant 0 : index
    %c0_113 = arith.constant 0 : index
    %151 = vector.load %arg6[%c2_111, %c0_112, %c0_113] : memref<9x8x16xf32, #tpu.memory_space<vmem>>, vector<1x8x16xf32>
    %152 = vector.shape_cast %151 : vector<1x8x16xf32> to vector<8x16xf32>
    %cst_114 = arith.constant dense<0.000000e+00> : vector<32x16xf32>
    %153 = tpu.matmul %150, %152, %cst_114 {dimension_numbers = #tpu.dot_dimension_numbers<[1], [0], [0], [1], [0, 0, 1, 1], [], []>} : vector<32x8xf32>, vector<8x16xf32>, vector<32x16xf32> -> vector<32x16xf32>
    %154 = arith.addf %146, %153 : vector<32x16xf32>
    %c3_115 = arith.constant 3 : index
    %c0_116 = arith.constant 0 : index
    %c0_117 = arith.constant 0 : index
    %155 = vector.load %arg5[%c3_115, %c0_116, %c0_117] : memref<9x32x98xbf16, #tpu.memory_space<vmem>>, vector<1x32x98xbf16>
    %156 = vector.shape_cast %155 : vector<1x32x98xbf16> to vector<32x98xbf16>
    %157 = arith.extf %156 : vector<32x98xbf16> to vector<32x98xf32>
    %cst_118 = arith.constant dense<0.000000e+00> : vector<32x8xf32>
    %158 = tpu.matmul %157, %129, %cst_118 {dimension_numbers = #tpu.dot_dimension_numbers<[1], [0], [0], [1], [0, 0, 1, 1], [], []>} : vector<32x98xf32>, vector<98x8xf32>, vector<32x8xf32> -> vector<32x8xf32>
    %c3_119 = arith.constant 3 : index
    %c0_120 = arith.constant 0 : index
    %c0_121 = arith.constant 0 : index
    %159 = vector.load %arg6[%c3_119, %c0_120, %c0_121] : memref<9x8x16xf32, #tpu.memory_space<vmem>>, vector<1x8x16xf32>
    %160 = vector.shape_cast %159 : vector<1x8x16xf32> to vector<8x16xf32>
    %cst_122 = arith.constant dense<0.000000e+00> : vector<32x16xf32>
    %161 = tpu.matmul %158, %160, %cst_122 {dimension_numbers = #tpu.dot_dimension_numbers<[1], [0], [0], [1], [0, 0, 1, 1], [], []>} : vector<32x8xf32>, vector<8x16xf32>, vector<32x16xf32> -> vector<32x16xf32>
    %162 = arith.addf %154, %161 : vector<32x16xf32>
    %c4_123 = arith.constant 4 : index
    %c0_124 = arith.constant 0 : index
    %c0_125 = arith.constant 0 : index
    %163 = vector.load %arg5[%c4_123, %c0_124, %c0_125] : memref<9x32x98xbf16, #tpu.memory_space<vmem>>, vector<1x32x98xbf16>
    %164 = vector.shape_cast %163 : vector<1x32x98xbf16> to vector<32x98xbf16>
    %165 = arith.extf %164 : vector<32x98xbf16> to vector<32x98xf32>
    %cst_126 = arith.constant dense<0.000000e+00> : vector<32x8xf32>
    %166 = tpu.matmul %165, %129, %cst_126 {dimension_numbers = #tpu.dot_dimension_numbers<[1], [0], [0], [1], [0, 0, 1, 1], [], []>} : vector<32x98xf32>, vector<98x8xf32>, vector<32x8xf32> -> vector<32x8xf32>
    %c4_127 = arith.constant 4 : index
    %c0_128 = arith.constant 0 : index
    %c0_129 = arith.constant 0 : index
    %167 = vector.load %arg6[%c4_127, %c0_128, %c0_129] : memref<9x8x16xf32, #tpu.memory_space<vmem>>, vector<1x8x16xf32>
    %168 = vector.shape_cast %167 : vector<1x8x16xf32> to vector<8x16xf32>
    %cst_130 = arith.constant dense<0.000000e+00> : vector<32x16xf32>
    %169 = tpu.matmul %166, %168, %cst_130 {dimension_numbers = #tpu.dot_dimension_numbers<[1], [0], [0], [1], [0, 0, 1, 1], [], []>} : vector<32x8xf32>, vector<8x16xf32>, vector<32x16xf32> -> vector<32x16xf32>
    %170 = arith.addf %162, %169 : vector<32x16xf32>
    %c5_131 = arith.constant 5 : index
    %c0_132 = arith.constant 0 : index
    %c0_133 = arith.constant 0 : index
    %171 = vector.load %arg5[%c5_131, %c0_132, %c0_133] : memref<9x32x98xbf16, #tpu.memory_space<vmem>>, vector<1x32x98xbf16>
    %172 = vector.shape_cast %171 : vector<1x32x98xbf16> to vector<32x98xbf16>
    %173 = arith.extf %172 : vector<32x98xbf16> to vector<32x98xf32>
    %cst_134 = arith.constant dense<0.000000e+00> : vector<32x8xf32>
    %174 = tpu.matmul %173, %129, %cst_134 {dimension_numbers = #tpu.dot_dimension_numbers<[1], [0], [0], [1], [0, 0, 1, 1], [], []>} : vector<32x98xf32>, vector<98x8xf32>, vector<32x8xf32> -> vector<32x8xf32>
    %c5_135 = arith.constant 5 : index
    %c0_136 = arith.constant 0 : index
    %c0_137 = arith.constant 0 : index
    %175 = vector.load %arg6[%c5_135, %c0_136, %c0_137] : memref<9x8x16xf32, #tpu.memory_space<vmem>>, vector<1x8x16xf32>
    %176 = vector.shape_cast %175 : vector<1x8x16xf32> to vector<8x16xf32>
    %cst_138 = arith.constant dense<0.000000e+00> : vector<32x16xf32>
    %177 = tpu.matmul %174, %176, %cst_138 {dimension_numbers = #tpu.dot_dimension_numbers<[1], [0], [0], [1], [0, 0, 1, 1], [], []>} : vector<32x8xf32>, vector<8x16xf32>, vector<32x16xf32> -> vector<32x16xf32>
    %178 = arith.addf %170, %177 : vector<32x16xf32>
    %c6_139 = arith.constant 6 : index
    %c0_140 = arith.constant 0 : index
    %c0_141 = arith.constant 0 : index
    %179 = vector.load %arg5[%c6_139, %c0_140, %c0_141] : memref<9x32x98xbf16, #tpu.memory_space<vmem>>, vector<1x32x98xbf16>
    %180 = vector.shape_cast %179 : vector<1x32x98xbf16> to vector<32x98xbf16>
    %181 = arith.extf %180 : vector<32x98xbf16> to vector<32x98xf32>
    %cst_142 = arith.constant dense<0.000000e+00> : vector<32x8xf32>
    %182 = tpu.matmul %181, %129, %cst_142 {dimension_numbers = #tpu.dot_dimension_numbers<[1], [0], [0], [1], [0, 0, 1, 1], [], []>} : vector<32x98xf32>, vector<98x8xf32>, vector<32x8xf32> -> vector<32x8xf32>
    %c6_143 = arith.constant 6 : index
    %c0_144 = arith.constant 0 : index
    %c0_145 = arith.constant 0 : index
    %183 = vector.load %arg6[%c6_143, %c0_144, %c0_145] : memref<9x8x16xf32, #tpu.memory_space<vmem>>, vector<1x8x16xf32>
    %184 = vector.shape_cast %183 : vector<1x8x16xf32> to vector<8x16xf32>
    %cst_146 = arith.constant dense<0.000000e+00> : vector<32x16xf32>
    %185 = tpu.matmul %182, %184, %cst_146 {dimension_numbers = #tpu.dot_dimension_numbers<[1], [0], [0], [1], [0, 0, 1, 1], [], []>} : vector<32x8xf32>, vector<8x16xf32>, vector<32x16xf32> -> vector<32x16xf32>
    %186 = arith.addf %178, %185 : vector<32x16xf32>
    %c7_147 = arith.constant 7 : index
    %c0_148 = arith.constant 0 : index
    %c0_149 = arith.constant 0 : index
    %187 = vector.load %arg5[%c7_147, %c0_148, %c0_149] : memref<9x32x98xbf16, #tpu.memory_space<vmem>>, vector<1x32x98xbf16>
    %188 = vector.shape_cast %187 : vector<1x32x98xbf16> to vector<32x98xbf16>
    %189 = arith.extf %188 : vector<32x98xbf16> to vector<32x98xf32>
    %cst_150 = arith.constant dense<0.000000e+00> : vector<32x8xf32>
    %190 = tpu.matmul %189, %129, %cst_150 {dimension_numbers = #tpu.dot_dimension_numbers<[1], [0], [0], [1], [0, 0, 1, 1], [], []>} : vector<32x98xf32>, vector<98x8xf32>, vector<32x8xf32> -> vector<32x8xf32>
    %c7_151 = arith.constant 7 : index
    %c0_152 = arith.constant 0 : index
    %c0_153 = arith.constant 0 : index
    %191 = vector.load %arg6[%c7_151, %c0_152, %c0_153] : memref<9x8x16xf32, #tpu.memory_space<vmem>>, vector<1x8x16xf32>
    %192 = vector.shape_cast %191 : vector<1x8x16xf32> to vector<8x16xf32>
    %cst_154 = arith.constant dense<0.000000e+00> : vector<32x16xf32>
    %193 = tpu.matmul %190, %192, %cst_154 {dimension_numbers = #tpu.dot_dimension_numbers<[1], [0], [0], [1], [0, 0, 1, 1], [], []>} : vector<32x8xf32>, vector<8x16xf32>, vector<32x16xf32> -> vector<32x16xf32>
    %194 = arith.addf %186, %193 : vector<32x16xf32>
    %c8_155 = arith.constant 8 : index
    %c0_156 = arith.constant 0 : index
    %c0_157 = arith.constant 0 : index
    %195 = vector.load %arg5[%c8_155, %c0_156, %c0_157] : memref<9x32x98xbf16, #tpu.memory_space<vmem>>, vector<1x32x98xbf16>
    %196 = vector.shape_cast %195 : vector<1x32x98xbf16> to vector<32x98xbf16>
    %197 = arith.extf %196 : vector<32x98xbf16> to vector<32x98xf32>
    %cst_158 = arith.constant dense<0.000000e+00> : vector<32x8xf32>
    %198 = tpu.matmul %197, %129, %cst_158 {dimension_numbers = #tpu.dot_dimension_numbers<[1], [0], [0], [1], [0, 0, 1, 1], [], []>} : vector<32x98xf32>, vector<98x8xf32>, vector<32x8xf32> -> vector<32x8xf32>
    %c8_159 = arith.constant 8 : index
    %c0_160 = arith.constant 0 : index
    %c0_161 = arith.constant 0 : index
    %199 = vector.load %arg6[%c8_159, %c0_160, %c0_161] : memref<9x8x16xf32, #tpu.memory_space<vmem>>, vector<1x8x16xf32>
    %200 = vector.shape_cast %199 : vector<1x8x16xf32> to vector<8x16xf32>
    %cst_162 = arith.constant dense<0.000000e+00> : vector<32x16xf32>
    %201 = tpu.matmul %198, %200, %cst_162 {dimension_numbers = #tpu.dot_dimension_numbers<[1], [0], [0], [1], [0, 0, 1, 1], [], []>} : vector<32x8xf32>, vector<8x16xf32>, vector<32x16xf32> -> vector<32x16xf32>
    %202 = arith.addf %194, %201 : vector<32x16xf32>
    %c0_163 = arith.constant 0 : index
    %c0_164 = arith.constant 0 : index
    %203 = vector.load %arg13[%c0_163, %c0_164] : memref<1x16xf32, #tpu.memory_space<vmem>>, vector<1x16xf32>
    %c0_165 = arith.constant 0 : index
    %c0_166 = arith.constant 0 : index
    %204 = vector.load %arg14[%c0_165, %c0_166] : memref<1x16xf32, #tpu.memory_space<vmem>>, vector<1x16xf32>
    %cst_167 = arith.constant dense<0.000000e+00> : vector<16xf32>
    %205 = vector.multi_reduction <add>, %202, %cst_167 [0] : vector<32x16xf32> to vector<16xf32>
    %206 = vector.shape_cast %205 : vector<16xf32> to vector<1x16xf32>
    %cst_168 = arith.constant 3.125000e-02 : f32
    %207 = vector.broadcast %cst_168 : f32 to vector<1x16xf32>
    %208 = arith.mulf %206, %207 : vector<1x16xf32>
    %209 = arith.mulf %202, %202 : vector<32x16xf32>
    %cst_169 = arith.constant dense<0.000000e+00> : vector<16xf32>
    %210 = vector.multi_reduction <add>, %209, %cst_169 [0] : vector<32x16xf32> to vector<16xf32>
    %211 = vector.shape_cast %210 : vector<16xf32> to vector<1x16xf32>
    %cst_170 = arith.constant 3.125000e-02 : f32
    %212 = vector.broadcast %cst_170 : f32 to vector<1x16xf32>
    %213 = arith.mulf %211, %212 : vector<1x16xf32>
    %214 = arith.mulf %208, %208 : vector<1x16xf32>
    %215 = arith.subf %213, %214 : vector<1x16xf32>
    %cst_171 = arith.constant 0.000000e+00 : f32
    %216 = vector.broadcast %cst_171 : f32 to vector<1x16xf32>
    %217 = arith.maximumf %215, %216 : vector<1x16xf32>
    %cst_172 = arith.constant 9.99999974E-6 : f32
    %218 = vector.broadcast %cst_172 : f32 to vector<1x16xf32>
    %219 = arith.addf %217, %218 : vector<1x16xf32>
    %220 = math.rsqrt %219 : vector<1x16xf32>
    %221 = arith.mulf %203, %220 : vector<1x16xf32>
    %222 = arith.mulf %208, %221 : vector<1x16xf32>
    %223 = arith.subf %204, %222 : vector<1x16xf32>
    %224 = vector.broadcast %221 : vector<1x16xf32> to vector<32x16xf32>
    %225 = arith.mulf %202, %224 : vector<32x16xf32>
    %226 = vector.broadcast %223 : vector<1x16xf32> to vector<32x16xf32>
    %227 = arith.addf %225, %226 : vector<32x16xf32>
    %cst_173 = arith.constant 0.000000e+00 : f32
    %228 = vector.broadcast %cst_173 : f32 to vector<32x16xf32>
    %229 = arith.maximumf %227, %228 : vector<32x16xf32>
    %cst_174 = arith.constant 0.000000e+00 : f32
    %230 = vector.broadcast %cst_174 : f32 to vector<8x32xf32>
    %c0_175 = arith.constant 0 : index
    %c0_176 = arith.constant 0 : index
    %c0_177 = arith.constant 0 : index
    %231 = vector.load %arg7[%c0_175, %c0_176, %c0_177] : memref<9x8x32xbf16, #tpu.memory_space<vmem>>, vector<1x8x32xbf16>
    %232 = vector.shape_cast %231 : vector<1x8x32xbf16> to vector<8x32xbf16>
    %233 = arith.extf %232 : vector<8x32xbf16> to vector<8x32xf32>
    %cst_178 = arith.constant dense<0.000000e+00> : vector<8x16xf32>
    %234 = tpu.matmul %233, %229, %cst_178 {dimension_numbers = #tpu.dot_dimension_numbers<[1], [0], [0], [1], [0, 0, 1, 1], [], []>} : vector<8x32xf32>, vector<32x16xf32>, vector<8x16xf32> -> vector<8x16xf32>
    %c0_179 = arith.constant 0 : index
    %c0_180 = arith.constant 0 : index
    %c0_181 = arith.constant 0 : index
    %235 = vector.load %arg8[%c0_179, %c0_180, %c0_181] : memref<9x16x32xf32, #tpu.memory_space<vmem>>, vector<1x16x32xf32>
    %236 = vector.shape_cast %235 : vector<1x16x32xf32> to vector<16x32xf32>
    %cst_182 = arith.constant dense<0.000000e+00> : vector<8x32xf32>
    %237 = tpu.matmul %234, %236, %cst_182 {dimension_numbers = #tpu.dot_dimension_numbers<[1], [0], [0], [1], [0, 0, 1, 1], [], []>} : vector<8x16xf32>, vector<16x32xf32>, vector<8x32xf32> -> vector<8x32xf32>
    %238 = arith.addf %230, %237 : vector<8x32xf32>
    %c1_183 = arith.constant 1 : index
    %c0_184 = arith.constant 0 : index
    %c0_185 = arith.constant 0 : index
    %239 = vector.load %arg7[%c1_183, %c0_184, %c0_185] : memref<9x8x32xbf16, #tpu.memory_space<vmem>>, vector<1x8x32xbf16>
    %240 = vector.shape_cast %239 : vector<1x8x32xbf16> to vector<8x32xbf16>
    %241 = arith.extf %240 : vector<8x32xbf16> to vector<8x32xf32>
    %cst_186 = arith.constant dense<0.000000e+00> : vector<8x16xf32>
    %242 = tpu.matmul %241, %229, %cst_186 {dimension_numbers = #tpu.dot_dimension_numbers<[1], [0], [0], [1], [0, 0, 1, 1], [], []>} : vector<8x32xf32>, vector<32x16xf32>, vector<8x16xf32> -> vector<8x16xf32>
    %c1_187 = arith.constant 1 : index
    %c0_188 = arith.constant 0 : index
    %c0_189 = arith.constant 0 : index
    %243 = vector.load %arg8[%c1_187, %c0_188, %c0_189] : memref<9x16x32xf32, #tpu.memory_space<vmem>>, vector<1x16x32xf32>
    %244 = vector.shape_cast %243 : vector<1x16x32xf32> to vector<16x32xf32>
    %cst_190 = arith.constant dense<0.000000e+00> : vector<8x32xf32>
    %245 = tpu.matmul %242, %244, %cst_190 {dimension_numbers = #tpu.dot_dimension_numbers<[1], [0], [0], [1], [0, 0, 1, 1], [], []>} : vector<8x16xf32>, vector<16x32xf32>, vector<8x32xf32> -> vector<8x32xf32>
    %246 = arith.addf %238, %245 : vector<8x32xf32>
    %c2_191 = arith.constant 2 : index
    %c0_192 = arith.constant 0 : index
    %c0_193 = arith.constant 0 : index
    %247 = vector.load %arg7[%c2_191, %c0_192, %c0_193] : memref<9x8x32xbf16, #tpu.memory_space<vmem>>, vector<1x8x32xbf16>
    %248 = vector.shape_cast %247 : vector<1x8x32xbf16> to vector<8x32xbf16>
    %249 = arith.extf %248 : vector<8x32xbf16> to vector<8x32xf32>
    %cst_194 = arith.constant dense<0.000000e+00> : vector<8x16xf32>
    %250 = tpu.matmul %249, %229, %cst_194 {dimension_numbers = #tpu.dot_dimension_numbers<[1], [0], [0], [1], [0, 0, 1, 1], [], []>} : vector<8x32xf32>, vector<32x16xf32>, vector<8x16xf32> -> vector<8x16xf32>
    %c2_195 = arith.constant 2 : index
    %c0_196 = arith.constant 0 : index
    %c0_197 = arith.constant 0 : index
    %251 = vector.load %arg8[%c2_195, %c0_196, %c0_197] : memref<9x16x32xf32, #tpu.memory_space<vmem>>, vector<1x16x32xf32>
    %252 = vector.shape_cast %251 : vector<1x16x32xf32> to vector<16x32xf32>
    %cst_198 = arith.constant dense<0.000000e+00> : vector<8x32xf32>
    %253 = tpu.matmul %250, %252, %cst_198 {dimension_numbers = #tpu.dot_dimension_numbers<[1], [0], [0], [1], [0, 0, 1, 1], [], []>} : vector<8x16xf32>, vector<16x32xf32>, vector<8x32xf32> -> vector<8x32xf32>
    %254 = arith.addf %246, %253 : vector<8x32xf32>
    %c3_199 = arith.constant 3 : index
    %c0_200 = arith.constant 0 : index
    %c0_201 = arith.constant 0 : index
    %255 = vector.load %arg7[%c3_199, %c0_200, %c0_201] : memref<9x8x32xbf16, #tpu.memory_space<vmem>>, vector<1x8x32xbf16>
    %256 = vector.shape_cast %255 : vector<1x8x32xbf16> to vector<8x32xbf16>
    %257 = arith.extf %256 : vector<8x32xbf16> to vector<8x32xf32>
    %cst_202 = arith.constant dense<0.000000e+00> : vector<8x16xf32>
    %258 = tpu.matmul %257, %229, %cst_202 {dimension_numbers = #tpu.dot_dimension_numbers<[1], [0], [0], [1], [0, 0, 1, 1], [], []>} : vector<8x32xf32>, vector<32x16xf32>, vector<8x16xf32> -> vector<8x16xf32>
    %c3_203 = arith.constant 3 : index
    %c0_204 = arith.constant 0 : index
    %c0_205 = arith.constant 0 : index
    %259 = vector.load %arg8[%c3_203, %c0_204, %c0_205] : memref<9x16x32xf32, #tpu.memory_space<vmem>>, vector<1x16x32xf32>
    %260 = vector.shape_cast %259 : vector<1x16x32xf32> to vector<16x32xf32>
    %cst_206 = arith.constant dense<0.000000e+00> : vector<8x32xf32>
    %261 = tpu.matmul %258, %260, %cst_206 {dimension_numbers = #tpu.dot_dimension_numbers<[1], [0], [0], [1], [0, 0, 1, 1], [], []>} : vector<8x16xf32>, vector<16x32xf32>, vector<8x32xf32> -> vector<8x32xf32>
    %262 = arith.addf %254, %261 : vector<8x32xf32>
    %c4_207 = arith.constant 4 : index
    %c0_208 = arith.constant 0 : index
    %c0_209 = arith.constant 0 : index
    %263 = vector.load %arg7[%c4_207, %c0_208, %c0_209] : memref<9x8x32xbf16, #tpu.memory_space<vmem>>, vector<1x8x32xbf16>
    %264 = vector.shape_cast %263 : vector<1x8x32xbf16> to vector<8x32xbf16>
    %265 = arith.extf %264 : vector<8x32xbf16> to vector<8x32xf32>
    %cst_210 = arith.constant dense<0.000000e+00> : vector<8x16xf32>
    %266 = tpu.matmul %265, %229, %cst_210 {dimension_numbers = #tpu.dot_dimension_numbers<[1], [0], [0], [1], [0, 0, 1, 1], [], []>} : vector<8x32xf32>, vector<32x16xf32>, vector<8x16xf32> -> vector<8x16xf32>
    %c4_211 = arith.constant 4 : index
    %c0_212 = arith.constant 0 : index
    %c0_213 = arith.constant 0 : index
    %267 = vector.load %arg8[%c4_211, %c0_212, %c0_213] : memref<9x16x32xf32, #tpu.memory_space<vmem>>, vector<1x16x32xf32>
    %268 = vector.shape_cast %267 : vector<1x16x32xf32> to vector<16x32xf32>
    %cst_214 = arith.constant dense<0.000000e+00> : vector<8x32xf32>
    %269 = tpu.matmul %266, %268, %cst_214 {dimension_numbers = #tpu.dot_dimension_numbers<[1], [0], [0], [1], [0, 0, 1, 1], [], []>} : vector<8x16xf32>, vector<16x32xf32>, vector<8x32xf32> -> vector<8x32xf32>
    %270 = arith.addf %262, %269 : vector<8x32xf32>
    %c5_215 = arith.constant 5 : index
    %c0_216 = arith.constant 0 : index
    %c0_217 = arith.constant 0 : index
    %271 = vector.load %arg7[%c5_215, %c0_216, %c0_217] : memref<9x8x32xbf16, #tpu.memory_space<vmem>>, vector<1x8x32xbf16>
    %272 = vector.shape_cast %271 : vector<1x8x32xbf16> to vector<8x32xbf16>
    %273 = arith.extf %272 : vector<8x32xbf16> to vector<8x32xf32>
    %cst_218 = arith.constant dense<0.000000e+00> : vector<8x16xf32>
    %274 = tpu.matmul %273, %229, %cst_218 {dimension_numbers = #tpu.dot_dimension_numbers<[1], [0], [0], [1], [0, 0, 1, 1], [], []>} : vector<8x32xf32>, vector<32x16xf32>, vector<8x16xf32> -> vector<8x16xf32>
    %c5_219 = arith.constant 5 : index
    %c0_220 = arith.constant 0 : index
    %c0_221 = arith.constant 0 : index
    %275 = vector.load %arg8[%c5_219, %c0_220, %c0_221] : memref<9x16x32xf32, #tpu.memory_space<vmem>>, vector<1x16x32xf32>
    %276 = vector.shape_cast %275 : vector<1x16x32xf32> to vector<16x32xf32>
    %cst_222 = arith.constant dense<0.000000e+00> : vector<8x32xf32>
    %277 = tpu.matmul %274, %276, %cst_222 {dimension_numbers = #tpu.dot_dimension_numbers<[1], [0], [0], [1], [0, 0, 1, 1], [], []>} : vector<8x16xf32>, vector<16x32xf32>, vector<8x32xf32> -> vector<8x32xf32>
    %278 = arith.addf %270, %277 : vector<8x32xf32>
    %c6_223 = arith.constant 6 : index
    %c0_224 = arith.constant 0 : index
    %c0_225 = arith.constant 0 : index
    %279 = vector.load %arg7[%c6_223, %c0_224, %c0_225] : memref<9x8x32xbf16, #tpu.memory_space<vmem>>, vector<1x8x32xbf16>
    %280 = vector.shape_cast %279 : vector<1x8x32xbf16> to vector<8x32xbf16>
    %281 = arith.extf %280 : vector<8x32xbf16> to vector<8x32xf32>
    %cst_226 = arith.constant dense<0.000000e+00> : vector<8x16xf32>
    %282 = tpu.matmul %281, %229, %cst_226 {dimension_numbers = #tpu.dot_dimension_numbers<[1], [0], [0], [1], [0, 0, 1, 1], [], []>} : vector<8x32xf32>, vector<32x16xf32>, vector<8x16xf32> -> vector<8x16xf32>
    %c6_227 = arith.constant 6 : index
    %c0_228 = arith.constant 0 : index
    %c0_229 = arith.constant 0 : index
    %283 = vector.load %arg8[%c6_227, %c0_228, %c0_229] : memref<9x16x32xf32, #tpu.memory_space<vmem>>, vector<1x16x32xf32>
    %284 = vector.shape_cast %283 : vector<1x16x32xf32> to vector<16x32xf32>
    %cst_230 = arith.constant dense<0.000000e+00> : vector<8x32xf32>
    %285 = tpu.matmul %282, %284, %cst_230 {dimension_numbers = #tpu.dot_dimension_numbers<[1], [0], [0], [1], [0, 0, 1, 1], [], []>} : vector<8x16xf32>, vector<16x32xf32>, vector<8x32xf32> -> vector<8x32xf32>
    %286 = arith.addf %278, %285 : vector<8x32xf32>
    %c7_231 = arith.constant 7 : index
    %c0_232 = arith.constant 0 : index
    %c0_233 = arith.constant 0 : index
    %287 = vector.load %arg7[%c7_231, %c0_232, %c0_233] : memref<9x8x32xbf16, #tpu.memory_space<vmem>>, vector<1x8x32xbf16>
    %288 = vector.shape_cast %287 : vector<1x8x32xbf16> to vector<8x32xbf16>
    %289 = arith.extf %288 : vector<8x32xbf16> to vector<8x32xf32>
    %cst_234 = arith.constant dense<0.000000e+00> : vector<8x16xf32>
    %290 = tpu.matmul %289, %229, %cst_234 {dimension_numbers = #tpu.dot_dimension_numbers<[1], [0], [0], [1], [0, 0, 1, 1], [], []>} : vector<8x32xf32>, vector<32x16xf32>, vector<8x16xf32> -> vector<8x16xf32>
    %c7_235 = arith.constant 7 : index
    %c0_236 = arith.constant 0 : index
    %c0_237 = arith.constant 0 : index
    %291 = vector.load %arg8[%c7_235, %c0_236, %c0_237] : memref<9x16x32xf32, #tpu.memory_space<vmem>>, vector<1x16x32xf32>
    %292 = vector.shape_cast %291 : vector<1x16x32xf32> to vector<16x32xf32>
    %cst_238 = arith.constant dense<0.000000e+00> : vector<8x32xf32>
    %293 = tpu.matmul %290, %292, %cst_238 {dimension_numbers = #tpu.dot_dimension_numbers<[1], [0], [0], [1], [0, 0, 1, 1], [], []>} : vector<8x16xf32>, vector<16x32xf32>, vector<8x32xf32> -> vector<8x32xf32>
    %294 = arith.addf %286, %293 : vector<8x32xf32>
    %c8_239 = arith.constant 8 : index
    %c0_240 = arith.constant 0 : index
    %c0_241 = arith.constant 0 : index
    %295 = vector.load %arg7[%c8_239, %c0_240, %c0_241] : memref<9x8x32xbf16, #tpu.memory_space<vmem>>, vector<1x8x32xbf16>
    %296 = vector.shape_cast %295 : vector<1x8x32xbf16> to vector<8x32xbf16>
    %297 = arith.extf %296 : vector<8x32xbf16> to vector<8x32xf32>
    %cst_242 = arith.constant dense<0.000000e+00> : vector<8x16xf32>
    %298 = tpu.matmul %297, %229, %cst_242 {dimension_numbers = #tpu.dot_dimension_numbers<[1], [0], [0], [1], [0, 0, 1, 1], [], []>} : vector<8x32xf32>, vector<32x16xf32>, vector<8x16xf32> -> vector<8x16xf32>
    %c8_243 = arith.constant 8 : index
    %c0_244 = arith.constant 0 : index
    %c0_245 = arith.constant 0 : index
    %299 = vector.load %arg8[%c8_243, %c0_244, %c0_245] : memref<9x16x32xf32, #tpu.memory_space<vmem>>, vector<1x16x32xf32>
    %300 = vector.shape_cast %299 : vector<1x16x32xf32> to vector<16x32xf32>
    %cst_246 = arith.constant dense<0.000000e+00> : vector<8x32xf32>
    %301 = tpu.matmul %298, %300, %cst_246 {dimension_numbers = #tpu.dot_dimension_numbers<[1], [0], [0], [1], [0, 0, 1, 1], [], []>} : vector<8x16xf32>, vector<16x32xf32>, vector<8x32xf32> -> vector<8x32xf32>
    %302 = arith.addf %294, %301 : vector<8x32xf32>
    %c0_247 = arith.constant 0 : index
    %c0_248 = arith.constant 0 : index
    %303 = vector.load %arg15[%c0_247, %c0_248] : memref<1x32xf32, #tpu.memory_space<vmem>>, vector<1x32xf32>
    %c0_249 = arith.constant 0 : index
    %c0_250 = arith.constant 0 : index
    %304 = vector.load %arg16[%c0_249, %c0_250] : memref<1x32xf32, #tpu.memory_space<vmem>>, vector<1x32xf32>
    %cst_251 = arith.constant dense<0.000000e+00> : vector<32xf32>
    %305 = vector.multi_reduction <add>, %302, %cst_251 [0] : vector<8x32xf32> to vector<32xf32>
    %306 = vector.shape_cast %305 : vector<32xf32> to vector<1x32xf32>
    %cst_252 = arith.constant 1.250000e-01 : f32
    %307 = vector.broadcast %cst_252 : f32 to vector<1x32xf32>
    %308 = arith.mulf %306, %307 : vector<1x32xf32>
    %309 = arith.mulf %302, %302 : vector<8x32xf32>
    %cst_253 = arith.constant dense<0.000000e+00> : vector<32xf32>
    %310 = vector.multi_reduction <add>, %309, %cst_253 [0] : vector<8x32xf32> to vector<32xf32>
    %311 = vector.shape_cast %310 : vector<32xf32> to vector<1x32xf32>
    %cst_254 = arith.constant 1.250000e-01 : f32
    %312 = vector.broadcast %cst_254 : f32 to vector<1x32xf32>
    %313 = arith.mulf %311, %312 : vector<1x32xf32>
    %314 = arith.mulf %308, %308 : vector<1x32xf32>
    %315 = arith.subf %313, %314 : vector<1x32xf32>
    %cst_255 = arith.constant 0.000000e+00 : f32
    %316 = vector.broadcast %cst_255 : f32 to vector<1x32xf32>
    %317 = arith.maximumf %315, %316 : vector<1x32xf32>
    %cst_256 = arith.constant 9.99999974E-6 : f32
    %318 = vector.broadcast %cst_256 : f32 to vector<1x32xf32>
    %319 = arith.addf %317, %318 : vector<1x32xf32>
    %320 = math.rsqrt %319 : vector<1x32xf32>
    %321 = arith.mulf %303, %320 : vector<1x32xf32>
    %322 = arith.mulf %308, %321 : vector<1x32xf32>
    %323 = arith.subf %304, %322 : vector<1x32xf32>
    %324 = vector.broadcast %321 : vector<1x32xf32> to vector<8x32xf32>
    %325 = arith.mulf %302, %324 : vector<8x32xf32>
    %326 = vector.broadcast %323 : vector<1x32xf32> to vector<8x32xf32>
    %327 = arith.addf %325, %326 : vector<8x32xf32>
    %cst_257 = arith.constant 0.000000e+00 : f32
    %328 = vector.broadcast %cst_257 : f32 to vector<8x32xf32>
    %329 = arith.maximumf %327, %328 : vector<8x32xf32>
    %330 = tpu.iota {dimensions = array<i32: 0>} : vector<2x8xi32>
    %331 = tpu.iota {dimensions = array<i32: 1>} : vector<2x8xi32>
    %c4_i32 = arith.constant 4 : i32
    %332 = vector.broadcast %c4_i32 : i32 to vector<2x8xi32>
    %333 = arith.muli %330, %332 : vector<2x8xi32>
    %334 = arith.cmpi sge, %331, %333 : vector<2x8xi32>
    %c1_i32 = arith.constant 1 : i32
    %335 = vector.broadcast %c1_i32 : i32 to vector<2x8xi32>
    %336 = arith.addi %330, %335 : vector<2x8xi32>
    %c4_i32_258 = arith.constant 4 : i32
    %337 = vector.broadcast %c4_i32_258 : i32 to vector<2x8xi32>
    %338 = arith.muli %336, %337 : vector<2x8xi32>
    %339 = arith.cmpi slt, %331, %338 : vector<2x8xi32>
    %340 = arith.andi %334, %339 : vector<2x8xi1>
    %cst_259 = arith.constant 2.500000e-01 : f32
    %cst_260 = arith.constant 0.000000e+00 : f32
    %341 = vector.broadcast %cst_259 : f32 to vector<2x8xf32>
    %342 = vector.broadcast %cst_260 : f32 to vector<2x8xf32>
    %343 = arith.select %340, %341, %342 : vector<2x8xi1>, vector<2x8xf32>
    %cst_261 = arith.constant dense<0.000000e+00> : vector<2x32xf32>
    %344 = tpu.matmul %343, %329, %cst_261 {dimension_numbers = #tpu.dot_dimension_numbers<[1], [0], [0], [1], [0, 0, 1, 1], [], []>} : vector<2x8xf32>, vector<8x32xf32>, vector<2x32xf32> -> vector<2x32xf32>
    %c0_262 = arith.constant 0 : index
    %c0_263 = arith.constant 0 : index
    %345 = vector.load %arg17[%c0_262, %c0_263] : memref<32x96xf32, #tpu.memory_space<vmem>>, vector<32x96xf32>
    %cst_264 = arith.constant dense<0.000000e+00> : vector<2x96xf32>
    %346 = tpu.matmul %344, %345, %cst_264 {dimension_numbers = #tpu.dot_dimension_numbers<[1], [0], [0], [1], [0, 0, 1, 1], [], []>} : vector<2x32xf32>, vector<32x96xf32>, vector<2x96xf32> -> vector<2x96xf32>
    %c0_265 = arith.constant 0 : index
    %c0_266 = arith.constant 0 : index
    %347 = vector.load %arg18[%c0_265, %c0_266] : memref<1x96xf32, #tpu.memory_space<vmem>>, vector<1x96xf32>
    %348 = vector.broadcast %347 : vector<1x96xf32> to vector<2x96xf32>
    %349 = arith.addf %346, %348 : vector<2x96xf32>
    %c0_267 = arith.constant 0 : index
    %c0_268 = arith.constant 0 : index
    %350 = vector.load %arg21[%c0_267, %c0_268] : memref<32x96xf32, #tpu.memory_space<vmem>>, vector<32x96xf32>
    %cst_269 = arith.constant dense<0.000000e+00> : vector<2x96xf32>
    %351 = tpu.matmul %344, %350, %cst_269 {dimension_numbers = #tpu.dot_dimension_numbers<[1], [0], [0], [1], [0, 0, 1, 1], [], []>} : vector<2x32xf32>, vector<32x96xf32>, vector<2x96xf32> -> vector<2x96xf32>
    %c0_270 = arith.constant 0 : index
    %c0_271 = arith.constant 0 : index
    %352 = vector.load %arg22[%c0_270, %c0_271] : memref<1x96xf32, #tpu.memory_space<vmem>>, vector<1x96xf32>
    %353 = vector.broadcast %352 : vector<1x96xf32> to vector<2x96xf32>
    %354 = arith.addf %351, %353 : vector<2x96xf32>
    %c0_272 = arith.constant 0 : index
    %c0_273 = arith.constant 0 : index
    %355 = vector.load %arg19[%c0_272, %c0_273] : memref<32x96xf32, #tpu.memory_space<vmem>>, vector<32x96xf32>
    %c0_274 = arith.constant 0 : index
    %c0_275 = arith.constant 0 : index
    %356 = vector.load %arg20[%c0_274, %c0_275] : memref<1x96xf32, #tpu.memory_space<vmem>>, vector<1x96xf32>
    %c0_276 = arith.constant 0 : index
    %c0_277 = arith.constant 0 : index
    %357 = vector.load %arg23[%c0_276, %c0_277] : memref<32x96xf32, #tpu.memory_space<vmem>>, vector<32x96xf32>
    %c0_278 = arith.constant 0 : index
    %c0_279 = arith.constant 0 : index
    %358 = vector.load %arg24[%c0_278, %c0_279] : memref<1x96xf32, #tpu.memory_space<vmem>>, vector<1x96xf32>
    %cst_280 = arith.constant 0.000000e+00 : f32
    %359 = vector.broadcast %cst_280 : f32 to vector<1x32xf32>
    %cst_281 = arith.constant 0.000000e+00 : f32
    %360 = vector.broadcast %cst_281 : f32 to vector<1x32xf32>
    %361 = vector.extract_strided_slice %349 {offsets = [0, 0], sizes = [1, 96], strides = [1, 1]} : vector<2x96xf32> to vector<1x96xf32>
    %cst_282 = arith.constant dense<0.000000e+00> : vector<1x96xf32>
    %362 = tpu.matmul %359, %355, %cst_282 {dimension_numbers = #tpu.dot_dimension_numbers<[1], [0], [0], [1], [0, 0, 1, 1], [], []>} : vector<1x32xf32>, vector<32x96xf32>, vector<1x96xf32> -> vector<1x96xf32>
    %363 = arith.addf %362, %356 : vector<1x96xf32>
    %364 = vector.extract_strided_slice %361 {offsets = [0, 0], sizes = [1, 32], strides = [1, 1]} : vector<1x96xf32> to vector<1x32xf32>
    %365 = vector.extract_strided_slice %363 {offsets = [0, 0], sizes = [1, 32], strides = [1, 1]} : vector<1x96xf32> to vector<1x32xf32>
    %366 = arith.addf %364, %365 : vector<1x32xf32>
    %cst_283 = arith.constant 0.000000e+00 : f32
    %367 = vector.broadcast %cst_283 : f32 to vector<1x32xf32>
    %368 = arith.subf %367, %366 : vector<1x32xf32>
    %369 = math.exp %368 : vector<1x32xf32>
    %cst_284 = arith.constant 1.000000e+00 : f32
    %370 = vector.broadcast %cst_284 : f32 to vector<1x32xf32>
    %371 = arith.addf %370, %369 : vector<1x32xf32>
    %cst_285 = arith.constant 1.000000e+00 : f32
    %372 = vector.broadcast %cst_285 : f32 to vector<1x32xf32>
    %373 = arith.divf %372, %371 : vector<1x32xf32>
    %374 = vector.extract_strided_slice %361 {offsets = [0, 32], sizes = [1, 32], strides = [1, 1]} : vector<1x96xf32> to vector<1x32xf32>
    %375 = vector.extract_strided_slice %363 {offsets = [0, 32], sizes = [1, 32], strides = [1, 1]} : vector<1x96xf32> to vector<1x32xf32>
    %376 = arith.addf %374, %375 : vector<1x32xf32>
    %cst_286 = arith.constant 0.000000e+00 : f32
    %377 = vector.broadcast %cst_286 : f32 to vector<1x32xf32>
    %378 = arith.subf %377, %376 : vector<1x32xf32>
    %379 = math.exp %378 : vector<1x32xf32>
    %cst_287 = arith.constant 1.000000e+00 : f32
    %380 = vector.broadcast %cst_287 : f32 to vector<1x32xf32>
    %381 = arith.addf %380, %379 : vector<1x32xf32>
    %cst_288 = arith.constant 1.000000e+00 : f32
    %382 = vector.broadcast %cst_288 : f32 to vector<1x32xf32>
    %383 = arith.divf %382, %381 : vector<1x32xf32>
    %384 = vector.extract_strided_slice %361 {offsets = [0, 64], sizes = [1, 32], strides = [1, 1]} : vector<1x96xf32> to vector<1x32xf32>
    %385 = vector.extract_strided_slice %363 {offsets = [0, 64], sizes = [1, 32], strides = [1, 1]} : vector<1x96xf32> to vector<1x32xf32>
    %386 = arith.mulf %373, %385 : vector<1x32xf32>
    %387 = arith.addf %384, %386 : vector<1x32xf32>
    %388 = math.tanh %387 : vector<1x32xf32>
    %cst_289 = arith.constant 1.000000e+00 : f32
    %389 = vector.broadcast %cst_289 : f32 to vector<1x32xf32>
    %390 = arith.subf %389, %383 : vector<1x32xf32>
    %391 = arith.mulf %390, %388 : vector<1x32xf32>
    %392 = arith.mulf %383, %359 : vector<1x32xf32>
    %393 = arith.addf %391, %392 : vector<1x32xf32>
    %394 = vector.extract_strided_slice %354 {offsets = [1, 0], sizes = [1, 96], strides = [1, 1]} : vector<2x96xf32> to vector<1x96xf32>
    %cst_290 = arith.constant dense<0.000000e+00> : vector<1x96xf32>
    %395 = tpu.matmul %360, %357, %cst_290 {dimension_numbers = #tpu.dot_dimension_numbers<[1], [0], [0], [1], [0, 0, 1, 1], [], []>} : vector<1x32xf32>, vector<32x96xf32>, vector<1x96xf32> -> vector<1x96xf32>
    %396 = arith.addf %395, %358 : vector<1x96xf32>
    %397 = vector.extract_strided_slice %394 {offsets = [0, 0], sizes = [1, 32], strides = [1, 1]} : vector<1x96xf32> to vector<1x32xf32>
    %398 = vector.extract_strided_slice %396 {offsets = [0, 0], sizes = [1, 32], strides = [1, 1]} : vector<1x96xf32> to vector<1x32xf32>
    %399 = arith.addf %397, %398 : vector<1x32xf32>
    %cst_291 = arith.constant 0.000000e+00 : f32
    %400 = vector.broadcast %cst_291 : f32 to vector<1x32xf32>
    %401 = arith.subf %400, %399 : vector<1x32xf32>
    %402 = math.exp %401 : vector<1x32xf32>
    %cst_292 = arith.constant 1.000000e+00 : f32
    %403 = vector.broadcast %cst_292 : f32 to vector<1x32xf32>
    %404 = arith.addf %403, %402 : vector<1x32xf32>
    %cst_293 = arith.constant 1.000000e+00 : f32
    %405 = vector.broadcast %cst_293 : f32 to vector<1x32xf32>
    %406 = arith.divf %405, %404 : vector<1x32xf32>
    %407 = vector.extract_strided_slice %394 {offsets = [0, 32], sizes = [1, 32], strides = [1, 1]} : vector<1x96xf32> to vector<1x32xf32>
    %408 = vector.extract_strided_slice %396 {offsets = [0, 32], sizes = [1, 32], strides = [1, 1]} : vector<1x96xf32> to vector<1x32xf32>
    %409 = arith.addf %407, %408 : vector<1x32xf32>
    %cst_294 = arith.constant 0.000000e+00 : f32
    %410 = vector.broadcast %cst_294 : f32 to vector<1x32xf32>
    %411 = arith.subf %410, %409 : vector<1x32xf32>
    %412 = math.exp %411 : vector<1x32xf32>
    %cst_295 = arith.constant 1.000000e+00 : f32
    %413 = vector.broadcast %cst_295 : f32 to vector<1x32xf32>
    %414 = arith.addf %413, %412 : vector<1x32xf32>
    %cst_296 = arith.constant 1.000000e+00 : f32
    %415 = vector.broadcast %cst_296 : f32 to vector<1x32xf32>
    %416 = arith.divf %415, %414 : vector<1x32xf32>
    %417 = vector.extract_strided_slice %394 {offsets = [0, 64], sizes = [1, 32], strides = [1, 1]} : vector<1x96xf32> to vector<1x32xf32>
    %418 = vector.extract_strided_slice %396 {offsets = [0, 64], sizes = [1, 32], strides = [1, 1]} : vector<1x96xf32> to vector<1x32xf32>
    %419 = arith.mulf %406, %418 : vector<1x32xf32>
    %420 = arith.addf %417, %419 : vector<1x32xf32>
    %421 = math.tanh %420 : vector<1x32xf32>
    %cst_297 = arith.constant 1.000000e+00 : f32
    %422 = vector.broadcast %cst_297 : f32 to vector<1x32xf32>
    %423 = arith.subf %422, %416 : vector<1x32xf32>
    %424 = arith.mulf %423, %421 : vector<1x32xf32>
    %425 = arith.mulf %416, %360 : vector<1x32xf32>
    %426 = arith.addf %424, %425 : vector<1x32xf32>
    %427 = vector.extract_strided_slice %349 {offsets = [1, 0], sizes = [1, 96], strides = [1, 1]} : vector<2x96xf32> to vector<1x96xf32>
    %cst_298 = arith.constant dense<0.000000e+00> : vector<1x96xf32>
    %428 = tpu.matmul %393, %355, %cst_298 {dimension_numbers = #tpu.dot_dimension_numbers<[1], [0], [0], [1], [0, 0, 1, 1], [], []>} : vector<1x32xf32>, vector<32x96xf32>, vector<1x96xf32> -> vector<1x96xf32>
    %429 = arith.addf %428, %356 : vector<1x96xf32>
    %430 = vector.extract_strided_slice %427 {offsets = [0, 0], sizes = [1, 32], strides = [1, 1]} : vector<1x96xf32> to vector<1x32xf32>
    %431 = vector.extract_strided_slice %429 {offsets = [0, 0], sizes = [1, 32], strides = [1, 1]} : vector<1x96xf32> to vector<1x32xf32>
    %432 = arith.addf %430, %431 : vector<1x32xf32>
    %cst_299 = arith.constant 0.000000e+00 : f32
    %433 = vector.broadcast %cst_299 : f32 to vector<1x32xf32>
    %434 = arith.subf %433, %432 : vector<1x32xf32>
    %435 = math.exp %434 : vector<1x32xf32>
    %cst_300 = arith.constant 1.000000e+00 : f32
    %436 = vector.broadcast %cst_300 : f32 to vector<1x32xf32>
    %437 = arith.addf %436, %435 : vector<1x32xf32>
    %cst_301 = arith.constant 1.000000e+00 : f32
    %438 = vector.broadcast %cst_301 : f32 to vector<1x32xf32>
    %439 = arith.divf %438, %437 : vector<1x32xf32>
    %440 = vector.extract_strided_slice %427 {offsets = [0, 32], sizes = [1, 32], strides = [1, 1]} : vector<1x96xf32> to vector<1x32xf32>
    %441 = vector.extract_strided_slice %429 {offsets = [0, 32], sizes = [1, 32], strides = [1, 1]} : vector<1x96xf32> to vector<1x32xf32>
    %442 = arith.addf %440, %441 : vector<1x32xf32>
    %cst_302 = arith.constant 0.000000e+00 : f32
    %443 = vector.broadcast %cst_302 : f32 to vector<1x32xf32>
    %444 = arith.subf %443, %442 : vector<1x32xf32>
    %445 = math.exp %444 : vector<1x32xf32>
    %cst_303 = arith.constant 1.000000e+00 : f32
    %446 = vector.broadcast %cst_303 : f32 to vector<1x32xf32>
    %447 = arith.addf %446, %445 : vector<1x32xf32>
    %cst_304 = arith.constant 1.000000e+00 : f32
    %448 = vector.broadcast %cst_304 : f32 to vector<1x32xf32>
    %449 = arith.divf %448, %447 : vector<1x32xf32>
    %450 = vector.extract_strided_slice %427 {offsets = [0, 64], sizes = [1, 32], strides = [1, 1]} : vector<1x96xf32> to vector<1x32xf32>
    %451 = vector.extract_strided_slice %429 {offsets = [0, 64], sizes = [1, 32], strides = [1, 1]} : vector<1x96xf32> to vector<1x32xf32>
    %452 = arith.mulf %439, %451 : vector<1x32xf32>
    %453 = arith.addf %450, %452 : vector<1x32xf32>
    %454 = math.tanh %453 : vector<1x32xf32>
    %cst_305 = arith.constant 1.000000e+00 : f32
    %455 = vector.broadcast %cst_305 : f32 to vector<1x32xf32>
    %456 = arith.subf %455, %449 : vector<1x32xf32>
    %457 = arith.mulf %456, %454 : vector<1x32xf32>
    %458 = arith.mulf %449, %393 : vector<1x32xf32>
    %459 = arith.addf %457, %458 : vector<1x32xf32>
    %460 = vector.extract_strided_slice %354 {offsets = [0, 0], sizes = [1, 96], strides = [1, 1]} : vector<2x96xf32> to vector<1x96xf32>
    %cst_306 = arith.constant dense<0.000000e+00> : vector<1x96xf32>
    %461 = tpu.matmul %426, %357, %cst_306 {dimension_numbers = #tpu.dot_dimension_numbers<[1], [0], [0], [1], [0, 0, 1, 1], [], []>} : vector<1x32xf32>, vector<32x96xf32>, vector<1x96xf32> -> vector<1x96xf32>
    %462 = arith.addf %461, %358 : vector<1x96xf32>
    %463 = vector.extract_strided_slice %460 {offsets = [0, 0], sizes = [1, 32], strides = [1, 1]} : vector<1x96xf32> to vector<1x32xf32>
    %464 = vector.extract_strided_slice %462 {offsets = [0, 0], sizes = [1, 32], strides = [1, 1]} : vector<1x96xf32> to vector<1x32xf32>
    %465 = arith.addf %463, %464 : vector<1x32xf32>
    %cst_307 = arith.constant 0.000000e+00 : f32
    %466 = vector.broadcast %cst_307 : f32 to vector<1x32xf32>
    %467 = arith.subf %466, %465 : vector<1x32xf32>
    %468 = math.exp %467 : vector<1x32xf32>
    %cst_308 = arith.constant 1.000000e+00 : f32
    %469 = vector.broadcast %cst_308 : f32 to vector<1x32xf32>
    %470 = arith.addf %469, %468 : vector<1x32xf32>
    %cst_309 = arith.constant 1.000000e+00 : f32
    %471 = vector.broadcast %cst_309 : f32 to vector<1x32xf32>
    %472 = arith.divf %471, %470 : vector<1x32xf32>
    %473 = vector.extract_strided_slice %460 {offsets = [0, 32], sizes = [1, 32], strides = [1, 1]} : vector<1x96xf32> to vector<1x32xf32>
    %474 = vector.extract_strided_slice %462 {offsets = [0, 32], sizes = [1, 32], strides = [1, 1]} : vector<1x96xf32> to vector<1x32xf32>
    %475 = arith.addf %473, %474 : vector<1x32xf32>
    %cst_310 = arith.constant 0.000000e+00 : f32
    %476 = vector.broadcast %cst_310 : f32 to vector<1x32xf32>
    %477 = arith.subf %476, %475 : vector<1x32xf32>
    %478 = math.exp %477 : vector<1x32xf32>
    %cst_311 = arith.constant 1.000000e+00 : f32
    %479 = vector.broadcast %cst_311 : f32 to vector<1x32xf32>
    %480 = arith.addf %479, %478 : vector<1x32xf32>
    %cst_312 = arith.constant 1.000000e+00 : f32
    %481 = vector.broadcast %cst_312 : f32 to vector<1x32xf32>
    %482 = arith.divf %481, %480 : vector<1x32xf32>
    %483 = vector.extract_strided_slice %460 {offsets = [0, 64], sizes = [1, 32], strides = [1, 1]} : vector<1x96xf32> to vector<1x32xf32>
    %484 = vector.extract_strided_slice %462 {offsets = [0, 64], sizes = [1, 32], strides = [1, 1]} : vector<1x96xf32> to vector<1x32xf32>
    %485 = arith.mulf %472, %484 : vector<1x32xf32>
    %486 = arith.addf %483, %485 : vector<1x32xf32>
    %487 = math.tanh %486 : vector<1x32xf32>
    %cst_313 = arith.constant 1.000000e+00 : f32
    %488 = vector.broadcast %cst_313 : f32 to vector<1x32xf32>
    %489 = arith.subf %488, %482 : vector<1x32xf32>
    %490 = arith.mulf %489, %487 : vector<1x32xf32>
    %491 = arith.mulf %482, %426 : vector<1x32xf32>
    %492 = arith.addf %490, %491 : vector<1x32xf32>
    %c0_314 = arith.constant 0 : index
    %c0_315 = arith.constant 0 : index
    %493 = vector.load %arg25[%c0_314, %c0_315] : memref<32x24xf32, #tpu.memory_space<vmem>>, vector<32x24xf32>
    %cst_316 = arith.constant dense<0.000000e+00> : vector<1x24xf32>
    %494 = tpu.matmul %459, %493, %cst_316 {dimension_numbers = #tpu.dot_dimension_numbers<[1], [0], [0], [1], [0, 0, 1, 1], [], []>} : vector<1x32xf32>, vector<32x24xf32>, vector<1x24xf32> -> vector<1x24xf32>
    %c0_317 = arith.constant 0 : index
    %c0_318 = arith.constant 0 : index
    %495 = vector.load %arg26[%c0_317, %c0_318] : memref<32x24xf32, #tpu.memory_space<vmem>>, vector<32x24xf32>
    %cst_319 = arith.constant dense<0.000000e+00> : vector<1x24xf32>
    %496 = tpu.matmul %492, %495, %cst_319 {dimension_numbers = #tpu.dot_dimension_numbers<[1], [0], [0], [1], [0, 0, 1, 1], [], []>} : vector<1x32xf32>, vector<32x24xf32>, vector<1x24xf32> -> vector<1x24xf32>
    %497 = arith.addf %494, %496 : vector<1x24xf32>
    %c0_320 = arith.constant 0 : index
    %c0_321 = arith.constant 0 : index
    %498 = vector.load %arg27[%c0_320, %c0_321] : memref<1x24xf32, #tpu.memory_space<vmem>>, vector<1x24xf32>
    %499 = arith.addf %497, %498 : vector<1x24xf32>
    %c0_322 = arith.constant 0 : index
    %c0_323 = arith.constant 0 : index
    %500 = vector.load %arg28[%c0_322, %c0_323] : memref<1x24xf32, #tpu.memory_space<vmem>>, vector<1x24xf32>
    tpu.vector_store %arg28[%c0_322, %c0_323], %499 {strides = array<i32>} : memref<1x24xf32, #tpu.memory_space<vmem>>, vector<1x24xf32>,
    return
  }
  func.func @transform_0(%arg0: i32) -> (i32, i32) {
    %c0_i32 = arith.constant 0 : i32
    %c0_i32_0 = arith.constant 0 : i32
    %c0_i32_1 = arith.constant 0 : i32
    return %c0_i32, %c0_i32_0 : i32, i32
  }
  func.func @transform_1(%arg0: i32) -> (i32, i32) {
    %c0_i32 = arith.constant 0 : i32
    %c0_i32_0 = arith.constant 0 : i32
    %c0_i32_1 = arith.constant 0 : i32
    return %c0_i32, %c0_i32_0 : i32, i32
  }
  func.func @transform_2(%arg0: i32) -> (i32, i32, i32) {
    %c0_i32 = arith.constant 0 : i32
    %c0_i32_0 = arith.constant 0 : i32
    %c0_i32_1 = arith.constant 0 : i32
    %c0_i32_2 = arith.constant 0 : i32
    return %c0_i32, %c0_i32_0, %c0_i32_1 : i32, i32, i32
  }
  func.func @transform_3(%arg0: i32) -> (i32, i32, i32) {
    %c0_i32 = arith.constant 0 : i32
    %c0_i32_0 = arith.constant 0 : i32
    %c0_i32_1 = arith.constant 0 : i32
    %c0_i32_2 = arith.constant 0 : i32
    return %c0_i32, %c0_i32_0, %c0_i32_1 : i32, i32, i32
  }
  func.func @transform_4(%arg0: i32) -> (i32, i32, i32) {
    %c0_i32 = arith.constant 0 : i32
    %c0_i32_0 = arith.constant 0 : i32
    %c0_i32_1 = arith.constant 0 : i32
    %c0_i32_2 = arith.constant 0 : i32
    return %c0_i32, %c0_i32_0, %c0_i32_1 : i32, i32, i32
  }
  func.func @transform_5(%arg0: i32) -> (i32, i32, i32) {
    %c0_i32 = arith.constant 0 : i32
    %c0_i32_0 = arith.constant 0 : i32
    %c0_i32_1 = arith.constant 0 : i32
    %c0_i32_2 = arith.constant 0 : i32
    return %c0_i32, %c0_i32_0, %c0_i32_1 : i32, i32, i32
  }
  func.func @transform_6(%arg0: i32) -> (i32, i32, i32) {
    %c0_i32 = arith.constant 0 : i32
    %c0_i32_0 = arith.constant 0 : i32
    %c0_i32_1 = arith.constant 0 : i32
    %c0_i32_2 = arith.constant 0 : i32
    return %c0_i32, %c0_i32_0, %c0_i32_1 : i32, i32, i32
  }
  func.func @transform_7(%arg0: i32) -> (i32, i32, i32) {
    %c0_i32 = arith.constant 0 : i32
    %c0_i32_0 = arith.constant 0 : i32
    %c0_i32_1 = arith.constant 0 : i32
    %c0_i32_2 = arith.constant 0 : i32
    return %c0_i32, %c0_i32_0, %c0_i32_1 : i32, i32, i32
  }
  func.func @transform_8(%arg0: i32) -> (i32, i32) {
    %c0_i32 = arith.constant 0 : i32
    %c0_i32_0 = arith.constant 0 : i32
    %c0_i32_1 = arith.constant 0 : i32
    return %c0_i32, %c0_i32_0 : i32, i32
  }
  func.func @transform_9(%arg0: i32) -> (i32, i32) {
    %c0_i32 = arith.constant 0 : i32
    %c0_i32_0 = arith.constant 0 : i32
    %c0_i32_1 = arith.constant 0 : i32
    return %c0_i32, %c0_i32_0 : i32, i32
  }
  func.func @transform_10(%arg0: i32) -> (i32, i32) {
    %c0_i32 = arith.constant 0 : i32
    %c0_i32_0 = arith.constant 0 : i32
    %c0_i32_1 = arith.constant 0 : i32
    return %c0_i32, %c0_i32_0 : i32, i32
  }
  func.func @transform_11(%arg0: i32) -> (i32, i32) {
    %c0_i32 = arith.constant 0 : i32
    %c0_i32_0 = arith.constant 0 : i32
    %c0_i32_1 = arith.constant 0 : i32
    return %c0_i32, %c0_i32_0 : i32, i32
  }
  func.func @transform_12(%arg0: i32) -> (i32, i32) {
    %c0_i32 = arith.constant 0 : i32
    %c0_i32_0 = arith.constant 0 : i32
    %c0_i32_1 = arith.constant 0 : i32
    return %c0_i32, %c0_i32_0 : i32, i32
  }
  func.func @transform_13(%arg0: i32) -> (i32, i32) {
    %c0_i32 = arith.constant 0 : i32
    %c0_i32_0 = arith.constant 0 : i32
    %c0_i32_1 = arith.constant 0 : i32
    return %c0_i32, %c0_i32_0 : i32, i32
  }
  func.func @transform_14(%arg0: i32) -> (i32, i32) {
    %c0_i32 = arith.constant 0 : i32
    %c0_i32_0 = arith.constant 0 : i32
    %c0_i32_1 = arith.constant 0 : i32
    return %c0_i32, %c0_i32_0 : i32, i32
  }
  func.func @transform_15(%arg0: i32) -> (i32, i32) {
    %c0_i32 = arith.constant 0 : i32
    %c0_i32_0 = arith.constant 0 : i32
    %c0_i32_1 = arith.constant 0 : i32
    return %c0_i32, %c0_i32_0 : i32, i32
  }
  func.func @transform_16(%arg0: i32) -> (i32, i32) {
    %c0_i32 = arith.constant 0 : i32
    %c0_i32_0 = arith.constant 0 : i32
    %c0_i32_1 = arith.constant 0 : i32
    return %c0_i32, %c0_i32_0 : i32, i32
  }
  func.func @transform_17(%arg0: i32) -> (i32, i32) {
    %c0_i32 = arith.constant 0 : i32
    %c0_i32_0 = arith.constant 0 : i32
    %c0_i32_1 = arith.constant 0 : i32
    return %c0_i32, %c0_i32_0 : i32, i32
  }
  func.func @transform_18(%arg0: i32) -> (i32, i32) {
    %c0_i32 = arith.constant 0 : i32
    %c0_i32_0 = arith.constant 0 : i32
    %c0_i32_1 = arith.constant 0 : i32
    return %c0_i32, %c0_i32_0 : i32, i32
  }
  func.func @transform_19(%arg0: i32) -> (i32, i32) {
    %c0_i32 = arith.constant 0 : i32
    %c0_i32_0 = arith.constant 0 : i32
    %c0_i32_1 = arith.constant 0 : i32
    return %c0_i32, %c0_i32_0 : i32, i32
  }
  func.func @transform_20(%arg0: i32) -> (i32, i32) {
    %c0_i32 = arith.constant 0 : i32
    %c0_i32_0 = arith.constant 0 : i32
    %c0_i32_1 = arith.constant 0 : i32
    return %c0_i32, %c0_i32_0 : i32, i32
  }
  func.func @transform_21(%arg0: i32) -> (i32, i32) {
    %c0_i32 = arith.constant 0 : i32
    %c0_i32_0 = arith.constant 0 : i32
    %c0_i32_1 = arith.constant 0 : i32
    return %c0_i32, %c0_i32_0 : i32, i32
  }
  func.func @transform_22(%arg0: i32) -> (i32, i32) {
    %c0_i32 = arith.constant 0 : i32
    %c0_i32_0 = arith.constant 0 : i32
    %c0_i32_1 = arith.constant 0 : i32
    return %c0_i32, %c0_i32_0 : i32, i32
  }
  func.func @transform_23(%arg0: i32) -> (i32, i32) {
    %c0_i32 = arith.constant 0 : i32
    %c0_i32_0 = arith.constant 0 : i32
    %c0_i32_1 = arith.constant 0 : i32
    return %c0_i32, %c0_i32_0 : i32, i32
  }
  func.func @transform_24(%arg0: i32) -> (i32, i32) {
    %c0_i32 = arith.constant 0 : i32
    %c0_i32_0 = arith.constant 0 : i32
    %c0_i32_1 = arith.constant 0 : i32
    return %c0_i32, %c0_i32_0 : i32, i32
  }
  func.func @transform_25(%arg0: i32) -> (i32, i32) {
    %c0_i32 = arith.constant 0 : i32
    %c0_i32_0 = arith.constant 0 : i32
    %c0_i32_1 = arith.constant 0 : i32
    return %c0_i32, %c0_i32_0 : i32, i32
  }
  func.func @transform_26(%arg0: i32) -> (i32, i32) {
    %c0_i32 = arith.constant 0 : i32
    %c0_i32_0 = arith.constant 0 : i32
    %c0_i32_1 = arith.constant 0 : i32
    return %c0_i32, %c0_i32_0 : i32, i32
  }
  func.func @transform_27(%arg0: i32) -> (i32, i32) {
    %c0_i32 = arith.constant 0 : i32
    %c0_i32_0 = arith.constant 0 : i32
    %c0_i32_1 = arith.constant 0 : i32
    return %c0_i32, %c0_i32_0 : i32, i32
  }
}

</mosaic_0001>

<llo_original>
// kernel: forward.1
$region0: #{forward.1}
  #allocation0 [shape = 'u32[]', space=smem, size = 0x4, offset = 0x4, fixed_abs, tag = 'smem constant byte address 0x4 - core index']
  #allocation1 [shape = 'u32[144,128]{1,0:T(1,128)}', space=vmem, size = 0x12000, scoped, tag = 'internal scratch']
  %s0 = inlined_call_operand.vmem [shape: f32[392,9], index: 0, kind: input, shape index: {}]
  %s1 = inlined_call_operand.vmem [shape: f32[9,4], index: 1, kind: input, shape index: {}]
  %s2 = inlined_call_operand.vmem [shape: bf16[9,98,392], index: 2, kind: input, shape index: {}]
  %s3 = inlined_call_operand.vmem [shape: f32[9,4,8], index: 3, kind: input, shape index: {}]
  %s4 = inlined_call_operand.vmem [shape: bf16[9,32,98], index: 4, kind: input, shape index: {}]
  %s5 = inlined_call_operand.vmem [shape: f32[9,8,16], index: 5, kind: input, shape index: {}]
  %s6 = inlined_call_operand.vmem [shape: bf16[9,8,32], index: 6, kind: input, shape index: {}]
  %s7 = inlined_call_operand.vmem [shape: f32[9,16,32], index: 7, kind: input, shape index: {}]
  %s8 = inlined_call_operand.vmem [shape: f32[1,4], index: 8, kind: input, shape index: {}]
  %s9 = inlined_call_operand.vmem [shape: f32[1,4], index: 9, kind: input, shape index: {}]
  %s10 = inlined_call_operand.vmem [shape: f32[1,8], index: 10, kind: input, shape index: {}]
  %s11 = inlined_call_operand.vmem [shape: f32[1,8], index: 11, kind: input, shape index: {}]
  %s12 = inlined_call_operand.vmem [shape: f32[1,16], index: 12, kind: input, shape index: {}]
  %s13 = inlined_call_operand.vmem [shape: f32[1,16], index: 13, kind: input, shape index: {}]
  %s14 = inlined_call_operand.vmem [shape: f32[1,32], index: 14, kind: input, shape index: {}]
  %s15 = inlined_call_operand.vmem [shape: f32[1,32], index: 15, kind: input, shape index: {}]
  %s16 = inlined_call_operand.vmem [shape: f32[32,96], index: 16, kind: input, shape index: {}]
  %s17 = inlined_call_operand.vmem [shape: f32[1,96], index: 17, kind: input, shape index: {}]
  %s18 = inlined_call_operand.vmem [shape: f32[32,96], index: 18, kind: input, shape index: {}]
  %s19 = inlined_call_operand.vmem [shape: f32[1,96], index: 19, kind: input, shape index: {}]
  %s20 = inlined_call_operand.vmem [shape: f32[32,96], index: 20, kind: input, shape index: {}]
  %s21 = inlined_call_operand.vmem [shape: f32[1,96], index: 21, kind: input, shape index: {}]
  %s22 = inlined_call_operand.vmem [shape: f32[32,96], index: 22, kind: input, shape index: {}]
  %s23 = inlined_call_operand.vmem [shape: f32[1,96], index: 23, kind: input, shape index: {}]
  %s24 = inlined_call_operand.vmem [shape: f32[32,24], index: 24, kind: input, shape index: {}]
  %s25 = inlined_call_operand.vmem [shape: f32[32,24], index: 25, kind: input, shape index: {}]
  %s26 = inlined_call_operand.vmem [shape: f32[1,24], index: 26, kind: input, shape index: {}]
  %s27 = inlined_call_operand.vmem [shape: f32[1,24], index: 27, kind: output, shape index: {}]
  %s28 = sld [smem:[#allocation0]]
  $region118: #{forward.1} parent=0
    _
  %s30 = ssub.s32 1, %s28
  %s31 = scalar_select 0, %s30, %s28
  // Predicated region
  $region2: #{forward.1} parent=0 // pred_check
    _
  $region3: #{forward.1} parent=0 // pred_check_branch
    %33 = sbr.rel (0) target = $region5
  $region4: #{forward.1} parent=0 // pred_region
    _
  $region5: #{forward.1} parent=0 // pred_fallthru
    _
  // Predicated region
  $region6: #{forward.1} parent=0 // pred_check
    _
  $region7: #{forward.1} parent=0 // pred_check_branch
    %35 = sbr.rel (0) target = $region9
  $region8: #{forward.1} parent=0 // pred_region
    _
  $region9: #{forward.1} parent=0 // pred_fallthru
    _
  // Predicated region
  $region10: #{forward.1} parent=0 // pred_check
    _
  $region11: #{forward.1} parent=0 // pred_check_branch
    %37 = sbr.rel (0) target = $region13
  $region12: #{forward.1} parent=0 // pred_region
    _
  $region13: #{forward.1} parent=0 // pred_fallthru
    _
  // Predicated region
  $region14: #{forward.1} parent=0 // pred_check
    _
  $region15: #{forward.1} parent=0 // pred_check_branch
    %39 = sbr.rel (0) target = $region17
  $region16: #{forward.1} parent=0 // pred_region
    _
  $region17: #{forward.1} parent=0 // pred_fallthru
    _
  // Predicated region
  $region18: #{forward.1} parent=0 // pred_check
    _
  $region19: #{forward.1} parent=0 // pred_check_branch
    %41 = sbr.rel (0) target = $region21
  $region20: #{forward.1} parent=0 // pred_region
    _
  $region21: #{forward.1} parent=0 // pred_fallthru
    _
  // Predicated region
  $region22: #{forward.1} parent=0 // pred_check
    _
  $region23: #{forward.1} parent=0 // pred_check_branch
    %43 = sbr.rel (0) target = $region25
  $region24: #{forward.1} parent=0 // pred_region
    _
  $region25: #{forward.1} parent=0 // pred_fallthru
    _
  // Predicated region
  $region26: #{forward.1} parent=0 // pred_check
    _
  $region27: #{forward.1} parent=0 // pred_check_branch
    %45 = sbr.rel (0) target = $region29
  $region28: #{forward.1} parent=0 // pred_region
    _
  $region29: #{forward.1} parent=0 // pred_fallthru
    _
  // Predicated region
  $region30: #{forward.1} parent=0 // pred_check
    _
  $region31: #{forward.1} parent=0 // pred_check_branch
    %47 = sbr.rel (0) target = $region33
  $region32: #{forward.1} parent=0 // pred_region
    _
  $region33: #{forward.1} parent=0 // pred_fallthru
    _
  // Predicated region
  $region34: #{forward.1} parent=0 // pred_check
    _
  $region35: #{forward.1} parent=0 // pred_check_branch
    %49 = sbr.rel (0) target = $region37
  $region36: #{forward.1} parent=0 // pred_region
    _
  $region37: #{forward.1} parent=0 // pred_fallthru
    _
  // Predicated region
  $region38: #{forward.1} parent=0 // pred_check
    _
  $region39: #{forward.1} parent=0 // pred_check_branch
    %51 = sbr.rel (0) target = $region41
  $region40: #{forward.1} parent=0 // pred_region
    _
  $region41: #{forward.1} parent=0 // pred_fallthru
    _
  // Predicated region
  $region42: #{forward.1} parent=0 // pred_check
    _
  $region43: #{forward.1} parent=0 // pred_check_branch
    %53 = sbr.rel (0) target = $region45
  $region44: #{forward.1} parent=0 // pred_region
    _
  $region45: #{forward.1} parent=0 // pred_fallthru
    _
  // Predicated region
  $region46: #{forward.1} parent=0 // pred_check
    _
  $region47: #{forward.1} parent=0 // pred_check_branch
    %55 = sbr.rel (0) target = $region49
  $region48: #{forward.1} parent=0 // pred_region
    _
  $region49: #{forward.1} parent=0 // pred_fallthru
    _
  // Predicated region
  $region50: #{forward.1} parent=0 // pred_check
    _
  $region51: #{forward.1} parent=0 // pred_check_branch
    %57 = sbr.rel (0) target = $region53
  $region52: #{forward.1} parent=0 // pred_region
    _
  $region53: #{forward.1} parent=0 // pred_fallthru
    _
  // Predicated region
  $region54: #{forward.1} parent=0 // pred_check
    _
  $region55: #{forward.1} parent=0 // pred_check_branch
    %59 = sbr.rel (0) target = $region57
  $region56: #{forward.1} parent=0 // pred_region
    _
  $region57: #{forward.1} parent=0 // pred_fallthru
    _
  // Predicated region
  $region58: #{forward.1} parent=0 // pred_check
    _
  $region59: #{forward.1} parent=0 // pred_check_branch
    %61 = sbr.rel (0) target = $region61
  $region60: #{forward.1} parent=0 // pred_region
    _
  $region61: #{forward.1} parent=0 // pred_fallthru
    _
  // Predicated region
  $region62: #{forward.1} parent=0 // pred_check
    _
  $region63: #{forward.1} parent=0 // pred_check_branch
    %63 = sbr.rel (0) target = $region65
  $region64: #{forward.1} parent=0 // pred_region
    _
  $region65: #{forward.1} parent=0 // pred_fallthru
    _
  // Predicated region
  $region66: #{forward.1} parent=0 // pred_check
    _
  $region67: #{forward.1} parent=0 // pred_check_branch
    %65 = sbr.rel (0) target = $region69
  $region68: #{forward.1} parent=0 // pred_region
    _
  $region69: #{forward.1} parent=0 // pred_fallthru
    _
  // Predicated region
  $region70: #{forward.1} parent=0 // pred_check
    _
  $region71: #{forward.1} parent=0 // pred_check_branch
    %67 = sbr.rel (0) target = $region73
  $region72: #{forward.1} parent=0 // pred_region
    _
  $region73: #{forward.1} parent=0 // pred_fallthru
    _
  // Predicated region
  $region74: #{forward.1} parent=0 // pred_check
    _
  $region75: #{forward.1} parent=0 // pred_check_branch
    %69 = sbr.rel (0) target = $region77
  $region76: #{forward.1} parent=0 // pred_region
    _
  $region77: #{forward.1} parent=0 // pred_fallthru
    _
  // Predicated region
  $region78: #{forward.1} parent=0 // pred_check
    _
  $region79: #{forward.1} parent=0 // pred_check_branch
    %71 = sbr.rel (0) target = $region81
  $region80: #{forward.1} parent=0 // pred_region
    _
  $region81: #{forward.1} parent=0 // pred_fallthru
    _
  // Predicated region
  $region82: #{forward.1} parent=0 // pred_check
    _
  $region83: #{forward.1} parent=0 // pred_check_branch
    %73 = sbr.rel (0) target = $region85
  $region84: #{forward.1} parent=0 // pred_region
    _
  $region85: #{forward.1} parent=0 // pred_fallthru
    _
  // Predicated region
  $region86: #{forward.1} parent=0 // pred_check
    _
  $region87: #{forward.1} parent=0 // pred_check_branch
    %75 = sbr.rel (0) target = $region89
  $region88: #{forward.1} parent=0 // pred_region
    _
  $region89: #{forward.1} parent=0 // pred_fallthru
    _
  // Predicated region
  $region90: #{forward.1} parent=0 // pred_check
    _
  $region91: #{forward.1} parent=0 // pred_check_branch
    %77 = sbr.rel (0) target = $region93
  $region92: #{forward.1} parent=0 // pred_region
    _
  $region93: #{forward.1} parent=0 // pred_fallthru
    _
  // Predicated region
  $region94: #{forward.1} parent=0 // pred_check
    _
  $region95: #{forward.1} parent=0 // pred_check_branch
    %79 = sbr.rel (0) target = $region97
  $region96: #{forward.1} parent=0 // pred_region
    _
  $region97: #{forward.1} parent=0 // pred_fallthru
    _
  // Predicated region
  $region98: #{forward.1} parent=0 // pred_check
    _
  $region99: #{forward.1} parent=0 // pred_check_branch
    %81 = sbr.rel (0) target = $region101
  $region100: #{forward.1} parent=0 // pred_region
    _
  $region101: #{forward.1} parent=0 // pred_fallthru
    _
  // Predicated region
  $region102: #{forward.1} parent=0 // pred_check
    _
  $region103: #{forward.1} parent=0 // pred_check_branch
    %83 = sbr.rel (0) target = $region105
  $region104: #{forward.1} parent=0 // pred_region
    _
  $region105: #{forward.1} parent=0 // pred_fallthru
    _
  // Predicated region
  $region106: #{forward.1} parent=0 // pred_check
    _
  $region107: #{forward.1} parent=0 // pred_check_branch
    %85 = sbr.rel (0) target = $region109
  $region108: #{forward.1} parent=0 // pred_region
    _
  $region109: #{forward.1} parent=0 // pred_fallthru
    _
  %v86 = vld [vmem:[%s0] sm:$0xff]
  %v87 = vld [vmem:[%s0 + $0x8] sm:$0xff]
  %v88 = vld [vmem:[%s0 + $0x10] sm:$0xff]
  %v89 = vld [vmem:[%s0 + $0x18] sm:$0xff]
  %v90 = vld [vmem:[%s0 + $0x20] sm:$0xff]
  %v91 = vld [vmem:[%s0 + $0x28] sm:$0xff]
  %v92 = vld [vmem:[%s0 + $0x30] sm:$0xff]
  %v93 = vld [vmem:[%s0 + $0x38] sm:$0xff]
  %v94 = vld [vmem:[%s0 + $0x40] sm:$0xff]
  %v95 = vld [vmem:[%s0 + $0x48] sm:$0xff]
  %v96 = vld [vmem:[%s0 + $0x50] sm:$0xff]
  %v97 = vld [vmem:[%s0 + $0x58] sm:$0xff]
  %v98 = vld [vmem:[%s0 + $0x60] sm:$0xff]
  %v99 = vld [vmem:[%s0 + $0x68] sm:$0xff]
  %v100 = vld [vmem:[%s0 + $0x70] sm:$0xff]
  %v101 = vld [vmem:[%s0 + $0x78] sm:$0xff]
  %v102 = vld [vmem:[%s0 + $0x80] sm:$0xff]
  %v103 = vld [vmem:[%s0 + $0x88] sm:$0xff]
  %v104 = vld [vmem:[%s0 + $0x90] sm:$0xff]
  %v105 = vld [vmem:[%s0 + $0x98] sm:$0xff]
  %v106 = vld [vmem:[%s0 + $0xa0] sm:$0xff]
  %v107 = vld [vmem:[%s0 + $0xa8] sm:$0xff]
  %v108 = vld [vmem:[%s0 + $0xb0] sm:$0xff]
  %v109 = vld [vmem:[%s0 + $0xb8] sm:$0xff]
  %v110 = vld [vmem:[%s0 + $0xc0] sm:$0xff]
  %v111 = vld [vmem:[%s0 + $0xc8] sm:$0xff]
  %v112 = vld [vmem:[%s0 + $0xd0] sm:$0xff]
  %v113 = vld [vmem:[%s0 + $0xd8] sm:$0xff]
  %v114 = vld [vmem:[%s0 + $0xe0] sm:$0xff]
  %v115 = vld [vmem:[%s0 + $0xe8] sm:$0xff]
  %v116 = vld [vmem:[%s0 + $0xf0] sm:$0xff]
  %v117 = vld [vmem:[%s0 + $0xf8] sm:$0xff]
  %v118 = vld [vmem:[%s0 + $0x100] sm:$0xff]
  %v119 = vld [vmem:[%s0 + $0x108] sm:$0xff]
  %v120 = vld [vmem:[%s0 + $0x110] sm:$0xff]
  %v121 = vld [vmem:[%s0 + $0x118] sm:$0xff]
  %v122 = vld [vmem:[%s0 + $0x120] sm:$0xff]
  %v123 = vld [vmem:[%s0 + $0x128] sm:$0xff]
  %v124 = vld [vmem:[%s0 + $0x130] sm:$0xff]
  %v125 = vld [vmem:[%s0 + $0x138] sm:$0xff]
  %v126 = vld [vmem:[%s0 + $0x140] sm:$0xff]
  %v127 = vld [vmem:[%s0 + $0x148] sm:$0xff]
  %v128 = vld [vmem:[%s0 + $0x150] sm:$0xff]
  %v129 = vld [vmem:[%s0 + $0x158] sm:$0xff]
  %v130 = vld [vmem:[%s0 + $0x160] sm:$0xff]
  %v131 = vld [vmem:[%s0 + $0x168] sm:$0xff]
  %v132 = vld [vmem:[%s0 + $0x170] sm:$0xff]
  %v133 = vld [vmem:[%s0 + $0x178] sm:$0xff]
  %v134 = vld [vmem:[%s0 + $0x180] sm:$0xff]
  %v135 = vld [vmem:[%s1] sm:$0xff]
  %v136 = vld [vmem:[%s1 + $0x8] sm:$0x1]
  %vm137 = vcmask 72704
  %v139 = vsel %vm137, %v86, 0
  %v142 = vsel %vm137, %v87, 0
  %v145 = vsel %vm137, %v88, 0
  %v148 = vsel %vm137, %v89, 0
  %v151 = vsel %vm137, %v90, 0
  %v154 = vsel %vm137, %v91, 0
  %v157 = vsel %vm137, %v92, 0
  %v160 = vsel %vm137, %v93, 0
  %v163 = vsel %vm137, %v94, 0
  %v166 = vsel %vm137, %v95, 0
  %v169 = vsel %vm137, %v96, 0
  %v172 = vsel %vm137, %v97, 0
  %v175 = vsel %vm137, %v98, 0
  %v178 = vsel %vm137, %v99, 0
  %v181 = vsel %vm137, %v100, 0
  %v184 = vsel %vm137, %v101, 0
  %v187 = vsel %vm137, %v102, 0
  %v190 = vsel %vm137, %v103, 0
  %v193 = vsel %vm137, %v104, 0
  %v196 = vsel %vm137, %v105, 0
  %v199 = vsel %vm137, %v106, 0
  %v202 = vsel %vm137, %v107, 0
  %v205 = vsel %vm137, %v108, 0
  %v208 = vsel %vm137, %v109, 0
  %v211 = vsel %vm137, %v110, 0
  %v214 = vsel %vm137, %v111, 0
  %v217 = vsel %vm137, %v112, 0
  %v220 = vsel %vm137, %v113, 0
  %v223 = vsel %vm137, %v114, 0
  %v226 = vsel %vm137, %v115, 0
  %v229 = vsel %vm137, %v116, 0
  %v232 = vsel %vm137, %v117, 0
  %v235 = vsel %vm137, %v118, 0
  %v238 = vsel %vm137, %v119, 0
  %v241 = vsel %vm137, %v120, 0
  %v244 = vsel %vm137, %v121, 0
  %v247 = vsel %vm137, %v122, 0
  %v250 = vsel %vm137, %v123, 0
  %v253 = vsel %vm137, %v124, 0
  %v256 = vsel %vm137, %v125, 0
  %v259 = vsel %vm137, %v126, 0
  %v262 = vsel %vm137, %v127, 0
  %v265 = vsel %vm137, %v128, 0
  %v268 = vsel %vm137, %v129, 0
  %v271 = vsel %vm137, %v130, 0
  %v274 = vsel %vm137, %v131, 0
  %v277 = vsel %vm137, %v132, 0
  %v280 = vsel %vm137, %v133, 0
  %v283 = vsel %vm137, %v134, 0
  %vm285 = vcmask 1040384
  %v287 = vsel %vm285, %v136, 0
  %289 = vmatprep.subr.mxu0 0.0
  %290 = vmatpush1.msra.mxu0 %v135
  %291 = vmatprep.subr.mxu0 0.0
  %292 = vmatpush1.msra.mxu0 %v287
  %293 = vmatprep.subr.mxu0 0.0
  %294 = vmatpush1.msra.mxu0 0.0
  %295 = vmatprep.subr.mxu0 0.0
  %296 = vmatpush1.msra.mxu0 0.0
  %297 = vmatprep.subr.mxu0 0.0
  %298 = vmatpush1.msra.mxu0 0.0
  %299 = vmatprep.subr.mxu0 0.0
  %300 = vmatpush1.msra.mxu0 0.0
  %301 = vmatprep.subr.mxu0 0.0
  %302 = vmatpush1.msra.mxu0 0.0
  %303 = vmatprep.subr.mxu0 0.0
  %304 = vmatpush1.msra.mxu0 0.0
  %305 = vmatprep.subr.mxu0 0.0
  %306 = vmatpush1.msra.mxu0 0.0
  %307 = vmatprep.subr.mxu0 0.0
  %308 = vmatpush1.msra.mxu0 0.0
  %309 = vmatprep.subr.mxu0 0.0
  %310 = vmatpush1.msra.mxu0 0.0
  %311 = vmatprep.subr.mxu0 0.0
  %312 = vmatpush1.msra.mxu0 0.0
  %313 = vmatprep.subr.mxu0 0.0
  %314 = vmatpush1.msra.mxu0 0.0
  %315 = vmatprep.subr.mxu0 0.0
  %316 = vmatpush1.msra.mxu0 0.0
  %317 = vmatprep.subr.mxu0 0.0
  %318 = vmatpush1.msra.mxu0 0.0
  %319 = vmatprep.subr.mxu0 0.0
  %320 = vmatpush1.msra.mxu0 0.0
  %321 = vmatprep.subr.mxu0 0.0
  %322 = vmatpush1.msra.mxu0 0.0
  %323 = vmatprep.subr.mxu0 0.0
  %324 = vmatpush1.msra.mxu0 0.0
  %325 = vmatprep.subr.mxu0 0.0
  %326 = vmatpush1.msra.mxu0 0.0
  %327 = vmatprep.subr.mxu0 0.0
  %328 = vmatpush1.msra.mxu0 0.0
  %329 = vmatprep.subr.mxu0 0.0
  %330 = vmatpush1.msra.mxu0 0.0
  %331 = vmatprep.subr.mxu0 0.0
  %332 = vmatpush1.msra.mxu0 0.0
  %333 = vmatprep.subr.mxu0 0.0
  %334 = vmatpush1.msra.mxu0 0.0
  %335 = vmatprep.subr.mxu0 0.0
  %336 = vmatpush1.msra.mxu0 0.0
  %337 = vmatprep.subr.mxu0 0.0
  %338 = vmatpush1.msra.mxu0 0.0
  %339 = vmatprep.subr.mxu0 0.0
  %340 = vmatpush1.msra.mxu0 0.0
  %341 = vmatprep.subr.mxu0 0.0
  %342 = vmatpush1.msra.mxu0 0.0
  %343 = vmatprep.subr.mxu0 0.0
  %344 = vmatpush1.msra.mxu0 0.0
  %345 = vmatprep.subr.mxu0 0.0
  %346 = vmatpush1.msra.mxu0 0.0
  %347 = vmatprep.subr.mxu0 0.0
  %348 = vmatpush1.msra.mxu0 0.0
  %349 = vmatprep.subr.mxu0 0.0
  %350 = vmatpush1.msra.mxu0 0.0
  %351 = vmatprep.subr.mxu0 0.0
  %352 = vmatpush1.msra.mxu0 0.0
  %353 = vmatprep.mubr.f32.mxu0 0.0
  %354 = vmatmul.mubr.f32.gmra.mrb[0].mxu0 %v139
  %v355 = vpop.f32.mrb[0].mxu0
  %v356 = vadd.f32 0.0, %v355
  %v357 = vpop.f32.mrb[0].mxu0
  %358 = vmatprep.mubr.f32.mxu0 0.0
  %359 = vmatmul.mubr.f32.gmra.mrb[0].mxu0 %v142
  %v360 = vpop.f32.mrb[0].mxu0
  %v361 = vadd.f32 0.0, %v360
  %v362 = vpop.f32.mrb[0].mxu0
  %363 = vmatprep.mubr.f32.mxu0 0.0
  %364 = vmatmul.mubr.f32.gmra.mrb[0].mxu0 %v145
  %v365 = vpop.f32.mrb[0].mxu0
  %v366 = vadd.f32 0.0, %v365
  %v367 = vpop.f32.mrb[0].mxu0
  %368 = vmatprep.mubr.f32.mxu0 0.0
  %369 = vmatmul.mubr.f32.gmra.mrb[0].mxu0 %v148
  %v370 = vpop.f32.mrb[0].mxu0
  %v371 = vadd.f32 0.0, %v370
  %v372 = vpop.f32.mrb[0].mxu0
  %373 = vmatprep.mubr.f32.mxu0 0.0
  %374 = vmatmul.mubr.f32.gmra.mrb[0].mxu0 %v151
  %v375 = vpop.f32.mrb[0].mxu0
  %v376 = vadd.f32 0.0, %v375
  %v377 = vpop.f32.mrb[0].mxu0
  %378 = vmatprep.mubr.f32.mxu0 0.0
  %379 = vmatmul.mubr.f32.gmra.mrb[0].mxu0 %v154
  %v380 = vpop.f32.mrb[0].mxu0
  %v381 = vadd.f32 0.0, %v380
  %v382 = vpop.f32.mrb[0].mxu0
  %383 = vmatprep.mubr.f32.mxu0 0.0
  %384 = vmatmul.mubr.f32.gmra.mrb[0].mxu0 %v157
  %v385 = vpop.f32.mrb[0].mxu0
  %v386 = vadd.f32 0.0, %v385
  %v387 = vpop.f32.mrb[0].mxu0
  %388 = vmatprep.mubr.f32.mxu0 0.0
  %389 = vmatmul.mubr.f32.gmra.mrb[0].mxu0 %v160
  %v390 = vpop.f32.mrb[0].mxu0
  %v391 = vadd.f32 0.0, %v390
  %v392 = vpop.f32.mrb[0].mxu0
  %393 = vmatprep.mubr.f32.mxu0 0.0
  %394 = vmatmul.mubr.f32.gmra.mrb[0].mxu0 %v163
  %v395 = vpop.f32.mrb[0].mxu0
  %v396 = vadd.f32 0.0, %v395
  %v397 = vpop.f32.mrb[0].mxu0
  %398 = vmatprep.mubr.f32.mxu0 0.0
  %399 = vmatmul.mubr.f32.gmra.mrb[0].mxu0 %v166
  %v400 = vpop.f32.mrb[0].mxu0
  %v401 = vadd.f32 0.0, %v400
  %v402 = vpop.f32.mrb[0].mxu0
  %403 = vmatprep.mubr.f32.mxu0 0.0
  %404 = vmatmul.mubr.f32.gmra.mrb[0].mxu0 %v169
  %v405 = vpop.f32.mrb[0].mxu0
  %v406 = vadd.f32 0.0, %v405
  %v407 = vpop.f32.mrb[0].mxu0
  %408 = vmatprep.mubr.f32.mxu0 0.0
  %409 = vmatmul.mubr.f32.gmra.mrb[0].mxu0 %v172
  %v410 = vpop.f32.mrb[0].mxu0
  %v411 = vadd.f32 0.0, %v410
  %v412 = vpop.f32.mrb[0].mxu0
  %413 = vmatprep.mubr.f32.mxu0 0.0
  %414 = vmatmul.mubr.f32.gmra.mrb[0].mxu0 %v175
  %v415 = vpop.f32.mrb[0].mxu0
  %v416 = vadd.f32 0.0, %v415
  %v417 = vpop.f32.mrb[0].mxu0
  %418 = vmatprep.mubr.f32.mxu0 0.0
  %419 = vmatmul.mubr.f32.gmra.mrb[0].mxu0 %v178
  %v420 = vpop.f32.mrb[0].mxu0
  %v421 = vadd.f32 0.0, %v420
  %v422 = vpop.f32.mrb[0].mxu0
  %423 = vmatprep.mubr.f32.mxu0 0.0
  %424 = vmatmul.mubr.f32.gmra.mrb[0].mxu0 %v181
  %v425 = vpop.f32.mrb[0].mxu0
  %v426 = vadd.f32 0.0, %v425
  %v427 = vpop.f32.mrb[0].mxu0
  %428 = vmatprep.mubr.f32.mxu0 0.0
  %429 = vmatmul.mubr.f32.gmra.mrb[0].mxu0 %v184
  %v430 = vpop.f32.mrb[0].mxu0
  %v431 = vadd.f32 0.0, %v430
  %v432 = vpop.f32.mrb[0].mxu0
  %433 = vmatprep.mubr.f32.mxu0 0.0
  %434 = vmatmul.mubr.f32.gmra.mrb[0].mxu0 %v187
  %v435 = vpop.f32.mrb[0].mxu0
  %v436 = vadd.f32 0.0, %v435
  %v437 = vpop.f32.mrb[0].mxu0
  %438 = vmatprep.mubr.f32.mxu0 0.0
  %439 = vmatmul.mubr.f32.gmra.mrb[0].mxu0 %v190
  %v440 = vpop.f32.mrb[0].mxu0
  %v441 = vadd.f32 0.0, %v440
  %v442 = vpop.f32.mrb[0].mxu0
  %443 = vmatprep.mubr.f32.mxu0 0.0
  %444 = vmatmul.mubr.f32.gmra.mrb[0].mxu0 %v193
  %v445 = vpop.f32.mrb[0].mxu0
  %v446 = vadd.f32 0.0, %v445
  %v447 = vpop.f32.mrb[0].mxu0
  %448 = vmatprep.mubr.f32.mxu0 0.0
  %449 = vmatmul.mubr.f32.gmra.mrb[0].mxu0 %v196
  %v450 = vpop.f32.mrb[0].mxu0
  %v451 = vadd.f32 0.0, %v450
  %v452 = vpop.f32.mrb[0].mxu0
  %453 = vmatprep.mubr.f32.mxu0 0.0
  %454 = vmatmul.mubr.f32.gmra.mrb[0].mxu0 %v199
  %v455 = vpop.f32.mrb[0].mxu0
  %v456 = vadd.f32 0.0, %v455
  %v457 = vpop.f32.mrb[0].mxu0
  %458 = vmatprep.mubr.f32.mxu0 0.0
  %459 = vmatmul.mubr.f32.gmra.mrb[0].mxu0 %v202
  %v460 = vpop.f32.mrb[0].mxu0
  %v461 = vadd.f32 0.0, %v460
  %v462 = vpop.f32.mrb[0].mxu0
  %463 = vmatprep.mubr.f32.mxu0 0.0
  %464 = vmatmul.mubr.f32.gmra.mrb[0].mxu0 %v205
  %v465 = vpop.f32.mrb[0].mxu0
  %v466 = vadd.f32 0.0, %v465
  %v467 = vpop.f32.mrb[0].mxu0
  %468 = vmatprep.mubr.f32.mxu0 0.0
  %469 = vmatmul.mubr.f32.gmra.mrb[0].mxu0 %v208
  %v470 = vpop.f32.mrb[0].mxu0
  %v471 = vadd.f32 0.0, %v470
  %v472 = vpop.f32.mrb[0].mxu0
  %473 = vmatprep.mubr.f32.mxu0 0.0
  %474 = vmatmul.mubr.f32.gmra.mrb[0].mxu0 %v211
  %v475 = vpop.f32.mrb[0].mxu0
  %v476 = vadd.f32 0.0, %v475
  %v477 = vpop.f32.mrb[0].mxu0
  %478 = vmatprep.mubr.f32.mxu0 0.0
  %479 = vmatmul.mubr.f32.gmra.mrb[0].mxu0 %v214
  %v480 = vpop.f32.mrb[0].mxu0
  %v481 = vadd.f32 0.0, %v480
  %v482 = vpop.f32.mrb[0].mxu0
  %483 = vmatprep.mubr.f32.mxu0 0.0
  %484 = vmatmul.mubr.f32.gmra.mrb[0].mxu0 %v217
  %v485 = vpop.f32.mrb[0].mxu0
  %v486 = vadd.f32 0.0, %v485
  %v487 = vpop.f32.mrb[0].mxu0
  %488 = vmatprep.mubr.f32.mxu0 0.0
  %489 = vmatmul.mubr.f32.gmra.mrb[0].mxu0 %v220
  %v490 = vpop.f32.mrb[0].mxu0
  %v491 = vadd.f32 0.0, %v490
  %v492 = vpop.f32.mrb[0].mxu0
  %493 = vmatprep.mubr.f32.mxu0 0.0
  %494 = vmatmul.mubr.f32.gmra.mrb[0].mxu0 %v223
  %v495 = vpop.f32.mrb[0].mxu0
  %v496 = vadd.f32 0.0, %v495
  %v497 = vpop.f32.mrb[0].mxu0
  %498 = vmatprep.mubr.f32.mxu0 0.0
  %499 = vmatmul.mubr.f32.gmra.mrb[0].mxu0 %v226
  %v500 = vpop.f32.mrb[0].mxu0
  %v501 = vadd.f32 0.0, %v500
  %v502 = vpop.f32.mrb[0].mxu0
  %503 = vmatprep.mubr.f32.mxu0 0.0
  %504 = vmatmul.mubr.f32.gmra.mrb[0].mxu0 %v229
  %v505 = vpop.f32.mrb[0].mxu0
  %v506 = vadd.f32 0.0, %v505
  %v507 = vpop.f32.mrb[0].mxu0
  %508 = vmatprep.mubr.f32.mxu0 0.0
  %509 = vmatmul.mubr.f32.gmra.mrb[0].mxu0 %v232
  %v510 = vpop.f32.mrb[0].mxu0
  %v511 = vadd.f32 0.0, %v510
  %v512 = vpop.f32.mrb[0].mxu0
  %513 = vmatprep.mubr.f32.mxu0 0.0
  %514 = vmatmul.mubr.f32.gmra.mrb[0].mxu0 %v235
  %v515 = vpop.f32.mrb[0].mxu0
  %v516 = vadd.f32 0.0, %v515
  %v517 = vpop.f32.mrb[0].mxu0
  %518 = vmatprep.mubr.f32.mxu0 0.0
  %519 = vmatmul.mubr.f32.gmra.mrb[0].mxu0 %v238
  %v520 = vpop.f32.mrb[0].mxu0
  %v521 = vadd.f32 0.0, %v520
  %v522 = vpop.f32.mrb[0].mxu0
  %523 = vmatprep.mubr.f32.mxu0 0.0
  %524 = vmatmul.mubr.f32.gmra.mrb[0].mxu0 %v241
  %v525 = vpop.f32.mrb[0].mxu0
  %v526 = vadd.f32 0.0, %v525
  %v527 = vpop.f32.mrb[0].mxu0
  %528 = vmatprep.mubr.f32.mxu0 0.0
  %529 = vmatmul.mubr.f32.gmra.mrb[0].mxu0 %v244
  %v530 = vpop.f32.mrb[0].mxu0
  %v531 = vadd.f32 0.0, %v530
  %v532 = vpop.f32.mrb[0].mxu0
  %533 = vmatprep.mubr.f32.mxu0 0.0
  %534 = vmatmul.mubr.f32.gmra.mrb[0].mxu0 %v247
  %v535 = vpop.f32.mrb[0].mxu0
  %v536 = vadd.f32 0.0, %v535
  %v537 = vpop.f32.mrb[0].mxu0
  %538 = vmatprep.mubr.f32.mxu0 0.0
  %539 = vmatmul.mubr.f32.gmra.mrb[0].mxu0 %v250
  %v540 = vpop.f32.mrb[0].mxu0
  %v541 = vadd.f32 0.0, %v540
  %v542 = vpop.f32.mrb[0].mxu0
  %543 = vmatprep.mubr.f32.mxu0 0.0
  %544 = vmatmul.mubr.f32.gmra.mrb[0].mxu0 %v253
  %v545 = vpop.f32.mrb[0].mxu0
  %v546 = vadd.f32 0.0, %v545
  %v547 = vpop.f32.mrb[0].mxu0
  %548 = vmatprep.mubr.f32.mxu0 0.0
  %549 = vmatmul.mubr.f32.gmra.mrb[0].mxu0 %v256
  %v550 = vpop.f32.mrb[0].mxu0
  %v551 = vadd.f32 0.0, %v550
  %v552 = vpop.f32.mrb[0].mxu0
  %553 = vmatprep.mubr.f32.mxu0 0.0
  %554 = vmatmul.mubr.f32.gmra.mrb[0].mxu0 %v259
  %v555 = vpop.f32.mrb[0].mxu0
  %v556 = vadd.f32 0.0, %v555
  %v557 = vpop.f32.mrb[0].mxu0
  %558 = vmatprep.mubr.f32.mxu0 0.0
  %559 = vmatmul.mubr.f32.gmra.mrb[0].mxu0 %v262
  %v560 = vpop.f32.mrb[0].mxu0
  %v561 = vadd.f32 0.0, %v560
  %v562 = vpop.f32.mrb[0].mxu0
  %563 = vmatprep.mubr.f32.mxu0 0.0
  %564 = vmatmul.mubr.f32.gmra.mrb[0].mxu0 %v265
  %v565 = vpop.f32.mrb[0].mxu0
  %v566 = vadd.f32 0.0, %v565
  %v567 = vpop.f32.mrb[0].mxu0
  %568 = vmatprep.mubr.f32.mxu0 0.0
  %569 = vmatmul.mubr.f32.gmra.mrb[0].mxu0 %v268
  %v570 = vpop.f32.mrb[0].mxu0
  %v571 = vadd.f32 0.0, %v570
  %v572 = vpop.f32.mrb[0].mxu0
  %573 = vmatprep.mubr.f32.mxu0 0.0
  %574 = vmatmul.mubr.f32.gmra.mrb[0].mxu0 %v271
  %v575 = vpop.f32.mrb[0].mxu0
  %v576 = vadd.f32 0.0, %v575
  %v577 = vpop.f32.mrb[0].mxu0
  %578 = vmatprep.mubr.f32.mxu0 0.0
  %579 = vmatmul.mubr.f32.gmra.mrb[0].mxu0 %v274
  %v580 = vpop.f32.mrb[0].mxu0
  %v581 = vadd.f32 0.0, %v580
  %v582 = vpop.f32.mrb[0].mxu0
  %583 = vmatprep.mubr.f32.mxu0 0.0
  %584 = vmatmul.mubr.f32.gmra.mrb[0].mxu0 %v277
  %v585 = vpop.f32.mrb[0].mxu0
  %v586 = vadd.f32 0.0, %v585
  %v587 = vpop.f32.mrb[0].mxu0
  %588 = vmatprep.mubr.f32.mxu0 0.0
  %589 = vmatmul.mubr.f32.gmra.mrb[0].mxu0 %v280
  %v590 = vpop.f32.mrb[0].mxu0
  %v591 = vadd.f32 0.0, %v590
  %v592 = vpop.f32.mrb[0].mxu0
  %593 = vmatprep.mubr.f32.mxu0 0.0
  %594 = vmatmul.mubr.f32.gmra.mrb[0].mxu0 %v283
  %v595 = vpop.f32.mrb[0].mxu0
  %v596 = vadd.f32 0.0, %v595
  %v597 = vpop.f32.mrb[0].mxu0
  %598 = vdwg.mxu0
  %v599 = vld [vmem:[%s8] sm:$0x1]
  %v600 = vld [vmem:[%s9] sm:$0x1]
  %vm601 = vcmask 31744
  %v602 = vsel %vm601, %v356, 0.0
  %v603 = vsel %vm601, %v361, 0.0
  %v604 = vadd.f32 %v602, %v603
  %v605 = vsel %vm601, %v366, 0.0
  %v606 = vadd.f32 %v604, %v605
  %v607 = vsel %vm601, %v371, 0.0
  %v608 = vadd.f32 %v606, %v607
  %v609 = vsel %vm601, %v376, 0.0
  %v610 = vadd.f32 %v608, %v609
  %v611 = vsel %vm601, %v381, 0.0
  %v612 = vadd.f32 %v610, %v611
  %v613 = vsel %vm601, %v386, 0.0
  %v614 = vadd.f32 %v612, %v613
  %v615 = vsel %vm601, %v391, 0.0
  %v616 = vadd.f32 %v614, %v615
  %v617 = vsel %vm601, %v396, 0.0
  %v618 = vadd.f32 %v616, %v617
  %v619 = vsel %vm601, %v401, 0.0
  %v620 = vadd.f32 %v618, %v619
  %v621 = vsel %vm601, %v406, 0.0
  %v622 = vadd.f32 %v620, %v621
  %v623 = vsel %vm601, %v411, 0.0
  %v624 = vadd.f32 %v622, %v623
  %v625 = vsel %vm601, %v416, 0.0
  %v626 = vadd.f32 %v624, %v625
  %v627 = vsel %vm601, %v421, 0.0
  %v628 = vadd.f32 %v626, %v627
  %v629 = vsel %vm601, %v426, 0.0
  %v630 = vadd.f32 %v628, %v629
  %v631 = vsel %vm601, %v431, 0.0
  %v632 = vadd.f32 %v630, %v631
  %v633 = vsel %vm601, %v436, 0.0
  %v634 = vadd.f32 %v632, %v633
  %v635 = vsel %vm601, %v441, 0.0
  %v636 = vadd.f32 %v634, %v635
  %v637 = vsel %vm601, %v446, 0.0
  %v638 = vadd.f32 %v636, %v637
  %v639 = vsel %vm601, %v451, 0.0
  %v640 = vadd.f32 %v638, %v639
  %v641 = vsel %vm601, %v456, 0.0
  %v642 = vadd.f32 %v640, %v641
  %v643 = vsel %vm601, %v461, 0.0
  %v644 = vadd.f32 %v642, %v643
  %v645 = vsel %vm601, %v466, 0.0
  %v646 = vadd.f32 %v644, %v645
  %v647 = vsel %vm601, %v471, 0.0
  %v648 = vadd.f32 %v646, %v647
  %v649 = vsel %vm601, %v476, 0.0
  %v650 = vadd.f32 %v648, %v649
  %v651 = vsel %vm601, %v481, 0.0
  %v652 = vadd.f32 %v650, %v651
  %v653 = vsel %vm601, %v486, 0.0
  %v654 = vadd.f32 %v652, %v653
  %v655 = vsel %vm601, %v491, 0.0
  %v656 = vadd.f32 %v654, %v655
  %v657 = vsel %vm601, %v496, 0.0
  %v658 = vadd.f32 %v656, %v657
  %v659 = vsel %vm601, %v501, 0.0
  %v660 = vadd.f32 %v658, %v659
  %v661 = vsel %vm601, %v506, 0.0
  %v662 = vadd.f32 %v660, %v661
  %v663 = vsel %vm601, %v511, 0.0
  %v664 = vadd.f32 %v662, %v663
  %v665 = vsel %vm601, %v516, 0.0
  %v666 = vadd.f32 %v664, %v665
  %v667 = vsel %vm601, %v521, 0.0
  %v668 = vadd.f32 %v666, %v667
  %v669 = vsel %vm601, %v526, 0.0
  %v670 = vadd.f32 %v668, %v669
  %v671 = vsel %vm601, %v531, 0.0
  %v672 = vadd.f32 %v670, %v671
  %v673 = vsel %vm601, %v536, 0.0
  %v674 = vadd.f32 %v672, %v673
  %v675 = vsel %vm601, %v541, 0.0
  %v676 = vadd.f32 %v674, %v675
  %v677 = vsel %vm601, %v546, 0.0
  %v678 = vadd.f32 %v676, %v677
  %v679 = vsel %vm601, %v551, 0.0
  %v680 = vadd.f32 %v678, %v679
  %v681 = vsel %vm601, %v556, 0.0
  %v682 = vadd.f32 %v680, %v681
  %v683 = vsel %vm601, %v561, 0.0
  %v684 = vadd.f32 %v682, %v683
  %v685 = vsel %vm601, %v566, 0.0
  %v686 = vadd.f32 %v684, %v685
  %v687 = vsel %vm601, %v571, 0.0
  %v688 = vadd.f32 %v686, %v687
  %v689 = vsel %vm601, %v576, 0.0
  %v690 = vadd.f32 %v688, %v689
  %v691 = vsel %vm601, %v581, 0.0
  %v692 = vadd.f32 %v690, %v691
  %v693 = vsel %vm601, %v586, 0.0
  %v694 = vadd.f32 %v692, %v693
  %v695 = vsel %vm601, %v591, 0.0
  %v696 = vadd.f32 %v694, %v695
  %v697 = vsel %vm601, %v596, 0.0
  %v698 = vadd.f32 %v696, %v697
  %v699 = vrot.slane %v698, 4
  %v700 = vadd.f32 %v698, %v699
  %v701 = vrot.slane %v700, 2
  %v702 = vadd.f32 %v700, %v701
  %v703 = vrot.slane %v702, 1
  %v704 = vadd.f32 %v702, %v703
  %v705 = vmul.f32 %v704, 0.0025510204
  %v706 = vmul.f32 %v356, %v356
  %v707 = vmul.f32 %v361, %v361
  %v708 = vmul.f32 %v366, %v366
  %v709 = vmul.f32 %v371, %v371
  %v710 = vmul.f32 %v376, %v376
  %v711 = vmul.f32 %v381, %v381
  %v712 = vmul.f32 %v386, %v386
  %v713 = vmul.f32 %v391, %v391
  %v714 = vmul.f32 %v396, %v396
  %v715 = vmul.f32 %v401, %v401
  %v716 = vmul.f32 %v406, %v406
  %v717 = vmul.f32 %v411, %v411
  %v718 = vmul.f32 %v416, %v416
  %v719 = vmul.f32 %v421, %v421
  %v720 = vmul.f32 %v426, %v426
  %v721 = vmul.f32 %v431, %v431
  %v722 = vmul.f32 %v436, %v436
  %v723 = vmul.f32 %v441, %v441
  %v724 = vmul.f32 %v446, %v446
  %v725 = vmul.f32 %v451, %v451
  %v726 = vmul.f32 %v456, %v456
  %v727 = vmul.f32 %v461, %v461
  %v728 = vmul.f32 %v466, %v466
  %v729 = vmul.f32 %v471, %v471
  %v730 = vmul.f32 %v476, %v476
  %v731 = vmul.f32 %v481, %v481
  %v732 = vmul.f32 %v486, %v486
  %v733 = vmul.f32 %v491, %v491
  %v734 = vmul.f32 %v496, %v496
  %v735 = vmul.f32 %v501, %v501
  %v736 = vmul.f32 %v506, %v506
  %v737 = vmul.f32 %v511, %v511
  %v738 = vmul.f32 %v516, %v516
  %v739 = vmul.f32 %v521, %v521
  %v740 = vmul.f32 %v526, %v526
  %v741 = vmul.f32 %v531, %v531
  %v742 = vmul.f32 %v536, %v536
  %v743 = vmul.f32 %v541, %v541
  %v744 = vmul.f32 %v546, %v546
  %v745 = vmul.f32 %v551, %v551
  %v746 = vmul.f32 %v556, %v556
  %v747 = vmul.f32 %v561, %v561
  %v748 = vmul.f32 %v566, %v566
  %v749 = vmul.f32 %v571, %v571
  %v750 = vmul.f32 %v576, %v576
  %v751 = vmul.f32 %v581, %v581
  %v752 = vmul.f32 %v586, %v586
  %v753 = vmul.f32 %v591, %v591
  %v754 = vmul.f32 %v596, %v596
  %v755 = vsel %vm601, %v706, 0.0
  %v756 = vsel %vm601, %v707, 0.0
  %v757 = vadd.f32 %v755, %v756
  %v758 = vsel %vm601, %v708, 0.0
  %v759 = vadd.f32 %v757, %v758
  %v760 = vsel %vm601, %v709, 0.0
  %v761 = vadd.f32 %v759, %v760
  %v762 = vsel %vm601, %v710, 0.0
  %v763 = vadd.f32 %v761, %v762
  %v764 = vsel %vm601, %v711, 0.0
  %v765 = vadd.f32 %v763, %v764
  %v766 = vsel %vm601, %v712, 0.0
  %v767 = vadd.f32 %v765, %v766
  %v768 = vsel %vm601, %v713, 0.0
  %v769 = vadd.f32 %v767, %v768
  %v770 = vsel %vm601, %v714, 0.0
  %v771 = vadd.f32 %v769, %v770
  %v772 = vsel %vm601, %v715, 0.0
  %v773 = vadd.f32 %v771, %v772
  %v774 = vsel %vm601, %v716, 0.0
  %v775 = vadd.f32 %v773, %v774
  %v776 = vsel %vm601, %v717, 0.0
  %v777 = vadd.f32 %v775, %v776
  %v778 = vsel %vm601, %v718, 0.0
  %v779 = vadd.f32 %v777, %v778
  %v780 = vsel %vm601, %v719, 0.0
  %v781 = vadd.f32 %v779, %v780
  %v782 = vsel %vm601, %v720, 0.0
  %v783 = vadd.f32 %v781, %v782
  %v784 = vsel %vm601, %v721, 0.0
  %v785 = vadd.f32 %v783, %v784
  %v786 = vsel %vm601, %v722, 0.0
  %v787 = vadd.f32 %v785, %v786
  %v788 = vsel %vm601, %v723, 0.0
  %v789 = vadd.f32 %v787, %v788
  %v790 = vsel %vm601, %v724, 0.0
  %v791 = vadd.f32 %v789, %v790
  %v792 = vsel %vm601, %v725, 0.0
  %v793 = vadd.f32 %v791, %v792
  %v794 = vsel %vm601, %v726, 0.0
  %v795 = vadd.f32 %v793, %v794
  %v796 = vsel %vm601, %v727, 0.0
  %v797 = vadd.f32 %v795, %v796
  %v798 = vsel %vm601, %v728, 0.0
  %v799 = vadd.f32 %v797, %v798
  %v800 = vsel %vm601, %v729, 0.0
  %v801 = vadd.f32 %v799, %v800
  %v802 = vsel %vm601, %v730, 0.0
  %v803 = vadd.f32 %v801, %v802
  %v804 = vsel %vm601, %v731, 0.0
  %v805 = vadd.f32 %v803, %v804
  %v806 = vsel %vm601, %v732, 0.0
  %v807 = vadd.f32 %v805, %v806
  %v808 = vsel %vm601, %v733, 0.0
  %v809 = vadd.f32 %v807, %v808
  %v810 = vsel %vm601, %v734, 0.0
  %v811 = vadd.f32 %v809, %v810
  %v812 = vsel %vm601, %v735, 0.0
  %v813 = vadd.f32 %v811, %v812
  %v814 = vsel %vm601, %v736, 0.0
  %v815 = vadd.f32 %v813, %v814
  %v816 = vsel %vm601, %v737, 0.0
  %v817 = vadd.f32 %v815, %v816
  %v818 = vsel %vm601, %v738, 0.0
  %v819 = vadd.f32 %v817, %v818
  %v820 = vsel %vm601, %v739, 0.0
  %v821 = vadd.f32 %v819, %v820
  %v822 = vsel %vm601, %v740, 0.0
  %v823 = vadd.f32 %v821, %v822
  %v824 = vsel %vm601, %v741, 0.0
  %v825 = vadd.f32 %v823, %v824
  %v826 = vsel %vm601, %v742, 0.0
  %v827 = vadd.f32 %v825, %v826
  %v828 = vsel %vm601, %v743, 0.0
  %v829 = vadd.f32 %v827, %v828
  %v830 = vsel %vm601, %v744, 0.0
  %v831 = vadd.f32 %v829, %v830
  %v832 = vsel %vm601, %v745, 0.0
  %v833 = vadd.f32 %v831, %v832
  %v834 = vsel %vm601, %v746, 0.0
  %v835 = vadd.f32 %v833, %v834
  %v836 = vsel %vm601, %v747, 0.0
  %v837 = vadd.f32 %v835, %v836
  %v838 = vsel %vm601, %v748, 0.0
  %v839 = vadd.f32 %v837, %v838
  %v840 = vsel %vm601, %v749, 0.0
  %v841 = vadd.f32 %v839, %v840
  %v842 = vsel %vm601, %v750, 0.0
  %v843 = vadd.f32 %v841, %v842
  %v844 = vsel %vm601, %v751, 0.0
  %v845 = vadd.f32 %v843, %v844
  %v846 = vsel %vm601, %v752, 0.0
  %v847 = vadd.f32 %v845, %v846
  %v848 = vsel %vm601, %v753, 0.0
  %v849 = vadd.f32 %v847, %v848
  %v850 = vsel %vm601, %v754, 0.0
  %v851 = vadd.f32 %v849, %v850
  %v852 = vrot.slane %v851, 4
  %v853 = vadd.f32 %v851, %v852
  %v854 = vrot.slane %v853, 2
  %v855 = vadd.f32 %v853, %v854
  %v856 = vrot.slane %v855, 1
  %v857 = vadd.f32 %v855, %v856
  %v858 = vmul.f32 %v857, 0.0025510204
  %v859 = vmul.f32 %v705, %v705
  %v860 = vsub.f32 %v858, %v859
  %v861 = vmax.f32 %v860, 0.0
  %v862 = vadd.f32 %v861, 1e-05
  %v863 = vrsqrt.pop %v862
  %v864 = vmul.f32 %v599, %v863
  %v865 = vmul.f32 %v705, %v864
  %v866 = vsub.f32 %v600, %v865
  %v868 = vlaneseq
  %v869 = vshrl.u32 %v868, 7
  %v870 = vsub.s32 0, %v869
  %v871 = vrot.slane %v864, %v870
  %v873 = vmul.f32 %v356, %v871
  %v874 = vmul.f32 %v361, %v871
  %v875 = vmul.f32 %v366, %v871
  %v876 = vmul.f32 %v371, %v871
  %v877 = vmul.f32 %v376, %v871
  %v878 = vmul.f32 %v381, %v871
  %v879 = vmul.f32 %v386, %v871
  %v880 = vmul.f32 %v391, %v871
  %v881 = vmul.f32 %v396, %v871
  %v882 = vmul.f32 %v401, %v871
  %v883 = vmul.f32 %v406, %v871
  %v884 = vmul.f32 %v411, %v871
  %v885 = vmul.f32 %v416, %v871
  %v886 = vmul.f32 %v421, %v871
  %v887 = vmul.f32 %v426, %v871
  %v888 = vmul.f32 %v431, %v871
  %v889 = vmul.f32 %v436, %v871
  %v890 = vmul.f32 %v441, %v871
  %v891 = vmul.f32 %v446, %v871
  %v892 = vmul.f32 %v451, %v871
  %v893 = vmul.f32 %v456, %v871
  %v894 = vmul.f32 %v461, %v871
  %v895 = vmul.f32 %v466, %v871
  %v896 = vmul.f32 %v471, %v871
  %v897 = vmul.f32 %v476, %v871
  %v898 = vmul.f32 %v481, %v871
  %v899 = vmul.f32 %v486, %v871
  %v900 = vmul.f32 %v491, %v871
  %v901 = vmul.f32 %v496, %v871
  %v902 = vmul.f32 %v501, %v871
  %v903 = vmul.f32 %v506, %v871
  %v904 = vmul.f32 %v511, %v871
  %v905 = vmul.f32 %v516, %v871
  %v906 = vmul.f32 %v521, %v871
  %v907 = vmul.f32 %v526, %v871
  %v908 = vmul.f32 %v531, %v871
  %v909 = vmul.f32 %v536, %v871
  %v910 = vmul.f32 %v541, %v871
  %v911 = vmul.f32 %v546, %v871
  %v912 = vmul.f32 %v551, %v871
  %v913 = vmul.f32 %v556, %v871
  %v914 = vmul.f32 %v561, %v871
  %v915 = vmul.f32 %v566, %v871
  %v916 = vmul.f32 %v571, %v871
  %v917 = vmul.f32 %v576, %v871
  %v918 = vmul.f32 %v581, %v871
  %v919 = vmul.f32 %v586, %v871
  %v920 = vmul.f32 %v591, %v871
  %v921 = vmul.f32 %v596, %v871
  %v923 = vlaneseq
  %v924 = vshrl.u32 %v923, 7
  %v925 = vsub.s32 0, %v924
  %v926 = vrot.slane %v866, %v925
  %v928 = vadd.f32 %v873, %v926
  %v929 = vadd.f32 %v874, %v926
  %v930 = vadd.f32 %v875, %v926
  %v931 = vadd.f32 %v876, %v926
  %v932 = vadd.f32 %v877, %v926
  %v933 = vadd.f32 %v878, %v926
  %v934 = vadd.f32 %v879, %v926
  %v935 = vadd.f32 %v880, %v926
  %v936 = vadd.f32 %v881, %v926
  %v937 = vadd.f32 %v882, %v926
  %v938 = vadd.f32 %v883, %v926
  %v939 = vadd.f32 %v884, %v926
  %v940 = vadd.f32 %v885, %v926
  %v941 = vadd.f32 %v886, %v926
  %v942 = vadd.f32 %v887, %v926
  %v943 = vadd.f32 %v888, %v926
  %v944 = vadd.f32 %v889, %v926
  %v945 = vadd.f32 %v890, %v926
  %v946 = vadd.f32 %v891, %v926
  %v947 = vadd.f32 %v892, %v926
  %v948 = vadd.f32 %v893, %v926
  %v949 = vadd.f32 %v894, %v926
  %v950 = vadd.f32 %v895, %v926
  %v951 = vadd.f32 %v896, %v926
  %v952 = vadd.f32 %v897, %v926
  %v953 = vadd.f32 %v898, %v926
  %v954 = vadd.f32 %v899, %v926
  %v955 = vadd.f32 %v900, %v926
  %v956 = vadd.f32 %v901, %v926
  %v957 = vadd.f32 %v902, %v926
  %v958 = vadd.f32 %v903, %v926
  %v959 = vadd.f32 %v904, %v926
  %v960 = vadd.f32 %v905, %v926
  %v961 = vadd.f32 %v906, %v926
  %v962 = vadd.f32 %v907, %v926
  %v963 = vadd.f32 %v908, %v926
  %v964 = vadd.f32 %v909, %v926
  %v965 = vadd.f32 %v910, %v926
  %v966 = vadd.f32 %v911, %v926
  %v967 = vadd.f32 %v912, %v926
  %v968 = vadd.f32 %v913, %v926
  %v969 = vadd.f32 %v914, %v926
  %v970 = vadd.f32 %v915, %v926
  %v971 = vadd.f32 %v916, %v926
  %v972 = vadd.f32 %v917, %v926
  %v973 = vadd.f32 %v918, %v926
  %v974 = vadd.f32 %v919, %v926
  %v975 = vadd.f32 %v920, %v926
  %v976 = vadd.f32 %v921, %v926
  %v977 = vmax.f32 %v928, 0.0
  %v978 = vmax.f32 %v929, 0.0
  %v979 = vmax.f32 %v930, 0.0
  %v980 = vmax.f32 %v931, 0.0
  %v981 = vmax.f32 %v932, 0.0
  %v982 = vmax.f32 %v933, 0.0
  %v983 = vmax.f32 %v934, 0.0
  %v984 = vmax.f32 %v935, 0.0
  %v985 = vmax.f32 %v936, 0.0
  %v986 = vmax.f32 %v937, 0.0
  %v987 = vmax.f32 %v938, 0.0
  %v988 = vmax.f32 %v939, 0.0
  %v989 = vmax.f32 %v940, 0.0
  %v990 = vmax.f32 %v941, 0.0
  %v991 = vmax.f32 %v942, 0.0
  %v992 = vmax.f32 %v943, 0.0
  %v993 = vmax.f32 %v944, 0.0
  %v994 = vmax.f32 %v945, 0.0
  %v995 = vmax.f32 %v946, 0.0
  %v996 = vmax.f32 %v947, 0.0
  %v997 = vmax.f32 %v948, 0.0
  %v998 = vmax.f32 %v949, 0.0
  %v999 = vmax.f32 %v950, 0.0
  %v1000 = vmax.f32 %v951, 0.0
  %v1001 = vmax.f32 %v952, 0.0
  %v1002 = vmax.f32 %v953, 0.0
  %v1003 = vmax.f32 %v954, 0.0
  %v1004 = vmax.f32 %v955, 0.0
  %v1005 = vmax.f32 %v956, 0.0
  %v1006 = vmax.f32 %v957, 0.0
  %v1007 = vmax.f32 %v958, 0.0
  %v1008 = vmax.f32 %v959, 0.0
  %v1009 = vmax.f32 %v960, 0.0
  %v1010 = vmax.f32 %v961, 0.0
  %v1011 = vmax.f32 %v962, 0.0
  %v1012 = vmax.f32 %v963, 0.0
  %v1013 = vmax.f32 %v964, 0.0
  %v1014 = vmax.f32 %v965, 0.0
  %v1015 = vmax.f32 %v966, 0.0
  %v1016 = vmax.f32 %v967, 0.0
  %v1017 = vmax.f32 %v968, 0.0
  %v1018 = vmax.f32 %v969, 0.0
  %v1019 = vmax.f32 %v970, 0.0
  %v1020 = vmax.f32 %v971, 0.0
  %v1021 = vmax.f32 %v972, 0.0
  %v1022 = vmax.f32 %v973, 0.0
  %v1023 = vmax.f32 %v974, 0.0
  %v1024 = vmax.f32 %v975, 0.0
  %v1025 = vmax.f32 %v976, 0.0
  %v1026 = vld [vmem:[%s2] sm:$0xff]
  %v1027 = vld [vmem:[%s2 + $0x8] sm:$0xff]
  %v1028 = vld [vmem:[%s2 + $0x10] sm:$0xff]
  %v1029 = vld [vmem:[%s2 + $0x18] sm:$0xff]
  %v1030 = vld [vmem:[%s2 + $0x20] sm:$0xff]
  %v1031 = vld [vmem:[%s2 + $0x28] sm:$0xff]
  %v1032 = vld [vmem:[%s2 + $0x30] sm:$0xff]
  %v1033 = vld [vmem:[%s2 + $0x38] sm:$0xff]
  %v1034 = vld [vmem:[%s2 + $0x40] sm:$0xff]
  %v1035 = vld [vmem:[%s2 + $0x48] sm:$0xff]
  %v1036 = vld [vmem:[%s2 + $0x50] sm:$0xff]
  %v1037 = vld [vmem:[%s2 + $0x58] sm:$0xff]
  %v1038 = vld [vmem:[%s2 + $0x60] sm:$0xff]
  %v1039 = vld [vmem:[%s2 + $0x68] sm:$0xff]
  %v1040 = vld [vmem:[%s2 + $0x70] sm:$0xff]
  %v1041 = vld [vmem:[%s2 + $0x78] sm:$0xff]
  %v1042 = vld [vmem:[%s2 + $0x80] sm:$0xff]
  %v1043 = vld [vmem:[%s2 + $0x88] sm:$0xff]
  %v1044 = vld [vmem:[%s2 + $0x90] sm:$0xff]
  %v1045 = vld [vmem:[%s2 + $0x98] sm:$0xff]
  %v1046 = vld [vmem:[%s2 + $0xa0] sm:$0xff]
  %v1047 = vld [vmem:[%s2 + $0xa8] sm:$0xff]
  %v1048 = vld [vmem:[%s2 + $0xb0] sm:$0xff]
  %v1049 = vld [vmem:[%s2 + $0xb8] sm:$0xff]
  %v1050 = vld [vmem:[%s2 + $0xc0] sm:$0x11]
  %v1051 = vld [vmem:[%s2 + $0xc8] sm:$0x11]
  %v1052 = vunpack.c.l.bf16 %v1026
  %v1053 = vunpack.c.h.bf16 %v1026
  %v1054 = vunpack.c.l.bf16 %v1027
  %v1055 = vunpack.c.h.bf16 %v1027
  %v1056 = vunpack.c.l.bf16 %v1028
  %v1057 = vunpack.c.h.bf16 %v1028
  %v1058 = vunpack.c.l.bf16 %v1029
  %v1059 = vunpack.c.h.bf16 %v1029
  %v1060 = vunpack.c.l.bf16 %v1030
  %v1061 = vunpack.c.h.bf16 %v1030
  %v1062 = vunpack.c.l.bf16 %v1031
  %v1063 = vunpack.c.h.bf16 %v1031
  %v1064 = vunpack.c.l.bf16 %v1032
  %v1065 = vunpack.c.h.bf16 %v1032
  %v1066 = vunpack.c.l.bf16 %v1033
  %v1067 = vunpack.c.h.bf16 %v1033
  %v1068 = vunpack.c.l.bf16 %v1034
  %v1069 = vunpack.c.h.bf16 %v1034
  %v1070 = vunpack.c.l.bf16 %v1035
  %v1071 = vunpack.c.h.bf16 %v1035
  %v1072 = vunpack.c.l.bf16 %v1036
  %v1073 = vunpack.c.h.bf16 %v1036
  %v1074 = vunpack.c.l.bf16 %v1037
  %v1075 = vunpack.c.h.bf16 %v1037
  %v1076 = vunpack.c.l.bf16 %v1038
  %v1077 = vunpack.c.h.bf16 %v1038
  %v1078 = vunpack.c.l.bf16 %v1039
  %v1079 = vunpack.c.h.bf16 %v1039
  %v1080 = vunpack.c.l.bf16 %v1040
  %v1081 = vunpack.c.h.bf16 %v1040
  %v1082 = vunpack.c.l.bf16 %v1041
  %v1083 = vunpack.c.h.bf16 %v1041
  %v1084 = vunpack.c.l.bf16 %v1042
  %v1085 = vunpack.c.h.bf16 %v1042
  %v1086 = vunpack.c.l.bf16 %v1043
  %v1087 = vunpack.c.h.bf16 %v1043
  %v1088 = vunpack.c.l.bf16 %v1044
  %v1089 = vunpack.c.h.bf16 %v1044
  %v1090 = vunpack.c.l.bf16 %v1045
  %v1091 = vunpack.c.h.bf16 %v1045
  %v1092 = vunpack.c.l.bf16 %v1046
  %v1093 = vunpack.c.h.bf16 %v1046
  %v1094 = vunpack.c.l.bf16 %v1047
  %v1095 = vunpack.c.h.bf16 %v1047
  %v1096 = vunpack.c.l.bf16 %v1048
  %v1097 = vunpack.c.h.bf16 %v1048
  %v1098 = vunpack.c.l.bf16 %v1049
  %v1099 = vunpack.c.h.bf16 %v1049
  %v1100 = vunpack.c.l.bf16 %v1050
  %v1101 = vunpack.c.h.bf16 %v1050
  %v1102 = vunpack.c.l.bf16 %v1051
  %v1103 = vunpack.c.h.bf16 %v1051
  %vm1104 = vcmask 64512
  %v1106 = vsel %vm1104, %v1055, 0
  %v1109 = vsel %vm1104, %v1059, 0
  %v1112 = vsel %vm1104, %v1063, 0
  %v1115 = vsel %vm1104, %v1067, 0
  %v1118 = vsel %vm1104, %v1071, 0
  %v1121 = vsel %vm1104, %v1075, 0
  %v1124 = vsel %vm1104, %v1079, 0
  %v1127 = vsel %vm1104, %v1083, 0
  %v1130 = vsel %vm1104, %v1087, 0
  %v1133 = vsel %vm1104, %v1091, 0
  %v1136 = vsel %vm1104, %v1095, 0
  %v1139 = vsel %vm1104, %v1099, 0
  %v1142 = vsel %vm1104, %v1103, 0
  %1144 = vmatprep.subr.mxu0 0.0
  %1145 = vmatpush1.msra.mxu0 %v977
  %1146 = vmatprep.subr.mxu0 0.0
  %1147 = vmatpush1.msra.mxu0 %v978
  %1148 = vmatprep.subr.mxu0 0.0
  %1149 = vmatpush1.msra.mxu0 %v979
  %1150 = vmatprep.subr.mxu0 0.0
  %1151 = vmatpush1.msra.mxu0 %v980
  %1152 = vmatprep.subr.mxu0 0.0
  %1153 = vmatpush1.msra.mxu0 %v981
  %1154 = vmatprep.subr.mxu0 0.0
  %1155 = vmatpush1.msra.mxu0 %v982
  %1156 = vmatprep.subr.mxu0 0.0
  %1157 = vmatpush1.msra.mxu0 %v983
  %1158 = vmatprep.subr.mxu0 0.0
  %1159 = vmatpush1.msra.mxu0 %v984
  %1160 = vmatprep.subr.mxu0 0.0
  %1161 = vmatpush1.msra.mxu0 %v985
  %1162 = vmatprep.subr.mxu0 0.0
  %1163 = vmatpush1.msra.mxu0 %v986
  %1164 = vmatprep.subr.mxu0 0.0
  %1165 = vmatpush1.msra.mxu0 %v987
  %1166 = vmatprep.subr.mxu0 0.0
  %1167 = vmatpush1.msra.mxu0 %v988
  %1168 = vmatprep.subr.mxu0 0.0
  %1169 = vmatpush1.msra.mxu0 %v989
  %1170 = vmatprep.subr.mxu0 0.0
  %1171 = vmatpush1.msra.mxu0 %v990
  %1172 = vmatprep.subr.mxu0 0.0
  %1173 = vmatpush1.msra.mxu0 %v991
  %1174 = vmatprep.subr.mxu0 0.0
  %1175 = vmatpush1.msra.mxu0 %v992
  %1176 = vmatprep.subr.mxu0 0.0
  %1177 = vmatpush1.msra.mxu0 %v993
  %1178 = vmatprep.subr.mxu0 0.0
  %1179 = vmatpush1.msra.mxu0 %v994
  %1180 = vmatprep.subr.mxu0 0.0
  %1181 = vmatpush1.msra.mxu0 %v995
  %1182 = vmatprep.subr.mxu0 0.0
  %1183 = vmatpush1.msra.mxu0 %v996
  %1184 = vmatprep.subr.mxu0 0.0
  %1185 = vmatpush1.msra.mxu0 %v997
  %1186 = vmatprep.subr.mxu0 0.0
  %1187 = vmatpush1.msra.mxu0 %v998
  %1188 = vmatprep.subr.mxu0 0.0
  %1189 = vmatpush1.msra.mxu0 %v999
  %1190 = vmatprep.subr.mxu0 0.0
  %1191 = vmatpush1.msra.mxu0 %v1000
  %1192 = vmatprep.subr.mxu0 0.0
  %1193 = vmatpush1.msra.mxu0 %v1001
  %1194 = vmatprep.subr.mxu0 0.0
  %1195 = vmatpush1.msra.mxu0 %v1002
  %1196 = vmatprep.subr.mxu0 0.0
  %1197 = vmatpush1.msra.mxu0 %v1003
  %1198 = vmatprep.subr.mxu0 0.0
  %1199 = vmatpush1.msra.mxu0 %v1004
  %1200 = vmatprep.subr.mxu0 0.0
  %1201 = vmatpush1.msra.mxu0 %v1005
  %1202 = vmatprep.subr.mxu0 0.0
  %1203 = vmatpush1.msra.mxu0 %v1006
  %1204 = vmatprep.subr.mxu0 0.0
  %1205 = vmatpush1.msra.mxu0 %v1007
  %1206 = vmatprep.subr.mxu0 0.0
  %1207 = vmatpush1.msra.mxu0 %v1008
  %1208 = vmatprep.mubr.f32.mxu0 %v1053
  %1209 = vmatmul.mubr.f32.gmra.mrb[0].mxu0 %v1052
  %v1210 = vpop.f32.mrb[0].mxu0
  %v1211 = vadd.f32 0.0, %v1210
  %v1212 = vpop.f32.mrb[0].mxu0
  %1213 = vmatprep.mubr.f32.mxu0 %v1057
  %1214 = vmatmul.mubr.f32.gmra.mrb[0].mxu0 %v1056
  %v1215 = vpop.f32.mrb[0].mxu0
  %v1216 = vadd.f32 0.0, %v1215
  %v1217 = vpop.f32.mrb[0].mxu0
  %1218 = vmatprep.mubr.f32.mxu0 %v1061
  %1219 = vmatmul.mubr.f32.gmra.mrb[0].mxu0 %v1060
  %v1220 = vpop.f32.mrb[0].mxu0
  %v1221 = vadd.f32 0.0, %v1220
  %v1222 = vpop.f32.mrb[0].mxu0
  %1223 = vmatprep.mubr.f32.mxu0 %v1065
  %1224 = vmatmul.mubr.f32.gmra.mrb[0].mxu0 %v1064
  %v1225 = vpop.f32.mrb[0].mxu0
  %v1226 = vadd.f32 0.0, %v1225
  %v1227 = vpop.f32.mrb[0].mxu0
  %1228 = vmatprep.mubr.f32.mxu0 %v1069
  %1229 = vmatmul.mubr.f32.gmra.mrb[0].mxu0 %v1068
  %v1230 = vpop.f32.mrb[0].mxu0
  %v1231 = vadd.f32 0.0, %v1230
  %v1232 = vpop.f32.mrb[0].mxu0
  %1233 = vmatprep.mubr.f32.mxu0 %v1073
  %1234 = vmatmul.mubr.f32.gmra.mrb[0].mxu0 %v1072
  %v1235 = vpop.f32.mrb[0].mxu0
  %v1236 = vadd.f32 0.0, %v1235
  %v1237 = vpop.f32.mrb[0].mxu0
  %1238 = vmatprep.mubr.f32.mxu0 %v1077
  %1239 = vmatmul.mubr.f32.gmra.mrb[0].mxu0 %v1076
  %v1240 = vpop.f32.mrb[0].mxu0
  %v1241 = vadd.f32 0.0, %v1240
  %v1242 = vpop.f32.mrb[0].mxu0
  %1243 = vmatprep.mubr.f32.mxu0 %v1081
  %1244 = vmatmul.mubr.f32.gmra.mrb[0].mxu0 %v1080
  %v1245 = vpop.f32.mrb[0].mxu0
  %v1246 = vadd.f32 0.0, %v1245
  %v1247 = vpop.f32.mrb[0].mxu0
  %1248 = vmatprep.mubr.f32.mxu0 %v1085
  %1249 = vmatmul.mubr.f32.gmra.mrb[0].mxu0 %v1084
  %v1250 = vpop.f32.mrb[0].mxu0
  %v1251 = vadd.f32 0.0, %v1250
  %v1252 = vpop.f32.mrb[0].mxu0
  %1253 = vmatprep.mubr.f32.mxu0 %v1089
  %1254 = vmatmul.mubr.f32.gmra.mrb[0].mxu0 %v1088
  %v1255 = vpop.f32.mrb[0].mxu0
  %v1256 = vadd.f32 0.0, %v1255
  %v1257 = vpop.f32.mrb[0].mxu0
  %1258 = vmatprep.mubr.f32.mxu0 %v1093
  %1259 = vmatmul.mubr.f32.gmra.mrb[0].mxu0 %v1092
  %v1260 = vpop.f32.mrb[0].mxu0
  %v1261 = vadd.f32 0.0, %v1260
  %v1262 = vpop.f32.mrb[0].mxu0
  %1263 = vmatprep.mubr.f32.mxu0 %v1097
  %1264 = vmatmul.mubr.f32.gmra.mrb[0].mxu0 %v1096
  %v1265 = vpop.f32.mrb[0].mxu0
  %v1266 = vadd.f32 0.0, %v1265
  %v1267 = vpop.f32.mrb[0].mxu0
  %1268 = vmatprep.mubr.f32.mxu0 %v1101
  %1269 = vmatmul.mubr.f32.gmra.mrb[0].mxu0 %v1100
  %v1270 = vpop.f32.mrb[0].mxu0
  %v1271 = vadd.f32 0.0, %v1270
  %v1272 = vpop.f32.mrb[0].mxu0
  %1273 = vdwg.mxu0
  %1274 = vmatprep.subr.mxu0 0.0
  %1275 = vmatpush1.msra.mxu0 %v1009
  %1276 = vmatprep.subr.mxu0 0.0
  %1277 = vmatpush1.msra.mxu0 %v1010
  %1278 = vmatprep.subr.mxu0 0.0
  %1279 = vmatpush1.msra.mxu0 %v1011
  %1280 = vmatprep.subr.mxu0 0.0
  %1281 = vmatpush1.msra.mxu0 %v1012
  %1282 = vmatprep.subr.mxu0 0.0
  %1283 = vmatpush1.msra.mxu0 %v1013
  %1284 = vmatprep.subr.mxu0 0.0
  %1285 = vmatpush1.msra.mxu0 %v1014
  %1286 = vmatprep.subr.mxu0 0.0
  %1287 = vmatpush1.msra.mxu0 %v1015
  %1288 = vmatprep.subr.mxu0 0.0
  %1289 = vmatpush1.msra.mxu0 %v1016
  %1290 = vmatprep.subr.mxu0 0.0
  %1291 = vmatpush1.msra.mxu0 %v1017
  %1292 = vmatprep.subr.mxu0 0.0
  %1293 = vmatpush1.msra.mxu0 %v1018
  %1294 = vmatprep.subr.mxu0 0.0
  %1295 = vmatpush1.msra.mxu0 %v1019
  %1296 = vmatprep.subr.mxu0 0.0
  %1297 = vmatpush1.msra.mxu0 %v1020
  %1298 = vmatprep.subr.mxu0 0.0
  %1299 = vmatpush1.msra.mxu0 %v1021
  %1300 = vmatprep.subr.mxu0 0.0
  %1301 = vmatpush1.msra.mxu0 %v1022
  %1302 = vmatprep.subr.mxu0 0.0
  %1303 = vmatpush1.msra.mxu0 %v1023
  %1304 = vmatprep.subr.mxu0 0.0
  %1305 = vmatpush1.msra.mxu0 %v1024
  %1306 = vmatprep.subr.mxu0 0.0
  %1307 = vmatpush1.msra.mxu0 %v1025
  %1308 = vmatprep.subr.mxu0 0.0
  %1309 = vmatpush1.msra.mxu0 0.0
  %1310 = vmatprep.subr.mxu0 0.0
  %1311 = vmatpush1.msra.mxu0 0.0
  %1312 = vmatprep.subr.mxu0 0.0
  %1313 = vmatpush1.msra.mxu0 0.0
  %1314 = vmatprep.subr.mxu0 0.0
  %1315 = vmatpush1.msra.mxu0 0.0
  %1316 = vmatprep.subr.mxu0 0.0
  %1317 = vmatpush1.msra.mxu0 0.0
  %1318 = vmatprep.subr.mxu0 0.0
  %1319 = vmatpush1.msra.mxu0 0.0
  %1320 = vmatprep.subr.mxu0 0.0
  %1321 = vmatpush1.msra.mxu0 0.0
  %1322 = vmatprep.subr.mxu0 0.0
  %1323 = vmatpush1.msra.mxu0 0.0
  %1324 = vmatprep.subr.mxu0 0.0
  %1325 = vmatpush1.msra.mxu0 0.0
  %1326 = vmatprep.subr.mxu0 0.0
  %1327 = vmatpush1.msra.mxu0 0.0
  %1328 = vmatprep.subr.mxu0 0.0
  %1329 = vmatpush1.msra.mxu0 0.0
  %1330 = vmatprep.subr.mxu0 0.0
  %1331 = vmatpush1.msra.mxu0 0.0
  %1332 = vmatprep.subr.mxu0 0.0
  %1333 = vmatpush1.msra.mxu0 0.0
  %1334 = vmatprep.subr.mxu0 0.0
  %1335 = vmatpush1.msra.mxu0 0.0
  %1336 = vmatprep.subr.mxu0 0.0
  %1337 = vmatpush1.msra.mxu0 0.0
  %1338 = vmatprep.mubr.f32.mxu0 %v1106
  %1339 = vmatmul.mubr.f32.gmra.mrb[0].mxu0 %v1054
  %v1340 = vpop.f32.mrb[0].mxu0
  %v1341 = vadd.f32 %v1211, %v1340
  %v1342 = vpop.f32.mrb[0].mxu0
  %1343 = vmatprep.mubr.f32.mxu0 %v1109
  %1344 = vmatmul.mubr.f32.gmra.mrb[0].mxu0 %v1058
  %v1345 = vpop.f32.mrb[0].mxu0
  %v1346 = vadd.f32 %v1216, %v1345
  %v1347 = vpop.f32.mrb[0].mxu0
  %1348 = vmatprep.mubr.f32.mxu0 %v1112
  %1349 = vmatmul.mubr.f32.gmra.mrb[0].mxu0 %v1062
  %v1350 = vpop.f32.mrb[0].mxu0
  %v1351 = vadd.f32 %v1221, %v1350
  %v1352 = vpop.f32.mrb[0].mxu0
  %1353 = vmatprep.mubr.f32.mxu0 %v1115
  %1354 = vmatmul.mubr.f32.gmra.mrb[0].mxu0 %v1066
  %v1355 = vpop.f32.mrb[0].mxu0
  %v1356 = vadd.f32 %v1226, %v1355
  %v1357 = vpop.f32.mrb[0].mxu0
  %1358 = vmatprep.mubr.f32.mxu0 %v1118
  %1359 = vmatmul.mubr.f32.gmra.mrb[0].mxu0 %v1070
  %v1360 = vpop.f32.mrb[0].mxu0
  %v1361 = vadd.f32 %v1231, %v1360
  %v1362 = vpop.f32.mrb[0].mxu0
  %1363 = vmatprep.mubr.f32.mxu0 %v1121
  %1364 = vmatmul.mubr.f32.gmra.mrb[0].mxu0 %v1074
  %v1365 = vpop.f32.mrb[0].mxu0
  %v1366 = vadd.f32 %v1236, %v1365
  %v1367 = vpop.f32.mrb[0].mxu0
  %1368 = vmatprep.mubr.f32.mxu0 %v1124
  %1369 = vmatmul.mubr.f32.gmra.mrb[0].mxu0 %v1078
  %v1370 = vpop.f32.mrb[0].mxu0
  %v1371 = vadd.f32 %v1241, %v1370
  %v1372 = vpop.f32.mrb[0].mxu0
  %1373 = vmatprep.mubr.f32.mxu0 %v1127
  %1374 = vmatmul.mubr.f32.gmra.mrb[0].mxu0 %v1082
  %v1375 = vpop.f32.mrb[0].mxu0
  %v1376 = vadd.f32 %v1246, %v1375
  %v1377 = vpop.f32.mrb[0].mxu0
  %1378 = vmatprep.mubr.f32.mxu0 %v1130
  %1379 = vmatmul.mubr.f32.gmra.mrb[0].mxu0 %v1086
  %v1380 = vpop.f32.mrb[0].mxu0
  %v1381 = vadd.f32 %v1251, %v1380
  %v1382 = vpop.f32.mrb[0].mxu0
  %1383 = vmatprep.mubr.f32.mxu0 %v1133
  %1384 = vmatmul.mubr.f32.gmra.mrb[0].mxu0 %v1090
  %v1385 = vpop.f32.mrb[0].mxu0
  %v1386 = vadd.f32 %v1256, %v1385
  %v1387 = vpop.f32.mrb[0].mxu0
  %1388 = vmatprep.mubr.f32.mxu0 %v1136
  %1389 = vmatmul.mubr.f32.gmra.mrb[0].mxu0 %v1094
  %v1390 = vpop.f32.mrb[0].mxu0
  %v1391 = vadd.f32 %v1261, %v1390
  %v1392 = vpop.f32.mrb[0].mxu0
  %1393 = vmatprep.mubr.f32.mxu0 %v1139
  %1394 = vmatmul.mubr.f32.gmra.mrb[0].mxu0 %v1098
  %v1395 = vpop.f32.mrb[0].mxu0
  %v1396 = vadd.f32 %v1266, %v1395
  %v1397 = vpop.f32.mrb[0].mxu0
  %1398 = vmatprep.mubr.f32.mxu0 %v1142
  %1399 = vmatmul.mubr.f32.gmra.mrb[0].mxu0 %v1102
  %v1400 = vpop.f32.mrb[0].mxu0
  %v1401 = vadd.f32 %v1271, %v1400
  %v1402 = vpop.f32.mrb[0].mxu0
  %1403 = vdwg.mxu0
  %v1404 = vld [vmem:[%s3] sm:$0xf]
  %s1405 = scalar_lea.vmem %s2, 208
  %v1406 = vld [vmem:[%s1405] sm:$0xff]
  %v1407 = vld [vmem:[%s1405 + $0x8] sm:$0xff]
  %v1408 = vld [vmem:[%s1405 + $0x10] sm:$0xff]
  %v1409 = vld [vmem:[%s1405 + $0x18] sm:$0xff]
  %v1410 = vld [vmem:[%s1405 + $0x20] sm:$0xff]
  %v1411 = vld [vmem:[%s1405 + $0x28] sm:$0xff]
  %v1412 = vld [vmem:[%s1405 + $0x30] sm:$0xff]
  %v1413 = vld [vmem:[%s1405 + $0x38] sm:$0xff]
  %v1414 = vld [vmem:[%s1405 + $0x40] sm:$0xff]
  %v1415 = vld [vmem:[%s1405 + $0x48] sm:$0xff]
  %v1416 = vld [vmem:[%s1405 + $0x50] sm:$0xff]
  %v1417 = vld [vmem:[%s1405 + $0x58] sm:$0xff]
  %v1418 = vld [vmem:[%s1405 + $0x60] sm:$0xff]
  %v1419 = vld [vmem:[%s1405 + $0x68] sm:$0xff]
  %v1420 = vld [vmem:[%s1405 + $0x70] sm:$0xff]
  %v1421 = vld [vmem:[%s1405 + $0x78] sm:$0xff]
  %v1422 = vld [vmem:[%s1405 + $0x80] sm:$0xff]
  %v1423 = vld [vmem:[%s1405 + $0x88] sm:$0xff]
  %v1424 = vld [vmem:[%s1405 + $0x90] sm:$0xff]
  %v1425 = vld [vmem:[%s1405 + $0x98] sm:$0xff]
  %v1426 = vld [vmem:[%s1405 + $0xa0] sm:$0xff]
  %v1427 = vld [vmem:[%s1405 + $0xa8] sm:$0xff]
  %v1428 = vld [vmem:[%s1405 + $0xb0] sm:$0xff]
  %v1429 = vld [vmem:[%s1405 + $0xb8] sm:$0xff]
  %v1430 = vld [vmem:[%s1405 + $0xc0] sm:$0x11]
  %v1431 = vld [vmem:[%s1405 + $0xc8] sm:$0x11]
  %v1432 = vunpack.c.l.bf16 %v1406
  %v1433 = vunpack.c.h.bf16 %v1406
  %v1434 = vunpack.c.l.bf16 %v1407
  %v1435 = vunpack.c.h.bf16 %v1407
  %v1436 = vunpack.c.l.bf16 %v1408
  %v1437 = vunpack.c.h.bf16 %v1408
  %v1438 = vunpack.c.l.bf16 %v1409
  %v1439 = vunpack.c.h.bf16 %v1409
  %v1440 = vunpack.c.l.bf16 %v1410
  %v1441 = vunpack.c.h.bf16 %v1410
  %v1442 = vunpack.c.l.bf16 %v1411
  %v1443 = vunpack.c.h.bf16 %v1411
  %v1444 = vunpack.c.l.bf16 %v1412
  %v1445 = vunpack.c.h.bf16 %v1412
  %v1446 = vunpack.c.l.bf16 %v1413
  %v1447 = vunpack.c.h.bf16 %v1413
  %v1448 = vunpack.c.l.bf16 %v1414
  %v1449 = vunpack.c.h.bf16 %v1414
  %v1450 = vunpack.c.l.bf16 %v1415
  %v1451 = vunpack.c.h.bf16 %v1415
  %v1452 = vunpack.c.l.bf16 %v1416
  %v1453 = vunpack.c.h.bf16 %v1416
  %v1454 = vunpack.c.l.bf16 %v1417
  %v1455 = vunpack.c.h.bf16 %v1417
  %v1456 = vunpack.c.l.bf16 %v1418
  %v1457 = vunpack.c.h.bf16 %v1418
  %v1458 = vunpack.c.l.bf16 %v1419
  %v1459 = vunpack.c.h.bf16 %v1419
  %v1460 = vunpack.c.l.bf16 %v1420
  %v1461 = vunpack.c.h.bf16 %v1420
  %v1462 = vunpack.c.l.bf16 %v1421
  %v1463 = vunpack.c.h.bf16 %v1421
  %v1464 = vunpack.c.l.bf16 %v1422
  %v1465 = vunpack.c.h.bf16 %v1422
  %v1466 = vunpack.c.l.bf16 %v1423
  %v1467 = vunpack.c.h.bf16 %v1423
  %v1468 = vunpack.c.l.bf16 %v1424
  %v1469 = vunpack.c.h.bf16 %v1424
  %v1470 = vunpack.c.l.bf16 %v1425
  %v1471 = vunpack.c.h.bf16 %v1425
  %v1472 = vunpack.c.l.bf16 %v1426
  %v1473 = vunpack.c.h.bf16 %v1426
  %v1474 = vunpack.c.l.bf16 %v1427
  %v1475 = vunpack.c.h.bf16 %v1427
  %v1476 = vunpack.c.l.bf16 %v1428
  %v1477 = vunpack.c.h.bf16 %v1428
  %v1478 = vunpack.c.l.bf16 %v1429
  %v1479 = vunpack.c.h.bf16 %v1429
  %v1480 = vunpack.c.l.bf16 %v1430
  %v1481 = vunpack.c.h.bf16 %v1430
  %v1482 = vunpack.c.l.bf16 %v1431
  %v1483 = vunpack.c.h.bf16 %v1431
  %v1485 = vsel %vm1104, %v1435, 0
  %v1488 = vsel %vm1104, %v1439, 0
  %v1491 = vsel %vm1104, %v1443, 0
  %v1494 = vsel %vm1104, %v1447, 0
  %v1497 = vsel %vm1104, %v1451, 0
  %v1500 = vsel %vm1104, %v1455, 0
  %v1503 = vsel %vm1104, %v1459, 0
  %v1506 = vsel %vm1104, %v1463, 0
  %v1509 = vsel %vm1104, %v1467, 0
  %v1512 = vsel %vm1104, %v1471, 0
  %v1515 = vsel %vm1104, %v1475, 0
  %v1518 = vsel %vm1104, %v1479, 0
  %v1521 = vsel %vm1104, %v1483, 0
  %1523 = vmatprep.subr.mxu0 0.0
  %1524 = vmatpush1.msra.mxu0 %v977
  %1525 = vmatprep.subr.mxu0 0.0
  %1526 = vmatpush1.msra.mxu0 %v978
  %1527 = vmatprep.subr.mxu0 0.0
  %1528 = vmatpush1.msra.mxu0 %v979
  %1529 = vmatprep.subr.mxu0 0.0
  %1530 = vmatpush1.msra.mxu0 %v980
  %1531 = vmatprep.subr.mxu0 0.0
  %1532 = vmatpush1.msra.mxu0 %v981
  %1533 = vmatprep.subr.mxu0 0.0
  %1534 = vmatpush1.msra.mxu0 %v982
  %1535 = vmatprep.subr.mxu0 0.0
  %1536 = vmatpush1.msra.mxu0 %v983
  %1537 = vmatprep.subr.mxu0 0.0
  %1538 = vmatpush1.msra.mxu0 %v984
  %1539 = vmatprep.subr.mxu0 0.0
  %1540 = vmatpush1.msra.mxu0 %v985
  %1541 = vmatprep.subr.mxu0 0.0
  %1542 = vmatpush1.msra.mxu0 %v986
  %1543 = vmatprep.subr.mxu0 0.0
  %1544 = vmatpush1.msra.mxu0 %v987
  %1545 = vmatprep.subr.mxu0 0.0
  %1546 = vmatpush1.msra.mxu0 %v988
  %1547 = vmatprep.subr.mxu0 0.0
  %1548 = vmatpush1.msra.mxu0 %v989
  %1549 = vmatprep.subr.mxu0 0.0
  %1550 = vmatpush1.msra.mxu0 %v990
  %1551 = vmatprep.subr.mxu0 0.0
  %1552 = vmatpush1.msra.mxu0 %v991
  %1553 = vmatprep.subr.mxu0 0.0
  %1554 = vmatpush1.msra.mxu0 %v992
  %1555 = vmatprep.subr.mxu0 0.0
  %1556 = vmatpush1.msra.mxu0 %v993
  %1557 = vmatprep.subr.mxu0 0.0
  %1558 = vmatpush1.msra.mxu0 %v994
  %1559 = vmatprep.subr.mxu0 0.0
  %1560 = vmatpush1.msra.mxu0 %v995
  %1561 = vmatprep.subr.mxu0 0.0
  %1562 = vmatpush1.msra.mxu0 %v996
  %1563 = vmatprep.subr.mxu0 0.0
  %1564 = vmatpush1.msra.mxu0 %v997
  %1565 = vmatprep.subr.mxu0 0.0
  %1566 = vmatpush1.msra.mxu0 %v998
  %1567 = vmatprep.subr.mxu0 0.0
  %1568 = vmatpush1.msra.mxu0 %v999
  %1569 = vmatprep.subr.mxu0 0.0
  %1570 = vmatpush1.msra.mxu0 %v1000
  %1571 = vmatprep.subr.mxu0 0.0
  %1572 = vmatpush1.msra.mxu0 %v1001
  %1573 = vmatprep.subr.mxu0 0.0
  %1574 = vmatpush1.msra.mxu0 %v1002
  %1575 = vmatprep.subr.mxu0 0.0
  %1576 = vmatpush1.msra.mxu0 %v1003
  %1577 = vmatprep.subr.mxu0 0.0
  %1578 = vmatpush1.msra.mxu0 %v1004
  %1579 = vmatprep.subr.mxu0 0.0
  %1580 = vmatpush1.msra.mxu0 %v1005
  %1581 = vmatprep.subr.mxu0 0.0
  %1582 = vmatpush1.msra.mxu0 %v1006
  %1583 = vmatprep.subr.mxu0 0.0
  %1584 = vmatpush1.msra.mxu0 %v1007
  %1585 = vmatprep.subr.mxu0 0.0
  %1586 = vmatpush1.msra.mxu0 %v1008
  %1587 = vmatprep.mubr.f32.mxu0 %v1433
  %1588 = vmatmul.mubr.f32.gmra.mrb[0].mxu0 %v1432
  %v1589 = vpop.f32.mrb[0].mxu0
  %v1590 = vadd.f32 0.0, %v1589
  %v1591 = vpop.f32.mrb[0].mxu0
  %1592 = vmatprep.mubr.f32.mxu0 %v1437
  %1593 = vmatmul.mubr.f32.gmra.mrb[0].mxu0 %v1436
  %v1594 = vpop.f32.mrb[0].mxu0
  %v1595 = vadd.f32 0.0, %v1594
  %v1596 = vpop.f32.mrb[0].mxu0
  %1597 = vmatprep.mubr.f32.mxu0 %v1441
  %1598 = vmatmul.mubr.f32.gmra.mrb[0].mxu0 %v1440
  %v1599 = vpop.f32.mrb[0].mxu0
  %v1600 = vadd.f32 0.0, %v1599
  %v1601 = vpop.f32.mrb[0].mxu0
  %1602 = vmatprep.mubr.f32.mxu0 %v1445
  %1603 = vmatmul.mubr.f32.gmra.mrb[0].mxu0 %v1444
  %v1604 = vpop.f32.mrb[0].mxu0
  %v1605 = vadd.f32 0.0, %v1604
  %v1606 = vpop.f32.mrb[0].mxu0
  %1607 = vmatprep.mubr.f32.mxu0 %v1449
  %1608 = vmatmul.mubr.f32.gmra.mrb[0].mxu0 %v1448
  %v1609 = vpop.f32.mrb[0].mxu0
  %v1610 = vadd.f32 0.0, %v1609
  %v1611 = vpop.f32.mrb[0].mxu0
  %1612 = vmatprep.mubr.f32.mxu0 %v1453
  %1613 = vmatmul.mubr.f32.gmra.mrb[0].mxu0 %v1452
  %v1614 = vpop.f32.mrb[0].mxu0
  %v1615 = vadd.f32 0.0, %v1614
  %v1616 = vpop.f32.mrb[0].mxu0
  %1617 = vmatprep.mubr.f32.mxu0 %v1457
  %1618 = vmatmul.mubr.f32.gmra.mrb[0].mxu0 %v1456
  %v1619 = vpop.f32.mrb[0].mxu0
  %v1620 = vadd.f32 0.0, %v1619
  %v1621 = vpop.f32.mrb[0].mxu0
  %1622 = vmatprep.mubr.f32.mxu0 %v1461
  %1623 = vmatmul.mubr.f32.gmra.mrb[0].mxu0 %v1460
  %v1624 = vpop.f32.mrb[0].mxu0
  %v1625 = vadd.f32 0.0, %v1624
  %v1626 = vpop.f32.mrb[0].mxu0
  %1627 = vmatprep.mubr.f32.mxu0 %v1465
  %1628 = vmatmul.mubr.f32.gmra.mrb[0].mxu0 %v1464
  %v1629 = vpop.f32.mrb[0].mxu0
  %v1630 = vadd.f32 0.0, %v1629
  %v1631 = vpop.f32.mrb[0].mxu0
  %1632 = vmatprep.mubr.f32.mxu0 %v1469
  %1633 = vmatmul.mubr.f32.gmra.mrb[0].mxu0 %v1468
  %v1634 = vpop.f32.mrb[0].mxu0
  %v1635 = vadd.f32 0.0, %v1634
  %v1636 = vpop.f32.mrb[0].mxu0
  %1637 = vmatprep.mubr.f32.mxu0 %v1473
  %1638 = vmatmul.mubr.f32.gmra.mrb[0].mxu0 %v1472
  %v1639 = vpop.f32.mrb[0].mxu0
  %v1640 = vadd.f32 0.0, %v1639
  %v1641 = vpop.f32.mrb[0].mxu0
  %1642 = vmatprep.mubr.f32.mxu0 %v1477
  %1643 = vmatmul.mubr.f32.gmra.mrb[0].mxu0 %v1476
  %v1644 = vpop.f32.mrb[0].mxu0
  %v1645 = vadd.f32 0.0, %v1644
  %v1646 = vpop.f32.mrb[0].mxu0
  %1647 = vmatprep.mubr.f32.mxu0 %v1481
  %1648 = vmatmul.mubr.f32.gmra.mrb[0].mxu0 %v1480
  %v1649 = vpop.f32.mrb[0].mxu0
  %v1650 = vadd.f32 0.0, %v1649
  %v1651 = vpop.f32.mrb[0].mxu0
  %1652 = vdwg.mxu0
  %1653 = vmatprep.subr.mxu0 0.0
  %1654 = vmatpush1.msra.mxu0 %v1009
  %1655 = vmatprep.subr.mxu0 0.0
  %1656 = vmatpush1.msra.mxu0 %v1010
  %1657 = vmatprep.subr.mxu0 0.0
  %1658 = vmatpush1.msra.mxu0 %v1011
  %1659 = vmatprep.subr.mxu0 0.0
  %1660 = vmatpush1.msra.mxu0 %v1012
  %1661 = vmatprep.subr.mxu0 0.0
  %1662 = vmatpush1.msra.mxu0 %v1013
  %1663 = vmatprep.subr.mxu0 0.0
  %1664 = vmatpush1.msra.mxu0 %v1014
  %1665 = vmatprep.subr.mxu0 0.0
  %1666 = vmatpush1.msra.mxu0 %v1015
  %1667 = vmatprep.subr.mxu0 0.0
  %1668 = vmatpush1.msra.mxu0 %v1016
  %1669 = vmatprep.subr.mxu0 0.0
  %1670 = vmatpush1.msra.mxu0 %v1017
  %1671 = vmatprep.subr.mxu0 0.0
  %1672 = vmatpush1.msra.mxu0 %v1018
  %1673 = vmatprep.subr.mxu0 0.0
  %1674 = vmatpush1.msra.mxu0 %v1019
  %1675 = vmatprep.subr.mxu0 0.0
  %1676 = vmatpush1.msra.mxu0 %v1020
  %1677 = vmatprep.subr.mxu0 0.0
  %1678 = vmatpush1.msra.mxu0 %v1021
  %1679 = vmatprep.subr.mxu0 0.0
  %1680 = vmatpush1.msra.mxu0 %v1022
  %1681 = vmatprep.subr.mxu0 0.0
  %1682 = vmatpush1.msra.mxu0 %v1023
  %1683 = vmatprep.subr.mxu0 0.0
  %1684 = vmatpush1.msra.mxu0 %v1024
  %1685 = vmatprep.subr.mxu0 0.0
  %1686 = vmatpush1.msra.mxu0 %v1025
  %1687 = vmatprep.subr.mxu0 0.0
  %1688 = vmatpush1.msra.mxu0 0.0
  %1689 = vmatprep.subr.mxu0 0.0
  %1690 = vmatpush1.msra.mxu0 0.0
  %1691 = vmatprep.subr.mxu0 0.0
  %1692 = vmatpush1.msra.mxu0 0.0
  %1693 = vmatprep.subr.mxu0 0.0
  %1694 = vmatpush1.msra.mxu0 0.0
  %1695 = vmatprep.subr.mxu0 0.0
  %1696 = vmatpush1.msra.mxu0 0.0
  %1697 = vmatprep.subr.mxu0 0.0
  %1698 = vmatpush1.msra.mxu0 0.0
  %1699 = vmatprep.subr.mxu0 0.0
  %1700 = vmatpush1.msra.mxu0 0.0
  %1701 = vmatprep.subr.mxu0 0.0
  %1702 = vmatpush1.msra.mxu0 0.0
  %1703 = vmatprep.subr.mxu0 0.0
  %1704 = vmatpush1.msra.mxu0 0.0
  %1705 = vmatprep.subr.mxu0 0.0
  %1706 = vmatpush1.msra.mxu0 0.0
  %1707 = vmatprep.subr.mxu0 0.0
  %1708 = vmatpush1.msra.mxu0 0.0
  %1709 = vmatprep.subr.mxu0 0.0
  %1710 = vmatpush1.msra.mxu0 0.0
  %1711 = vmatprep.subr.mxu0 0.0
  %1712 = vmatpush1.msra.mxu0 0.0
  %1713 = vmatprep.subr.mxu0 0.0
  %1714 = vmatpush1.msra.mxu0 0.0
  %1715 = vmatprep.subr.mxu0 0.0
  %1716 = vmatpush1.msra.mxu0 0.0
  %1717 = vmatprep.mubr.f32.mxu0 %v1485
  %1718 = vmatmul.mubr.f32.gmra.mrb[0].mxu0 %v1434
  %v1719 = vpop.f32.mrb[0].mxu0
  %v1720 = vadd.f32 %v1590, %v1719
  %v1721 = vpop.f32.mrb[0].mxu0
  %1722 = vmatprep.mubr.f32.mxu0 %v1488
  %1723 = vmatmul.mubr.f32.gmra.mrb[0].mxu0 %v1438
  %v1724 = vpop.f32.mrb[0].mxu0
  %v1725 = vadd.f32 %v1595, %v1724
  %v1726 = vpop.f32.mrb[0].mxu0
  %1727 = vmatprep.mubr.f32.mxu0 %v1491
  %1728 = vmatmul.mubr.f32.gmra.mrb[0].mxu0 %v1442
  %v1729 = vpop.f32.mrb[0].mxu0
  %v1730 = vadd.f32 %v1600, %v1729
  %v1731 = vpop.f32.mrb[0].mxu0
  %1732 = vmatprep.mubr.f32.mxu0 %v1494
  %1733 = vmatmul.mubr.f32.gmra.mrb[0].mxu0 %v1446
  %v1734 = vpop.f32.mrb[0].mxu0
  %v1735 = vadd.f32 %v1605, %v1734
  %v1736 = vpop.f32.mrb[0].mxu0
  %1737 = vmatprep.mubr.f32.mxu0 %v1497
  %1738 = vmatmul.mubr.f32.gmra.mrb[0].mxu0 %v1450
  %v1739 = vpop.f32.mrb[0].mxu0
  %v1740 = vadd.f32 %v1610, %v1739
  %v1741 = vpop.f32.mrb[0].mxu0
  %1742 = vmatprep.mubr.f32.mxu0 %v1500
  %1743 = vmatmul.mubr.f32.gmra.mrb[0].mxu0 %v1454
  %v1744 = vpop.f32.mrb[0].mxu0
  %v1745 = vadd.f32 %v1615, %v1744
  %v1746 = vpop.f32.mrb[0].mxu0
  %1747 = vmatprep.mubr.f32.mxu0 %v1503
  %1748 = vmatmul.mubr.f32.gmra.mrb[0].mxu0 %v1458
  %v1749 = vpop.f32.mrb[0].mxu0
  %v1750 = vadd.f32 %v1620, %v1749
  %v1751 = vpop.f32.mrb[0].mxu0
  %1752 = vmatprep.mubr.f32.mxu0 %v1506
  %1753 = vmatmul.mubr.f32.gmra.mrb[0].mxu0 %v1462
  %v1754 = vpop.f32.mrb[0].mxu0
  %v1755 = vadd.f32 %v1625, %v1754
  %v1756 = vpop.f32.mrb[0].mxu0
  %1757 = vmatprep.mubr.f32.mxu0 %v1509
  %1758 = vmatmul.mubr.f32.gmra.mrb[0].mxu0 %v1466
  %v1759 = vpop.f32.mrb[0].mxu0
  %v1760 = vadd.f32 %v1630, %v1759
  %v1761 = vpop.f32.mrb[0].mxu0
  %1762 = vmatprep.mubr.f32.mxu0 %v1512
  %1763 = vmatmul.mubr.f32.gmra.mrb[0].mxu0 %v1470
  %v1764 = vpop.f32.mrb[0].mxu0
  %v1765 = vadd.f32 %v1635, %v1764
  %v1766 = vpop.f32.mrb[0].mxu0
  %1767 = vmatprep.mubr.f32.mxu0 %v1515
  %1768 = vmatmul.mubr.f32.gmra.mrb[0].mxu0 %v1474
  %v1769 = vpop.f32.mrb[0].mxu0
  %v1770 = vadd.f32 %v1640, %v1769
  %v1771 = vpop.f32.mrb[0].mxu0
  %1772 = vmatprep.mubr.f32.mxu0 %v1518
  %1773 = vmatmul.mubr.f32.gmra.mrb[0].mxu0 %v1478
  %v1774 = vpop.f32.mrb[0].mxu0
  %v1775 = vadd.f32 %v1645, %v1774
  %v1776 = vpop.f32.mrb[0].mxu0
  %1777 = vmatprep.mubr.f32.mxu0 %v1521
  %1778 = vmatmul.mubr.f32.gmra.mrb[0].mxu0 %v1482
  %v1779 = vpop.f32.mrb[0].mxu0
  %v1780 = vadd.f32 %v1650, %v1779
  %v1781 = vpop.f32.mrb[0].mxu0
  %1782 = vdwg.mxu0
  %s1783 = scalar_lea.vmem %s3, 4
  %v1784 = vld [vmem:[%s1783] sm:$0xf]
  %v1786 = vsel %vm601, %v1720, 0
  %v1789 = vsel %vm601, %v1725, 0
  %v1792 = vsel %vm601, %v1730, 0
  %v1795 = vsel %vm601, %v1735, 0
  %v1798 = vsel %vm601, %v1740, 0
  %v1801 = vsel %vm601, %v1745, 0
  %v1804 = vsel %vm601, %v1750, 0
  %v1807 = vsel %vm601, %v1755, 0
  %v1810 = vsel %vm601, %v1760, 0
  %v1813 = vsel %vm601, %v1765, 0
  %v1816 = vsel %vm601, %v1770, 0
  %v1819 = vsel %vm601, %v1775, 0
  %v1822 = vsel %vm601, %v1780, 0
  %vm1824 = vcmask 1043456
  %v1826 = vsel %vm1824, %v1784, 0
  %1828 = vmatprep.subr.mxu0 0.0
  %1829 = vmatpush1.msra.mxu0 %v1826
  %1830 = vmatprep.subr.mxu0 0.0
  %1831 = vmatpush1.msra.mxu0 0.0
  %1832 = vmatprep.subr.mxu0 0.0
  %1833 = vmatpush1.msra.mxu0 0.0
  %1834 = vmatprep.subr.mxu0 0.0
  %1835 = vmatpush1.msra.mxu0 0.0
  %1836 = vmatprep.subr.mxu0 0.0
  %1837 = vmatpush1.msra.mxu0 0.0
  %1838 = vmatprep.subr.mxu0 0.0
  %1839 = vmatpush1.msra.mxu0 0.0
  %1840 = vmatprep.subr.mxu0 0.0
  %1841 = vmatpush1.msra.mxu0 0.0
  %1842 = vmatprep.subr.mxu0 0.0
  %1843 = vmatpush1.msra.mxu0 0.0
  %1844 = vmatprep.subr.mxu0 0.0
  %1845 = vmatpush1.msra.mxu0 0.0
  %1846 = vmatprep.subr.mxu0 0.0
  %1847 = vmatpush1.msra.mxu0 0.0
  %1848 = vmatprep.subr.mxu0 0.0
  %1849 = vmatpush1.msra.mxu0 0.0
  %1850 = vmatprep.subr.mxu0 0.0
  %1851 = vmatpush1.msra.mxu0 0.0
  %1852 = vmatprep.subr.mxu0 0.0
  %1853 = vmatpush1.msra.mxu0 0.0
  %1854 = vmatprep.subr.mxu0 0.0
  %1855 = vmatpush1.msra.mxu0 0.0
  %1856 = vmatprep.subr.mxu0 0.0
  %1857 = vmatpush1.msra.mxu0 0.0
  %1858 = vmatprep.subr.mxu0 0.0
  %1859 = vmatpush1.msra.mxu0 0.0
  %1860 = vmatprep.subr.mxu0 0.0
  %1861 = vmatpush1.msra.mxu0 0.0
  %1862 = vmatprep.subr.mxu0 0.0
  %1863 = vmatpush1.msra.mxu0 0.0
  %1864 = vmatprep.subr.mxu0 0.0
  %1865 = vmatpush1.msra.mxu0 0.0
  %1866 = vmatprep.subr.mxu0 0.0
  %1867 = vmatpush1.msra.mxu0 0.0
  %1868 = vmatprep.subr.mxu0 0.0
  %1869 = vmatpush1.msra.mxu0 0.0
  %1870 = vmatprep.subr.mxu0 0.0
  %1871 = vmatpush1.msra.mxu0 0.0
  %1872 = vmatprep.subr.mxu0 0.0
  %1873 = vmatpush1.msra.mxu0 0.0
  %1874 = vmatprep.subr.mxu0 0.0
  %1875 = vmatpush1.msra.mxu0 0.0
  %1876 = vmatprep.subr.mxu0 0.0
  %1877 = vmatpush1.msra.mxu0 0.0
  %1878 = vmatprep.subr.mxu0 0.0
  %1879 = vmatpush1.msra.mxu0 0.0
  %1880 = vmatprep.subr.mxu0 0.0
  %1881 = vmatpush1.msra.mxu0 0.0
  %1882 = vmatprep.subr.mxu0 0.0
  %1883 = vmatpush1.msra.mxu0 0.0
  %1884 = vmatprep.subr.mxu0 0.0
  %1885 = vmatpush1.msra.mxu0 0.0
  %1886 = vmatprep.subr.mxu0 0.0
  %1887 = vmatpush1.msra.mxu0 0.0
  %1888 = vmatprep.subr.mxu0 0.0
  %1889 = vmatpush1.msra.mxu0 0.0
  %1890 = vmatprep.subr.mxu0 0.0
  %1891 = vmatpush1.msra.mxu0 0.0
  %1892 = vmatprep.mubr.f32.mxu0 0.0
  %1893 = vmatmul.mubr.f32.gmra.mrb[0].mxu0 %v1786
  %v1894 = vpop.f32.mrb[0].mxu0
  %v1895 = vadd.f32 0.0, %v1894
  %v1896 = vpop.f32.mrb[0].mxu0
  %1897 = vmatprep.mubr.f32.mxu0 0.0
  %1898 = vmatmul.mubr.f32.gmra.mrb[0].mxu0 %v1789
  %v1899 = vpop.f32.mrb[0].mxu0
  %v1900 = vadd.f32 0.0, %v1899
  %v1901 = vpop.f32.mrb[0].mxu0
  %1902 = vmatprep.mubr.f32.mxu0 0.0
  %1903 = vmatmul.mubr.f32.gmra.mrb[0].mxu0 %v1792
  %v1904 = vpop.f32.mrb[0].mxu0
  %v1905 = vadd.f32 0.0, %v1904
  %v1906 = vpop.f32.mrb[0].mxu0
  %1907 = vmatprep.mubr.f32.mxu0 0.0
  %1908 = vmatmul.mubr.f32.gmra.mrb[0].mxu0 %v1795
  %v1909 = vpop.f32.mrb[0].mxu0
  %v1910 = vadd.f32 0.0, %v1909
  %v1911 = vpop.f32.mrb[0].mxu0
  %1912 = vmatprep.mubr.f32.mxu0 0.0
  %1913 = vmatmul.mubr.f32.gmra.mrb[0].mxu0 %v1798
  %v1914 = vpop.f32.mrb[0].mxu0
  %v1915 = vadd.f32 0.0, %v1914
  %v1916 = vpop.f32.mrb[0].mxu0
  %1917 = vmatprep.mubr.f32.mxu0 0.0
  %1918 = vmatmul.mubr.f32.gmra.mrb[0].mxu0 %v1801
  %v1919 = vpop.f32.mrb[0].mxu0
  %v1920 = vadd.f32 0.0, %v1919
  %v1921 = vpop.f32.mrb[0].mxu0
  %1922 = vmatprep.mubr.f32.mxu0 0.0
  %1923 = vmatmul.mubr.f32.gmra.mrb[0].mxu0 %v1804
  %v1924 = vpop.f32.mrb[0].mxu0
  %v1925 = vadd.f32 0.0, %v1924
  %v1926 = vpop.f32.mrb[0].mxu0
  %1927 = vmatprep.mubr.f32.mxu0 0.0
  %1928 = vmatmul.mubr.f32.gmra.mrb[0].mxu0 %v1807
  %v1929 = vpop.f32.mrb[0].mxu0
  %v1930 = vadd.f32 0.0, %v1929
  %v1931 = vpop.f32.mrb[0].mxu0
  %1932 = vmatprep.mubr.f32.mxu0 0.0
  %1933 = vmatmul.mubr.f32.gmra.mrb[0].mxu0 %v1810
  %v1934 = vpop.f32.mrb[0].mxu0
  %v1935 = vadd.f32 0.0, %v1934
  %v1936 = vpop.f32.mrb[0].mxu0
  %1937 = vmatprep.mubr.f32.mxu0 0.0
  %1938 = vmatmul.mubr.f32.gmra.mrb[0].mxu0 %v1813
  %v1939 = vpop.f32.mrb[0].mxu0
  %v1940 = vadd.f32 0.0, %v1939
  %v1941 = vpop.f32.mrb[0].mxu0
  %1942 = vmatprep.mubr.f32.mxu0 0.0
  %1943 = vmatmul.mubr.f32.gmra.mrb[0].mxu0 %v1816
  %v1944 = vpop.f32.mrb[0].mxu0
  %v1945 = vadd.f32 0.0, %v1944
  %v1946 = vpop.f32.mrb[0].mxu0
  %1947 = vmatprep.mubr.f32.mxu0 0.0
  %1948 = vmatmul.mubr.f32.gmra.mrb[0].mxu0 %v1819
  %v1949 = vpop.f32.mrb[0].mxu0
  %v1950 = vadd.f32 0.0, %v1949
  %v1951 = vpop.f32.mrb[0].mxu0
  %1952 = vmatprep.mubr.f32.mxu0 0.0
  %1953 = vmatmul.mubr.f32.gmra.mrb[0].mxu0 %v1822
  %v1954 = vpop.f32.mrb[0].mxu0
  %v1955 = vadd.f32 0.0, %v1954
  %v1956 = vpop.f32.mrb[0].mxu0
  %1957 = vdwg.mxu0
  %v1959 = vsel %vm601, %v1341, 0
  %v1962 = vsel %vm601, %v1346, 0
  %v1965 = vsel %vm601, %v1351, 0
  %v1968 = vsel %vm601, %v1356, 0
  %v1971 = vsel %vm601, %v1361, 0
  %v1974 = vsel %vm601, %v1366, 0
  %v1977 = vsel %vm601, %v1371, 0
  %v1980 = vsel %vm601, %v1376, 0
  %v1983 = vsel %vm601, %v1381, 0
  %v1986 = vsel %vm601, %v1386, 0
  %v1989 = vsel %vm601, %v1391, 0
  %v1992 = vsel %vm601, %v1396, 0
  %v1995 = vsel %vm601, %v1401, 0
  %v1998 = vsel %vm1824, %v1404, 0
  %2000 = vmatprep.subr.mxu0 0.0
  %2001 = vmatpush1.msra.mxu0 %v1998
  %2002 = vmatprep.subr.mxu0 0.0
  %2003 = vmatpush1.msra.mxu0 0.0
  %2004 = vmatprep.subr.mxu0 0.0
  %2005 = vmatpush1.msra.mxu0 0.0
  %2006 = vmatprep.subr.mxu0 0.0
  %2007 = vmatpush1.msra.mxu0 0.0
  %2008 = vmatprep.subr.mxu0 0.0
  %2009 = vmatpush1.msra.mxu0 0.0
  %2010 = vmatprep.subr.mxu0 0.0
  %2011 = vmatpush1.msra.mxu0 0.0
  %2012 = vmatprep.subr.mxu0 0.0
  %2013 = vmatpush1.msra.mxu0 0.0
  %2014 = vmatprep.subr.mxu0 0.0
  %2015 = vmatpush1.msra.mxu0 0.0
  %2016 = vmatprep.subr.mxu0 0.0
  %2017 = vmatpush1.msra.mxu0 0.0
  %2018 = vmatprep.subr.mxu0 0.0
  %2019 = vmatpush1.msra.mxu0 0.0
  %2020 = vmatprep.subr.mxu0 0.0
  %2021 = vmatpush1.msra.mxu0 0.0
  %2022 = vmatprep.subr.mxu0 0.0
  %2023 = vmatpush1.msra.mxu0 0.0
  %2024 = vmatprep.subr.mxu0 0.0
  %2025 = vmatpush1.msra.mxu0 0.0
  %2026 = vmatprep.subr.mxu0 0.0
  %2027 = vmatpush1.msra.mxu0 0.0
  %2028 = vmatprep.subr.mxu0 0.0
  %2029 = vmatpush1.msra.mxu0 0.0
  %2030 = vmatprep.subr.mxu0 0.0
  %2031 = vmatpush1.msra.mxu0 0.0
  %2032 = vmatprep.subr.mxu0 0.0
  %2033 = vmatpush1.msra.mxu0 0.0
  %2034 = vmatprep.subr.mxu0 0.0
  %2035 = vmatpush1.msra.mxu0 0.0
  %2036 = vmatprep.subr.mxu0 0.0
  %2037 = vmatpush1.msra.mxu0 0.0
  %2038 = vmatprep.subr.mxu0 0.0
  %2039 = vmatpush1.msra.mxu0 0.0
  %2040 = vmatprep.subr.mxu0 0.0
  %2041 = vmatpush1.msra.mxu0 0.0
  %2042 = vmatprep.subr.mxu0 0.0
  %2043 = vmatpush1.msra.mxu0 0.0
  %2044 = vmatprep.subr.mxu0 0.0
  %2045 = vmatpush1.msra.mxu0 0.0
  %2046 = vmatprep.subr.mxu0 0.0
  %2047 = vmatpush1.msra.mxu0 0.0
  %2048 = vmatprep.subr.mxu0 0.0
  %2049 = vmatpush1.msra.mxu0 0.0
  %2050 = vmatprep.subr.mxu0 0.0
  %2051 = vmatpush1.msra.mxu0 0.0
  %2052 = vmatprep.subr.mxu0 0.0
  %2053 = vmatpush1.msra.mxu0 0.0
  %2054 = vmatprep.subr.mxu0 0.0
  %2055 = vmatpush1.msra.mxu0 0.0
  %2056 = vmatprep.subr.mxu0 0.0
  %2057 = vmatpush1.msra.mxu0 0.0
  %2058 = vmatprep.subr.mxu0 0.0
  %2059 = vmatpush1.msra.mxu0 0.0
  %2060 = vmatprep.subr.mxu0 0.0
  %2061 = vmatpush1.msra.mxu0 0.0
  %2062 = vmatprep.subr.mxu0 0.0
  %2063 = vmatpush1.msra.mxu0 0.0
  %2064 = vmatprep.mubr.f32.mxu0 0.0
  %2065 = vmatmul.mubr.f32.gmra.mrb[0].mxu0 %v1959
  %v2066 = vpop.f32.mrb[0].mxu0
  %v2067 = vadd.f32 %v1895, %v2066
  %v2068 = vpop.f32.mrb[0].mxu0
  %2069 = vmatprep.mubr.f32.mxu0 0.0
  %2070 = vmatmul.mubr.f32.gmra.mrb[0].mxu0 %v1962
  %v2071 = vpop.f32.mrb[0].mxu0
  %v2072 = vadd.f32 %v1900, %v2071
  %v2073 = vpop.f32.mrb[0].mxu0
  %2074 = vmatprep.mubr.f32.mxu0 0.0
  %2075 = vmatmul.mubr.f32.gmra.mrb[0].mxu0 %v1965
  %v2076 = vpop.f32.mrb[0].mxu0
  %v2077 = vadd.f32 %v1905, %v2076
  %v2078 = vpop.f32.mrb[0].mxu0
  %2079 = vmatprep.mubr.f32.mxu0 0.0
  %2080 = vmatmul.mubr.f32.gmra.mrb[0].mxu0 %v1968
  %v2081 = vpop.f32.mrb[0].mxu0
  %v2082 = vadd.f32 %v1910, %v2081
  %v2083 = vpop.f32.mrb[0].mxu0
  %2084 = vmatprep.mubr.f32.mxu0 0.0
  %2085 = vmatmul.mubr.f32.gmra.mrb[0].mxu0 %v1971
  %v2086 = vpop.f32.mrb[0].mxu0
  %v2087 = vadd.f32 %v1915, %v2086
  %v2088 = vpop.f32.mrb[0].mxu0
  %2089 = vmatprep.mubr.f32.mxu0 0.0
  %2090 = vmatmul.mubr.f32.gmra.mrb[0].mxu0 %v1974
  %v2091 = vpop.f32.mrb[0].mxu0
  %v2092 = vadd.f32 %v1920, %v2091
  %v2093 = vpop.f32.mrb[0].mxu0
  %2094 = vmatprep.mubr.f32.mxu0 0.0
  %2095 = vmatmul.mubr.f32.gmra.mrb[0].mxu0 %v1977
  %v2096 = vpop.f32.mrb[0].mxu0
  %v2097 = vadd.f32 %v1925, %v2096
  %v2098 = vpop.f32.mrb[0].mxu0
  %2099 = vmatprep.mubr.f32.mxu0 0.0
  %2100 = vmatmul.mubr.f32.gmra.mrb[0].mxu0 %v1980
  %v2101 = vpop.f32.mrb[0].mxu0
  %v2102 = vadd.f32 %v1930, %v2101
  %v2103 = vpop.f32.mrb[0].mxu0
  %2104 = vmatprep.mubr.f32.mxu0 0.0
  %2105 = vmatmul.mubr.f32.gmra.mrb[0].mxu0 %v1983
  %v2106 = vpop.f32.mrb[0].mxu0
  %v2107 = vadd.f32 %v1935, %v2106
  %v2108 = vpop.f32.mrb[0].mxu0
  %2109 = vmatprep.mubr.f32.mxu0 0.0
  %2110 = vmatmul.mubr.f32.gmra.mrb[0].mxu0 %v1986
  %v2111 = vpop.f32.mrb[0].mxu0
  %v2112 = vadd.f32 %v1940, %v2111
  %v2113 = vpop.f32.mrb[0].mxu0
  %2114 = vmatprep.mubr.f32.mxu0 0.0
  %2115 = vmatmul.mubr.f32.gmra.mrb[0].mxu0 %v1989
  %v2116 = vpop.f32.mrb[0].mxu0
  %v2117 = vadd.f32 %v1945, %v2116
  %v2118 = vpop.f32.mrb[0].mxu0
  %2119 = vmatprep.mubr.f32.mxu0 0.0
  %2120 = vmatmul.mubr.f32.gmra.mrb[0].mxu0 %v1992
  %v2121 = vpop.f32.mrb[0].mxu0
  %v2122 = vadd.f32 %v1950, %v2121
  %v2123 = vpop.f32.mrb[0].mxu0
  %2124 = vmatprep.mubr.f32.mxu0 0.0
  %2125 = vmatmul.mubr.f32.gmra.mrb[0].mxu0 %v1995
  %v2126 = vpop.f32.mrb[0].mxu0
  %v2127 = vadd.f32 %v1955, %v2126
  %v2128 = vpop.f32.mrb[0].mxu0
  %2129 = vdwg.mxu0
  %s2130 = scalar_lea.vmem %s2, 416
  %v2131 = vld [vmem:[%s2130] sm:$0xff]
  %v2132 = vld [vmem:[%s2130 + $0x8] sm:$0xff]
  %v2133 = vld [vmem:[%s2130 + $0x10] sm:$0xff]
  %v2134 = vld [vmem:[%s2130 + $0x18] sm:$0xff]
  %v2135 = vld [vmem:[%s2130 + $0x20] sm:$0xff]
  %v2136 = vld [vmem:[%s2130 + $0x28] sm:$0xff]
  %v2137 = vld [vmem:[%s2130 + $0x30] sm:$0xff]
  %v2138 = vld [vmem:[%s2130 + $0x38] sm:$0xff]
  %v2139 = vld [vmem:[%s2130 + $0x40] sm:$0xff]
  %v2140 = vld [vmem:[%s2130 + $0x48] sm:$0xff]
  %v2141 = vld [vmem:[%s2130 + $0x50] sm:$0xff]
  %v2142 = vld [vmem:[%s2130 + $0x58] sm:$0xff]
  %v2143 = vld [vmem:[%s2130 + $0x60] sm:$0xff]
  %v2144 = vld [vmem:[%s2130 + $0x68] sm:$0xff]
  %v2145 = vld [vmem:[%s2130 + $0x70] sm:$0xff]
  %v2146 = vld [vmem:[%s2130 + $0x78] sm:$0xff]
  %v2147 = vld [vmem:[%s2130 + $0x80] sm:$0xff]
  %v2148 = vld [vmem:[%s2130 + $0x88] sm:$0xff]
  %v2149 = vld [vmem:[%s2130 + $0x90] sm:$0xff]
  %v2150 = vld [vmem:[%s2130 + $0x98] sm:$0xff]
  %v2151 = vld [vmem:[%s2130 + $0xa0] sm:$0xff]
  %v2152 = vld [vmem:[%s2130 + $0xa8] sm:$0xff]
  %v2153 = vld [vmem:[%s2130 + $0xb0] sm:$0xff]
  %v2154 = vld [vmem:[%s2130 + $0xb8] sm:$0xff]
  %v2155 = vld [vmem:[%s2130 + $0xc0] sm:$0x11]
  %v2156 = vld [vmem:[%s2130 + $0xc8] sm:$0x11]
  %v2157 = vunpack.c.l.bf16 %v2131
  %v2158 = vunpack.c.h.bf16 %v2131
  %v2159 = vunpack.c.l.bf16 %v2132
  %v2160 = vunpack.c.h.bf16 %v2132
  %v2161 = vunpack.c.l.bf16 %v2133
  %v2162 = vunpack.c.h.bf16 %v2133
  %v2163 = vunpack.c.l.bf16 %v2134
  %v2164 = vunpack.c.h.bf16 %v2134
  %v2165 = vunpack.c.l.bf16 %v2135
  %v2166 = vunpack.c.h.bf16 %v2135
  %v2167 = vunpack.c.l.bf16 %v2136
  %v2168 = vunpack.c.h.bf16 %v2136
  %v2169 = vunpack.c.l.bf16 %v2137
  %v2170 = vunpack.c.h.bf16 %v2137
  %v2171 = vunpack.c.l.bf16 %v2138
  %v2172 = vunpack.c.h.bf16 %v2138
  %v2173 = vunpack.c.l.bf16 %v2139
  %v2174 = vunpack.c.h.bf16 %v2139
  %v2175 = vunpack.c.l.bf16 %v2140
  %v2176 = vunpack.c.h.bf16 %v2140
  %v2177 = vunpack.c.l.bf16 %v2141
  %v2178 = vunpack.c.h.bf16 %v2141
  %v2179 = vunpack.c.l.bf16 %v2142
  %v2180 = vunpack.c.h.bf16 %v2142
  %v2181 = vunpack.c.l.bf16 %v2143
  %v2182 = vunpack.c.h.bf16 %v2143
  %v2183 = vunpack.c.l.bf16 %v2144
  %v2184 = vunpack.c.h.bf16 %v2144
  %v2185 = vunpack.c.l.bf16 %v2145
  %v2186 = vunpack.c.h.bf16 %v2145
  %v2187 = vunpack.c.l.bf16 %v2146
  %v2188 = vunpack.c.h.bf16 %v2146
  %v2189 = vunpack.c.l.bf16 %v2147
  %v2190 = vunpack.c.h.bf16 %v2147
  %v2191 = vunpack.c.l.bf16 %v2148
  %v2192 = vunpack.c.h.bf16 %v2148
  %v2193 = vunpack.c.l.bf16 %v2149
  %v2194 = vunpack.c.h.bf16 %v2149
  %v2195 = vunpack.c.l.bf16 %v2150
  %v2196 = vunpack.c.h.bf16 %v2150
  %v2197 = vunpack.c.l.bf16 %v2151
  %v2198 = vunpack.c.h.bf16 %v2151
  %v2199 = vunpack.c.l.bf16 %v2152
  %v2200 = vunpack.c.h.bf16 %v2152
  %v2201 = vunpack.c.l.bf16 %v2153
  %v2202 = vunpack.c.h.bf16 %v2153
  %v2203 = vunpack.c.l.bf16 %v2154
  %v2204 = vunpack.c.h.bf16 %v2154
  %v2205 = vunpack.c.l.bf16 %v2155
  %v2206 = vunpack.c.h.bf16 %v2155
  %v2207 = vunpack.c.l.bf16 %v2156
  %v2208 = vunpack.c.h.bf16 %v2156
  %v2210 = vsel %vm1104, %v2160, 0
  %v2213 = vsel %vm1104, %v2164, 0
  %v2216 = vsel %vm1104, %v2168, 0
  %v2219 = vsel %vm1104, %v2172, 0
  %v2222 = vsel %vm1104, %v2176, 0
  %v2225 = vsel %vm1104, %v2180, 0
  %v2228 = vsel %vm1104, %v2184, 0
  %v2231 = vsel %vm1104, %v2188, 0
  %v2234 = vsel %vm1104, %v2192, 0
  %v2237 = vsel %vm1104, %v2196, 0
  %v2240 = vsel %vm1104, %v2200, 0
  %v2243 = vsel %vm1104, %v2204, 0
  %v2246 = vsel %vm1104, %v2208, 0
  %2248 = vmatprep.subr.mxu0 0.0
  %2249 = vmatpush1.msra.mxu0 %v977
  %2250 = vmatprep.subr.mxu0 0.0
  %2251 = vmatpush1.msra.mxu0 %v978
  %2252 = vmatprep.subr.mxu0 0.0
  %2253 = vmatpush1.msra.mxu0 %v979
  %2254 = vmatprep.subr.mxu0 0.0
  %2255 = vmatpush1.msra.mxu0 %v980
  %2256 = vmatprep.subr.mxu0 0.0
  %2257 = vmatpush1.msra.mxu0 %v981
  %2258 = vmatprep.subr.mxu0 0.0
  %2259 = vmatpush1.msra.mxu0 %v982
  %2260 = vmatprep.subr.mxu0 0.0
  %2261 = vmatpush1.msra.mxu0 %v983
  %2262 = vmatprep.subr.mxu0 0.0
  %2263 = vmatpush1.msra.mxu0 %v984
  %2264 = vmatprep.subr.mxu0 0.0
  %2265 = vmatpush1.msra.mxu0 %v985
  %2266 = vmatprep.subr.mxu0 0.0
  %2267 = vmatpush1.msra.mxu0 %v986
  %2268 = vmatprep.subr.mxu0 0.0
  %2269 = vmatpush1.msra.mxu0 %v987
  %2270 = vmatprep.subr.mxu0 0.0
  %2271 = vmatpush1.msra.mxu0 %v988
  %2272 = vmatprep.subr.mxu0 0.0
  %2273 = vmatpush1.msra.mxu0 %v989
  %2274 = vmatprep.subr.mxu0 0.0
  %2275 = vmatpush1.msra.mxu0 %v990
  %2276 = vmatprep.subr.mxu0 0.0
  %2277 = vmatpush1.msra.mxu0 %v991
  %2278 = vmatprep.subr.mxu0 0.0
  %2279 = vmatpush1.msra.mxu0 %v992
  %2280 = vmatprep.subr.mxu0 0.0
  %2281 = vmatpush1.msra.mxu0 %v993
  %2282 = vmatprep.subr.mxu0 0.0
  %2283 = vmatpush1.msra.mxu0 %v994
  %2284 = vmatprep.subr.mxu0 0.0
  %2285 = vmatpush1.msra.mxu0 %v995
  %2286 = vmatprep.subr.mxu0 0.0
  %2287 = vmatpush1.msra.mxu0 %v996
  %2288 = vmatprep.subr.mxu0 0.0
  %2289 = vmatpush1.msra.mxu0 %v997
  %2290 = vmatprep.subr.mxu0 0.0
  %2291 = vmatpush1.msra.mxu0 %v998
  %2292 = vmatprep.subr.mxu0 0.0
  %2293 = vmatpush1.msra.mxu0 %v999
  %2294 = vmatprep.subr.mxu0 0.0
  %2295 = vmatpush1.msra.mxu0 %v1000
  %2296 = vmatprep.subr.mxu0 0.0
  %2297 = vmatpush1.msra.mxu0 %v1001
  %2298 = vmatprep.subr.mxu0 0.0
  %2299 = vmatpush1.msra.mxu0 %v1002
  %2300 = vmatprep.subr.mxu0 0.0
  %2301 = vmatpush1.msra.mxu0 %v1003
  %2302 = vmatprep.subr.mxu0 0.0
  %2303 = vmatpush1.msra.mxu0 %v1004
  %2304 = vmatprep.subr.mxu0 0.0
  %2305 = vmatpush1.msra.mxu0 %v1005
  %2306 = vmatprep.subr.mxu0 0.0
  %2307 = vmatpush1.msra.mxu0 %v1006
  %2308 = vmatprep.subr.mxu0 0.0
  %2309 = vmatpush1.msra.mxu0 %v1007
  %2310 = vmatprep.subr.mxu0 0.0
  %2311 = vmatpush1.msra.mxu0 %v1008
  %2312 = vmatprep.mubr.f32.mxu0 %v2158
  %2313 = vmatmul.mubr.f32.gmra.mrb[0].mxu0 %v2157
  %v2314 = vpop.f32.mrb[0].mxu0
  %v2315 = vadd.f32 0.0, %v2314
  %v2316 = vpop.f32.mrb[0].mxu0
  %2317 = vmatprep.mubr.f32.mxu0 %v2162
  %2318 = vmatmul.mubr.f32.gmra.mrb[0].mxu0 %v2161
  %v2319 = vpop.f32.mrb[0].mxu0
  %v2320 = vadd.f32 0.0, %v2319
  %v2321 = vpop.f32.mrb[0].mxu0
  %2322 = vmatprep.mubr.f32.mxu0 %v2166
  %2323 = vmatmul.mubr.f32.gmra.mrb[0].mxu0 %v2165
  %v2324 = vpop.f32.mrb[0].mxu0
  %v2325 = vadd.f32 0.0, %v2324
  %v2326 = vpop.f32.mrb[0].mxu0
  %2327 = vmatprep.mubr.f32.mxu0 %v2170
  %2328 = vmatmul.mubr.f32.gmra.mrb[0].mxu0 %v2169
  %v2329 = vpop.f32.mrb[0].mxu0
  %v2330 = vadd.f32 0.0, %v2329
  %v2331 = vpop.f32.mrb[0].mxu0
  %2332 = vmatprep.mubr.f32.mxu0 %v2174
  %2333 = vmatmul.mubr.f32.gmra.mrb[0].mxu0 %v2173
  %v2334 = vpop.f32.mrb[0].mxu0
  %v2335 = vadd.f32 0.0, %v2334
  %v2336 = vpop.f32.mrb[0].mxu0
  %2337 = vmatprep.mubr.f32.mxu0 %v2178
  %2338 = vmatmul.mubr.f32.gmra.mrb[0].mxu0 %v2177
  %v2339 = vpop.f32.mrb[0].mxu0
  %v2340 = vadd.f32 0.0, %v2339
  %v2341 = vpop.f32.mrb[0].mxu0
  %2342 = vmatprep.mubr.f32.mxu0 %v2182
  %2343 = vmatmul.mubr.f32.gmra.mrb[0].mxu0 %v2181
  %v2344 = vpop.f32.mrb[0].mxu0
  %v2345 = vadd.f32 0.0, %v2344
  %v2346 = vpop.f32.mrb[0].mxu0
  %2347 = vmatprep.mubr.f32.mxu0 %v2186
  %2348 = vmatmul.mubr.f32.gmra.mrb[0].mxu0 %v2185
  %v2349 = vpop.f32.mrb[0].mxu0
  %v2350 = vadd.f32 0.0, %v2349
  %v2351 = vpop.f32.mrb[0].mxu0
  %2352 = vmatprep.mubr.f32.mxu0 %v2190
  %2353 = vmatmul.mubr.f32.gmra.mrb[0].mxu0 %v2189
  %v2354 = vpop.f32.mrb[0].mxu0
  %v2355 = vadd.f32 0.0, %v2354
  %v2356 = vpop.f32.mrb[0].mxu0
  %2357 = vmatprep.mubr.f32.mxu0 %v2194
  %2358 = vmatmul.mubr.f32.gmra.mrb[0].mxu0 %v2193
  %v2359 = vpop.f32.mrb[0].mxu0
  %v2360 = vadd.f32 0.0, %v2359
  %v2361 = vpop.f32.mrb[0].mxu0
  %2362 = vmatprep.mubr.f32.mxu0 %v2198
  %2363 = vmatmul.mubr.f32.gmra.mrb[0].mxu0 %v2197
  %v2364 = vpop.f32.mrb[0].mxu0
  %v2365 = vadd.f32 0.0, %v2364
  %v2366 = vpop.f32.mrb[0].mxu0
  %2367 = vmatprep.mubr.f32.mxu0 %v2202
  %2368 = vmatmul.mubr.f32.gmra.mrb[0].mxu0 %v2201
  %v2369 = vpop.f32.mrb[0].mxu0
  %v2370 = vadd.f32 0.0, %v2369
  %v2371 = vpop.f32.mrb[0].mxu0
  %2372 = vmatprep.mubr.f32.mxu0 %v2206
  %2373 = vmatmul.mubr.f32.gmra.mrb[0].mxu0 %v2205
  %v2374 = vpop.f32.mrb[0].mxu0
  %v2375 = vadd.f32 0.0, %v2374
  %v2376 = vpop.f32.mrb[0].mxu0
  %2377 = vdwg.mxu0
  %2378 = vmatprep.subr.mxu0 0.0
  %2379 = vmatpush1.msra.mxu0 %v1009
  %2380 = vmatprep.subr.mxu0 0.0
  %2381 = vmatpush1.msra.mxu0 %v1010
  %2382 = vmatprep.subr.mxu0 0.0
  %2383 = vmatpush1.msra.mxu0 %v1011
  %2384 = vmatprep.subr.mxu0 0.0
  %2385 = vmatpush1.msra.mxu0 %v1012
  %2386 = vmatprep.subr.mxu0 0.0
  %2387 = vmatpush1.msra.mxu0 %v1013
  %2388 = vmatprep.subr.mxu0 0.0
  %2389 = vmatpush1.msra.mxu0 %v1014
  %2390 = vmatprep.subr.mxu0 0.0
  %2391 = vmatpush1.msra.mxu0 %v1015
  %2392 = vmatprep.subr.mxu0 0.0
  %2393 = vmatpush1.msra.mxu0 %v1016
  %2394 = vmatprep.subr.mxu0 0.0
  %2395 = vmatpush1.msra.mxu0 %v1017
  %2396 = vmatprep.subr.mxu0 0.0
  %2397 = vmatpush1.msra.mxu0 %v1018
  %2398 = vmatprep.subr.mxu0 0.0
  %2399 = vmatpush1.msra.mxu0 %v1019
  %2400 = vmatprep.subr.mxu0 0.0
  %2401 = vmatpush1.msra.mxu0 %v1020
  %2402 = vmatprep.subr.mxu0 0.0
  %2403 = vmatpush1.msra.mxu0 %v1021
  %2404 = vmatprep.subr.mxu0 0.0
  %2405 = vmatpush1.msra.mxu0 %v1022
  %2406 = vmatprep.subr.mxu0 0.0
  %2407 = vmatpush1.msra.mxu0 %v1023
  %2408 = vmatprep.subr.mxu0 0.0
  %2409 = vmatpush1.msra.mxu0 %v1024
  %2410 = vmatprep.subr.mxu0 0.0
  %2411 = vmatpush1.msra.mxu0 %v1025
  %2412 = vmatprep.subr.mxu0 0.0
  %2413 = vmatpush1.msra.mxu0 0.0
  %2414 = vmatprep.subr.mxu0 0.0
  %2415 = vmatpush1.msra.mxu0 0.0
  %2416 = vmatprep.subr.mxu0 0.0
  %2417 = vmatpush1.msra.mxu0 0.0
  %2418 = vmatprep.subr.mxu0 0.0
  %2419 = vmatpush1.msra.mxu0 0.0
  %2420 = vmatprep.subr.mxu0 0.0
  %2421 = vmatpush1.msra.mxu0 0.0
  %2422 = vmatprep.subr.mxu0 0.0
  %2423 = vmatpush1.msra.mxu0 0.0
  %2424 = vmatprep.subr.mxu0 0.0
  %2425 = vmatpush1.msra.mxu0 0.0
  %2426 = vmatprep.subr.mxu0 0.0
  %2427 = vmatpush1.msra.mxu0 0.0
  %2428 = vmatprep.subr.mxu0 0.0
  %2429 = vmatpush1.msra.mxu0 0.0
  %2430 = vmatprep.subr.mxu0 0.0
  %2431 = vmatpush1.msra.mxu0 0.0
  %2432 = vmatprep.subr.mxu0 0.0
  %2433 = vmatpush1.msra.mxu0 0.0
  %2434 = vmatprep.subr.mxu0 0.0
  %2435 = vmatpush1.msra.mxu0 0.0
  %2436 = vmatprep.subr.mxu0 0.0
  %2437 = vmatpush1.msra.mxu0 0.0
  %2438 = vmatprep.subr.mxu0 0.0
  %2439 = vmatpush1.msra.mxu0 0.0
  %2440 = vmatprep.subr.mxu0 0.0
  %2441 = vmatpush1.msra.mxu0 0.0
  %2442 = vmatprep.mubr.f32.mxu0 %v2210
  %2443 = vmatmul.mubr.f32.gmra.mrb[0].mxu0 %v2159
  %v2444 = vpop.f32.mrb[0].mxu0
  %v2445 = vadd.f32 %v2315, %v2444
  %v2446 = vpop.f32.mrb[0].mxu0
  %2447 = vmatprep.mubr.f32.mxu0 %v2213
  %2448 = vmatmul.mubr.f32.gmra.mrb[0].mxu0 %v2163
  %v2449 = vpop.f32.mrb[0].mxu0
  %v2450 = vadd.f32 %v2320, %v2449
  %v2451 = vpop.f32.mrb[0].mxu0
  %2452 = vmatprep.mubr.f32.mxu0 %v2216
  %2453 = vmatmul.mubr.f32.gmra.mrb[0].mxu0 %v2167
  %v2454 = vpop.f32.mrb[0].mxu0
  %v2455 = vadd.f32 %v2325, %v2454
  %v2456 = vpop.f32.mrb[0].mxu0
  %2457 = vmatprep.mubr.f32.mxu0 %v2219
  %2458 = vmatmul.mubr.f32.gmra.mrb[0].mxu0 %v2171
  %v2459 = vpop.f32.mrb[0].mxu0
  %v2460 = vadd.f32 %v2330, %v2459
  %v2461 = vpop.f32.mrb[0].mxu0
  %2462 = vmatprep.mubr.f32.mxu0 %v2222
  %2463 = vmatmul.mubr.f32.gmra.mrb[0].mxu0 %v2175
  %v2464 = vpop.f32.mrb[0].mxu0
  %v2465 = vadd.f32 %v2335, %v2464
  %v2466 = vpop.f32.mrb[0].mxu0
  %2467 = vmatprep.mubr.f32.mxu0 %v2225
  %2468 = vmatmul.mubr.f32.gmra.mrb[0].mxu0 %v2179
  %v2469 = vpop.f32.mrb[0].mxu0
  %v2470 = vadd.f32 %v2340, %v2469
  %v2471 = vpop.f32.mrb[0].mxu0
  %2472 = vmatprep.mubr.f32.mxu0 %v2228
  %2473 = vmatmul.mubr.f32.gmra.mrb[0].mxu0 %v2183
  %v2474 = vpop.f32.mrb[0].mxu0
  %v2475 = vadd.f32 %v2345, %v2474
  %v2476 = vpop.f32.mrb[0].mxu0
  %2477 = vmatprep.mubr.f32.mxu0 %v2231
  %2478 = vmatmul.mubr.f32.gmra.mrb[0].mxu0 %v2187
  %v2479 = vpop.f32.mrb[0].mxu0
  %v2480 = vadd.f32 %v2350, %v2479
  %v2481 = vpop.f32.mrb[0].mxu0
  %2482 = vmatprep.mubr.f32.mxu0 %v2234
  %2483 = vmatmul.mubr.f32.gmra.mrb[0].mxu0 %v2191
  %v2484 = vpop.f32.mrb[0].mxu0
  %v2485 = vadd.f32 %v2355, %v2484
  %v2486 = vpop.f32.mrb[0].mxu0
  %2487 = vmatprep.mubr.f32.mxu0 %v2237
  %2488 = vmatmul.mubr.f32.gmra.mrb[0].mxu0 %v2195
  %v2489 = vpop.f32.mrb[0].mxu0
  %v2490 = vadd.f32 %v2360, %v2489
  %v2491 = vpop.f32.mrb[0].mxu0
  %2492 = vmatprep.mubr.f32.mxu0 %v2240
  %2493 = vmatmul.mubr.f32.gmra.mrb[0].mxu0 %v2199
  %v2494 = vpop.f32.mrb[0].mxu0
  %v2495 = vadd.f32 %v2365, %v2494
  %v2496 = vpop.f32.mrb[0].mxu0
  %2497 = vmatprep.mubr.f32.mxu0 %v2243
  %2498 = vmatmul.mubr.f32.gmra.mrb[0].mxu0 %v2203
  %v2499 = vpop.f32.mrb[0].mxu0
  %v2500 = vadd.f32 %v2370, %v2499
  %v2501 = vpop.f32.mrb[0].mxu0
  %2502 = vmatprep.mubr.f32.mxu0 %v2246
  %2503 = vmatmul.mubr.f32.gmra.mrb[0].mxu0 %v2207
  %v2504 = vpop.f32.mrb[0].mxu0
  %v2505 = vadd.f32 %v2375, %v2504
  %v2506 = vpop.f32.mrb[0].mxu0
  %2507 = vdwg.mxu0
  %s2508 = scalar_lea.vmem %s3, 8
  %v2509 = vld [vmem:[%s2508] sm:$0xf]
  %v2511 = vsel %vm601, %v2445, 0
  %v2514 = vsel %vm601, %v2450, 0
  %v2517 = vsel %vm601, %v2455, 0
  %v2520 = vsel %vm601, %v2460, 0
  %v2523 = vsel %vm601, %v2465, 0
  %v2526 = vsel %vm601, %v2470, 0
  %v2529 = vsel %vm601, %v2475, 0
  %v2532 = vsel %vm601, %v2480, 0
  %v2535 = vsel %vm601, %v2485, 0
  %v2538 = vsel %vm601, %v2490, 0
  %v2541 = vsel %vm601, %v2495, 0
  %v2544 = vsel %vm601, %v2500, 0
  %v2547 = vsel %vm601, %v2505, 0
  %v2550 = vsel %vm1824, %v2509, 0
  %2552 = vmatprep.subr.mxu0 0.0
  %2553 = vmatpush1.msra.mxu0 %v2550
  %2554 = vmatprep.subr.mxu0 0.0
  %2555 = vmatpush1.msra.mxu0 0.0
  %2556 = vmatprep.subr.mxu0 0.0
  %2557 = vmatpush1.msra.mxu0 0.0
  %2558 = vmatprep.subr.mxu0 0.0
  %2559 = vmatpush1.msra.mxu0 0.0
  %2560 = vmatprep.subr.mxu0 0.0
  %2561 = vmatpush1.msra.mxu0 0.0
  %2562 = vmatprep.subr.mxu0 0.0
  %2563 = vmatpush1.msra.mxu0 0.0
  %2564 = vmatprep.subr.mxu0 0.0
  %2565 = vmatpush1.msra.mxu0 0.0
  %2566 = vmatprep.subr.mxu0 0.0
  %2567 = vmatpush1.msra.mxu0 0.0
  %2568 = vmatprep.subr.mxu0 0.0
  %2569 = vmatpush1.msra.mxu0 0.0
  %2570 = vmatprep.subr.mxu0 0.0
  %2571 = vmatpush1.msra.mxu0 0.0
  %2572 = vmatprep.subr.mxu0 0.0
  %2573 = vmatpush1.msra.mxu0 0.0
  %2574 = vmatprep.subr.mxu0 0.0
  %2575 = vmatpush1.msra.mxu0 0.0
  %2576 = vmatprep.subr.mxu0 0.0
  %2577 = vmatpush1.msra.mxu0 0.0
  %2578 = vmatprep.subr.mxu0 0.0
  %2579 = vmatpush1.msra.mxu0 0.0
  %2580 = vmatprep.subr.mxu0 0.0
  %2581 = vmatpush1.msra.mxu0 0.0
  %2582 = vmatprep.subr.mxu0 0.0
  %2583 = vmatpush1.msra.mxu0 0.0
  %2584 = vmatprep.subr.mxu0 0.0
  %2585 = vmatpush1.msra.mxu0 0.0
  %2586 = vmatprep.subr.mxu0 0.0
  %2587 = vmatpush1.msra.mxu0 0.0
  %2588 = vmatprep.subr.mxu0 0.0
  %2589 = vmatpush1.msra.mxu0 0.0
  %2590 = vmatprep.subr.mxu0 0.0
  %2591 = vmatpush1.msra.mxu0 0.0
  %2592 = vmatprep.subr.mxu0 0.0
  %2593 = vmatpush1.msra.mxu0 0.0
  %2594 = vmatprep.subr.mxu0 0.0
  %2595 = vmatpush1.msra.mxu0 0.0
  %2596 = vmatprep.subr.mxu0 0.0
  %2597 = vmatpush1.msra.mxu0 0.0
  %2598 = vmatprep.subr.mxu0 0.0
  %2599 = vmatpush1.msra.mxu0 0.0
  %2600 = vmatprep.subr.mxu0 0.0
  %2601 = vmatpush1.msra.mxu0 0.0
  %2602 = vmatprep.subr.mxu0 0.0
  %2603 = vmatpush1.msra.mxu0 0.0
  %2604 = vmatprep.subr.mxu0 0.0
  %2605 = vmatpush1.msra.mxu0 0.0
  %2606 = vmatprep.subr.mxu0 0.0
  %2607 = vmatpush1.msra.mxu0 0.0
  %2608 = vmatprep.subr.mxu0 0.0
  %2609 = vmatpush1.msra.mxu0 0.0
  %2610 = vmatprep.subr.mxu0 0.0
  %2611 = vmatpush1.msra.mxu0 0.0
  %2612 = vmatprep.subr.mxu0 0.0
  %2613 = vmatpush1.msra.mxu0 0.0
  %2614 = vmatprep.subr.mxu0 0.0
  %2615 = vmatpush1.msra.mxu0 0.0
  %2616 = vmatprep.mubr.f32.mxu0 0.0
  %2617 = vmatmul.mubr.f32.gmra.mrb[0].mxu0 %v2511
  %v2618 = vpop.f32.mrb[0].mxu0
  %v2619 = vadd.f32 0.0, %v2618
  %v2620 = vpop.f32.mrb[0].mxu0
  %2621 = vmatprep.mubr.f32.mxu0 0.0
  %2622 = vmatmul.mubr.f32.gmra.mrb[0].mxu0 %v2514
  %v2623 = vpop.f32.mrb[0].mxu0
  %v2624 = vadd.f32 0.0, %v2623
  %v2625 = vpop.f32.mrb[0].mxu0
  %2626 = vmatprep.mubr.f32.mxu0 0.0
  %2627 = vmatmul.mubr.f32.gmra.mrb[0].mxu0 %v2517
  %v2628 = vpop.f32.mrb[0].mxu0
  %v2629 = vadd.f32 0.0, %v2628
  %v2630 = vpop.f32.mrb[0].mxu0
  %2631 = vmatprep.mubr.f32.mxu0 0.0
  %2632 = vmatmul.mubr.f32.gmra.mrb[0].mxu0 %v2520
  %v2633 = vpop.f32.mrb[0].mxu0
  %v2634 = vadd.f32 0.0, %v2633
  %v2635 = vpop.f32.mrb[0].mxu0
  %2636 = vmatprep.mubr.f32.mxu0 0.0
  %2637 = vmatmul.mubr.f32.gmra.mrb[0].mxu0 %v2523
  %v2638 = vpop.f32.mrb[0].mxu0
  %v2639 = vadd.f32 0.0, %v2638
  %v2640 = vpop.f32.mrb[0].mxu0
  %2641 = vmatprep.mubr.f32.mxu0 0.0
  %2642 = vmatmul.mubr.f32.gmra.mrb[0].mxu0 %v2526
  %v2643 = vpop.f32.mrb[0].mxu0
  %v2644 = vadd.f32 0.0, %v2643
  %v2645 = vpop.f32.mrb[0].mxu0
  %2646 = vmatprep.mubr.f32.mxu0 0.0
  %2647 = vmatmul.mubr.f32.gmra.mrb[0].mxu0 %v2529
  %v2648 = vpop.f32.mrb[0].mxu0
  %v2649 = vadd.f32 0.0, %v2648
  %v2650 = vpop.f32.mrb[0].mxu0
  %2651 = vmatprep.mubr.f32.mxu0 0.0
  %2652 = vmatmul.mubr.f32.gmra.mrb[0].mxu0 %v2532
  %v2653 = vpop.f32.mrb[0].mxu0
  %v2654 = vadd.f32 0.0, %v2653
  %v2655 = vpop.f32.mrb[0].mxu0
  %2656 = vmatprep.mubr.f32.mxu0 0.0
  %2657 = vmatmul.mubr.f32.gmra.mrb[0].mxu0 %v2535
  %v2658 = vpop.f32.mrb[0].mxu0
  %v2659 = vadd.f32 0.0, %v2658
  %v2660 = vpop.f32.mrb[0].mxu0
  %2661 = vmatprep.mubr.f32.mxu0 0.0
  %2662 = vmatmul.mubr.f32.gmra.mrb[0].mxu0 %v2538
  %v2663 = vpop.f32.mrb[0].mxu0
  %v2664 = vadd.f32 0.0, %v2663
  %v2665 = vpop.f32.mrb[0].mxu0
  %2666 = vmatprep.mubr.f32.mxu0 0.0
  %2667 = vmatmul.mubr.f32.gmra.mrb[0].mxu0 %v2541
  %v2668 = vpop.f32.mrb[0].mxu0
  %v2669 = vadd.f32 0.0, %v2668
  %v2670 = vpop.f32.mrb[0].mxu0
  %2671 = vmatprep.mubr.f32.mxu0 0.0
  %2672 = vmatmul.mubr.f32.gmra.mrb[0].mxu0 %v2544
  %v2673 = vpop.f32.mrb[0].mxu0
  %v2674 = vadd.f32 0.0, %v2673
  %v2675 = vpop.f32.mrb[0].mxu0
  %2676 = vmatprep.mubr.f32.mxu0 0.0
  %2677 = vmatmul.mubr.f32.gmra.mrb[0].mxu0 %v2547
  %v2678 = vpop.f32.mrb[0].mxu0
  %v2679 = vadd.f32 0.0, %v2678
  %v2680 = vpop.f32.mrb[0].mxu0
  %2681 = vdwg.mxu0
  %v2682 = vadd.f32 %v2067, %v2619
  %v2683 = vadd.f32 %v2072, %v2624
  %v2684 = vadd.f32 %v2077, %v2629
  %v2685 = vadd.f32 %v2082, %v2634
  %v2686 = vadd.f32 %v2087, %v2639
  %v2687 = vadd.f32 %v2092, %v2644
  %v2688 = vadd.f32 %v2097, %v2649
  %v2689 = vadd.f32 %v2102, %v2654
  %v2690 = vadd.f32 %v2107, %v2659
  %v2691 = vadd.f32 %v2112, %v2664
  %v2692 = vadd.f32 %v2117, %v2669
  %v2693 = vadd.f32 %v2122, %v2674
  %v2694 = vadd.f32 %v2127, %v2679
  %s2695 = scalar_lea.vmem %s2, 624
  %v2696 = vld [vmem:[%s2695] sm:$0xff]
  %v2697 = vld [vmem:[%s2695 + $0x8] sm:$0xff]
  %v2698 = vld [vmem:[%s2695 + $0x10] sm:$0xff]
  %v2699 = vld [vmem:[%s2695 + $0x18] sm:$0xff]
  %v2700 = vld [vmem:[%s2695 + $0x20] sm:$0xff]
  %v2701 = vld [vmem:[%s2695 + $0x28] sm:$0xff]
  %v2702 = vld [vmem:[%s2695 + $0x30] sm:$0xff]
  %v2703 = vld [vmem:[%s2695 + $0x38] sm:$0xff]
  %v2704 = vld [vmem:[%s2695 + $0x40] sm:$0xff]
  %v2705 = vld [vmem:[%s2695 + $0x48] sm:$0xff]
  %v2706 = vld [vmem:[%s2695 + $0x50] sm:$0xff]
  %v2707 = vld [vmem:[%s2695 + $0x58] sm:$0xff]
  %v2708 = vld [vmem:[%s2695 + $0x60] sm:$0xff]
  %v2709 = vld [vmem:[%s2695 + $0x68] sm:$0xff]
  %v2710 = vld [vmem:[%s2695 + $0x70] sm:$0xff]
  %v2711 = vld [vmem:[%s2695 + $0x78] sm:$0xff]
  %v2712 = vld [vmem:[%s2695 + $0x80] sm:$0xff]
  %v2713 = vld [vmem:[%s2695 + $0x88] sm:$0xff]
  %v2714 = vld [vmem:[%s2695 + $0x90] sm:$0xff]
  %v2715 = vld [vmem:[%s2695 + $0x98] sm:$0xff]
  %v2716 = vld [vmem:[%s2695 + $0xa0] sm:$0xff]
  %v2717 = vld [vmem:[%s2695 + $0xa8] sm:$0xff]
  %v2718 = vld [vmem:[%s2695 + $0xb0] sm:$0xff]
  %v2719 = vld [vmem:[%s2695 + $0xb8] sm:$0xff]
  %v2720 = vld [vmem:[%s2695 + $0xc0] sm:$0x11]
  %v2721 = vld [vmem:[%s2695 + $0xc8] sm:$0x11]
  %v2722 = vunpack.c.l.bf16 %v2696
  %v2723 = vunpack.c.h.bf16 %v2696
  %v2724 = vunpack.c.l.bf16 %v2697
  %v2725 = vunpack.c.h.bf16 %v2697
  %v2726 = vunpack.c.l.bf16 %v2698
  %v2727 = vunpack.c.h.bf16 %v2698
  %v2728 = vunpack.c.l.bf16 %v2699
  %v2729 = vunpack.c.h.bf16 %v2699
  %v2730 = vunpack.c.l.bf16 %v2700
  %v2731 = vunpack.c.h.bf16 %v2700
  %v2732 = vunpack.c.l.bf16 %v2701
  %v2733 = vunpack.c.h.bf16 %v2701
  %v2734 = vunpack.c.l.bf16 %v2702
  %v2735 = vunpack.c.h.bf16 %v2702
  %v2736 = vunpack.c.l.bf16 %v2703
  %v2737 = vunpack.c.h.bf16 %v2703
  %v2738 = vunpack.c.l.bf16 %v2704
  %v2739 = vunpack.c.h.bf16 %v2704
  %v2740 = vunpack.c.l.bf16 %v2705
  %v2741 = vunpack.c.h.bf16 %v2705
  %v2742 = vunpack.c.l.bf16 %v2706
  %v2743 = vunpack.c.h.bf16 %v2706
  %v2744 = vunpack.c.l.bf16 %v2707
  %v2745 = vunpack.c.h.bf16 %v2707
  %v2746 = vunpack.c.l.bf16 %v2708
  %v2747 = vunpack.c.h.bf16 %v2708
  %v2748 = vunpack.c.l.bf16 %v2709
  %v2749 = vunpack.c.h.bf16 %v2709
  %v2750 = vunpack.c.l.bf16 %v2710
  %v2751 = vunpack.c.h.bf16 %v2710
  %v2752 = vunpack.c.l.bf16 %v2711
  %v2753 = vunpack.c.h.bf16 %v2711
  %v2754 = vunpack.c.l.bf16 %v2712
  %v2755 = vunpack.c.h.bf16 %v2712
  %v2756 = vunpack.c.l.bf16 %v2713
  %v2757 = vunpack.c.h.bf16 %v2713
  %v2758 = vunpack.c.l.bf16 %v2714
  %v2759 = vunpack.c.h.bf16 %v2714
  %v2760 = vunpack.c.l.bf16 %v2715
  %v2761 = vunpack.c.h.bf16 %v2715
  %v2762 = vunpack.c.l.bf16 %v2716
  %v2763 = vunpack.c.h.bf16 %v2716
  %v2764 = vunpack.c.l.bf16 %v2717
  %v2765 = vunpack.c.h.bf16 %v2717
  %v2766 = vunpack.c.l.bf16 %v2718
  %v2767 = vunpack.c.h.bf16 %v2718
  %v2768 = vunpack.c.l.bf16 %v2719
  %v2769 = vunpack.c.h.bf16 %v2719
  %v2770 = vunpack.c.l.bf16 %v2720
  %v2771 = vunpack.c.h.bf16 %v2720
  %v2772 = vunpack.c.l.bf16 %v2721
  %v2773 = vunpack.c.h.bf16 %v2721
  %v2775 = vsel %vm1104, %v2725, 0
  %v2778 = vsel %vm1104, %v2729, 0
  %v2781 = vsel %vm1104, %v2733, 0
  %v2784 = vsel %vm1104, %v2737, 0
  %v2787 = vsel %vm1104, %v2741, 0
  %v2790 = vsel %vm1104, %v2745, 0
  %v2793 = vsel %vm1104, %v2749, 0
  %v2796 = vsel %vm1104, %v2753, 0
  %v2799 = vsel %vm1104, %v2757, 0
  %v2802 = vsel %vm1104, %v2761, 0
  %v2805 = vsel %vm1104, %v2765, 0
  %v2808 = vsel %vm1104, %v2769, 0
  %v2811 = vsel %vm1104, %v2773, 0
  %2813 = vmatprep.subr.mxu0 0.0
  %2814 = vmatpush1.msra.mxu0 %v977
  %2815 = vmatprep.subr.mxu0 0.0
  %2816 = vmatpush1.msra.mxu0 %v978
  %2817 = vmatprep.subr.mxu0 0.0
  %2818 = vmatpush1.msra.mxu0 %v979
  %2819 = vmatprep.subr.mxu0 0.0
  %2820 = vmatpush1.msra.mxu0 %v980
  %2821 = vmatprep.subr.mxu0 0.0
  %2822 = vmatpush1.msra.mxu0 %v981
  %2823 = vmatprep.subr.mxu0 0.0
  %2824 = vmatpush1.msra.mxu0 %v982
  %2825 = vmatprep.subr.mxu0 0.0
  %2826 = vmatpush1.msra.mxu0 %v983
  %2827 = vmatprep.subr.mxu0 0.0
  %2828 = vmatpush1.msra.mxu0 %v984
  %2829 = vmatprep.subr.mxu0 0.0
  %2830 = vmatpush1.msra.mxu0 %v985
  %2831 = vmatprep.subr.mxu0 0.0
  %2832 = vmatpush1.msra.mxu0 %v986
  %2833 = vmatprep.subr.mxu0 0.0
  %2834 = vmatpush1.msra.mxu0 %v987
  %2835 = vmatprep.subr.mxu0 0.0
  %2836 = vmatpush1.msra.mxu0 %v988
  %2837 = vmatprep.subr.mxu0 0.0
  %2838 = vmatpush1.msra.mxu0 %v989
  %2839 = vmatprep.subr.mxu0 0.0
  %2840 = vmatpush1.msra.mxu0 %v990
  %2841 = vmatprep.subr.mxu0 0.0
  %2842 = vmatpush1.msra.mxu0 %v991
  %2843 = vmatprep.subr.mxu0 0.0
  %2844 = vmatpush1.msra.mxu0 %v992
  %2845 = vmatprep.subr.mxu0 0.0
  %2846 = vmatpush1.msra.mxu0 %v993
  %2847 = vmatprep.subr.mxu0 0.0
  %2848 = vmatpush1.msra.mxu0 %v994
  %2849 = vmatprep.subr.mxu0 0.0
  %2850 = vmatpush1.msra.mxu0 %v995
  %2851 = vmatprep.subr.mxu0 0.0
  %2852 = vmatpush1.msra.mxu0 %v996
  %2853 = vmatprep.subr.mxu0 0.0
  %2854 = vmatpush1.msra.mxu0 %v997
  %2855 = vmatprep.subr.mxu0 0.0
  %2856 = vmatpush1.msra.mxu0 %v998
  %2857 = vmatprep.subr.mxu0 0.0
  %2858 = vmatpush1.msra.mxu0 %v999
  %2859 = vmatprep.subr.mxu0 0.0
  %2860 = vmatpush1.msra.mxu0 %v1000
  %2861 = vmatprep.subr.mxu0 0.0
  %2862 = vmatpush1.msra.mxu0 %v1001
  %2863 = vmatprep.subr.mxu0 0.0
  %2864 = vmatpush1.msra.mxu0 %v1002
  %2865 = vmatprep.subr.mxu0 0.0
  %2866 = vmatpush1.msra.mxu0 %v1003
  %2867 = vmatprep.subr.mxu0 0.0
  %2868 = vmatpush1.msra.mxu0 %v1004
  %2869 = vmatprep.subr.mxu0 0.0
  %2870 = vmatpush1.msra.mxu0 %v1005
  %2871 = vmatprep.subr.mxu0 0.0
  %2872 = vmatpush1.msra.mxu0 %v1006
  %2873 = vmatprep.subr.mxu0 0.0
  %2874 = vmatpush1.msra.mxu0 %v1007
  %2875 = vmatprep.subr.mxu0 0.0
  %2876 = vmatpush1.msra.mxu0 %v1008
  %2877 = vmatprep.mubr.f32.mxu0 %v2723
  %2878 = vmatmul.mubr.f32.gmra.mrb[0].mxu0 %v2722
  %v2879 = vpop.f32.mrb[0].mxu0
  %v2880 = vadd.f32 0.0, %v2879
  %v2881 = vpop.f32.mrb[0].mxu0
  %2882 = vmatprep.mubr.f32.mxu0 %v2727
  %2883 = vmatmul.mubr.f32.gmra.mrb[0].mxu0 %v2726
  %v2884 = vpop.f32.mrb[0].mxu0
  %v2885 = vadd.f32 0.0, %v2884
  %v2886 = vpop.f32.mrb[0].mxu0
  %2887 = vmatprep.mubr.f32.mxu0 %v2731
  %2888 = vmatmul.mubr.f32.gmra.mrb[0].mxu0 %v2730
  %v2889 = vpop.f32.mrb[0].mxu0
  %v2890 = vadd.f32 0.0, %v2889
  %v2891 = vpop.f32.mrb[0].mxu0
  %2892 = vmatprep.mubr.f32.mxu0 %v2735
  %2893 = vmatmul.mubr.f32.gmra.mrb[0].mxu0 %v2734
  %v2894 = vpop.f32.mrb[0].mxu0
  %v2895 = vadd.f32 0.0, %v2894
  %v2896 = vpop.f32.mrb[0].mxu0
  %2897 = vmatprep.mubr.f32.mxu0 %v2739
  %2898 = vmatmul.mubr.f32.gmra.mrb[0].mxu0 %v2738
  %v2899 = vpop.f32.mrb[0].mxu0
  %v2900 = vadd.f32 0.0, %v2899
  %v2901 = vpop.f32.mrb[0].mxu0
  %2902 = vmatprep.mubr.f32.mxu0 %v2743
  %2903 = vmatmul.mubr.f32.gmra.mrb[0].mxu0 %v2742
  %v2904 = vpop.f32.mrb[0].mxu0
  %v2905 = vadd.f32 0.0, %v2904
  %v2906 = vpop.f32.mrb[0].mxu0
  %2907 = vmatprep.mubr.f32.mxu0 %v2747
  %2908 = vmatmul.mubr.f32.gmra.mrb[0].mxu0 %v2746
  %v2909 = vpop.f32.mrb[0].mxu0
  %v2910 = vadd.f32 0.0, %v2909
  %v2911 = vpop.f32.mrb[0].mxu0
  %2912 = vmatprep.mubr.f32.mxu0 %v2751
  %2913 = vmatmul.mubr.f32.gmra.mrb[0].mxu0 %v2750
  %v2914 = vpop.f32.mrb[0].mxu0
  %v2915 = vadd.f32 0.0, %v2914
  %v2916 = vpop.f32.mrb[0].mxu0
  %2917 = vmatprep.mubr.f32.mxu0 %v2755
  %2918 = vmatmul.mubr.f32.gmra.mrb[0].mxu0 %v2754
  %v2919 = vpop.f32.mrb[0].mxu0
  %v2920 = vadd.f32 0.0, %v2919
  %v2921 = vpop.f32.mrb[0].mxu0
  %2922 = vmatprep.mubr.f32.mxu0 %v2759
  %2923 = vmatmul.mubr.f32.gmra.mrb[0].mxu0 %v2758
  %v2924 = vpop.f32.mrb[0].mxu0
  %v2925 = vadd.f32 0.0, %v2924
  %v2926 = vpop.f32.mrb[0].mxu0
  %2927 = vmatprep.mubr.f32.mxu0 %v2763
  %2928 = vmatmul.mubr.f32.gmra.mrb[0].mxu0 %v2762
  %v2929 = vpop.f32.mrb[0].mxu0
  %v2930 = vadd.f32 0.0, %v2929
  %v2931 = vpop.f32.mrb[0].mxu0
  %2932 = vmatprep.mubr.f32.mxu0 %v2767
  %2933 = vmatmul.mubr.f32.gmra.mrb[0].mxu0 %v2766
  %v2934 = vpop.f32.mrb[0].mxu0
  %v2935 = vadd.f32 0.0, %v2934
  %v2936 = vpop.f32.mrb[0].mxu0
  %2937 = vmatprep.mubr.f32.mxu0 %v2771
  %2938 = vmatmul.mubr.f32.gmra.mrb[0].mxu0 %v2770
  %v2939 = vpop.f32.mrb[0].mxu0
  %v2940 = vadd.f32 0.0, %v2939
  %v2941 = vpop.f32.mrb[0].mxu0
  %2942 = vdwg.mxu0
  %2943 = vmatprep.subr.mxu0 0.0
  %2944 = vmatpush1.msra.mxu0 %v1009
  %2945 = vmatprep.subr.mxu0 0.0
  %2946 = vmatpush1.msra.mxu0 %v1010
  %2947 = vmatprep.subr.mxu0 0.0
  %2948 = vmatpush1.msra.mxu0 %v1011
  %2949 = vmatprep.subr.mxu0 0.0
  %2950 = vmatpush1.msra.mxu0 %v1012
  %2951 = vmatprep.subr.mxu0 0.0
  %2952 = vmatpush1.msra.mxu0 %v1013
  %2953 = vmatprep.subr.mxu0 0.0
  %2954 = vmatpush1.msra.mxu0 %v1014
  %2955 = vmatprep.subr.mxu0 0.0
  %2956 = vmatpush1.msra.mxu0 %v1015
  %2957 = vmatprep.subr.mxu0 0.0
  %2958 = vmatpush1.msra.mxu0 %v1016
  %2959 = vmatprep.subr.mxu0 0.0
  %2960 = vmatpush1.msra.mxu0 %v1017
  %2961 = vmatprep.subr.mxu0 0.0
  %2962 = vmatpush1.msra.mxu0 %v1018
  %2963 = vmatprep.subr.mxu0 0.0
  %2964 = vmatpush1.msra.mxu0 %v1019
  %2965 = vmatprep.subr.mxu0 0.0
  %2966 = vmatpush1.msra.mxu0 %v1020
  %2967 = vmatprep.subr.mxu0 0.0
  %2968 = vmatpush1.msra.mxu0 %v1021
  %2969 = vmatprep.subr.mxu0 0.0
  %2970 = vmatpush1.msra.mxu0 %v1022
  %2971 = vmatprep.subr.mxu0 0.0
  %2972 = vmatpush1.msra.mxu0 %v1023
  %2973 = vmatprep.subr.mxu0 0.0
  %2974 = vmatpush1.msra.mxu0 %v1024
  %2975 = vmatprep.subr.mxu0 0.0
  %2976 = vmatpush1.msra.mxu0 %v1025
  %2977 = vmatprep.subr.mxu0 0.0
  %2978 = vmatpush1.msra.mxu0 0.0
  %2979 = vmatprep.subr.mxu0 0.0
  %2980 = vmatpush1.msra.mxu0 0.0
  %2981 = vmatprep.subr.mxu0 0.0
  %2982 = vmatpush1.msra.mxu0 0.0
  %2983 = vmatprep.subr.mxu0 0.0
  %2984 = vmatpush1.msra.mxu0 0.0
  %2985 = vmatprep.subr.mxu0 0.0
  %2986 = vmatpush1.msra.mxu0 0.0
  %2987 = vmatprep.subr.mxu0 0.0
  %2988 = vmatpush1.msra.mxu0 0.0
  %2989 = vmatprep.subr.mxu0 0.0
  %2990 = vmatpush1.msra.mxu0 0.0
  %2991 = vmatprep.subr.mxu0 0.0
  %2992 = vmatpush1.msra.mxu0 0.0
  %2993 = vmatprep.subr.mxu0 0.0
  %2994 = vmatpush1.msra.mxu0 0.0
  %2995 = vmatprep.subr.mxu0 0.0
  %2996 = vmatpush1.msra.mxu0 0.0
  %2997 = vmatprep.subr.mxu0 0.0
  %2998 = vmatpush1.msra.mxu0 0.0
  %2999 = vmatprep.subr.mxu0 0.0
  %3000 = vmatpush1.msra.mxu0 0.0
  %3001 = vmatprep.subr.mxu0 0.0
  %3002 = vmatpush1.msra.mxu0 0.0
  %3003 = vmatprep.subr.mxu0 0.0
  %3004 = vmatpush1.msra.mxu0 0.0
  %3005 = vmatprep.subr.mxu0 0.0
  %3006 = vmatpush1.msra.mxu0 0.0
  %3007 = vmatprep.mubr.f32.mxu0 %v2775
  %3008 = vmatmul.mubr.f32.gmra.mrb[0].mxu0 %v2724
  %v3009 = vpop.f32.mrb[0].mxu0
  %v3010 = vadd.f32 %v2880, %v3009
  %v3011 = vpop.f32.mrb[0].mxu0
  %3012 = vmatprep.mubr.f32.mxu0 %v2778
  %3013 = vmatmul.mubr.f32.gmra.mrb[0].mxu0 %v2728
  %v3014 = vpop.f32.mrb[0].mxu0
  %v3015 = vadd.f32 %v2885, %v3014
  %v3016 = vpop.f32.mrb[0].mxu0
  %3017 = vmatprep.mubr.f32.mxu0 %v2781
  %3018 = vmatmul.mubr.f32.gmra.mrb[0].mxu0 %v2732
  %v3019 = vpop.f32.mrb[0].mxu0
  %v3020 = vadd.f32 %v2890, %v3019
  %v3021 = vpop.f32.mrb[0].mxu0
  %3022 = vmatprep.mubr.f32.mxu0 %v2784
  %3023 = vmatmul.mubr.f32.gmra.mrb[0].mxu0 %v2736
  %v3024 = vpop.f32.mrb[0].mxu0
  %v3025 = vadd.f32 %v2895, %v3024
  %v3026 = vpop.f32.mrb[0].mxu0
  %3027 = vmatprep.mubr.f32.mxu0 %v2787
  %3028 = vmatmul.mubr.f32.gmra.mrb[0].mxu0 %v2740
  %v3029 = vpop.f32.mrb[0].mxu0
  %v3030 = vadd.f32 %v2900, %v3029
  %v3031 = vpop.f32.mrb[0].mxu0
  %3032 = vmatprep.mubr.f32.mxu0 %v2790
  %3033 = vmatmul.mubr.f32.gmra.mrb[0].mxu0 %v2744
  %v3034 = vpop.f32.mrb[0].mxu0
  %v3035 = vadd.f32 %v2905, %v3034
  %v3036 = vpop.f32.mrb[0].mxu0
  %3037 = vmatprep.mubr.f32.mxu0 %v2793
  %3038 = vmatmul.mubr.f32.gmra.mrb[0].mxu0 %v2748
  %v3039 = vpop.f32.mrb[0].mxu0
  %v3040 = vadd.f32 %v2910, %v3039
  %v3041 = vpop.f32.mrb[0].mxu0
  %3042 = vmatprep.mubr.f32.mxu0 %v2796
  %3043 = vmatmul.mubr.f32.gmra.mrb[0].mxu0 %v2752
  %v3044 = vpop.f32.mrb[0].mxu0
  %v3045 = vadd.f32 %v2915, %v3044
  %v3046 = vpop.f32.mrb[0].mxu0
  %3047 = vmatprep.mubr.f32.mxu0 %v2799
  %3048 = vmatmul.mubr.f32.gmra.mrb[0].mxu0 %v2756
  %v3049 = vpop.f32.mrb[0].mxu0
  %v3050 = vadd.f32 %v2920, %v3049
  %v3051 = vpop.f32.mrb[0].mxu0
  %3052 = vmatprep.mubr.f32.mxu0 %v2802
  %3053 = vmatmul.mubr.f32.gmra.mrb[0].mxu0 %v2760
  %v3054 = vpop.f32.mrb[0].mxu0
  %v3055 = vadd.f32 %v2925, %v3054
  %v3056 = vpop.f32.mrb[0].mxu0
  %3057 = vmatprep.mubr.f32.mxu0 %v2805
  %3058 = vmatmul.mubr.f32.gmra.mrb[0].mxu0 %v2764
  %v3059 = vpop.f32.mrb[0].mxu0
  %v3060 = vadd.f32 %v2930, %v3059
  %v3061 = vpop.f32.mrb[0].mxu0
  %3062 = vmatprep.mubr.f32.mxu0 %v2808
  %3063 = vmatmul.mubr.f32.gmra.mrb[0].mxu0 %v2768
  %v3064 = vpop.f32.mrb[0].mxu0
  %v3065 = vadd.f32 %v2935, %v3064
  %v3066 = vpop.f32.mrb[0].mxu0
  %3067 = vmatprep.mubr.f32.mxu0 %v2811
  %3068 = vmatmul.mubr.f32.gmra.mrb[0].mxu0 %v2772
  %v3069 = vpop.f32.mrb[0].mxu0
  %v3070 = vadd.f32 %v2940, %v3069
  %v3071 = vpop.f32.mrb[0].mxu0
  %3072 = vdwg.mxu0
  %s3073 = scalar_lea.vmem %s3, 12
  %v3074 = vld [vmem:[%s3073] sm:$0xf]
  %v3076 = vsel %vm601, %v3010, 0
  %v3079 = vsel %vm601, %v3015, 0
  %v3082 = vsel %vm601, %v3020, 0
  %v3085 = vsel %vm601, %v3025, 0
  %v3088 = vsel %vm601, %v3030, 0
  %v3091 = vsel %vm601, %v3035, 0
  %v3094 = vsel %vm601, %v3040, 0
  %v3097 = vsel %vm601, %v3045, 0
  %v3100 = vsel %vm601, %v3050, 0
  %v3103 = vsel %vm601, %v3055, 0
  %v3106 = vsel %vm601, %v3060, 0
  %v3109 = vsel %vm601, %v3065, 0
  %v3112 = vsel %vm601, %v3070, 0
  %v3115 = vsel %vm1824, %v3074, 0
  %3117 = vmatprep.subr.mxu0 0.0
  %3118 = vmatpush1.msra.mxu0 %v3115
  %3119 = vmatprep.subr.mxu0 0.0
  %3120 = vmatpush1.msra.mxu0 0.0
  %3121 = vmatprep.subr.mxu0 0.0
  %3122 = vmatpush1.msra.mxu0 0.0
  %3123 = vmatprep.subr.mxu0 0.0
  %3124 = vmatpush1.msra.mxu0 0.0
  %3125 = vmatprep.subr.mxu0 0.0
  %3126 = vmatpush1.msra.mxu0 0.0
  %3127 = vmatprep.subr.mxu0 0.0
  %3128 = vmatpush1.msra.mxu0 0.0
  %3129 = vmatprep.subr.mxu0 0.0
  %3130 = vmatpush1.msra.mxu0 0.0
  %3131 = vmatprep.subr.mxu0 0.0
  %3132 = vmatpush1.msra.mxu0 0.0
  %3133 = vmatprep.subr.mxu0 0.0
  %3134 = vmatpush1.msra.mxu0 0.0
  %3135 = vmatprep.subr.mxu0 0.0
  %3136 = vmatpush1.msra.mxu0 0.0
  %3137 = vmatprep.subr.mxu0 0.0
  %3138 = vmatpush1.msra.mxu0 0.0
  %3139 = vmatprep.subr.mxu0 0.0
  %3140 = vmatpush1.msra.mxu0 0.0
  %3141 = vmatprep.subr.mxu0 0.0
  %3142 = vmatpush1.msra.mxu0 0.0
  %3143 = vmatprep.subr.mxu0 0.0
  %3144 = vmatpush1.msra.mxu0 0.0
  %3145 = vmatprep.subr.mxu0 0.0
  %3146 = vmatpush1.msra.mxu0 0.0
  %3147 = vmatprep.subr.mxu0 0.0
  %3148 = vmatpush1.msra.mxu0 0.0
  %3149 = vmatprep.subr.mxu0 0.0
  %3150 = vmatpush1.msra.mxu0 0.0
  %3151 = vmatprep.subr.mxu0 0.0
  %3152 = vmatpush1.msra.mxu0 0.0
  %3153 = vmatprep.subr.mxu0 0.0
  %3154 = vmatpush1.msra.mxu0 0.0
  %3155 = vmatprep.subr.mxu0 0.0
  %3156 = vmatpush1.msra.mxu0 0.0
  %3157 = vmatprep.subr.mxu0 0.0
  %3158 = vmatpush1.msra.mxu0 0.0
  %3159 = vmatprep.subr.mxu0 0.0
  %3160 = vmatpush1.msra.mxu0 0.0
  %3161 = vmatprep.subr.mxu0 0.0
  %3162 = vmatpush1.msra.mxu0 0.0
  %3163 = vmatprep.subr.mxu0 0.0
  %3164 = vmatpush1.msra.mxu0 0.0
  %3165 = vmatprep.subr.mxu0 0.0
  %3166 = vmatpush1.msra.mxu0 0.0
  %3167 = vmatprep.subr.mxu0 0.0
  %3168 = vmatpush1.msra.mxu0 0.0
  %3169 = vmatprep.subr.mxu0 0.0
  %3170 = vmatpush1.msra.mxu0 0.0
  %3171 = vmatprep.subr.mxu0 0.0
  %3172 = vmatpush1.msra.mxu0 0.0
  %3173 = vmatprep.subr.mxu0 0.0
  %3174 = vmatpush1.msra.mxu0 0.0
  %3175 = vmatprep.subr.mxu0 0.0
  %3176 = vmatpush1.msra.mxu0 0.0
  %3177 = vmatprep.subr.mxu0 0.0
  %3178 = vmatpush1.msra.mxu0 0.0
  %3179 = vmatprep.subr.mxu0 0.0
  %3180 = vmatpush1.msra.mxu0 0.0
  %3181 = vmatprep.mubr.f32.mxu0 0.0
  %3182 = vmatmul.mubr.f32.gmra.mrb[0].mxu0 %v3076
  %v3183 = vpop.f32.mrb[0].mxu0
  %v3184 = vadd.f32 0.0, %v3183
  %v3185 = vpop.f32.mrb[0].mxu0
  %3186 = vmatprep.mubr.f32.mxu0 0.0
  %3187 = vmatmul.mubr.f32.gmra.mrb[0].mxu0 %v3079
  %v3188 = vpop.f32.mrb[0].mxu0
  %v3189 = vadd.f32 0.0, %v3188
  %v3190 = vpop.f32.mrb[0].mxu0
  %3191 = vmatprep.mubr.f32.mxu0 0.0
  %3192 = vmatmul.mubr.f32.gmra.mrb[0].mxu0 %v3082
  %v3193 = vpop.f32.mrb[0].mxu0
  %v3194 = vadd.f32 0.0, %v3193
  %v3195 = vpop.f32.mrb[0].mxu0
  %3196 = vmatprep.mubr.f32.mxu0 0.0
  %3197 = vmatmul.mubr.f32.gmra.mrb[0].mxu0 %v3085
  %v3198 = vpop.f32.mrb[0].mxu0
  %v3199 = vadd.f32 0.0, %v3198
  %v3200 = vpop.f32.mrb[0].mxu0
  %3201 = vmatprep.mubr.f32.mxu0 0.0
  %3202 = vmatmul.mubr.f32.gmra.mrb[0].mxu0 %v3088
  %v3203 = vpop.f32.mrb[0].mxu0
  %v3204 = vadd.f32 0.0, %v3203
  %v3205 = vpop.f32.mrb[0].mxu0
  %3206 = vmatprep.mubr.f32.mxu0 0.0
  %3207 = vmatmul.mubr.f32.gmra.mrb[0].mxu0 %v3091
  %v3208 = vpop.f32.mrb[0].mxu0
  %v3209 = vadd.f32 0.0, %v3208
  %v3210 = vpop.f32.mrb[0].mxu0
  %3211 = vmatprep.mubr.f32.mxu0 0.0
  %3212 = vmatmul.mubr.f32.gmra.mrb[0].mxu0 %v3094
  %v3213 = vpop.f32.mrb[0].mxu0
  %v3214 = vadd.f32 0.0, %v3213
  %v3215 = vpop.f32.mrb[0].mxu0
  %3216 = vmatprep.mubr.f32.mxu0 0.0
  %3217 = vmatmul.mubr.f32.gmra.mrb[0].mxu0 %v3097
  %v3218 = vpop.f32.mrb[0].mxu0
  %v3219 = vadd.f32 0.0, %v3218
  %v3220 = vpop.f32.mrb[0].mxu0
  %3221 = vmatprep.mubr.f32.mxu0 0.0
  %3222 = vmatmul.mubr.f32.gmra.mrb[0].mxu0 %v3100
  %v3223 = vpop.f32.mrb[0].mxu0
  %v3224 = vadd.f32 0.0, %v3223
  %v3225 = vpop.f32.mrb[0].mxu0
  %3226 = vmatprep.mubr.f32.mxu0 0.0
  %3227 = vmatmul.mubr.f32.gmra.mrb[0].mxu0 %v3103
  %v3228 = vpop.f32.mrb[0].mxu0
  %v3229 = vadd.f32 0.0, %v3228
  %v3230 = vpop.f32.mrb[0].mxu0
  %3231 = vmatprep.mubr.f32.mxu0 0.0
  %3232 = vmatmul.mubr.f32.gmra.mrb[0].mxu0 %v3106
  %v3233 = vpop.f32.mrb[0].mxu0
  %v3234 = vadd.f32 0.0, %v3233
  %v3235 = vpop.f32.mrb[0].mxu0
  %3236 = vmatprep.mubr.f32.mxu0 0.0
  %3237 = vmatmul.mubr.f32.gmra.mrb[0].mxu0 %v3109
  %v3238 = vpop.f32.mrb[0].mxu0
  %v3239 = vadd.f32 0.0, %v3238
  %v3240 = vpop.f32.mrb[0].mxu0
  %3241 = vmatprep.mubr.f32.mxu0 0.0
  %3242 = vmatmul.mubr.f32.gmra.mrb[0].mxu0 %v3112
  %v3243 = vpop.f32.mrb[0].mxu0
  %v3244 = vadd.f32 0.0, %v3243
  %v3245 = vpop.f32.mrb[0].mxu0
  %3246 = vdwg.mxu0
  %v3247 = vadd.f32 %v2682, %v3184
  %v3248 = vadd.f32 %v2683, %v3189
  %v3249 = vadd.f32 %v2684, %v3194
  %v3250 = vadd.f32 %v2685, %v3199
  %v3251 = vadd.f32 %v2686, %v3204
  %v3252 = vadd.f32 %v2687, %v3209
  %v3253 = vadd.f32 %v2688, %v3214
  %v3254 = vadd.f32 %v2689, %v3219
  %v3255 = vadd.f32 %v2690, %v3224
  %v3256 = vadd.f32 %v2691, %v3229
  %v3257 = vadd.f32 %v2692, %v3234
  %v3258 = vadd.f32 %v2693, %v3239
  %v3259 = vadd.f32 %v2694, %v3244
  %s3260 = scalar_lea.vmem %s2, 832
  %v3261 = vld [vmem:[%s3260] sm:$0xff]
  %v3262 = vld [vmem:[%s3260 + $0x8] sm:$0xff]
  %v3263 = vld [vmem:[%s3260 + $0x10] sm:$0xff]
  %v3264 = vld [vmem:[%s3260 + $0x18] sm:$0xff]
  %v3265 = vld [vmem:[%s3260 + $0x20] sm:$0xff]
  %v3266 = vld [vmem:[%s3260 + $0x28] sm:$0xff]
  %v3267 = vld [vmem:[%s3260 + $0x30] sm:$0xff]
  %v3268 = vld [vmem:[%s3260 + $0x38] sm:$0xff]
  %v3269 = vld [vmem:[%s3260 + $0x40] sm:$0xff]
  %v3270 = vld [vmem:[%s3260 + $0x48] sm:$0xff]
  %v3271 = vld [vmem:[%s3260 + $0x50] sm:$0xff]
  %v3272 = vld [vmem:[%s3260 + $0x58] sm:$0xff]
  %v3273 = vld [vmem:[%s3260 + $0x60] sm:$0xff]
  %v3274 = vld [vmem:[%s3260 + $0x68] sm:$0xff]
  %v3275 = vld [vmem:[%s3260 + $0x70] sm:$0xff]
  %v3276 = vld [vmem:[%s3260 + $0x78] sm:$0xff]
  %v3277 = vld [vmem:[%s3260 + $0x80] sm:$0xff]
  %v3278 = vld [vmem:[%s3260 + $0x88] sm:$0xff]
  %v3279 = vld [vmem:[%s3260 + $0x90] sm:$0xff]
  %v3280 = vld [vmem:[%s3260 + $0x98] sm:$0xff]
  %v3281 = vld [vmem:[%s3260 + $0xa0] sm:$0xff]
  %v3282 = vld [vmem:[%s3260 + $0xa8] sm:$0xff]
  %v3283 = vld [vmem:[%s3260 + $0xb0] sm:$0xff]
  %v3284 = vld [vmem:[%s3260 + $0xb8] sm:$0xff]
  %v3285 = vld [vmem:[%s3260 + $0xc0] sm:$0x11]
  %v3286 = vld [vmem:[%s3260 + $0xc8] sm:$0x11]
  %v3287 = vunpack.c.l.bf16 %v3261
  %v3288 = vunpack.c.h.bf16 %v3261
  %v3289 = vunpack.c.l.bf16 %v3262
  %v3290 = vunpack.c.h.bf16 %v3262
  %v3291 = vunpack.c.l.bf16 %v3263
  %v3292 = vunpack.c.h.bf16 %v3263
  %v3293 = vunpack.c.l.bf16 %v3264
  %v3294 = vunpack.c.h.bf16 %v3264
  %v3295 = vunpack.c.l.bf16 %v3265
  %v3296 = vunpack.c.h.bf16 %v3265
  %v3297 = vunpack.c.l.bf16 %v3266
  %v3298 = vunpack.c.h.bf16 %v3266
  %v3299 = vunpack.c.l.bf16 %v3267
  %v3300 = vunpack.c.h.bf16 %v3267
  %v3301 = vunpack.c.l.bf16 %v3268
  %v3302 = vunpack.c.h.bf16 %v3268
  %v3303 = vunpack.c.l.bf16 %v3269
  %v3304 = vunpack.c.h.bf16 %v3269
  %v3305 = vunpack.c.l.bf16 %v3270
  %v3306 = vunpack.c.h.bf16 %v3270
  %v3307 = vunpack.c.l.bf16 %v3271
  %v3308 = vunpack.c.h.bf16 %v3271
  %v3309 = vunpack.c.l.bf16 %v3272
  %v3310 = vunpack.c.h.bf16 %v3272
  %v3311 = vunpack.c.l.bf16 %v3273
  %v3312 = vunpack.c.h.bf16 %v3273
  %v3313 = vunpack.c.l.bf16 %v3274
  %v3314 = vunpack.c.h.bf16 %v3274
  %v3315 = vunpack.c.l.bf16 %v3275
  %v3316 = vunpack.c.h.bf16 %v3275
  %v3317 = vunpack.c.l.bf16 %v3276
  %v3318 = vunpack.c.h.bf16 %v3276
  %v3319 = vunpack.c.l.bf16 %v3277
  %v3320 = vunpack.c.h.bf16 %v3277
  %v3321 = vunpack.c.l.bf16 %v3278
  %v3322 = vunpack.c.h.bf16 %v3278
  %v3323 = vunpack.c.l.bf16 %v3279
  %v3324 = vunpack.c.h.bf16 %v3279
  %v3325 = vunpack.c.l.bf16 %v3280
  %v3326 = vunpack.c.h.bf16 %v3280
  %v3327 = vunpack.c.l.bf16 %v3281
  %v3328 = vunpack.c.h.bf16 %v3281
  %v3329 = vunpack.c.l.bf16 %v3282
  %v3330 = vunpack.c.h.bf16 %v3282
  %v3331 = vunpack.c.l.bf16 %v3283
  %v3332 = vunpack.c.h.bf16 %v3283
  %v3333 = vunpack.c.l.bf16 %v3284
  %v3334 = vunpack.c.h.bf16 %v3284
  %v3335 = vunpack.c.l.bf16 %v3285
  %v3336 = vunpack.c.h.bf16 %v3285
  %v3337 = vunpack.c.l.bf16 %v3286
  %v3338 = vunpack.c.h.bf16 %v3286
  %v3340 = vsel %vm1104, %v3290, 0
  %v3343 = vsel %vm1104, %v3294, 0
  %v3346 = vsel %vm1104, %v3298, 0
  %v3349 = vsel %vm1104, %v3302, 0
  %v3352 = vsel %vm1104, %v3306, 0
  %v3355 = vsel %vm1104, %v3310, 0
  %v3358 = vsel %vm1104, %v3314, 0
  %v3361 = vsel %vm1104, %v3318, 0
  %v3364 = vsel %vm1104, %v3322, 0
  %v3367 = vsel %vm1104, %v3326, 0
  %v3370 = vsel %vm1104, %v3330, 0
  %v3373 = vsel %vm1104, %v3334, 0
  %v3376 = vsel %vm1104, %v3338, 0
  %3378 = vmatprep.subr.mxu0 0.0
  %3379 = vmatpush1.msra.mxu0 %v977
  %3380 = vmatprep.subr.mxu0 0.0
  %3381 = vmatpush1.msra.mxu0 %v978
  %3382 = vmatprep.subr.mxu0 0.0
  %3383 = vmatpush1.msra.mxu0 %v979
  %3384 = vmatprep.subr.mxu0 0.0
  %3385 = vmatpush1.msra.mxu0 %v980
  %3386 = vmatprep.subr.mxu0 0.0
  %3387 = vmatpush1.msra.mxu0 %v981
  %3388 = vmatprep.subr.mxu0 0.0
  %3389 = vmatpush1.msra.mxu0 %v982
  %3390 = vmatprep.subr.mxu0 0.0
  %3391 = vmatpush1.msra.mxu0 %v983
  %3392 = vmatprep.subr.mxu0 0.0
  %3393 = vmatpush1.msra.mxu0 %v984
  %3394 = vmatprep.subr.mxu0 0.0
  %3395 = vmatpush1.msra.mxu0 %v985
  %3396 = vmatprep.subr.mxu0 0.0
  %3397 = vmatpush1.msra.mxu0 %v986
  %3398 = vmatprep.subr.mxu0 0.0
  %3399 = vmatpush1.msra.mxu0 %v987
  %3400 = vmatprep.subr.mxu0 0.0
  %3401 = vmatpush1.msra.mxu0 %v988
  %3402 = vmatprep.subr.mxu0 0.0
  %3403 = vmatpush1.msra.mxu0 %v989
  %3404 = vmatprep.subr.mxu0 0.0
  %3405 = vmatpush1.msra.mxu0 %v990
  %3406 = vmatprep.subr.mxu0 0.0
  %3407 = vmatpush1.msra.mxu0 %v991
  %3408 = vmatprep.subr.mxu0 0.0
  %3409 = vmatpush1.msra.mxu0 %v992
  %3410 = vmatprep.subr.mxu0 0.0
  %3411 = vmatpush1.msra.mxu0 %v993
  %3412 = vmatprep.subr.mxu0 0.0
  %3413 = vmatpush1.msra.mxu0 %v994
  %3414 = vmatprep.subr.mxu0 0.0
  %3415 = vmatpush1.msra.mxu0 %v995
  %3416 = vmatprep.subr.mxu0 0.0
  %3417 = vmatpush1.msra.mxu0 %v996
  %3418 = vmatprep.subr.mxu0 0.0
  %3419 = vmatpush1.msra.mxu0 %v997
  %3420 = vmatprep.subr.mxu0 0.0
  %3421 = vmatpush1.msra.mxu0 %v998
  %3422 = vmatprep.subr.mxu0 0.0
  %3423 = vmatpush1.msra.mxu0 %v999
  %3424 = vmatprep.subr.mxu0 0.0
  %3425 = vmatpush1.msra.mxu0 %v1000
  %3426 = vmatprep.subr.mxu0 0.0
  %3427 = vmatpush1.msra.mxu0 %v1001
  %3428 = vmatprep.subr.mxu0 0.0
  %3429 = vmatpush1.msra.mxu0 %v1002
  %3430 = vmatprep.subr.mxu0 0.0
  %3431 = vmatpush1.msra.mxu0 %v1003
  %3432 = vmatprep.subr.mxu0 0.0
  %3433 = vmatpush1.msra.mxu0 %v1004
  %3434 = vmatprep.subr.mxu0 0.0
  %3435 = vmatpush1.msra.mxu0 %v1005
  %3436 = vmatprep.subr.mxu0 0.0
  %3437 = vmatpush1.msra.mxu0 %v1006
  %3438 = vmatprep.subr.mxu0 0.0
  %3439 = vmatpush1.msra.mxu0 %v1007
  %3440 = vmatprep.subr.mxu0 0.0
  %3441 = vmatpush1.msra.mxu0 %v1008
  %3442 = vmatprep.mubr.f32.mxu0 %v3288
  %3443 = vmatmul.mubr.f32.gmra.mrb[0].mxu0 %v3287
  %v3444 = vpop.f32.mrb[0].mxu0
  %v3445 = vadd.f32 0.0, %v3444
  %v3446 = vpop.f32.mrb[0].mxu0
  %3447 = vmatprep.mubr.f32.mxu0 %v3292
  %3448 = vmatmul.mubr.f32.gmra.mrb[0].mxu0 %v3291
  %v3449 = vpop.f32.mrb[0].mxu0
  %v3450 = vadd.f32 0.0, %v3449
  %v3451 = vpop.f32.mrb[0].mxu0
  %3452 = vmatprep.mubr.f32.mxu0 %v3296
  %3453 = vmatmul.mubr.f32.gmra.mrb[0].mxu0 %v3295
  %v3454 = vpop.f32.mrb[0].mxu0
  %v3455 = vadd.f32 0.0, %v3454
  %v3456 = vpop.f32.mrb[0].mxu0
  %3457 = vmatprep.mubr.f32.mxu0 %v3300
  %3458 = vmatmul.mubr.f32.gmra.mrb[0].mxu0 %v3299
  %v3459 = vpop.f32.mrb[0].mxu0
  %v3460 = vadd.f32 0.0, %v3459
  %v3461 = vpop.f32.mrb[0].mxu0
  %3462 = vmatprep.mubr.f32.mxu0 %v3304
  %3463 = vmatmul.mubr.f32.gmra.mrb[0].mxu0 %v3303
  %v3464 = vpop.f32.mrb[0].mxu0
  %v3465 = vadd.f32 0.0, %v3464
  %v3466 = vpop.f32.mrb[0].mxu0
  %3467 = vmatprep.mubr.f32.mxu0 %v3308
  %3468 = vmatmul.mubr.f32.gmra.mrb[0].mxu0 %v3307
  %v3469 = vpop.f32.mrb[0].mxu0
  %v3470 = vadd.f32 0.0, %v3469
  %v3471 = vpop.f32.mrb[0].mxu0
  %3472 = vmatprep.mubr.f32.mxu0 %v3312
  %3473 = vmatmul.mubr.f32.gmra.mrb[0].mxu0 %v3311
  %v3474 = vpop.f32.mrb[0].mxu0
  %v3475 = vadd.f32 0.0, %v3474
  %v3476 = vpop.f32.mrb[0].mxu0
  %3477 = vmatprep.mubr.f32.mxu0 %v3316
  %3478 = vmatmul.mubr.f32.gmra.mrb[0].mxu0 %v3315
  %v3479 = vpop.f32.mrb[0].mxu0
  %v3480 = vadd.f32 0.0, %v3479
  %v3481 = vpop.f32.mrb[0].mxu0
  %3482 = vmatprep.mubr.f32.mxu0 %v3320
  %3483 = vmatmul.mubr.f32.gmra.mrb[0].mxu0 %v3319
  %v3484 = vpop.f32.mrb[0].mxu0
  %v3485 = vadd.f32 0.0, %v3484
  %v3486 = vpop.f32.mrb[0].mxu0
  %3487 = vmatprep.mubr.f32.mxu0 %v3324
  %3488 = vmatmul.mubr.f32.gmra.mrb[0].mxu0 %v3323
  %v3489 = vpop.f32.mrb[0].mxu0
  %v3490 = vadd.f32 0.0, %v3489
  %v3491 = vpop.f32.mrb[0].mxu0
  %3492 = vmatprep.mubr.f32.mxu0 %v3328
  %3493 = vmatmul.mubr.f32.gmra.mrb[0].mxu0 %v3327
  %v3494 = vpop.f32.mrb[0].mxu0
  %v3495 = vadd.f32 0.0, %v3494
  %v3496 = vpop.f32.mrb[0].mxu0
  %3497 = vmatprep.mubr.f32.mxu0 %v3332
  %3498 = vmatmul.mubr.f32.gmra.mrb[0].mxu0 %v3331
  %v3499 = vpop.f32.mrb[0].mxu0
  %v3500 = vadd.f32 0.0, %v3499
  %v3501 = vpop.f32.mrb[0].mxu0
  %3502 = vmatprep.mubr.f32.mxu0 %v3336
  %3503 = vmatmul.mubr.f32.gmra.mrb[0].mxu0 %v3335
  %v3504 = vpop.f32.mrb[0].mxu0
  %v3505 = vadd.f32 0.0, %v3504
  %v3506 = vpop.f32.mrb[0].mxu0
  %3507 = vdwg.mxu0
  %3508 = vmatprep.subr.mxu0 0.0
  %3509 = vmatpush1.msra.mxu0 %v1009
  %3510 = vmatprep.subr.mxu0 0.0
  %3511 = vmatpush1.msra.mxu0 %v1010
  %3512 = vmatprep.subr.mxu0 0.0
  %3513 = vmatpush1.msra.mxu0 %v1011
  %3514 = vmatprep.subr.mxu0 0.0
  %3515 = vmatpush1.msra.mxu0 %v1012
  %3516 = vmatprep.subr.mxu0 0.0
  %3517 = vmatpush1.msra.mxu0 %v1013
  %3518 = vmatprep.subr.mxu0 0.0
  %3519 = vmatpush1.msra.mxu0 %v1014
  %3520 = vmatprep.subr.mxu0 0.0
  %3521 = vmatpush1.msra.mxu0 %v1015
  %3522 = vmatprep.subr.mxu0 0.0
  %3523 = vmatpush1.msra.mxu0 %v1016
  %3524 = vmatprep.subr.mxu0 0.0
  %3525 = vmatpush1.msra.mxu0 %v1017
  %3526 = vmatprep.subr.mxu0 0.0
  %3527 = vmatpush1.msra.mxu0 %v1018
  %3528 = vmatprep.subr.mxu0 0.0
  %3529 = vmatpush1.msra.mxu0 %v1019
  %3530 = vmatprep.subr.mxu0 0.0
  %3531 = vmatpush1.msra.mxu0 %v1020
  %3532 = vmatprep.subr.mxu0 0.0
  %3533 = vmatpush1.msra.mxu0 %v1021
  %3534 = vmatprep.subr.mxu0 0.0
  %3535 = vmatpush1.msra.mxu0 %v1022
  %3536 = vmatprep.subr.mxu0 0.0
  %3537 = vmatpush1.msra.mxu0 %v1023
  %3538 = vmatprep.subr.mxu0 0.0
  %3539 = vmatpush1.msra.mxu0 %v1024
  %3540 = vmatprep.subr.mxu0 0.0
  %3541 = vmatpush1.msra.mxu0 %v1025
  %3542 = vmatprep.subr.mxu0 0.0
  %3543 = vmatpush1.msra.mxu0 0.0
  %3544 = vmatprep.subr.mxu0 0.0
  %3545 = vmatpush1.msra.mxu0 0.0
  %3546 = vmatprep.subr.mxu0 0.0
  %3547 = vmatpush1.msra.mxu0 0.0
  %3548 = vmatprep.subr.mxu0 0.0
  %3549 = vmatpush1.msra.mxu0 0.0
  %3550 = vmatprep.subr.mxu0 0.0
  %3551 = vmatpush1.msra.mxu0 0.0
  %3552 = vmatprep.subr.mxu0 0.0
  %3553 = vmatpush1.msra.mxu0 0.0
  %3554 = vmatprep.subr.mxu0 0.0
  %3555 = vmatpush1.msra.mxu0 0.0
  %3556 = vmatprep.subr.mxu0 0.0
  %3557 = vmatpush1.msra.mxu0 0.0
  %3558 = vmatprep.subr.mxu0 0.0
  %3559 = vmatpush1.msra.mxu0 0.0
  %3560 = vmatprep.subr.mxu0 0.0
  %3561 = vmatpush1.msra.mxu0 0.0
  %3562 = vmatprep.subr.mxu0 0.0
  %3563 = vmatpush1.msra.mxu0 0.0
  %3564 = vmatprep.subr.mxu0 0.0
  %3565 = vmatpush1.msra.mxu0 0.0
  %3566 = vmatprep.subr.mxu0 0.0
  %3567 = vmatpush1.msra.mxu0 0.0
  %3568 = vmatprep.subr.mxu0 0.0
  %3569 = vmatpush1.msra.mxu0 0.0
  %3570 = vmatprep.subr.mxu0 0.0
  %3571 = vmatpush1.msra.mxu0 0.0
  %3572 = vmatprep.mubr.f32.mxu0 %v3340
  %3573 = vmatmul.mubr.f32.gmra.mrb[0].mxu0 %v3289
  %v3574 = vpop.f32.mrb[0].mxu0
  %v3575 = vadd.f32 %v3445, %v3574
  %v3576 = vpop.f32.mrb[0].mxu0
  %3577 = vmatprep.mubr.f32.mxu0 %v3343
  %3578 = vmatmul.mubr.f32.gmra.mrb[0].mxu0 %v3293
  %v3579 = vpop.f32.mrb[0].mxu0
  %v3580 = vadd.f32 %v3450, %v3579
  %v3581 = vpop.f32.mrb[0].mxu0
  %3582 = vmatprep.mubr.f32.mxu0 %v3346
  %3583 = vmatmul.mubr.f32.gmra.mrb[0].mxu0 %v3297
  %v3584 = vpop.f32.mrb[0].mxu0
  %v3585 = vadd.f32 %v3455, %v3584
  %v3586 = vpop.f32.mrb[0].mxu0
  %3587 = vmatprep.mubr.f32.mxu0 %v3349
  %3588 = vmatmul.mubr.f32.gmra.mrb[0].mxu0 %v3301
  %v3589 = vpop.f32.mrb[0].mxu0
  %v3590 = vadd.f32 %v3460, %v3589
  %v3591 = vpop.f32.mrb[0].mxu0
  %3592 = vmatprep.mubr.f32.mxu0 %v3352
  %3593 = vmatmul.mubr.f32.gmra.mrb[0].mxu0 %v3305
  %v3594 = vpop.f32.mrb[0].mxu0
  %v3595 = vadd.f32 %v3465, %v3594
  %v3596 = vpop.f32.mrb[0].mxu0
  %3597 = vmatprep.mubr.f32.mxu0 %v3355
  %3598 = vmatmul.mubr.f32.gmra.mrb[0].mxu0 %v3309
  %v3599 = vpop.f32.mrb[0].mxu0
  %v3600 = vadd.f32 %v3470, %v3599
  %v3601 = vpop.f32.mrb[0].mxu0
  %3602 = vmatprep.mubr.f32.mxu0 %v3358
  %3603 = vmatmul.mubr.f32.gmra.mrb[0].mxu0 %v3313
  %v3604 = vpop.f32.mrb[0].mxu0
  %v3605 = vadd.f32 %v3475, %v3604
  %v3606 = vpop.f32.mrb[0].mxu0
  %3607 = vmatprep.mubr.f32.mxu0 %v3361
  %3608 = vmatmul.mubr.f32.gmra.mrb[0].mxu0 %v3317
  %v3609 = vpop.f32.mrb[0].mxu0
  %v3610 = vadd.f32 %v3480, %v3609
  %v3611 = vpop.f32.mrb[0].mxu0
  %3612 = vmatprep.mubr.f32.mxu0 %v3364
  %3613 = vmatmul.mubr.f32.gmra.mrb[0].mxu0 %v3321
  %v3614 = vpop.f32.mrb[0].mxu0
  %v3615 = vadd.f32 %v3485, %v3614
  %v3616 = vpop.f32.mrb[0].mxu0
  %3617 = vmatprep.mubr.f32.mxu0 %v3367
  %3618 = vmatmul.mubr.f32.gmra.mrb[0].mxu0 %v3325
  %v3619 = vpop.f32.mrb[0].mxu0
  %v3620 = vadd.f32 %v3490, %v3619
  %v3621 = vpop.f32.mrb[0].mxu0
  %3622 = vmatprep.mubr.f32.mxu0 %v3370
  %3623 = vmatmul.mubr.f32.gmra.mrb[0].mxu0 %v3329
  %v3624 = vpop.f32.mrb[0].mxu0
  %v3625 = vadd.f32 %v3495, %v3624
  %v3626 = vpop.f32.mrb[0].mxu0
  %3627 = vmatprep.mubr.f32.mxu0 %v3373
  %3628 = vmatmul.mubr.f32.gmra.mrb[0].mxu0 %v3333
  %v3629 = vpop.f32.mrb[0].mxu0
  %v3630 = vadd.f32 %v3500, %v3629
  %v3631 = vpop.f32.mrb[0].mxu0
  %3632 = vmatprep.mubr.f32.mxu0 %v3376
  %3633 = vmatmul.mubr.f32.gmra.mrb[0].mxu0 %v3337
  %v3634 = vpop.f32.mrb[0].mxu0
  %v3635 = vadd.f32 %v3505, %v3634
  %v3636 = vpop.f32.mrb[0].mxu0
  %3637 = vdwg.mxu0
  %s3638 = scalar_lea.vmem %s3, 16
  %v3639 = vld [vmem:[%s3638] sm:$0xf]
  %v3641 = vsel %vm601, %v3575, 0
  %v3644 = vsel %vm601, %v3580, 0
  %v3647 = vsel %vm601, %v3585, 0
  %v3650 = vsel %vm601, %v3590, 0
  %v3653 = vsel %vm601, %v3595, 0
  %v3656 = vsel %vm601, %v3600, 0
  %v3659 = vsel %vm601, %v3605, 0
  %v3662 = vsel %vm601, %v3610, 0
  %v3665 = vsel %vm601, %v3615, 0
  %v3668 = vsel %vm601, %v3620, 0
  %v3671 = vsel %vm601, %v3625, 0
  %v3674 = vsel %vm601, %v3630, 0
  %v3677 = vsel %vm601, %v3635, 0
  %v3680 = vsel %vm1824, %v3639, 0
  %3682 = vmatprep.subr.mxu0 0.0
  %3683 = vmatpush1.msra.mxu0 %v3680
  %3684 = vmatprep.subr.mxu0 0.0
  %3685 = vmatpush1.msra.mxu0 0.0
  %3686 = vmatprep.subr.mxu0 0.0
  %3687 = vmatpush1.msra.mxu0 0.0
  %3688 = vmatprep.subr.mxu0 0.0
  %3689 = vmatpush1.msra.mxu0 0.0
  %3690 = vmatprep.subr.mxu0 0.0
  %3691 = vmatpush1.msra.mxu0 0.0
  %3692 = vmatprep.subr.mxu0 0.0
  %3693 = vmatpush1.msra.mxu0 0.0
  %3694 = vmatprep.subr.mxu0 0.0
  %3695 = vmatpush1.msra.mxu0 0.0
  %3696 = vmatprep.subr.mxu0 0.0
  %3697 = vmatpush1.msra.mxu0 0.0
  %3698 = vmatprep.subr.mxu0 0.0
  %3699 = vmatpush1.msra.mxu0 0.0
  %3700 = vmatprep.subr.mxu0 0.0
  %3701 = vmatpush1.msra.mxu0 0.0
  %3702 = vmatprep.subr.mxu0 0.0
  %3703 = vmatpush1.msra.mxu0 0.0
  %3704 = vmatprep.subr.mxu0 0.0
  %3705 = vmatpush1.msra.mxu0 0.0
  %3706 = vmatprep.subr.mxu0 0.0
  %3707 = vmatpush1.msra.mxu0 0.0
  %3708 = vmatprep.subr.mxu0 0.0
  %3709 = vmatpush1.msra.mxu0 0.0
  %3710 = vmatprep.subr.mxu0 0.0
  %3711 = vmatpush1.msra.mxu0 0.0
  %3712 = vmatprep.subr.mxu0 0.0
  %3713 = vmatpush1.msra.mxu0 0.0
  %3714 = vmatprep.subr.mxu0 0.0
  %3715 = vmatpush1.msra.mxu0 0.0
  %3716 = vmatprep.subr.mxu0 0.0
  %3717 = vmatpush1.msra.mxu0 0.0
  %3718 = vmatprep.subr.mxu0 0.0
  %3719 = vmatpush1.msra.mxu0 0.0
  %3720 = vmatprep.subr.mxu0 0.0
  %3721 = vmatpush1.msra.mxu0 0.0
  %3722 = vmatprep.subr.mxu0 0.0
  %3723 = vmatpush1.msra.mxu0 0.0
  %3724 = vmatprep.subr.mxu0 0.0
  %3725 = vmatpush1.msra.mxu0 0.0
  %3726 = vmatprep.subr.mxu0 0.0
  %3727 = vmatpush1.msra.mxu0 0.0
  %3728 = vmatprep.subr.mxu0 0.0
  %3729 = vmatpush1.msra.mxu0 0.0
  %3730 = vmatprep.subr.mxu0 0.0
  %3731 = vmatpush1.msra.mxu0 0.0
  %3732 = vmatprep.subr.mxu0 0.0
  %3733 = vmatpush1.msra.mxu0 0.0
  %3734 = vmatprep.subr.mxu0 0.0
  %3735 = vmatpush1.msra.mxu0 0.0
  %3736 = vmatprep.subr.mxu0 0.0
  %3737 = vmatpush1.msra.mxu0 0.0
  %3738 = vmatprep.subr.mxu0 0.0
  %3739 = vmatpush1.msra.mxu0 0.0
  %3740 = vmatprep.subr.mxu0 0.0
  %3741 = vmatpush1.msra.mxu0 0.0
  %3742 = vmatprep.subr.mxu0 0.0
  %3743 = vmatpush1.msra.mxu0 0.0
  %3744 = vmatprep.subr.mxu0 0.0
  %3745 = vmatpush1.msra.mxu0 0.0
  %3746 = vmatprep.mubr.f32.mxu0 0.0
  %3747 = vmatmul.mubr.f32.gmra.mrb[0].mxu0 %v3641
  %v3748 = vpop.f32.mrb[0].mxu0
  %v3749 = vadd.f32 0.0, %v3748
  %v3750 = vpop.f32.mrb[0].mxu0
  %3751 = vmatprep.mubr.f32.mxu0 0.0
  %3752 = vmatmul.mubr.f32.gmra.mrb[0].mxu0 %v3644
  %v3753 = vpop.f32.mrb[0].mxu0
  %v3754 = vadd.f32 0.0, %v3753
  %v3755 = vpop.f32.mrb[0].mxu0
  %3756 = vmatprep.mubr.f32.mxu0 0.0
  %3757 = vmatmul.mubr.f32.gmra.mrb[0].mxu0 %v3647
  %v3758 = vpop.f32.mrb[0].mxu0
  %v3759 = vadd.f32 0.0, %v3758
  %v3760 = vpop.f32.mrb[0].mxu0
  %3761 = vmatprep.mubr.f32.mxu0 0.0
  %3762 = vmatmul.mubr.f32.gmra.mrb[0].mxu0 %v3650
  %v3763 = vpop.f32.mrb[0].mxu0
  %v3764 = vadd.f32 0.0, %v3763
  %v3765 = vpop.f32.mrb[0].mxu0
  %3766 = vmatprep.mubr.f32.mxu0 0.0
  %3767 = vmatmul.mubr.f32.gmra.mrb[0].mxu0 %v3653
  %v3768 = vpop.f32.mrb[0].mxu0
  %v3769 = vadd.f32 0.0, %v3768
  %v3770 = vpop.f32.mrb[0].mxu0
  %3771 = vmatprep.mubr.f32.mxu0 0.0
  %3772 = vmatmul.mubr.f32.gmra.mrb[0].mxu0 %v3656
  %v3773 = vpop.f32.mrb[0].mxu0
  %v3774 = vadd.f32 0.0, %v3773
  %v3775 = vpop.f32.mrb[0].mxu0
  %3776 = vmatprep.mubr.f32.mxu0 0.0
  %3777 = vmatmul.mubr.f32.gmra.mrb[0].mxu0 %v3659
  %v3778 = vpop.f32.mrb[0].mxu0
  %v3779 = vadd.f32 0.0, %v3778
  %v3780 = vpop.f32.mrb[0].mxu0
  %3781 = vmatprep.mubr.f32.mxu0 0.0
  %3782 = vmatmul.mubr.f32.gmra.mrb[0].mxu0 %v3662
  %v3783 = vpop.f32.mrb[0].mxu0
  %v3784 = vadd.f32 0.0, %v3783
  %v3785 = vpop.f32.mrb[0].mxu0
  %3786 = vmatprep.mubr.f32.mxu0 0.0
  %3787 = vmatmul.mubr.f32.gmra.mrb[0].mxu0 %v3665
  %v3788 = vpop.f32.mrb[0].mxu0
  %v3789 = vadd.f32 0.0, %v3788
  %v3790 = vpop.f32.mrb[0].mxu0
  %3791 = vmatprep.mubr.f32.mxu0 0.0
  %3792 = vmatmul.mubr.f32.gmra.mrb[0].mxu0 %v3668
  %v3793 = vpop.f32.mrb[0].mxu0
  %v3794 = vadd.f32 0.0, %v3793
  %v3795 = vpop.f32.mrb[0].mxu0
  %3796 = vmatprep.mubr.f32.mxu0 0.0
  %3797 = vmatmul.mubr.f32.gmra.mrb[0].mxu0 %v3671
  %v3798 = vpop.f32.mrb[0].mxu0
  %v3799 = vadd.f32 0.0, %v3798
  %v3800 = vpop.f32.mrb[0].mxu0
  %3801 = vmatprep.mubr.f32.mxu0 0.0
  %3802 = vmatmul.mubr.f32.gmra.mrb[0].mxu0 %v3674
  %v3803 = vpop.f32.mrb[0].mxu0
  %v3804 = vadd.f32 0.0, %v3803
  %v3805 = vpop.f32.mrb[0].mxu0
  %3806 = vmatprep.mubr.f32.mxu0 0.0
  %3807 = vmatmul.mubr.f32.gmra.mrb[0].mxu0 %v3677
  %v3808 = vpop.f32.mrb[0].mxu0
  %v3809 = vadd.f32 0.0, %v3808
  %v3810 = vpop.f32.mrb[0].mxu0
  %3811 = vdwg.mxu0
  %v3812 = vadd.f32 %v3247, %v3749
  %v3813 = vadd.f32 %v3248, %v3754
  %v3814 = vadd.f32 %v3249, %v3759
  %v3815 = vadd.f32 %v3250, %v3764
  %v3816 = vadd.f32 %v3251, %v3769
  %v3817 = vadd.f32 %v3252, %v3774
  %v3818 = vadd.f32 %v3253, %v3779
  %v3819 = vadd.f32 %v3254, %v3784
  %v3820 = vadd.f32 %v3255, %v3789
  %v3821 = vadd.f32 %v3256, %v3794
  %v3822 = vadd.f32 %v3257, %v3799
  %v3823 = vadd.f32 %v3258, %v3804
  %v3824 = vadd.f32 %v3259, %v3809
  %s3825 = scalar_lea.vmem %s2, 1040
  %v3826 = vld [vmem:[%s3825] sm:$0xff]
  %v3827 = vld [vmem:[%s3825 + $0x8] sm:$0xff]
  %v3828 = vld [vmem:[%s3825 + $0x10] sm:$0xff]
  %v3829 = vld [vmem:[%s3825 + $0x18] sm:$0xff]
  %v3830 = vld [vmem:[%s3825 + $0x20] sm:$0xff]
  %v3831 = vld [vmem:[%s3825 + $0x28] sm:$0xff]
  %v3832 = vld [vmem:[%s3825 + $0x30] sm:$0xff]
  %v3833 = vld [vmem:[%s3825 + $0x38] sm:$0xff]
  %v3834 = vld [vmem:[%s3825 + $0x40] sm:$0xff]
  %v3835 = vld [vmem:[%s3825 + $0x48] sm:$0xff]
  %v3836 = vld [vmem:[%s3825 + $0x50] sm:$0xff]
  %v3837 = vld [vmem:[%s3825 + $0x58] sm:$0xff]
  %v3838 = vld [vmem:[%s3825 + $0x60] sm:$0xff]
  %v3839 = vld [vmem:[%s3825 + $0x68] sm:$0xff]
  %v3840 = vld [vmem:[%s3825 + $0x70] sm:$0xff]
  %v3841 = vld [vmem:[%s3825 + $0x78] sm:$0xff]
  %v3842 = vld [vmem:[%s3825 + $0x80] sm:$0xff]
  %v3843 = vld [vmem:[%s3825 + $0x88] sm:$0xff]
  %v3844 = vld [vmem:[%s3825 + $0x90] sm:$0xff]
  %v3845 = vld [vmem:[%s3825 + $0x98] sm:$0xff]
  %v3846 = vld [vmem:[%s3825 + $0xa0] sm:$0xff]
  %v3847 = vld [vmem:[%s3825 + $0xa8] sm:$0xff]
  %v3848 = vld [vmem:[%s3825 + $0xb0] sm:$0xff]
  %v3849 = vld [vmem:[%s3825 + $0xb8] sm:$0xff]
  %v3850 = vld [vmem:[%s3825 + $0xc0] sm:$0x11]
  %v3851 = vld [vmem:[%s3825 + $0xc8] sm:$0x11]
  %v3852 = vunpack.c.l.bf16 %v3826
  %v3853 = vunpack.c.h.bf16 %v3826
  %v3854 = vunpack.c.l.bf16 %v3827
  %v3855 = vunpack.c.h.bf16 %v3827
  %v3856 = vunpack.c.l.bf16 %v3828
  %v3857 = vunpack.c.h.bf16 %v3828
  %v3858 = vunpack.c.l.bf16 %v3829
  %v3859 = vunpack.c.h.bf16 %v3829
  %v3860 = vunpack.c.l.bf16 %v3830
  %v3861 = vunpack.c.h.bf16 %v3830
  %v3862 = vunpack.c.l.bf16 %v3831
  %v3863 = vunpack.c.h.bf16 %v3831
  %v3864 = vunpack.c.l.bf16 %v3832
  %v3865 = vunpack.c.h.bf16 %v3832
  %v3866 = vunpack.c.l.bf16 %v3833
  %v3867 = vunpack.c.h.bf16 %v3833
  %v3868 = vunpack.c.l.bf16 %v3834
  %v3869 = vunpack.c.h.bf16 %v3834
  %v3870 = vunpack.c.l.bf16 %v3835
  %v3871 = vunpack.c.h.bf16 %v3835
  %v3872 = vunpack.c.l.bf16 %v3836
  %v3873 = vunpack.c.h.bf16 %v3836
  %v3874 = vunpack.c.l.bf16 %v3837
  %v3875 = vunpack.c.h.bf16 %v3837
  %v3876 = vunpack.c.l.bf16 %v3838
  %v3877 = vunpack.c.h.bf16 %v3838
  %v3878 = vunpack.c.l.bf16 %v3839
  %v3879 = vunpack.c.h.bf16 %v3839
  %v3880 = vunpack.c.l.bf16 %v3840
  %v3881 = vunpack.c.h.bf16 %v3840
  %v3882 = vunpack.c.l.bf16 %v3841
  %v3883 = vunpack.c.h.bf16 %v3841
  %v3884 = vunpack.c.l.bf16 %v3842
  %v3885 = vunpack.c.h.bf16 %v3842
  %v3886 = vunpack.c.l.bf16 %v3843
  %v3887 = vunpack.c.h.bf16 %v3843
  %v3888 = vunpack.c.l.bf16 %v3844
  %v3889 = vunpack.c.h.bf16 %v3844
  %v3890 = vunpack.c.l.bf16 %v3845
  %v3891 = vunpack.c.h.bf16 %v3845
  %v3892 = vunpack.c.l.bf16 %v3846
  %v3893 = vunpack.c.h.bf16 %v3846
  %v3894 = vunpack.c.l.bf16 %v3847
  %v3895 = vunpack.c.h.bf16 %v3847
  %v3896 = vunpack.c.l.bf16 %v3848
  %v3897 = vunpack.c.h.bf16 %v3848
  %v3898 = vunpack.c.l.bf16 %v3849
  %v3899 = vunpack.c.h.bf16 %v3849
  %v3900 = vunpack.c.l.bf16 %v3850
  %v3901 = vunpack.c.h.bf16 %v3850
  %v3902 = vunpack.c.l.bf16 %v3851
  %v3903 = vunpack.c.h.bf16 %v3851
  %v3905 = vsel %vm1104, %v3855, 0
  %v3908 = vsel %vm1104, %v3859, 0
  %v3911 = vsel %vm1104, %v3863, 0
  %v3914 = vsel %vm1104, %v3867, 0
  %v3917 = vsel %vm1104, %v3871, 0
  %v3920 = vsel %vm1104, %v3875, 0
  %v3923 = vsel %vm1104, %v3879, 0
  %v3926 = vsel %vm1104, %v3883, 0
  %v3929 = vsel %vm1104, %v3887, 0
  %v3932 = vsel %vm1104, %v3891, 0
  %v3935 = vsel %vm1104, %v3895, 0
  %v3938 = vsel %vm1104, %v3899, 0
  %v3941 = vsel %vm1104, %v3903, 0
  %3943 = vmatprep.subr.mxu0 0.0
  %3944 = vmatpush1.msra.mxu0 %v977
  %3945 = vmatprep.subr.mxu0 0.0
  %3946 = vmatpush1.msra.mxu0 %v978
  %3947 = vmatprep.subr.mxu0 0.0
  %3948 = vmatpush1.msra.mxu0 %v979
  %3949 = vmatprep.subr.mxu0 0.0
  %3950 = vmatpush1.msra.mxu0 %v980
  %3951 = vmatprep.subr.mxu0 0.0
  %3952 = vmatpush1.msra.mxu0 %v981
  %3953 = vmatprep.subr.mxu0 0.0
  %3954 = vmatpush1.msra.mxu0 %v982
  %3955 = vmatprep.subr.mxu0 0.0
  %3956 = vmatpush1.msra.mxu0 %v983
  %3957 = vmatprep.subr.mxu0 0.0
  %3958 = vmatpush1.msra.mxu0 %v984
  %3959 = vmatprep.subr.mxu0 0.0
  %3960 = vmatpush1.msra.mxu0 %v985
  %3961 = vmatprep.subr.mxu0 0.0
  %3962 = vmatpush1.msra.mxu0 %v986
  %3963 = vmatprep.subr.mxu0 0.0
  %3964 = vmatpush1.msra.mxu0 %v987
  %3965 = vmatprep.subr.mxu0 0.0
  %3966 = vmatpush1.msra.mxu0 %v988
  %3967 = vmatprep.subr.mxu0 0.0
  %3968 = vmatpush1.msra.mxu0 %v989
  %3969 = vmatprep.subr.mxu0 0.0
  %3970 = vmatpush1.msra.mxu0 %v990
  %3971 = vmatprep.subr.mxu0 0.0
  %3972 = vmatpush1.msra.mxu0 %v991
  %3973 = vmatprep.subr.mxu0 0.0
  %3974 = vmatpush1.msra.mxu0 %v992
  %3975 = vmatprep.subr.mxu0 0.0
  %3976 = vmatpush1.msra.mxu0 %v993
  %3977 = vmatprep.subr.mxu0 0.0
  %3978 = vmatpush1.msra.mxu0 %v994
  %3979 = vmatprep.subr.mxu0 0.0
  %3980 = vmatpush1.msra.mxu0 %v995
  %3981 = vmatprep.subr.mxu0 0.0
  %3982 = vmatpush1.msra.mxu0 %v996
  %3983 = vmatprep.subr.mxu0 0.0
  %3984 = vmatpush1.msra.mxu0 %v997
  %3985 = vmatprep.subr.mxu0 0.0
  %3986 = vmatpush1.msra.mxu0 %v998
  %3987 = vmatprep.subr.mxu0 0.0
  %3988 = vmatpush1.msra.mxu0 %v999
  %3989 = vmatprep.subr.mxu0 0.0
  %3990 = vmatpush1.msra.mxu0 %v1000
  %3991 = vmatprep.subr.mxu0 0.0
  %3992 = vmatpush1.msra.mxu0 %v1001
  %3993 = vmatprep.subr.mxu0 0.0
  %3994 = vmatpush1.msra.mxu0 %v1002
  %3995 = vmatprep.subr.mxu0 0.0
  %3996 = vmatpush1.msra.mxu0 %v1003
  %3997 = vmatprep.subr.mxu0 0.0
  %3998 = vmatpush1.msra.mxu0 %v1004
  %3999 = vmatprep.subr.mxu0 0.0
  %4000 = vmatpush1.msra.mxu0 %v1005
  %4001 = vmatprep.subr.mxu0 0.0
  %4002 = vmatpush1.msra.mxu0 %v1006
  %4003 = vmatprep.subr.mxu0 0.0
  %4004 = vmatpush1.msra.mxu0 %v1007
  %4005 = vmatprep.subr.mxu0 0.0
  %4006 = vmatpush1.msra.mxu0 %v1008
  %4007 = vmatprep.mubr.f32.mxu0 %v3853
  %4008 = vmatmul.mubr.f32.gmra.mrb[0].mxu0 %v3852
  %v4009 = vpop.f32.mrb[0].mxu0
  %v4010 = vadd.f32 0.0, %v4009
  %v4011 = vpop.f32.mrb[0].mxu0
  %4012 = vmatprep.mubr.f32.mxu0 %v3857
  %4013 = vmatmul.mubr.f32.gmra.mrb[0].mxu0 %v3856
  %v4014 = vpop.f32.mrb[0].mxu0
  %v4015 = vadd.f32 0.0, %v4014
  %v4016 = vpop.f32.mrb[0].mxu0
  %4017 = vmatprep.mubr.f32.mxu0 %v3861
  %4018 = vmatmul.mubr.f32.gmra.mrb[0].mxu0 %v3860
  %v4019 = vpop.f32.mrb[0].mxu0
  %v4020 = vadd.f32 0.0, %v4019
  %v4021 = vpop.f32.mrb[0].mxu0
  %4022 = vmatprep.mubr.f32.mxu0 %v3865
  %4023 = vmatmul.mubr.f32.gmra.mrb[0].mxu0 %v3864
  %v4024 = vpop.f32.mrb[0].mxu0
  %v4025 = vadd.f32 0.0, %v4024
  %v4026 = vpop.f32.mrb[0].mxu0
  %4027 = vmatprep.mubr.f32.mxu0 %v3869
  %4028 = vmatmul.mubr.f32.gmra.mrb[0].mxu0 %v3868
  %v4029 = vpop.f32.mrb[0].mxu0
  %v4030 = vadd.f32 0.0, %v4029
  %v4031 = vpop.f32.mrb[0].mxu0
  %4032 = vmatprep.mubr.f32.mxu0 %v3873
  %4033 = vmatmul.mubr.f32.gmra.mrb[0].mxu0 %v3872
  %v4034 = vpop.f32.mrb[0].mxu0
  %v4035 = vadd.f32 0.0, %v4034
  %v4036 = vpop.f32.mrb[0].mxu0
  %4037 = vmatprep.mubr.f32.mxu0 %v3877
  %4038 = vmatmul.mubr.f32.gmra.mrb[0].mxu0 %v3876
  %v4039 = vpop.f32.mrb[0].mxu0
  %v4040 = vadd.f32 0.0, %v4039
  %v4041 = vpop.f32.mrb[0].mxu0
  %4042 = vmatprep.mubr.f32.mxu0 %v3881
  %4043 = vmatmul.mubr.f32.gmra.mrb[0].mxu0 %v3880
  %v4044 = vpop.f32.mrb[0].mxu0
  %v4045 = vadd.f32 0.0, %v4044
  %v4046 = vpop.f32.mrb[0].mxu0
  %4047 = vmatprep.mubr.f32.mxu0 %v3885
  %4048 = vmatmul.mubr.f32.gmra.mrb[0].mxu0 %v3884
  %v4049 = vpop.f32.mrb[0].mxu0
  %v4050 = vadd.f32 0.0, %v4049
  %v4051 = vpop.f32.mrb[0].mxu0
  %4052 = vmatprep.mubr.f32.mxu0 %v3889
  %4053 = vmatmul.mubr.f32.gmra.mrb[0].mxu0 %v3888
  %v4054 = vpop.f32.mrb[0].mxu0
  %v4055 = vadd.f32 0.0, %v4054
  %v4056 = vpop.f32.mrb[0].mxu0
  %4057 = vmatprep.mubr.f32.mxu0 %v3893
  %4058 = vmatmul.mubr.f32.gmra.mrb[0].mxu0 %v3892
  %v4059 = vpop.f32.mrb[0].mxu0
  %v4060 = vadd.f32 0.0, %v4059
  %v4061 = vpop.f32.mrb[0].mxu0
  %4062 = vmatprep.mubr.f32.mxu0 %v3897
  %4063 = vmatmul.mubr.f32.gmra.mrb[0].mxu0 %v3896
  %v4064 = vpop.f32.mrb[0].mxu0
  %v4065 = vadd.f32 0.0, %v4064
  %v4066 = vpop.f32.mrb[0].mxu0
  %4067 = vmatprep.mubr.f32.mxu0 %v3901
  %4068 = vmatmul.mubr.f32.gmra.mrb[0].mxu0 %v3900
  %v4069 = vpop.f32.mrb[0].mxu0
  %v4070 = vadd.f32 0.0, %v4069
  %v4071 = vpop.f32.mrb[0].mxu0
  %4072 = vdwg.mxu0
  %4073 = vmatprep.subr.mxu0 0.0
  %4074 = vmatpush1.msra.mxu0 %v1009
  %4075 = vmatprep.subr.mxu0 0.0
  %4076 = vmatpush1.msra.mxu0 %v1010
  %4077 = vmatprep.subr.mxu0 0.0
  %4078 = vmatpush1.msra.mxu0 %v1011
  %4079 = vmatprep.subr.mxu0 0.0
  %4080 = vmatpush1.msra.mxu0 %v1012
  %4081 = vmatprep.subr.mxu0 0.0
  %4082 = vmatpush1.msra.mxu0 %v1013
  %4083 = vmatprep.subr.mxu0 0.0
  %4084 = vmatpush1.msra.mxu0 %v1014
  %4085 = vmatprep.subr.mxu0 0.0
  %4086 = vmatpush1.msra.mxu0 %v1015
  %4087 = vmatprep.subr.mxu0 0.0
  %4088 = vmatpush1.msra.mxu0 %v1016
  %4089 = vmatprep.subr.mxu0 0.0
  %4090 = vmatpush1.msra.mxu0 %v1017
  %4091 = vmatprep.subr.mxu0 0.0
  %4092 = vmatpush1.msra.mxu0 %v1018
  %4093 = vmatprep.subr.mxu0 0.0
  %4094 = vmatpush1.msra.mxu0 %v1019
  %4095 = vmatprep.subr.mxu0 0.0
  %4096 = vmatpush1.msra.mxu0 %v1020
  %4097 = vmatprep.subr.mxu0 0.0
  %4098 = vmatpush1.msra.mxu0 %v1021
  %4099 = vmatprep.subr.mxu0 0.0
  %4100 = vmatpush1.msra.mxu0 %v1022
  %4101 = vmatprep.subr.mxu0 0.0
  %4102 = vmatpush1.msra.mxu0 %v1023
  %4103 = vmatprep.subr.mxu0 0.0
  %4104 = vmatpush1.msra.mxu0 %v1024
  %4105 = vmatprep.subr.mxu0 0.0
  %4106 = vmatpush1.msra.mxu0 %v1025
  %4107 = vmatprep.subr.mxu0 0.0
  %4108 = vmatpush1.msra.mxu0 0.0
  %4109 = vmatprep.subr.mxu0 0.0
  %4110 = vmatpush1.msra.mxu0 0.0
  %4111 = vmatprep.subr.mxu0 0.0
  %4112 = vmatpush1.msra.mxu0 0.0
  %4113 = vmatprep.subr.mxu0 0.0
  %4114 = vmatpush1.msra.mxu0 0.0
  %4115 = vmatprep.subr.mxu0 0.0
  %4116 = vmatpush1.msra.mxu0 0.0
  %4117 = vmatprep.subr.mxu0 0.0
  %4118 = vmatpush1.msra.mxu0 0.0
  %4119 = vmatprep.subr.mxu0 0.0
  %4120 = vmatpush1.msra.mxu0 0.0
  %4121 = vmatprep.subr.mxu0 0.0
  %4122 = vmatpush1.msra.mxu0 0.0
  %4123 = vmatprep.subr.mxu0 0.0
  %4124 = vmatpush1.msra.mxu0 0.0
  %4125 = vmatprep.subr.mxu0 0.0
  %4126 = vmatpush1.msra.mxu0 0.0
  %4127 = vmatprep.subr.mxu0 0.0
  %4128 = vmatpush1.msra.mxu0 0.0
  %4129 = vmatprep.subr.mxu0 0.0
  %4130 = vmatpush1.msra.mxu0 0.0
  %4131 = vmatprep.subr.mxu0 0.0
  %4132 = vmatpush1.msra.mxu0 0.0
  %4133 = vmatprep.subr.mxu0 0.0
  %4134 = vmatpush1.msra.mxu0 0.0
  %4135 = vmatprep.subr.mxu0 0.0
  %4136 = vmatpush1.msra.mxu0 0.0
  %4137 = vmatprep.mubr.f32.mxu0 %v3905
  %4138 = vmatmul.mubr.f32.gmra.mrb[0].mxu0 %v3854
  %v4139 = vpop.f32.mrb[0].mxu0
  %v4140 = vadd.f32 %v4010, %v4139
  %v4141 = vpop.f32.mrb[0].mxu0
  %4142 = vmatprep.mubr.f32.mxu0 %v3908
  %4143 = vmatmul.mubr.f32.gmra.mrb[0].mxu0 %v3858
  %v4144 = vpop.f32.mrb[0].mxu0
  %v4145 = vadd.f32 %v4015, %v4144
  %v4146 = vpop.f32.mrb[0].mxu0
  %4147 = vmatprep.mubr.f32.mxu0 %v3911
  %4148 = vmatmul.mubr.f32.gmra.mrb[0].mxu0 %v3862
  %v4149 = vpop.f32.mrb[0].mxu0
  %v4150 = vadd.f32 %v4020, %v4149
  %v4151 = vpop.f32.mrb[0].mxu0
  %4152 = vmatprep.mubr.f32.mxu0 %v3914
  %4153 = vmatmul.mubr.f32.gmra.mrb[0].mxu0 %v3866
  %v4154 = vpop.f32.mrb[0].mxu0
  %v4155 = vadd.f32 %v4025, %v4154
  %v4156 = vpop.f32.mrb[0].mxu0
  %4157 = vmatprep.mubr.f32.mxu0 %v3917
  %4158 = vmatmul.mubr.f32.gmra.mrb[0].mxu0 %v3870
  %v4159 = vpop.f32.mrb[0].mxu0
  %v4160 = vadd.f32 %v4030, %v4159
  %v4161 = vpop.f32.mrb[0].mxu0
  %4162 = vmatprep.mubr.f32.mxu0 %v3920
  %4163 = vmatmul.mubr.f32.gmra.mrb[0].mxu0 %v3874
  %v4164 = vpop.f32.mrb[0].mxu0
  %v4165 = vadd.f32 %v4035, %v4164
  %v4166 = vpop.f32.mrb[0].mxu0
  %4167 = vmatprep.mubr.f32.mxu0 %v3923
  %4168 = vmatmul.mubr.f32.gmra.mrb[0].mxu0 %v3878
  %v4169 = vpop.f32.mrb[0].mxu0
  %v4170 = vadd.f32 %v4040, %v4169
  %v4171 = vpop.f32.mrb[0].mxu0
  %4172 = vmatprep.mubr.f32.mxu0 %v3926
  %4173 = vmatmul.mubr.f32.gmra.mrb[0].mxu0 %v3882
  %v4174 = vpop.f32.mrb[0].mxu0
  %v4175 = vadd.f32 %v4045, %v4174
  %v4176 = vpop.f32.mrb[0].mxu0
  %4177 = vmatprep.mubr.f32.mxu0 %v3929
  %4178 = vmatmul.mubr.f32.gmra.mrb[0].mxu0 %v3886
  %v4179 = vpop.f32.mrb[0].mxu0
  %v4180 = vadd.f32 %v4050, %v4179
  %v4181 = vpop.f32.mrb[0].mxu0
  %4182 = vmatprep.mubr.f32.mxu0 %v3932
  %4183 = vmatmul.mubr.f32.gmra.mrb[0].mxu0 %v3890
  %v4184 = vpop.f32.mrb[0].mxu0
  %v4185 = vadd.f32 %v4055, %v4184
  %v4186 = vpop.f32.mrb[0].mxu0
  %4187 = vmatprep.mubr.f32.mxu0 %v3935
  %4188 = vmatmul.mubr.f32.gmra.mrb[0].mxu0 %v3894
  %v4189 = vpop.f32.mrb[0].mxu0
  %v4190 = vadd.f32 %v4060, %v4189
  %v4191 = vpop.f32.mrb[0].mxu0
  %4192 = vmatprep.mubr.f32.mxu0 %v3938
  %4193 = vmatmul.mubr.f32.gmra.mrb[0].mxu0 %v3898
  %v4194 = vpop.f32.mrb[0].mxu0
  %v4195 = vadd.f32 %v4065, %v4194
  %v4196 = vpop.f32.mrb[0].mxu0
  %4197 = vmatprep.mubr.f32.mxu0 %v3941
  %4198 = vmatmul.mubr.f32.gmra.mrb[0].mxu0 %v3902
  %v4199 = vpop.f32.mrb[0].mxu0
  %v4200 = vadd.f32 %v4070, %v4199
  %v4201 = vpop.f32.mrb[0].mxu0
  %4202 = vdwg.mxu0
  %s4203 = scalar_lea.vmem %s3, 20
  %v4204 = vld [vmem:[%s4203] sm:$0xf]
  %v4206 = vsel %vm601, %v4140, 0
  %v4209 = vsel %vm601, %v4145, 0
  %v4212 = vsel %vm601, %v4150, 0
  %v4215 = vsel %vm601, %v4155, 0
  %v4218 = vsel %vm601, %v4160, 0
  %v4221 = vsel %vm601, %v4165, 0
  %v4224 = vsel %vm601, %v4170, 0
  %v4227 = vsel %vm601, %v4175, 0
  %v4230 = vsel %vm601, %v4180, 0
  %v4233 = vsel %vm601, %v4185, 0
  %v4236 = vsel %vm601, %v4190, 0
  %v4239 = vsel %vm601, %v4195, 0
  %v4242 = vsel %vm601, %v4200, 0
  %v4245 = vsel %vm1824, %v4204, 0
  %4247 = vmatprep.subr.mxu0 0.0
  %4248 = vmatpush1.msra.mxu0 %v4245
  %4249 = vmatprep.subr.mxu0 0.0
  %4250 = vmatpush1.msra.mxu0 0.0
  %4251 = vmatprep.subr.mxu0 0.0
  %4252 = vmatpush1.msra.mxu0 0.0
  %4253 = vmatprep.subr.mxu0 0.0
  %4254 = vmatpush1.msra.mxu0 0.0
  %4255 = vmatprep.subr.mxu0 0.0
  %4256 = vmatpush1.msra.mxu0 0.0
  %4257 = vmatprep.subr.mxu0 0.0
  %4258 = vmatpush1.msra.mxu0 0.0
  %4259 = vmatprep.subr.mxu0 0.0
  %4260 = vmatpush1.msra.mxu0 0.0
  %4261 = vmatprep.subr.mxu0 0.0
  %4262 = vmatpush1.msra.mxu0 0.0
  %4263 = vmatprep.subr.mxu0 0.0
  %4264 = vmatpush1.msra.mxu0 0.0
  %4265 = vmatprep.subr.mxu0 0.0
  %4266 = vmatpush1.msra.mxu0 0.0
  %4267 = vmatprep.subr.mxu0 0.0
  %4268 = vmatpush1.msra.mxu0 0.0
  %4269 = vmatprep.subr.mxu0 0.0
  %4270 = vmatpush1.msra.mxu0 0.0
  %4271 = vmatprep.subr.mxu0 0.0
  %4272 = vmatpush1.msra.mxu0 0.0
  %4273 = vmatprep.subr.mxu0 0.0
  %4274 = vmatpush1.msra.mxu0 0.0
  %4275 = vmatprep.subr.mxu0 0.0
  %4276 = vmatpush1.msra.mxu0 0.0
  %4277 = vmatprep.subr.mxu0 0.0
  %4278 = vmatpush1.msra.mxu0 0.0
  %4279 = vmatprep.subr.mxu0 0.0
  %4280 = vmatpush1.msra.mxu0 0.0
  %4281 = vmatprep.subr.mxu0 0.0
  %4282 = vmatpush1.msra.mxu0 0.0
  %4283 = vmatprep.subr.mxu0 0.0
  %4284 = vmatpush1.msra.mxu0 0.0
  %4285 = vmatprep.subr.mxu0 0.0
  %4286 = vmatpush1.msra.mxu0 0.0
  %4287 = vmatprep.subr.mxu0 0.0
  %4288 = vmatpush1.msra.mxu0 0.0
  %4289 = vmatprep.subr.mxu0 0.0
  %4290 = vmatpush1.msra.mxu0 0.0
  %4291 = vmatprep.subr.mxu0 0.0
  %4292 = vmatpush1.msra.mxu0 0.0
  %4293 = vmatprep.subr.mxu0 0.0
  %4294 = vmatpush1.msra.mxu0 0.0
  %4295 = vmatprep.subr.mxu0 0.0
  %4296 = vmatpush1.msra.mxu0 0.0
  %4297 = vmatprep.subr.mxu0 0.0
  %4298 = vmatpush1.msra.mxu0 0.0
  %4299 = vmatprep.subr.mxu0 0.0
  %4300 = vmatpush1.msra.mxu0 0.0
  %4301 = vmatprep.subr.mxu0 0.0
  %4302 = vmatpush1.msra.mxu0 0.0
  %4303 = vmatprep.subr.mxu0 0.0
  %4304 = vmatpush1.msra.mxu0 0.0
  %4305 = vmatprep.subr.mxu0 0.0
  %4306 = vmatpush1.msra.mxu0 0.0
  %4307 = vmatprep.subr.mxu0 0.0
  %4308 = vmatpush1.msra.mxu0 0.0
  %4309 = vmatprep.subr.mxu0 0.0
  %4310 = vmatpush1.msra.mxu0 0.0
  %4311 = vmatprep.mubr.f32.mxu0 0.0
  %4312 = vmatmul.mubr.f32.gmra.mrb[0].mxu0 %v4206
  %v4313 = vpop.f32.mrb[0].mxu0
  %v4314 = vadd.f32 0.0, %v4313
  %v4315 = vpop.f32.mrb[0].mxu0
  %4316 = vmatprep.mubr.f32.mxu0 0.0
  %4317 = vmatmul.mubr.f32.gmra.mrb[0].mxu0 %v4209
  %v4318 = vpop.f32.mrb[0].mxu0
  %v4319 = vadd.f32 0.0, %v4318
  %v4320 = vpop.f32.mrb[0].mxu0
  %4321 = vmatprep.mubr.f32.mxu0 0.0
  %4322 = vmatmul.mubr.f32.gmra.mrb[0].mxu0 %v4212
  %v4323 = vpop.f32.mrb[0].mxu0
  %v4324 = vadd.f32 0.0, %v4323
  %v4325 = vpop.f32.mrb[0].mxu0
  %4326 = vmatprep.mubr.f32.mxu0 0.0
  %4327 = vmatmul.mubr.f32.gmra.mrb[0].mxu0 %v4215
  %v4328 = vpop.f32.mrb[0].mxu0
  %v4329 = vadd.f32 0.0, %v4328
  %v4330 = vpop.f32.mrb[0].mxu0
  %4331 = vmatprep.mubr.f32.mxu0 0.0
  %4332 = vmatmul.mubr.f32.gmra.mrb[0].mxu0 %v4218
  %v4333 = vpop.f32.mrb[0].mxu0
  %v4334 = vadd.f32 0.0, %v4333
  %v4335 = vpop.f32.mrb[0].mxu0
  %4336 = vmatprep.mubr.f32.mxu0 0.0
  %4337 = vmatmul.mubr.f32.gmra.mrb[0].mxu0 %v4221
  %v4338 = vpop.f32.mrb[0].mxu0
  %v4339 = vadd.f32 0.0, %v4338
  %v4340 = vpop.f32.mrb[0].mxu0
  %4341 = vmatprep.mubr.f32.mxu0 0.0
  %4342 = vmatmul.mubr.f32.gmra.mrb[0].mxu0 %v4224
  %v4343 = vpop.f32.mrb[0].mxu0
  %v4344 = vadd.f32 0.0, %v4343
  %v4345 = vpop.f32.mrb[0].mxu0
  %4346 = vmatprep.mubr.f32.mxu0 0.0
  %4347 = vmatmul.mubr.f32.gmra.mrb[0].mxu0 %v4227
  %v4348 = vpop.f32.mrb[0].mxu0
  %v4349 = vadd.f32 0.0, %v4348
  %v4350 = vpop.f32.mrb[0].mxu0
  %4351 = vmatprep.mubr.f32.mxu0 0.0
  %4352 = vmatmul.mubr.f32.gmra.mrb[0].mxu0 %v4230
  %v4353 = vpop.f32.mrb[0].mxu0
  %v4354 = vadd.f32 0.0, %v4353
  %v4355 = vpop.f32.mrb[0].mxu0
  %4356 = vmatprep.mubr.f32.mxu0 0.0
  %4357 = vmatmul.mubr.f32.gmra.mrb[0].mxu0 %v4233
  %v4358 = vpop.f32.mrb[0].mxu0
  %v4359 = vadd.f32 0.0, %v4358
  %v4360 = vpop.f32.mrb[0].mxu0
  %4361 = vmatprep.mubr.f32.mxu0 0.0
  %4362 = vmatmul.mubr.f32.gmra.mrb[0].mxu0 %v4236
  %v4363 = vpop.f32.mrb[0].mxu0
  %v4364 = vadd.f32 0.0, %v4363
  %v4365 = vpop.f32.mrb[0].mxu0
  %4366 = vmatprep.mubr.f32.mxu0 0.0
  %4367 = vmatmul.mubr.f32.gmra.mrb[0].mxu0 %v4239
  %v4368 = vpop.f32.mrb[0].mxu0
  %v4369 = vadd.f32 0.0, %v4368
  %v4370 = vpop.f32.mrb[0].mxu0
  %4371 = vmatprep.mubr.f32.mxu0 0.0
  %4372 = vmatmul.mubr.f32.gmra.mrb[0].mxu0 %v4242
  %v4373 = vpop.f32.mrb[0].mxu0
  %v4374 = vadd.f32 0.0, %v4373
  %v4375 = vpop.f32.mrb[0].mxu0
  %4376 = vdwg.mxu0
  %v4377 = vadd.f32 %v3812, %v4314
  %v4378 = vadd.f32 %v3813, %v4319
  %v4379 = vadd.f32 %v3814, %v4324
  %v4380 = vadd.f32 %v3815, %v4329
  %v4381 = vadd.f32 %v3816, %v4334
  %v4382 = vadd.f32 %v3817, %v4339
  %v4383 = vadd.f32 %v3818, %v4344
  %v4384 = vadd.f32 %v3819, %v4349
  %v4385 = vadd.f32 %v3820, %v4354
  %v4386 = vadd.f32 %v3821, %v4359
  %v4387 = vadd.f32 %v3822, %v4364
  %v4388 = vadd.f32 %v3823, %v4369
  %v4389 = vadd.f32 %v3824, %v4374
  %s4390 = scalar_lea.vmem %s2, 1248
  %v4391 = vld [vmem:[%s4390] sm:$0xff]
  %v4392 = vld [vmem:[%s4390 + $0x8] sm:$0xff]
  %v4393 = vld [vmem:[%s4390 + $0x10] sm:$0xff]
  %v4394 = vld [vmem:[%s4390 + $0x18] sm:$0xff]
  %v4395 = vld [vmem:[%s4390 + $0x20] sm:$0xff]
  %v4396 = vld [vmem:[%s4390 + $0x28] sm:$0xff]
  %v4397 = vld [vmem:[%s4390 + $0x30] sm:$0xff]
  %v4398 = vld [vmem:[%s4390 + $0x38] sm:$0xff]
  %v4399 = vld [vmem:[%s4390 + $0x40] sm:$0xff]
  %v4400 = vld [vmem:[%s4390 + $0x48] sm:$0xff]
  %v4401 = vld [vmem:[%s4390 + $0x50] sm:$0xff]
  %v4402 = vld [vmem:[%s4390 + $0x58] sm:$0xff]
  %v4403 = vld [vmem:[%s4390 + $0x60] sm:$0xff]
  %v4404 = vld [vmem:[%s4390 + $0x68] sm:$0xff]
  %v4405 = vld [vmem:[%s4390 + $0x70] sm:$0xff]
  %v4406 = vld [vmem:[%s4390 + $0x78] sm:$0xff]
  %v4407 = vld [vmem:[%s4390 + $0x80] sm:$0xff]
  %v4408 = vld [vmem:[%s4390 + $0x88] sm:$0xff]
  %v4409 = vld [vmem:[%s4390 + $0x90] sm:$0xff]
  %v4410 = vld [vmem:[%s4390 + $0x98] sm:$0xff]
  %v4411 = vld [vmem:[%s4390 + $0xa0] sm:$0xff]
  %v4412 = vld [vmem:[%s4390 + $0xa8] sm:$0xff]
  %v4413 = vld [vmem:[%s4390 + $0xb0] sm:$0xff]
  %v4414 = vld [vmem:[%s4390 + $0xb8] sm:$0xff]
  %v4415 = vld [vmem:[%s4390 + $0xc0] sm:$0x11]
  %v4416 = vld [vmem:[%s4390 + $0xc8] sm:$0x11]
  %v4417 = vunpack.c.l.bf16 %v4391
  %v4418 = vunpack.c.h.bf16 %v4391
  %v4419 = vunpack.c.l.bf16 %v4392
  %v4420 = vunpack.c.h.bf16 %v4392
  %v4421 = vunpack.c.l.bf16 %v4393
  %v4422 = vunpack.c.h.bf16 %v4393
  %v4423 = vunpack.c.l.bf16 %v4394
  %v4424 = vunpack.c.h.bf16 %v4394
  %v4425 = vunpack.c.l.bf16 %v4395
  %v4426 = vunpack.c.h.bf16 %v4395
  %v4427 = vunpack.c.l.bf16 %v4396
  %v4428 = vunpack.c.h.bf16 %v4396
  %v4429 = vunpack.c.l.bf16 %v4397
  %v4430 = vunpack.c.h.bf16 %v4397
  %v4431 = vunpack.c.l.bf16 %v4398
  %v4432 = vunpack.c.h.bf16 %v4398
  %v4433 = vunpack.c.l.bf16 %v4399
  %v4434 = vunpack.c.h.bf16 %v4399
  %v4435 = vunpack.c.l.bf16 %v4400
  %v4436 = vunpack.c.h.bf16 %v4400
  %v4437 = vunpack.c.l.bf16 %v4401
  %v4438 = vunpack.c.h.bf16 %v4401
  %v4439 = vunpack.c.l.bf16 %v4402
  %v4440 = vunpack.c.h.bf16 %v4402
  %v4441 = vunpack.c.l.bf16 %v4403
  %v4442 = vunpack.c.h.bf16 %v4403
  %v4443 = vunpack.c.l.bf16 %v4404
  %v4444 = vunpack.c.h.bf16 %v4404
  %v4445 = vunpack.c.l.bf16 %v4405
  %v4446 = vunpack.c.h.bf16 %v4405
  %v4447 = vunpack.c.l.bf16 %v4406
  %v4448 = vunpack.c.h.bf16 %v4406
  %v4449 = vunpack.c.l.bf16 %v4407
  %v4450 = vunpack.c.h.bf16 %v4407
  %v4451 = vunpack.c.l.bf16 %v4408
  %v4452 = vunpack.c.h.bf16 %v4408
  %v4453 = vunpack.c.l.bf16 %v4409
  %v4454 = vunpack.c.h.bf16 %v4409
  %v4455 = vunpack.c.l.bf16 %v4410
  %v4456 = vunpack.c.h.bf16 %v4410
  %v4457 = vunpack.c.l.bf16 %v4411
  %v4458 = vunpack.c.h.bf16 %v4411
  %v4459 = vunpack.c.l.bf16 %v4412
  %v4460 = vunpack.c.h.bf16 %v4412
  %v4461 = vunpack.c.l.bf16 %v4413
  %v4462 = vunpack.c.h.bf16 %v4413
  %v4463 = vunpack.c.l.bf16 %v4414
  %v4464 = vunpack.c.h.bf16 %v4414
  %v4465 = vunpack.c.l.bf16 %v4415
  %v4466 = vunpack.c.h.bf16 %v4415
  %v4467 = vunpack.c.l.bf16 %v4416
  %v4468 = vunpack.c.h.bf16 %v4416
  %v4470 = vsel %vm1104, %v4420, 0
  %v4473 = vsel %vm1104, %v4424, 0
  %v4476 = vsel %vm1104, %v4428, 0
  %v4479 = vsel %vm1104, %v4432, 0
  %v4482 = vsel %vm1104, %v4436, 0
  %v4485 = vsel %vm1104, %v4440, 0
  %v4488 = vsel %vm1104, %v4444, 0
  %v4491 = vsel %vm1104, %v4448, 0
  %v4494 = vsel %vm1104, %v4452, 0
  %v4497 = vsel %vm1104, %v4456, 0
  %v4500 = vsel %vm1104, %v4460, 0
  %v4503 = vsel %vm1104, %v4464, 0
  %v4506 = vsel %vm1104, %v4468, 0
  %4508 = vmatprep.subr.mxu0 0.0
  %4509 = vmatpush1.msra.mxu0 %v977
  %4510 = vmatprep.subr.mxu0 0.0
  %4511 = vmatpush1.msra.mxu0 %v978
  %4512 = vmatprep.subr.mxu0 0.0
  %4513 = vmatpush1.msra.mxu0 %v979
  %4514 = vmatprep.subr.mxu0 0.0
  %4515 = vmatpush1.msra.mxu0 %v980
  %4516 = vmatprep.subr.mxu0 0.0
  %4517 = vmatpush1.msra.mxu0 %v981
  %4518 = vmatprep.subr.mxu0 0.0
  %4519 = vmatpush1.msra.mxu0 %v982
  %4520 = vmatprep.subr.mxu0 0.0
  %4521 = vmatpush1.msra.mxu0 %v983
  %4522 = vmatprep.subr.mxu0 0.0
  %4523 = vmatpush1.msra.mxu0 %v984
  %4524 = vmatprep.subr.mxu0 0.0
  %4525 = vmatpush1.msra.mxu0 %v985
  %4526 = vmatprep.subr.mxu0 0.0
  %4527 = vmatpush1.msra.mxu0 %v986
  %4528 = vmatprep.subr.mxu0 0.0
  %4529 = vmatpush1.msra.mxu0 %v987
  %4530 = vmatprep.subr.mxu0 0.0
  %4531 = vmatpush1.msra.mxu0 %v988
  %4532 = vmatprep.subr.mxu0 0.0
  %4533 = vmatpush1.msra.mxu0 %v989
  %4534 = vmatprep.subr.mxu0 0.0
  %4535 = vmatpush1.msra.mxu0 %v990
  %4536 = vmatprep.subr.mxu0 0.0
  %4537 = vmatpush1.msra.mxu0 %v991
  %4538 = vmatprep.subr.mxu0 0.0
  %4539 = vmatpush1.msra.mxu0 %v992
  %4540 = vmatprep.subr.mxu0 0.0
  %4541 = vmatpush1.msra.mxu0 %v993
  %4542 = vmatprep.subr.mxu0 0.0
  %4543 = vmatpush1.msra.mxu0 %v994
  %4544 = vmatprep.subr.mxu0 0.0
  %4545 = vmatpush1.msra.mxu0 %v995
  %4546 = vmatprep.subr.mxu0 0.0
  %4547 = vmatpush1.msra.mxu0 %v996
  %4548 = vmatprep.subr.mxu0 0.0
  %4549 = vmatpush1.msra.mxu0 %v997
  %4550 = vmatprep.subr.mxu0 0.0
  %4551 = vmatpush1.msra.mxu0 %v998
  %4552 = vmatprep.subr.mxu0 0.0
  %4553 = vmatpush1.msra.mxu0 %v999
  %4554 = vmatprep.subr.mxu0 0.0
  %4555 = vmatpush1.msra.mxu0 %v1000
  %4556 = vmatprep.subr.mxu0 0.0
  %4557 = vmatpush1.msra.mxu0 %v1001
  %4558 = vmatprep.subr.mxu0 0.0
  %4559 = vmatpush1.msra.mxu0 %v1002
  %4560 = vmatprep.subr.mxu0 0.0
  %4561 = vmatpush1.msra.mxu0 %v1003
  %4562 = vmatprep.subr.mxu0 0.0
  %4563 = vmatpush1.msra.mxu0 %v1004
  %4564 = vmatprep.subr.mxu0 0.0
  %4565 = vmatpush1.msra.mxu0 %v1005
  %4566 = vmatprep.subr.mxu0 0.0
  %4567 = vmatpush1.msra.mxu0 %v1006
  %4568 = vmatprep.subr.mxu0 0.0
  %4569 = vmatpush1.msra.mxu0 %v1007
  %4570 = vmatprep.subr.mxu0 0.0
  %4571 = vmatpush1.msra.mxu0 %v1008
  %4572 = vmatprep.mubr.f32.mxu0 %v4418
  %4573 = vmatmul.mubr.f32.gmra.mrb[0].mxu0 %v4417
  %v4574 = vpop.f32.mrb[0].mxu0
  %v4575 = vadd.f32 0.0, %v4574
  %v4576 = vpop.f32.mrb[0].mxu0
  %4577 = vmatprep.mubr.f32.mxu0 %v4422
  %4578 = vmatmul.mubr.f32.gmra.mrb[0].mxu0 %v4421
  %v4579 = vpop.f32.mrb[0].mxu0
  %v4580 = vadd.f32 0.0, %v4579
  %v4581 = vpop.f32.mrb[0].mxu0
  %4582 = vmatprep.mubr.f32.mxu0 %v4426
  %4583 = vmatmul.mubr.f32.gmra.mrb[0].mxu0 %v4425
  %v4584 = vpop.f32.mrb[0].mxu0
  %v4585 = vadd.f32 0.0, %v4584
  %v4586 = vpop.f32.mrb[0].mxu0
  %4587 = vmatprep.mubr.f32.mxu0 %v4430
  %4588 = vmatmul.mubr.f32.gmra.mrb[0].mxu0 %v4429
  %v4589 = vpop.f32.mrb[0].mxu0
  %v4590 = vadd.f32 0.0, %v4589
  %v4591 = vpop.f32.mrb[0].mxu0
  %4592 = vmatprep.mubr.f32.mxu0 %v4434
  %4593 = vmatmul.mubr.f32.gmra.mrb[0].mxu0 %v4433
  %v4594 = vpop.f32.mrb[0].mxu0
  %v4595 = vadd.f32 0.0, %v4594
  %v4596 = vpop.f32.mrb[0].mxu0
  %4597 = vmatprep.mubr.f32.mxu0 %v4438
  %4598 = vmatmul.mubr.f32.gmra.mrb[0].mxu0 %v4437
  %v4599 = vpop.f32.mrb[0].mxu0
  %v4600 = vadd.f32 0.0, %v4599
  %v4601 = vpop.f32.mrb[0].mxu0
  %4602 = vmatprep.mubr.f32.mxu0 %v4442
  %4603 = vmatmul.mubr.f32.gmra.mrb[0].mxu0 %v4441
  %v4604 = vpop.f32.mrb[0].mxu0
  %v4605 = vadd.f32 0.0, %v4604
  %v4606 = vpop.f32.mrb[0].mxu0
  %4607 = vmatprep.mubr.f32.mxu0 %v4446
  %4608 = vmatmul.mubr.f32.gmra.mrb[0].mxu0 %v4445
  %v4609 = vpop.f32.mrb[0].mxu0
  %v4610 = vadd.f32 0.0, %v4609
  %v4611 = vpop.f32.mrb[0].mxu0
  %4612 = vmatprep.mubr.f32.mxu0 %v4450
  %4613 = vmatmul.mubr.f32.gmra.mrb[0].mxu0 %v4449
  %v4614 = vpop.f32.mrb[0].mxu0
  %v4615 = vadd.f32 0.0, %v4614
  %v4616 = vpop.f32.mrb[0].mxu0
  %4617 = vmatprep.mubr.f32.mxu0 %v4454
  %4618 = vmatmul.mubr.f32.gmra.mrb[0].mxu0 %v4453
  %v4619 = vpop.f32.mrb[0].mxu0
  %v4620 = vadd.f32 0.0, %v4619
  %v4621 = vpop.f32.mrb[0].mxu0
  %4622 = vmatprep.mubr.f32.mxu0 %v4458
  %4623 = vmatmul.mubr.f32.gmra.mrb[0].mxu0 %v4457
  %v4624 = vpop.f32.mrb[0].mxu0
  %v4625 = vadd.f32 0.0, %v4624
  %v4626 = vpop.f32.mrb[0].mxu0
  %4627 = vmatprep.mubr.f32.mxu0 %v4462
  %4628 = vmatmul.mubr.f32.gmra.mrb[0].mxu0 %v4461
  %v4629 = vpop.f32.mrb[0].mxu0
  %v4630 = vadd.f32 0.0, %v4629
  %v4631 = vpop.f32.mrb[0].mxu0
  %4632 = vmatprep.mubr.f32.mxu0 %v4466
  %4633 = vmatmul.mubr.f32.gmra.mrb[0].mxu0 %v4465
  %v4634 = vpop.f32.mrb[0].mxu0
  %v4635 = vadd.f32 0.0, %v4634
  %v4636 = vpop.f32.mrb[0].mxu0
  %4637 = vdwg.mxu0
  %4638 = vmatprep.subr.mxu0 0.0
  %4639 = vmatpush1.msra.mxu0 %v1009
  %4640 = vmatprep.subr.mxu0 0.0
  %4641 = vmatpush1.msra.mxu0 %v1010
  %4642 = vmatprep.subr.mxu0 0.0
  %4643 = vmatpush1.msra.mxu0 %v1011
  %4644 = vmatprep.subr.mxu0 0.0
  %4645 = vmatpush1.msra.mxu0 %v1012
  %4646 = vmatprep.subr.mxu0 0.0
  %4647 = vmatpush1.msra.mxu0 %v1013
  %4648 = vmatprep.subr.mxu0 0.0
  %4649 = vmatpush1.msra.mxu0 %v1014
  %4650 = vmatprep.subr.mxu0 0.0
  %4651 = vmatpush1.msra.mxu0 %v1015
  %4652 = vmatprep.subr.mxu0 0.0
  %4653 = vmatpush1.msra.mxu0 %v1016
  %4654 = vmatprep.subr.mxu0 0.0
  %4655 = vmatpush1.msra.mxu0 %v1017
  %4656 = vmatprep.subr.mxu0 0.0
  %4657 = vmatpush1.msra.mxu0 %v1018
  %4658 = vmatprep.subr.mxu0 0.0
  %4659 = vmatpush1.msra.mxu0 %v1019
  %4660 = vmatprep.subr.mxu0 0.0
  %4661 = vmatpush1.msra.mxu0 %v1020
  %4662 = vmatprep.subr.mxu0 0.0
  %4663 = vmatpush1.msra.mxu0 %v1021
  %4664 = vmatprep.subr.mxu0 0.0
  %4665 = vmatpush1.msra.mxu0 %v1022
  %4666 = vmatprep.subr.mxu0 0.0
  %4667 = vmatpush1.msra.mxu0 %v1023
  %4668 = vmatprep.subr.mxu0 0.0
  %4669 = vmatpush1.msra.mxu0 %v1024
  %4670 = vmatprep.subr.mxu0 0.0
  %4671 = vmatpush1.msra.mxu0 %v1025
  %4672 = vmatprep.subr.mxu0 0.0
  %4673 = vmatpush1.msra.mxu0 0.0
  %4674 = vmatprep.subr.mxu0 0.0
  %4675 = vmatpush1.msra.mxu0 0.0
  %4676 = vmatprep.subr.mxu0 0.0
  %4677 = vmatpush1.msra.mxu0 0.0
  %4678 = vmatprep.subr.mxu0 0.0
  %4679 = vmatpush1.msra.mxu0 0.0
  %4680 = vmatprep.subr.mxu0 0.0
  %4681 = vmatpush1.msra.mxu0 0.0
  %4682 = vmatprep.subr.mxu0 0.0
  %4683 = vmatpush1.msra.mxu0 0.0
  %4684 = vmatprep.subr.mxu0 0.0
  %4685 = vmatpush1.msra.mxu0 0.0
  %4686 = vmatprep.subr.mxu0 0.0
  %4687 = vmatpush1.msra.mxu0 0.0
  %4688 = vmatprep.subr.mxu0 0.0
  %4689 = vmatpush1.msra.mxu0 0.0
  %4690 = vmatprep.subr.mxu0 0.0
  %4691 = vmatpush1.msra.mxu0 0.0
  %4692 = vmatprep.subr.mxu0 0.0
  %4693 = vmatpush1.msra.mxu0 0.0
  %4694 = vmatprep.subr.mxu0 0.0
  %4695 = vmatpush1.msra.mxu0 0.0
  %4696 = vmatprep.subr.mxu0 0.0
  %4697 = vmatpush1.msra.mxu0 0.0
  %4698 = vmatprep.subr.mxu0 0.0
  %4699 = vmatpush1.msra.mxu0 0.0
  %4700 = vmatprep.subr.mxu0 0.0
  %4701 = vmatpush1.msra.mxu0 0.0
  %4702 = vmatprep.mubr.f32.mxu0 %v4470
  %4703 = vmatmul.mubr.f32.gmra.mrb[0].mxu0 %v4419
  %v4704 = vpop.f32.mrb[0].mxu0
  %v4705 = vadd.f32 %v4575, %v4704
  %v4706 = vpop.f32.mrb[0].mxu0
  %4707 = vmatprep.mubr.f32.mxu0 %v4473
  %4708 = vmatmul.mubr.f32.gmra.mrb[0].mxu0 %v4423
  %v4709 = vpop.f32.mrb[0].mxu0
  %v4710 = vadd.f32 %v4580, %v4709
  %v4711 = vpop.f32.mrb[0].mxu0
  %4712 = vmatprep.mubr.f32.mxu0 %v4476
  %4713 = vmatmul.mubr.f32.gmra.mrb[0].mxu0 %v4427
  %v4714 = vpop.f32.mrb[0].mxu0
  %v4715 = vadd.f32 %v4585, %v4714
  %v4716 = vpop.f32.mrb[0].mxu0
  %4717 = vmatprep.mubr.f32.mxu0 %v4479
  %4718 = vmatmul.mubr.f32.gmra.mrb[0].mxu0 %v4431
  %v4719 = vpop.f32.mrb[0].mxu0
  %v4720 = vadd.f32 %v4590, %v4719
  %v4721 = vpop.f32.mrb[0].mxu0
  %4722 = vmatprep.mubr.f32.mxu0 %v4482
  %4723 = vmatmul.mubr.f32.gmra.mrb[0].mxu0 %v4435
  %v4724 = vpop.f32.mrb[0].mxu0
  %v4725 = vadd.f32 %v4595, %v4724
  %v4726 = vpop.f32.mrb[0].mxu0
  %4727 = vmatprep.mubr.f32.mxu0 %v4485
  %4728 = vmatmul.mubr.f32.gmra.mrb[0].mxu0 %v4439
  %v4729 = vpop.f32.mrb[0].mxu0
  %v4730 = vadd.f32 %v4600, %v4729
  %v4731 = vpop.f32.mrb[0].mxu0
  %4732 = vmatprep.mubr.f32.mxu0 %v4488
  %4733 = vmatmul.mubr.f32.gmra.mrb[0].mxu0 %v4443
  %v4734 = vpop.f32.mrb[0].mxu0
  %v4735 = vadd.f32 %v4605, %v4734
  %v4736 = vpop.f32.mrb[0].mxu0
  %4737 = vmatprep.mubr.f32.mxu0 %v4491
  %4738 = vmatmul.mubr.f32.gmra.mrb[0].mxu0 %v4447
  %v4739 = vpop.f32.mrb[0].mxu0
  %v4740 = vadd.f32 %v4610, %v4739
  %v4741 = vpop.f32.mrb[0].mxu0
  %4742 = vmatprep.mubr.f32.mxu0 %v4494
  %4743 = vmatmul.mubr.f32.gmra.mrb[0].mxu0 %v4451
  %v4744 = vpop.f32.mrb[0].mxu0
  %v4745 = vadd.f32 %v4615, %v4744
  %v4746 = vpop.f32.mrb[0].mxu0
  %4747 = vmatprep.mubr.f32.mxu0 %v4497
  %4748 = vmatmul.mubr.f32.gmra.mrb[0].mxu0 %v4455
  %v4749 = vpop.f32.mrb[0].mxu0
  %v4750 = vadd.f32 %v4620, %v4749
  %v4751 = vpop.f32.mrb[0].mxu0
  %4752 = vmatprep.mubr.f32.mxu0 %v4500
  %4753 = vmatmul.mubr.f32.gmra.mrb[0].mxu0 %v4459
  %v4754 = vpop.f32.mrb[0].mxu0
  %v4755 = vadd.f32 %v4625, %v4754
  %v4756 = vpop.f32.mrb[0].mxu0
  %4757 = vmatprep.mubr.f32.mxu0 %v4503
  %4758 = vmatmul.mubr.f32.gmra.mrb[0].mxu0 %v4463
  %v4759 = vpop.f32.mrb[0].mxu0
  %v4760 = vadd.f32 %v4630, %v4759
  %v4761 = vpop.f32.mrb[0].mxu0
  %4762 = vmatprep.mubr.f32.mxu0 %v4506
  %4763 = vmatmul.mubr.f32.gmra.mrb[0].mxu0 %v4467
  %v4764 = vpop.f32.mrb[0].mxu0
  %v4765 = vadd.f32 %v4635, %v4764
  %v4766 = vpop.f32.mrb[0].mxu0
  %4767 = vdwg.mxu0
  %s4768 = scalar_lea.vmem %s3, 24
  %v4769 = vld [vmem:[%s4768] sm:$0xf]
  %v4771 = vsel %vm601, %v4705, 0
  %v4774 = vsel %vm601, %v4710, 0
  %v4777 = vsel %vm601, %v4715, 0
  %v4780 = vsel %vm601, %v4720, 0
  %v4783 = vsel %vm601, %v4725, 0
  %v4786 = vsel %vm601, %v4730, 0
  %v4789 = vsel %vm601, %v4735, 0
  %v4792 = vsel %vm601, %v4740, 0
  %v4795 = vsel %vm601, %v4745, 0
  %v4798 = vsel %vm601, %v4750, 0
  %v4801 = vsel %vm601, %v4755, 0
  %v4804 = vsel %vm601, %v4760, 0
  %v4807 = vsel %vm601, %v4765, 0
  %v4810 = vsel %vm1824, %v4769, 0
  %4812 = vmatprep.subr.mxu0 0.0
  %4813 = vmatpush1.msra.mxu0 %v4810
  %4814 = vmatprep.subr.mxu0 0.0
  %4815 = vmatpush1.msra.mxu0 0.0
  %4816 = vmatprep.subr.mxu0 0.0
  %4817 = vmatpush1.msra.mxu0 0.0
  %4818 = vmatprep.subr.mxu0 0.0
  %4819 = vmatpush1.msra.mxu0 0.0
  %4820 = vmatprep.subr.mxu0 0.0
  %4821 = vmatpush1.msra.mxu0 0.0
  %4822 = vmatprep.subr.mxu0 0.0
  %4823 = vmatpush1.msra.mxu0 0.0
  %4824 = vmatprep.subr.mxu0 0.0
  %4825 = vmatpush1.msra.mxu0 0.0
  %4826 = vmatprep.subr.mxu0 0.0
  %4827 = vmatpush1.msra.mxu0 0.0
  %4828 = vmatprep.subr.mxu0 0.0
  %4829 = vmatpush1.msra.mxu0 0.0
  %4830 = vmatprep.subr.mxu0 0.0
  %4831 = vmatpush1.msra.mxu0 0.0
  %4832 = vmatprep.subr.mxu0 0.0
  %4833 = vmatpush1.msra.mxu0 0.0
  %4834 = vmatprep.subr.mxu0 0.0
  %4835 = vmatpush1.msra.mxu0 0.0
  %4836 = vmatprep.subr.mxu0 0.0
  %4837 = vmatpush1.msra.mxu0 0.0
  %4838 = vmatprep.subr.mxu0 0.0
  %4839 = vmatpush1.msra.mxu0 0.0
  %4840 = vmatprep.subr.mxu0 0.0
  %4841 = vmatpush1.msra.mxu0 0.0
  %4842 = vmatprep.subr.mxu0 0.0
  %4843 = vmatpush1.msra.mxu0 0.0
  %4844 = vmatprep.subr.mxu0 0.0
  %4845 = vmatpush1.msra.mxu0 0.0
  %4846 = vmatprep.subr.mxu0 0.0
  %4847 = vmatpush1.msra.mxu0 0.0
  %4848 = vmatprep.subr.mxu0 0.0
  %4849 = vmatpush1.msra.mxu0 0.0
  %4850 = vmatprep.subr.mxu0 0.0
  %4851 = vmatpush1.msra.mxu0 0.0
  %4852 = vmatprep.subr.mxu0 0.0
  %4853 = vmatpush1.msra.mxu0 0.0
  %4854 = vmatprep.subr.mxu0 0.0
  %4855 = vmatpush1.msra.mxu0 0.0
  %4856 = vmatprep.subr.mxu0 0.0
  %4857 = vmatpush1.msra.mxu0 0.0
  %4858 = vmatprep.subr.mxu0 0.0
  %4859 = vmatpush1.msra.mxu0 0.0
  %4860 = vmatprep.subr.mxu0 0.0
  %4861 = vmatpush1.msra.mxu0 0.0
  %4862 = vmatprep.subr.mxu0 0.0
  %4863 = vmatpush1.msra.mxu0 0.0
  %4864 = vmatprep.subr.mxu0 0.0
  %4865 = vmatpush1.msra.mxu0 0.0
  %4866 = vmatprep.subr.mxu0 0.0
  %4867 = vmatpush1.msra.mxu0 0.0
  %4868 = vmatprep.subr.mxu0 0.0
  %4869 = vmatpush1.msra.mxu0 0.0
  %4870 = vmatprep.subr.mxu0 0.0
  %4871 = vmatpush1.msra.mxu0 0.0
  %4872 = vmatprep.subr.mxu0 0.0
  %4873 = vmatpush1.msra.mxu0 0.0
  %4874 = vmatprep.subr.mxu0 0.0
  %4875 = vmatpush1.msra.mxu0 0.0
  %4876 = vmatprep.mubr.f32.mxu0 0.0
  %4877 = vmatmul.mubr.f32.gmra.mrb[0].mxu0 %v4771
  %v4878 = vpop.f32.mrb[0].mxu0
  %v4879 = vadd.f32 0.0, %v4878
  %v4880 = vpop.f32.mrb[0].mxu0
  %4881 = vmatprep.mubr.f32.mxu0 0.0
  %4882 = vmatmul.mubr.f32.gmra.mrb[0].mxu0 %v4774
  %v4883 = vpop.f32.mrb[0].mxu0
  %v4884 = vadd.f32 0.0, %v4883
  %v4885 = vpop.f32.mrb[0].mxu0
  %4886 = vmatprep.mubr.f32.mxu0 0.0
  %4887 = vmatmul.mubr.f32.gmra.mrb[0].mxu0 %v4777
  %v4888 = vpop.f32.mrb[0].mxu0
  %v4889 = vadd.f32 0.0, %v4888
  %v4890 = vpop.f32.mrb[0].mxu0
  %4891 = vmatprep.mubr.f32.mxu0 0.0
  %4892 = vmatmul.mubr.f32.gmra.mrb[0].mxu0 %v4780
  %v4893 = vpop.f32.mrb[0].mxu0
  %v4894 = vadd.f32 0.0, %v4893
  %v4895 = vpop.f32.mrb[0].mxu0
  %4896 = vmatprep.mubr.f32.mxu0 0.0
  %4897 = vmatmul.mubr.f32.gmra.mrb[0].mxu0 %v4783
  %v4898 = vpop.f32.mrb[0].mxu0
  %v4899 = vadd.f32 0.0, %v4898
  %v4900 = vpop.f32.mrb[0].mxu0
  %4901 = vmatprep.mubr.f32.mxu0 0.0
  %4902 = vmatmul.mubr.f32.gmra.mrb[0].mxu0 %v4786
  %v4903 = vpop.f32.mrb[0].mxu0
  %v4904 = vadd.f32 0.0, %v4903
  %v4905 = vpop.f32.mrb[0].mxu0
  %4906 = vmatprep.mubr.f32.mxu0 0.0
  %4907 = vmatmul.mubr.f32.gmra.mrb[0].mxu0 %v4789
  %v4908 = vpop.f32.mrb[0].mxu0
  %v4909 = vadd.f32 0.0, %v4908
  %v4910 = vpop.f32.mrb[0].mxu0
  %4911 = vmatprep.mubr.f32.mxu0 0.0
  %4912 = vmatmul.mubr.f32.gmra.mrb[0].mxu0 %v4792
  %v4913 = vpop.f32.mrb[0].mxu0
  %v4914 = vadd.f32 0.0, %v4913
  %v4915 = vpop.f32.mrb[0].mxu0
  %4916 = vmatprep.mubr.f32.mxu0 0.0
  %4917 = vmatmul.mubr.f32.gmra.mrb[0].mxu0 %v4795
  %v4918 = vpop.f32.mrb[0].mxu0
  %v4919 = vadd.f32 0.0, %v4918
  %v4920 = vpop.f32.mrb[0].mxu0
  %4921 = vmatprep.mubr.f32.mxu0 0.0
  %4922 = vmatmul.mubr.f32.gmra.mrb[0].mxu0 %v4798
  %v4923 = vpop.f32.mrb[0].mxu0
  %v4924 = vadd.f32 0.0, %v4923
  %v4925 = vpop.f32.mrb[0].mxu0
  %4926 = vmatprep.mubr.f32.mxu0 0.0
  %4927 = vmatmul.mubr.f32.gmra.mrb[0].mxu0 %v4801
  %v4928 = vpop.f32.mrb[0].mxu0
  %v4929 = vadd.f32 0.0, %v4928
  %v4930 = vpop.f32.mrb[0].mxu0
  %4931 = vmatprep.mubr.f32.mxu0 0.0
  %4932 = vmatmul.mubr.f32.gmra.mrb[0].mxu0 %v4804
  %v4933 = vpop.f32.mrb[0].mxu0
  %v4934 = vadd.f32 0.0, %v4933
  %v4935 = vpop.f32.mrb[0].mxu0
  %4936 = vmatprep.mubr.f32.mxu0 0.0
  %4937 = vmatmul.mubr.f32.gmra.mrb[0].mxu0 %v4807
  %v4938 = vpop.f32.mrb[0].mxu0
  %v4939 = vadd.f32 0.0, %v4938
  %v4940 = vpop.f32.mrb[0].mxu0
  %4941 = vdwg.mxu0
  %v4942 = vadd.f32 %v4377, %v4879
  %v4943 = vadd.f32 %v4378, %v4884
  %v4944 = vadd.f32 %v4379, %v4889
  %v4945 = vadd.f32 %v4380, %v4894
  %v4946 = vadd.f32 %v4381, %v4899
  %v4947 = vadd.f32 %v4382, %v4904
  %v4948 = vadd.f32 %v4383, %v4909
  %v4949 = vadd.f32 %v4384, %v4914
  %v4950 = vadd.f32 %v4385, %v4919
  %v4951 = vadd.f32 %v4386, %v4924
  %v4952 = vadd.f32 %v4387, %v4929
  %v4953 = vadd.f32 %v4388, %v4934
  %v4954 = vadd.f32 %v4389, %v4939
  %s4955 = scalar_lea.vmem %s2, 1456
  %v4956 = vld [vmem:[%s4955] sm:$0xff]
  %v4957 = vld [vmem:[%s4955 + $0x8] sm:$0xff]
  %v4958 = vld [vmem:[%s4955 + $0x10] sm:$0xff]
  %v4959 = vld [vmem:[%s4955 + $0x18] sm:$0xff]
  %v4960 = vld [vmem:[%s4955 + $0x20] sm:$0xff]
  %v4961 = vld [vmem:[%s4955 + $0x28] sm:$0xff]
  %v4962 = vld [vmem:[%s4955 + $0x30] sm:$0xff]
  %v4963 = vld [vmem:[%s4955 + $0x38] sm:$0xff]
  %v4964 = vld [vmem:[%s4955 + $0x40] sm:$0xff]
  %v4965 = vld [vmem:[%s4955 + $0x48] sm:$0xff]
  %v4966 = vld [vmem:[%s4955 + $0x50] sm:$0xff]
  %v4967 = vld [vmem:[%s4955 + $0x58] sm:$0xff]
  %v4968 = vld [vmem:[%s4955 + $0x60] sm:$0xff]
  %v4969 = vld [vmem:[%s4955 + $0x68] sm:$0xff]
  %v4970 = vld [vmem:[%s4955 + $0x70] sm:$0xff]
  %v4971 = vld [vmem:[%s4955 + $0x78] sm:$0xff]
  %v4972 = vld [vmem:[%s4955 + $0x80] sm:$0xff]
  %v4973 = vld [vmem:[%s4955 + $0x88] sm:$0xff]
  %v4974 = vld [vmem:[%s4955 + $0x90] sm:$0xff]
  %v4975 = vld [vmem:[%s4955 + $0x98] sm:$0xff]
  %v4976 = vld [vmem:[%s4955 + $0xa0] sm:$0xff]
  %v4977 = vld [vmem:[%s4955 + $0xa8] sm:$0xff]
  %v4978 = vld [vmem:[%s4955 + $0xb0] sm:$0xff]
  %v4979 = vld [vmem:[%s4955 + $0xb8] sm:$0xff]
  %v4980 = vld [vmem:[%s4955 + $0xc0] sm:$0x11]
  %v4981 = vld [vmem:[%s4955 + $0xc8] sm:$0x11]
  %v4982 = vunpack.c.l.bf16 %v4956
  %v4983 = vunpack.c.h.bf16 %v4956
  %v4984 = vunpack.c.l.bf16 %v4957
  %v4985 = vunpack.c.h.bf16 %v4957
  %v4986 = vunpack.c.l.bf16 %v4958
  %v4987 = vunpack.c.h.bf16 %v4958
  %v4988 = vunpack.c.l.bf16 %v4959
  %v4989 = vunpack.c.h.bf16 %v4959
  %v4990 = vunpack.c.l.bf16 %v4960
  %v4991 = vunpack.c.h.bf16 %v4960
  %v4992 = vunpack.c.l.bf16 %v4961
  %v4993 = vunpack.c.h.bf16 %v4961
  %v4994 = vunpack.c.l.bf16 %v4962
  %v4995 = vunpack.c.h.bf16 %v4962
  %v4996 = vunpack.c.l.bf16 %v4963
  %v4997 = vunpack.c.h.bf16 %v4963
  %v4998 = vunpack.c.l.bf16 %v4964
  %v4999 = vunpack.c.h.bf16 %v4964
  %v5000 = vunpack.c.l.bf16 %v4965
  %v5001 = vunpack.c.h.bf16 %v4965
  %v5002 = vunpack.c.l.bf16 %v4966
  %v5003 = vunpack.c.h.bf16 %v4966
  %v5004 = vunpack.c.l.bf16 %v4967
  %v5005 = vunpack.c.h.bf16 %v4967
  %v5006 = vunpack.c.l.bf16 %v4968
  %v5007 = vunpack.c.h.bf16 %v4968
  %v5008 = vunpack.c.l.bf16 %v4969
  %v5009 = vunpack.c.h.bf16 %v4969
  %v5010 = vunpack.c.l.bf16 %v4970
  %v5011 = vunpack.c.h.bf16 %v4970
  %v5012 = vunpack.c.l.bf16 %v4971
  %v5013 = vunpack.c.h.bf16 %v4971
  %v5014 = vunpack.c.l.bf16 %v4972
  %v5015 = vunpack.c.h.bf16 %v4972
  %v5016 = vunpack.c.l.bf16 %v4973
  %v5017 = vunpack.c.h.bf16 %v4973
  %v5018 = vunpack.c.l.bf16 %v4974
  %v5019 = vunpack.c.h.bf16 %v4974
  %v5020 = vunpack.c.l.bf16 %v4975
  %v5021 = vunpack.c.h.bf16 %v4975
  %v5022 = vunpack.c.l.bf16 %v4976
  %v5023 = vunpack.c.h.bf16 %v4976
  %v5024 = vunpack.c.l.bf16 %v4977
  %v5025 = vunpack.c.h.bf16 %v4977
  %v5026 = vunpack.c.l.bf16 %v4978
  %v5027 = vunpack.c.h.bf16 %v4978
  %v5028 = vunpack.c.l.bf16 %v4979
  %v5029 = vunpack.c.h.bf16 %v4979
  %v5030 = vunpack.c.l.bf16 %v4980
  %v5031 = vunpack.c.h.bf16 %v4980
  %v5032 = vunpack.c.l.bf16 %v4981
  %v5033 = vunpack.c.h.bf16 %v4981
  %v5035 = vsel %vm1104, %v4985, 0
  %v5038 = vsel %vm1104, %v4989, 0
  %v5041 = vsel %vm1104, %v4993, 0
  %v5044 = vsel %vm1104, %v4997, 0
  %v5047 = vsel %vm1104, %v5001, 0
  %v5050 = vsel %vm1104, %v5005, 0
  %v5053 = vsel %vm1104, %v5009, 0
  %v5056 = vsel %vm1104, %v5013, 0
  %v5059 = vsel %vm1104, %v5017, 0
  %v5062 = vsel %vm1104, %v5021, 0
  %v5065 = vsel %vm1104, %v5025, 0
  %v5068 = vsel %vm1104, %v5029, 0
  %v5071 = vsel %vm1104, %v5033, 0
  %5073 = vmatprep.subr.mxu0 0.0
  %5074 = vmatpush1.msra.mxu0 %v977
  %5075 = vmatprep.subr.mxu0 0.0
  %5076 = vmatpush1.msra.mxu0 %v978
  %5077 = vmatprep.subr.mxu0 0.0
  %5078 = vmatpush1.msra.mxu0 %v979
  %5079 = vmatprep.subr.mxu0 0.0
  %5080 = vmatpush1.msra.mxu0 %v980
  %5081 = vmatprep.subr.mxu0 0.0
  %5082 = vmatpush1.msra.mxu0 %v981
  %5083 = vmatprep.subr.mxu0 0.0
  %5084 = vmatpush1.msra.mxu0 %v982
  %5085 = vmatprep.subr.mxu0 0.0
  %5086 = vmatpush1.msra.mxu0 %v983
  %5087 = vmatprep.subr.mxu0 0.0
  %5088 = vmatpush1.msra.mxu0 %v984
  %5089 = vmatprep.subr.mxu0 0.0
  %5090 = vmatpush1.msra.mxu0 %v985
  %5091 = vmatprep.subr.mxu0 0.0
  %5092 = vmatpush1.msra.mxu0 %v986
  %5093 = vmatprep.subr.mxu0 0.0
  %5094 = vmatpush1.msra.mxu0 %v987
  %5095 = vmatprep.subr.mxu0 0.0
  %5096 = vmatpush1.msra.mxu0 %v988
  %5097 = vmatprep.subr.mxu0 0.0
  %5098 = vmatpush1.msra.mxu0 %v989
  %5099 = vmatprep.subr.mxu0 0.0
  %5100 = vmatpush1.msra.mxu0 %v990
  %5101 = vmatprep.subr.mxu0 0.0
  %5102 = vmatpush1.msra.mxu0 %v991
  %5103 = vmatprep.subr.mxu0 0.0
  %5104 = vmatpush1.msra.mxu0 %v992
  %5105 = vmatprep.subr.mxu0 0.0
  %5106 = vmatpush1.msra.mxu0 %v993
  %5107 = vmatprep.subr.mxu0 0.0
  %5108 = vmatpush1.msra.mxu0 %v994
  %5109 = vmatprep.subr.mxu0 0.0
  %5110 = vmatpush1.msra.mxu0 %v995
  %5111 = vmatprep.subr.mxu0 0.0
  %5112 = vmatpush1.msra.mxu0 %v996
  %5113 = vmatprep.subr.mxu0 0.0
  %5114 = vmatpush1.msra.mxu0 %v997
  %5115 = vmatprep.subr.mxu0 0.0
  %5116 = vmatpush1.msra.mxu0 %v998
  %5117 = vmatprep.subr.mxu0 0.0
  %5118 = vmatpush1.msra.mxu0 %v999
  %5119 = vmatprep.subr.mxu0 0.0
  %5120 = vmatpush1.msra.mxu0 %v1000
  %5121 = vmatprep.subr.mxu0 0.0
  %5122 = vmatpush1.msra.mxu0 %v1001
  %5123 = vmatprep.subr.mxu0 0.0
  %5124 = vmatpush1.msra.mxu0 %v1002
  %5125 = vmatprep.subr.mxu0 0.0
  %5126 = vmatpush1.msra.mxu0 %v1003
  %5127 = vmatprep.subr.mxu0 0.0
  %5128 = vmatpush1.msra.mxu0 %v1004
  %5129 = vmatprep.subr.mxu0 0.0
  %5130 = vmatpush1.msra.mxu0 %v1005
  %5131 = vmatprep.subr.mxu0 0.0
  %5132 = vmatpush1.msra.mxu0 %v1006
  %5133 = vmatprep.subr.mxu0 0.0
  %5134 = vmatpush1.msra.mxu0 %v1007
  %5135 = vmatprep.subr.mxu0 0.0
  %5136 = vmatpush1.msra.mxu0 %v1008
  %5137 = vmatprep.mubr.f32.mxu0 %v4983
  %5138 = vmatmul.mubr.f32.gmra.mrb[0].mxu0 %v4982
  %v5139 = vpop.f32.mrb[0].mxu0
  %v5140 = vadd.f32 0.0, %v5139
  %v5141 = vpop.f32.mrb[0].mxu0
  %5142 = vmatprep.mubr.f32.mxu0 %v4987
  %5143 = vmatmul.mubr.f32.gmra.mrb[0].mxu0 %v4986
  %v5144 = vpop.f32.mrb[0].mxu0
  %v5145 = vadd.f32 0.0, %v5144
  %v5146 = vpop.f32.mrb[0].mxu0
  %5147 = vmatprep.mubr.f32.mxu0 %v4991
  %5148 = vmatmul.mubr.f32.gmra.mrb[0].mxu0 %v4990
  %v5149 = vpop.f32.mrb[0].mxu0
  %v5150 = vadd.f32 0.0, %v5149
  %v5151 = vpop.f32.mrb[0].mxu0
  %5152 = vmatprep.mubr.f32.mxu0 %v4995
  %5153 = vmatmul.mubr.f32.gmra.mrb[0].mxu0 %v4994
  %v5154 = vpop.f32.mrb[0].mxu0
  %v5155 = vadd.f32 0.0, %v5154
  %v5156 = vpop.f32.mrb[0].mxu0
  %5157 = vmatprep.mubr.f32.mxu0 %v4999
  %5158 = vmatmul.mubr.f32.gmra.mrb[0].mxu0 %v4998
  %v5159 = vpop.f32.mrb[0].mxu0
  %v5160 = vadd.f32 0.0, %v5159
  %v5161 = vpop.f32.mrb[0].mxu0
  %5162 = vmatprep.mubr.f32.mxu0 %v5003
  %5163 = vmatmul.mubr.f32.gmra.mrb[0].mxu0 %v5002
  %v5164 = vpop.f32.mrb[0].mxu0
  %v5165 = vadd.f32 0.0, %v5164
  %v5166 = vpop.f32.mrb[0].mxu0
  %5167 = vmatprep.mubr.f32.mxu0 %v5007
  %5168 = vmatmul.mubr.f32.gmra.mrb[0].mxu0 %v5006
  %v5169 = vpop.f32.mrb[0].mxu0
  %v5170 = vadd.f32 0.0, %v5169
  %v5171 = vpop.f32.mrb[0].mxu0
  %5172 = vmatprep.mubr.f32.mxu0 %v5011
  %5173 = vmatmul.mubr.f32.gmra.mrb[0].mxu0 %v5010
  %v5174 = vpop.f32.mrb[0].mxu0
  %v5175 = vadd.f32 0.0, %v5174
  %v5176 = vpop.f32.mrb[0].mxu0
  %5177 = vmatprep.mubr.f32.mxu0 %v5015
  %5178 = vmatmul.mubr.f32.gmra.mrb[0].mxu0 %v5014
  %v5179 = vpop.f32.mrb[0].mxu0
  %v5180 = vadd.f32 0.0, %v5179
  %v5181 = vpop.f32.mrb[0].mxu0
  %5182 = vmatprep.mubr.f32.mxu0 %v5019
  %5183 = vmatmul.mubr.f32.gmra.mrb[0].mxu0 %v5018
  %v5184 = vpop.f32.mrb[0].mxu0
  %v5185 = vadd.f32 0.0, %v5184
  %v5186 = vpop.f32.mrb[0].mxu0
  %5187 = vmatprep.mubr.f32.mxu0 %v5023
  %5188 = vmatmul.mubr.f32.gmra.mrb[0].mxu0 %v5022
  %v5189 = vpop.f32.mrb[0].mxu0
  %v5190 = vadd.f32 0.0, %v5189
  %v5191 = vpop.f32.mrb[0].mxu0
  %5192 = vmatprep.mubr.f32.mxu0 %v5027
  %5193 = vmatmul.mubr.f32.gmra.mrb[0].mxu0 %v5026
  %v5194 = vpop.f32.mrb[0].mxu0
  %v5195 = vadd.f32 0.0, %v5194
  %v5196 = vpop.f32.mrb[0].mxu0
  %5197 = vmatprep.mubr.f32.mxu0 %v5031
  %5198 = vmatmul.mubr.f32.gmra.mrb[0].mxu0 %v5030
  %v5199 = vpop.f32.mrb[0].mxu0
  %v5200 = vadd.f32 0.0, %v5199
  %v5201 = vpop.f32.mrb[0].mxu0
  %5202 = vdwg.mxu0
  %5203 = vmatprep.subr.mxu0 0.0
  %5204 = vmatpush1.msra.mxu0 %v1009
  %5205 = vmatprep.subr.mxu0 0.0
  %5206 = vmatpush1.msra.mxu0 %v1010
  %5207 = vmatprep.subr.mxu0 0.0
  %5208 = vmatpush1.msra.mxu0 %v1011
  %5209 = vmatprep.subr.mxu0 0.0
  %5210 = vmatpush1.msra.mxu0 %v1012
  %5211 = vmatprep.subr.mxu0 0.0
  %5212 = vmatpush1.msra.mxu0 %v1013
  %5213 = vmatprep.subr.mxu0 0.0
  %5214 = vmatpush1.msra.mxu0 %v1014
  %5215 = vmatprep.subr.mxu0 0.0
  %5216 = vmatpush1.msra.mxu0 %v1015
  %5217 = vmatprep.subr.mxu0 0.0
  %5218 = vmatpush1.msra.mxu0 %v1016
  %5219 = vmatprep.subr.mxu0 0.0
  %5220 = vmatpush1.msra.mxu0 %v1017
  %5221 = vmatprep.subr.mxu0 0.0
  %5222 = vmatpush1.msra.mxu0 %v1018
  %5223 = vmatprep.subr.mxu0 0.0
  %5224 = vmatpush1.msra.mxu0 %v1019
  %5225 = vmatprep.subr.mxu0 0.0
  %5226 = vmatpush1.msra.mxu0 %v1020
  %5227 = vmatprep.subr.mxu0 0.0
  %5228 = vmatpush1.msra.mxu0 %v1021
  %5229 = vmatprep.subr.mxu0 0.0
  %5230 = vmatpush1.msra.mxu0 %v1022
  %5231 = vmatprep.subr.mxu0 0.0
  %5232 = vmatpush1.msra.mxu0 %v1023
  %5233 = vmatprep.subr.mxu0 0.0
  %5234 = vmatpush1.msra.mxu0 %v1024
  %5235 = vmatprep.subr.mxu0 0.0
  %5236 = vmatpush1.msra.mxu0 %v1025
  %5237 = vmatprep.subr.mxu0 0.0
  %5238 = vmatpush1.msra.mxu0 0.0
  %5239 = vmatprep.subr.mxu0 0.0
  %5240 = vmatpush1.msra.mxu0 0.0
  %5241 = vmatprep.subr.mxu0 0.0
  %5242 = vmatpush1.msra.mxu0 0.0
  %5243 = vmatprep.subr.mxu0 0.0
  %5244 = vmatpush1.msra.mxu0 0.0
  %5245 = vmatprep.subr.mxu0 0.0
  %5246 = vmatpush1.msra.mxu0 0.0
  %5247 = vmatprep.subr.mxu0 0.0
  %5248 = vmatpush1.msra.mxu0 0.0
  %5249 = vmatprep.subr.mxu0 0.0
  %5250 = vmatpush1.msra.mxu0 0.0
  %5251 = vmatprep.subr.mxu0 0.0
  %5252 = vmatpush1.msra.mxu0 0.0
  %5253 = vmatprep.subr.mxu0 0.0
  %5254 = vmatpush1.msra.mxu0 0.0
  %5255 = vmatprep.subr.mxu0 0.0
  %5256 = vmatpush1.msra.mxu0 0.0
  %5257 = vmatprep.subr.mxu0 0.0
  %5258 = vmatpush1.msra.mxu0 0.0
  %5259 = vmatprep.subr.mxu0 0.0
  %5260 = vmatpush1.msra.mxu0 0.0
  %5261 = vmatprep.subr.mxu0 0.0
  %5262 = vmatpush1.msra.mxu0 0.0
  %5263 = vmatprep.subr.mxu0 0.0
  %5264 = vmatpush1.msra.mxu0 0.0
  %5265 = vmatprep.subr.mxu0 0.0
  %5266 = vmatpush1.msra.mxu0 0.0
  %5267 = vmatprep.mubr.f32.mxu0 %v5035
  %5268 = vmatmul.mubr.f32.gmra.mrb[0].mxu0 %v4984
  %v5269 = vpop.f32.mrb[0].mxu0
  %v5270 = vadd.f32 %v5140, %v5269
  %v5271 = vpop.f32.mrb[0].mxu0
  %5272 = vmatprep.mubr.f32.mxu0 %v5038
  %5273 = vmatmul.mubr.f32.gmra.mrb[0].mxu0 %v4988
  %v5274 = vpop.f32.mrb[0].mxu0
  %v5275 = vadd.f32 %v5145, %v5274
  %v5276 = vpop.f32.mrb[0].mxu0
  %5277 = vmatprep.mubr.f32.mxu0 %v5041
  %5278 = vmatmul.mubr.f32.gmra.mrb[0].mxu0 %v4992
  %v5279 = vpop.f32.mrb[0].mxu0
  %v5280 = vadd.f32 %v5150, %v5279
  %v5281 = vpop.f32.mrb[0].mxu0
  %5282 = vmatprep.mubr.f32.mxu0 %v5044
  %5283 = vmatmul.mubr.f32.gmra.mrb[0].mxu0 %v4996
  %v5284 = vpop.f32.mrb[0].mxu0
  %v5285 = vadd.f32 %v5155, %v5284
  %v5286 = vpop.f32.mrb[0].mxu0
  %5287 = vmatprep.mubr.f32.mxu0 %v5047
  %5288 = vmatmul.mubr.f32.gmra.mrb[0].mxu0 %v5000
  %v5289 = vpop.f32.mrb[0].mxu0
  %v5290 = vadd.f32 %v5160, %v5289
  %v5291 = vpop.f32.mrb[0].mxu0
  %5292 = vmatprep.mubr.f32.mxu0 %v5050
  %5293 = vmatmul.mubr.f32.gmra.mrb[0].mxu0 %v5004
  %v5294 = vpop.f32.mrb[0].mxu0
  %v5295 = vadd.f32 %v5165, %v5294
  %v5296 = vpop.f32.mrb[0].mxu0
  %5297 = vmatprep.mubr.f32.mxu0 %v5053
  %5298 = vmatmul.mubr.f32.gmra.mrb[0].mxu0 %v5008
  %v5299 = vpop.f32.mrb[0].mxu0
  %v5300 = vadd.f32 %v5170, %v5299
  %v5301 = vpop.f32.mrb[0].mxu0
  %5302 = vmatprep.mubr.f32.mxu0 %v5056
  %5303 = vmatmul.mubr.f32.gmra.mrb[0].mxu0 %v5012
  %v5304 = vpop.f32.mrb[0].mxu0
  %v5305 = vadd.f32 %v5175, %v5304
  %v5306 = vpop.f32.mrb[0].mxu0
  %5307 = vmatprep.mubr.f32.mxu0 %v5059
  %5308 = vmatmul.mubr.f32.gmra.mrb[0].mxu0 %v5016
  %v5309 = vpop.f32.mrb[0].mxu0
  %v5310 = vadd.f32 %v5180, %v5309
  %v5311 = vpop.f32.mrb[0].mxu0
  %5312 = vmatprep.mubr.f32.mxu0 %v5062
  %5313 = vmatmul.mubr.f32.gmra.mrb[0].mxu0 %v5020
  %v5314 = vpop.f32.mrb[0].mxu0
  %v5315 = vadd.f32 %v5185, %v5314
  %v5316 = vpop.f32.mrb[0].mxu0
  %5317 = vmatprep.mubr.f32.mxu0 %v5065
  %5318 = vmatmul.mubr.f32.gmra.mrb[0].mxu0 %v5024
  %v5319 = vpop.f32.mrb[0].mxu0
  %v5320 = vadd.f32 %v5190, %v5319
  %v5321 = vpop.f32.mrb[0].mxu0
  %5322 = vmatprep.mubr.f32.mxu0 %v5068
  %5323 = vmatmul.mubr.f32.gmra.mrb[0].mxu0 %v5028
  %v5324 = vpop.f32.mrb[0].mxu0
  %v5325 = vadd.f32 %v5195, %v5324
  %v5326 = vpop.f32.mrb[0].mxu0
  %5327 = vmatprep.mubr.f32.mxu0 %v5071
  %5328 = vmatmul.mubr.f32.gmra.mrb[0].mxu0 %v5032
  %v5329 = vpop.f32.mrb[0].mxu0
  %v5330 = vadd.f32 %v5200, %v5329
  %v5331 = vpop.f32.mrb[0].mxu0
  %5332 = vdwg.mxu0
  %s5333 = scalar_lea.vmem %s3, 28
  %v5334 = vld [vmem:[%s5333] sm:$0xf]
  %v5336 = vsel %vm601, %v5270, 0
  %v5339 = vsel %vm601, %v5275, 0
  %v5342 = vsel %vm601, %v5280, 0
  %v5345 = vsel %vm601, %v5285, 0
  %v5348 = vsel %vm601, %v5290, 0
  %v5351 = vsel %vm601, %v5295, 0
  %v5354 = vsel %vm601, %v5300, 0
  %v5357 = vsel %vm601, %v5305, 0
  %v5360 = vsel %vm601, %v5310, 0
  %v5363 = vsel %vm601, %v5315, 0
  %v5366 = vsel %vm601, %v5320, 0
  %v5369 = vsel %vm601, %v5325, 0
  %v5372 = vsel %vm601, %v5330, 0
  %v5375 = vsel %vm1824, %v5334, 0
  %5377 = vmatprep.subr.mxu0 0.0
  %5378 = vmatpush1.msra.mxu0 %v5375
  %5379 = vmatprep.subr.mxu0 0.0
  %5380 = vmatpush1.msra.mxu0 0.0
  %5381 = vmatprep.subr.mxu0 0.0
  %5382 = vmatpush1.msra.mxu0 0.0
  %5383 = vmatprep.subr.mxu0 0.0
  %5384 = vmatpush1.msra.mxu0 0.0
  %5385 = vmatprep.subr.mxu0 0.0
  %5386 = vmatpush1.msra.mxu0 0.0
  %5387 = vmatprep.subr.mxu0 0.0
  %5388 = vmatpush1.msra.mxu0 0.0
  %5389 = vmatprep.subr.mxu0 0.0
  %5390 = vmatpush1.msra.mxu0 0.0
  %5391 = vmatprep.subr.mxu0 0.0
  %5392 = vmatpush1.msra.mxu0 0.0
  %5393 = vmatprep.subr.mxu0 0.0
  %5394 = vmatpush1.msra.mxu0 0.0
  %5395 = vmatprep.subr.mxu0 0.0
  %5396 = vmatpush1.msra.mxu0 0.0
  %5397 = vmatprep.subr.mxu0 0.0
  %5398 = vmatpush1.msra.mxu0 0.0
  %5399 = vmatprep.subr.mxu0 0.0
  %5400 = vmatpush1.msra.mxu0 0.0
  %5401 = vmatprep.subr.mxu0 0.0
  %5402 = vmatpush1.msra.mxu0 0.0
  %5403 = vmatprep.subr.mxu0 0.0
  %5404 = vmatpush1.msra.mxu0 0.0
  %5405 = vmatprep.subr.mxu0 0.0
  %5406 = vmatpush1.msra.mxu0 0.0
  %5407 = vmatprep.subr.mxu0 0.0
  %5408 = vmatpush1.msra.mxu0 0.0
  %5409 = vmatprep.subr.mxu0 0.0
  %5410 = vmatpush1.msra.mxu0 0.0
  %5411 = vmatprep.subr.mxu0 0.0
  %5412 = vmatpush1.msra.mxu0 0.0
  %5413 = vmatprep.subr.mxu0 0.0
  %5414 = vmatpush1.msra.mxu0 0.0
  %5415 = vmatprep.subr.mxu0 0.0
  %5416 = vmatpush1.msra.mxu0 0.0
  %5417 = vmatprep.subr.mxu0 0.0
  %5418 = vmatpush1.msra.mxu0 0.0
  %5419 = vmatprep.subr.mxu0 0.0
  %5420 = vmatpush1.msra.mxu0 0.0
  %5421 = vmatprep.subr.mxu0 0.0
  %5422 = vmatpush1.msra.mxu0 0.0
  %5423 = vmatprep.subr.mxu0 0.0
  %5424 = vmatpush1.msra.mxu0 0.0
  %5425 = vmatprep.subr.mxu0 0.0
  %5426 = vmatpush1.msra.mxu0 0.0
  %5427 = vmatprep.subr.mxu0 0.0
  %5428 = vmatpush1.msra.mxu0 0.0
  %5429 = vmatprep.subr.mxu0 0.0
  %5430 = vmatpush1.msra.mxu0 0.0
  %5431 = vmatprep.subr.mxu0 0.0
  %5432 = vmatpush1.msra.mxu0 0.0
  %5433 = vmatprep.subr.mxu0 0.0
  %5434 = vmatpush1.msra.mxu0 0.0
  %5435 = vmatprep.subr.mxu0 0.0
  %5436 = vmatpush1.msra.mxu0 0.0
  %5437 = vmatprep.subr.mxu0 0.0
  %5438 = vmatpush1.msra.mxu0 0.0
  %5439 = vmatprep.subr.mxu0 0.0
  %5440 = vmatpush1.msra.mxu0 0.0
  %5441 = vmatprep.mubr.f32.mxu0 0.0
  %5442 = vmatmul.mubr.f32.gmra.mrb[0].mxu0 %v5336
  %v5443 = vpop.f32.mrb[0].mxu0
  %v5444 = vadd.f32 0.0, %v5443
  %v5445 = vpop.f32.mrb[0].mxu0
  %5446 = vmatprep.mubr.f32.mxu0 0.0
  %5447 = vmatmul.mubr.f32.gmra.mrb[0].mxu0 %v5339
  %v5448 = vpop.f32.mrb[0].mxu0
  %v5449 = vadd.f32 0.0, %v5448
  %v5450 = vpop.f32.mrb[0].mxu0
  %5451 = vmatprep.mubr.f32.mxu0 0.0
  %5452 = vmatmul.mubr.f32.gmra.mrb[0].mxu0 %v5342
  %v5453 = vpop.f32.mrb[0].mxu0
  %v5454 = vadd.f32 0.0, %v5453
  %v5455 = vpop.f32.mrb[0].mxu0
  %5456 = vmatprep.mubr.f32.mxu0 0.0
  %5457 = vmatmul.mubr.f32.gmra.mrb[0].mxu0 %v5345
  %v5458 = vpop.f32.mrb[0].mxu0
  %v5459 = vadd.f32 0.0, %v5458
  %v5460 = vpop.f32.mrb[0].mxu0
  %5461 = vmatprep.mubr.f32.mxu0 0.0
  %5462 = vmatmul.mubr.f32.gmra.mrb[0].mxu0 %v5348
  %v5463 = vpop.f32.mrb[0].mxu0
  %v5464 = vadd.f32 0.0, %v5463
  %v5465 = vpop.f32.mrb[0].mxu0
  %5466 = vmatprep.mubr.f32.mxu0 0.0
  %5467 = vmatmul.mubr.f32.gmra.mrb[0].mxu0 %v5351
  %v5468 = vpop.f32.mrb[0].mxu0
  %v5469 = vadd.f32 0.0, %v5468
  %v5470 = vpop.f32.mrb[0].mxu0
  %5471 = vmatprep.mubr.f32.mxu0 0.0
  %5472 = vmatmul.mubr.f32.gmra.mrb[0].mxu0 %v5354
  %v5473 = vpop.f32.mrb[0].mxu0
  %v5474 = vadd.f32 0.0, %v5473
  %v5475 = vpop.f32.mrb[0].mxu0
  %5476 = vmatprep.mubr.f32.mxu0 0.0
  %5477 = vmatmul.mubr.f32.gmra.mrb[0].mxu0 %v5357
  %v5478 = vpop.f32.mrb[0].mxu0
  %v5479 = vadd.f32 0.0, %v5478
  %v5480 = vpop.f32.mrb[0].mxu0
  %5481 = vmatprep.mubr.f32.mxu0 0.0
  %5482 = vmatmul.mubr.f32.gmra.mrb[0].mxu0 %v5360
  %v5483 = vpop.f32.mrb[0].mxu0
  %v5484 = vadd.f32 0.0, %v5483
  %v5485 = vpop.f32.mrb[0].mxu0
  %5486 = vmatprep.mubr.f32.mxu0 0.0
  %5487 = vmatmul.mubr.f32.gmra.mrb[0].mxu0 %v5363
  %v5488 = vpop.f32.mrb[0].mxu0
  %v5489 = vadd.f32 0.0, %v5488
  %v5490 = vpop.f32.mrb[0].mxu0
  %5491 = vmatprep.mubr.f32.mxu0 0.0
  %5492 = vmatmul.mubr.f32.gmra.mrb[0].mxu0 %v5366
  %v5493 = vpop.f32.mrb[0].mxu0
  %v5494 = vadd.f32 0.0, %v5493
  %v5495 = vpop.f32.mrb[0].mxu0
  %5496 = vmatprep.mubr.f32.mxu0 0.0
  %5497 = vmatmul.mubr.f32.gmra.mrb[0].mxu0 %v5369
  %v5498 = vpop.f32.mrb[0].mxu0
  %v5499 = vadd.f32 0.0, %v5498
  %v5500 = vpop.f32.mrb[0].mxu0
  %5501 = vmatprep.mubr.f32.mxu0 0.0
  %5502 = vmatmul.mubr.f32.gmra.mrb[0].mxu0 %v5372
  %v5503 = vpop.f32.mrb[0].mxu0
  %v5504 = vadd.f32 0.0, %v5503
  %v5505 = vpop.f32.mrb[0].mxu0
  %5506 = vdwg.mxu0
  %v5507 = vadd.f32 %v4942, %v5444
  %v5508 = vadd.f32 %v4943, %v5449
  %v5509 = vadd.f32 %v4944, %v5454
  %v5510 = vadd.f32 %v4945, %v5459
  %v5511 = vadd.f32 %v4946, %v5464
  %v5512 = vadd.f32 %v4947, %v5469
  %v5513 = vadd.f32 %v4948, %v5474
  %v5514 = vadd.f32 %v4949, %v5479
  %v5515 = vadd.f32 %v4950, %v5484
  %v5516 = vadd.f32 %v4951, %v5489
  %v5517 = vadd.f32 %v4952, %v5494
  %v5518 = vadd.f32 %v4953, %v5499
  %v5519 = vadd.f32 %v4954, %v5504
  %s5520 = scalar_lea.vmem %s2, 1664
  %v5521 = vld [vmem:[%s5520] sm:$0xff]
  %v5522 = vld [vmem:[%s5520 + $0x8] sm:$0xff]
  %v5523 = vld [vmem:[%s5520 + $0x10] sm:$0xff]
  %v5524 = vld [vmem:[%s5520 + $0x18] sm:$0xff]
  %v5525 = vld [vmem:[%s5520 + $0x20] sm:$0xff]
  %v5526 = vld [vmem:[%s5520 + $0x28] sm:$0xff]
  %v5527 = vld [vmem:[%s5520 + $0x30] sm:$0xff]
  %v5528 = vld [vmem:[%s5520 + $0x38] sm:$0xff]
  %v5529 = vld [vmem:[%s5520 + $0x40] sm:$0xff]
  %v5530 = vld [vmem:[%s5520 + $0x48] sm:$0xff]
  %v5531 = vld [vmem:[%s5520 + $0x50] sm:$0xff]
  %v5532 = vld [vmem:[%s5520 + $0x58] sm:$0xff]
  %v5533 = vld [vmem:[%s5520 + $0x60] sm:$0xff]
  %v5534 = vld [vmem:[%s5520 + $0x68] sm:$0xff]
  %v5535 = vld [vmem:[%s5520 + $0x70] sm:$0xff]
  %v5536 = vld [vmem:[%s5520 + $0x78] sm:$0xff]
  %v5537 = vld [vmem:[%s5520 + $0x80] sm:$0xff]
  %v5538 = vld [vmem:[%s5520 + $0x88] sm:$0xff]
  %v5539 = vld [vmem:[%s5520 + $0x90] sm:$0xff]
  %v5540 = vld [vmem:[%s5520 + $0x98] sm:$0xff]
  %v5541 = vld [vmem:[%s5520 + $0xa0] sm:$0xff]
  %v5542 = vld [vmem:[%s5520 + $0xa8] sm:$0xff]
  %v5543 = vld [vmem:[%s5520 + $0xb0] sm:$0xff]
  %v5544 = vld [vmem:[%s5520 + $0xb8] sm:$0xff]
  %v5545 = vld [vmem:[%s5520 + $0xc0] sm:$0x11]
  %v5546 = vld [vmem:[%s5520 + $0xc8] sm:$0x11]
  %v5547 = vunpack.c.l.bf16 %v5521
  %v5548 = vunpack.c.h.bf16 %v5521
  %v5549 = vunpack.c.l.bf16 %v5522
  %v5550 = vunpack.c.h.bf16 %v5522
  %v5551 = vunpack.c.l.bf16 %v5523
  %v5552 = vunpack.c.h.bf16 %v5523
  %v5553 = vunpack.c.l.bf16 %v5524
  %v5554 = vunpack.c.h.bf16 %v5524
  %v5555 = vunpack.c.l.bf16 %v5525
  %v5556 = vunpack.c.h.bf16 %v5525
  %v5557 = vunpack.c.l.bf16 %v5526
  %v5558 = vunpack.c.h.bf16 %v5526
  %v5559 = vunpack.c.l.bf16 %v5527
  %v5560 = vunpack.c.h.bf16 %v5527
  %v5561 = vunpack.c.l.bf16 %v5528
  %v5562 = vunpack.c.h.bf16 %v5528
  %v5563 = vunpack.c.l.bf16 %v5529
  %v5564 = vunpack.c.h.bf16 %v5529
  %v5565 = vunpack.c.l.bf16 %v5530
  %v5566 = vunpack.c.h.bf16 %v5530
  %v5567 = vunpack.c.l.bf16 %v5531
  %v5568 = vunpack.c.h.bf16 %v5531
  %v5569 = vunpack.c.l.bf16 %v5532
  %v5570 = vunpack.c.h.bf16 %v5532
  %v5571 = vunpack.c.l.bf16 %v5533
  %v5572 = vunpack.c.h.bf16 %v5533
  %v5573 = vunpack.c.l.bf16 %v5534
  %v5574 = vunpack.c.h.bf16 %v5534
  %v5575 = vunpack.c.l.bf16 %v5535
  %v5576 = vunpack.c.h.bf16 %v5535
  %v5577 = vunpack.c.l.bf16 %v5536
  %v5578 = vunpack.c.h.bf16 %v5536
  %v5579 = vunpack.c.l.bf16 %v5537
  %v5580 = vunpack.c.h.bf16 %v5537
  %v5581 = vunpack.c.l.bf16 %v5538
  %v5582 = vunpack.c.h.bf16 %v5538
  %v5583 = vunpack.c.l.bf16 %v5539
  %v5584 = vunpack.c.h.bf16 %v5539
  %v5585 = vunpack.c.l.bf16 %v5540
  %v5586 = vunpack.c.h.bf16 %v5540
  %v5587 = vunpack.c.l.bf16 %v5541
  %v5588 = vunpack.c.h.bf16 %v5541
  %v5589 = vunpack.c.l.bf16 %v5542
  %v5590 = vunpack.c.h.bf16 %v5542
  %v5591 = vunpack.c.l.bf16 %v5543
  %v5592 = vunpack.c.h.bf16 %v5543
  %v5593 = vunpack.c.l.bf16 %v5544
  %v5594 = vunpack.c.h.bf16 %v5544
  %v5595 = vunpack.c.l.bf16 %v5545
  %v5596 = vunpack.c.h.bf16 %v5545
  %v5597 = vunpack.c.l.bf16 %v5546
  %v5598 = vunpack.c.h.bf16 %v5546
  %v5600 = vsel %vm1104, %v5550, 0
  %v5603 = vsel %vm1104, %v5554, 0
  %v5606 = vsel %vm1104, %v5558, 0
  %v5609 = vsel %vm1104, %v5562, 0
  %v5612 = vsel %vm1104, %v5566, 0
  %v5615 = vsel %vm1104, %v5570, 0
  %v5618 = vsel %vm1104, %v5574, 0
  %v5621 = vsel %vm1104, %v5578, 0
  %v5624 = vsel %vm1104, %v5582, 0
  %v5627 = vsel %vm1104, %v5586, 0
  %v5630 = vsel %vm1104, %v5590, 0
  %v5633 = vsel %vm1104, %v5594, 0
  %v5636 = vsel %vm1104, %v5598, 0
  %5638 = vmatprep.subr.mxu0 0.0
  %5639 = vmatpush1.msra.mxu0 %v977
  %5640 = vmatprep.subr.mxu0 0.0
  %5641 = vmatpush1.msra.mxu0 %v978
  %5642 = vmatprep.subr.mxu0 0.0
  %5643 = vmatpush1.msra.mxu0 %v979
  %5644 = vmatprep.subr.mxu0 0.0
  %5645 = vmatpush1.msra.mxu0 %v980
  %5646 = vmatprep.subr.mxu0 0.0
  %5647 = vmatpush1.msra.mxu0 %v981
  %5648 = vmatprep.subr.mxu0 0.0
  %5649 = vmatpush1.msra.mxu0 %v982
  %5650 = vmatprep.subr.mxu0 0.0
  %5651 = vmatpush1.msra.mxu0 %v983
  %5652 = vmatprep.subr.mxu0 0.0
  %5653 = vmatpush1.msra.mxu0 %v984
  %5654 = vmatprep.subr.mxu0 0.0
  %5655 = vmatpush1.msra.mxu0 %v985
  %5656 = vmatprep.subr.mxu0 0.0
  %5657 = vmatpush1.msra.mxu0 %v986
  %5658 = vmatprep.subr.mxu0 0.0
  %5659 = vmatpush1.msra.mxu0 %v987
  %5660 = vmatprep.subr.mxu0 0.0
  %5661 = vmatpush1.msra.mxu0 %v988
  %5662 = vmatprep.subr.mxu0 0.0
  %5663 = vmatpush1.msra.mxu0 %v989
  %5664 = vmatprep.subr.mxu0 0.0
  %5665 = vmatpush1.msra.mxu0 %v990
  %5666 = vmatprep.subr.mxu0 0.0
  %5667 = vmatpush1.msra.mxu0 %v991
  %5668 = vmatprep.subr.mxu0 0.0
  %5669 = vmatpush1.msra.mxu0 %v992
  %5670 = vmatprep.subr.mxu0 0.0
  %5671 = vmatpush1.msra.mxu0 %v993
  %5672 = vmatprep.subr.mxu0 0.0
  %5673 = vmatpush1.msra.mxu0 %v994
  %5674 = vmatprep.subr.mxu0 0.0
  %5675 = vmatpush1.msra.mxu0 %v995
  %5676 = vmatprep.subr.mxu0 0.0
  %5677 = vmatpush1.msra.mxu0 %v996
  %5678 = vmatprep.subr.mxu0 0.0
  %5679 = vmatpush1.msra.mxu0 %v997
  %5680 = vmatprep.subr.mxu0 0.0
  %5681 = vmatpush1.msra.mxu0 %v998
  %5682 = vmatprep.subr.mxu0 0.0
  %5683 = vmatpush1.msra.mxu0 %v999
  %5684 = vmatprep.subr.mxu0 0.0
  %5685 = vmatpush1.msra.mxu0 %v1000
  %5686 = vmatprep.subr.mxu0 0.0
  %5687 = vmatpush1.msra.mxu0 %v1001
  %5688 = vmatprep.subr.mxu0 0.0
  %5689 = vmatpush1.msra.mxu0 %v1002
  %5690 = vmatprep.subr.mxu0 0.0
  %5691 = vmatpush1.msra.mxu0 %v1003
  %5692 = vmatprep.subr.mxu0 0.0
  %5693 = vmatpush1.msra.mxu0 %v1004
  %5694 = vmatprep.subr.mxu0 0.0
  %5695 = vmatpush1.msra.mxu0 %v1005
  %5696 = vmatprep.subr.mxu0 0.0
  %5697 = vmatpush1.msra.mxu0 %v1006
  %5698 = vmatprep.subr.mxu0 0.0
  %5699 = vmatpush1.msra.mxu0 %v1007
  %5700 = vmatprep.subr.mxu0 0.0
  %5701 = vmatpush1.msra.mxu0 %v1008
  %5702 = vmatprep.mubr.f32.mxu0 %v5548
  %5703 = vmatmul.mubr.f32.gmra.mrb[0].mxu0 %v5547
  %v5704 = vpop.f32.mrb[0].mxu0
  %v5705 = vadd.f32 0.0, %v5704
  %v5706 = vpop.f32.mrb[0].mxu0
  %5707 = vmatprep.mubr.f32.mxu0 %v5552
  %5708 = vmatmul.mubr.f32.gmra.mrb[0].mxu0 %v5551
  %v5709 = vpop.f32.mrb[0].mxu0
  %v5710 = vadd.f32 0.0, %v5709
  %v5711 = vpop.f32.mrb[0].mxu0
  %5712 = vmatprep.mubr.f32.mxu0 %v5556
  %5713 = vmatmul.mubr.f32.gmra.mrb[0].mxu0 %v5555
  %v5714 = vpop.f32.mrb[0].mxu0
  %v5715 = vadd.f32 0.0, %v5714
  %v5716 = vpop.f32.mrb[0].mxu0
  %5717 = vmatprep.mubr.f32.mxu0 %v5560
  %5718 = vmatmul.mubr.f32.gmra.mrb[0].mxu0 %v5559
  %v5719 = vpop.f32.mrb[0].mxu0
  %v5720 = vadd.f32 0.0, %v5719
  %v5721 = vpop.f32.mrb[0].mxu0
  %5722 = vmatprep.mubr.f32.mxu0 %v5564
  %5723 = vmatmul.mubr.f32.gmra.mrb[0].mxu0 %v5563
  %v5724 = vpop.f32.mrb[0].mxu0
  %v5725 = vadd.f32 0.0, %v5724
  %v5726 = vpop.f32.mrb[0].mxu0
  %5727 = vmatprep.mubr.f32.mxu0 %v5568
  %5728 = vmatmul.mubr.f32.gmra.mrb[0].mxu0 %v5567
  %v5729 = vpop.f32.mrb[0].mxu0
  %v5730 = vadd.f32 0.0, %v5729
  %v5731 = vpop.f32.mrb[0].mxu0
  %5732 = vmatprep.mubr.f32.mxu0 %v5572
  %5733 = vmatmul.mubr.f32.gmra.mrb[0].mxu0 %v5571
  %v5734 = vpop.f32.mrb[0].mxu0
  %v5735 = vadd.f32 0.0, %v5734
  %v5736 = vpop.f32.mrb[0].mxu0
  %5737 = vmatprep.mubr.f32.mxu0 %v5576
  %5738 = vmatmul.mubr.f32.gmra.mrb[0].mxu0 %v5575
  %v5739 = vpop.f32.mrb[0].mxu0
  %v5740 = vadd.f32 0.0, %v5739
  %v5741 = vpop.f32.mrb[0].mxu0
  %5742 = vmatprep.mubr.f32.mxu0 %v5580
  %5743 = vmatmul.mubr.f32.gmra.mrb[0].mxu0 %v5579
  %v5744 = vpop.f32.mrb[0].mxu0
  %v5745 = vadd.f32 0.0, %v5744
  %v5746 = vpop.f32.mrb[0].mxu0
  %5747 = vmatprep.mubr.f32.mxu0 %v5584
  %5748 = vmatmul.mubr.f32.gmra.mrb[0].mxu0 %v5583
  %v5749 = vpop.f32.mrb[0].mxu0
  %v5750 = vadd.f32 0.0, %v5749
  %v5751 = vpop.f32.mrb[0].mxu0
  %5752 = vmatprep.mubr.f32.mxu0 %v5588
  %5753 = vmatmul.mubr.f32.gmra.mrb[0].mxu0 %v5587
  %v5754 = vpop.f32.mrb[0].mxu0
  %v5755 = vadd.f32 0.0, %v5754
  %v5756 = vpop.f32.mrb[0].mxu0
  %5757 = vmatprep.mubr.f32.mxu0 %v5592
  %5758 = vmatmul.mubr.f32.gmra.mrb[0].mxu0 %v5591
  %v5759 = vpop.f32.mrb[0].mxu0
  %v5760 = vadd.f32 0.0, %v5759
  %v5761 = vpop.f32.mrb[0].mxu0
  %5762 = vmatprep.mubr.f32.mxu0 %v5596
  %5763 = vmatmul.mubr.f32.gmra.mrb[0].mxu0 %v5595
  %v5764 = vpop.f32.mrb[0].mxu0
  %v5765 = vadd.f32 0.0, %v5764
  %v5766 = vpop.f32.mrb[0].mxu0
  %5767 = vdwg.mxu0
  %5768 = vmatprep.subr.mxu0 0.0
  %5769 = vmatpush1.msra.mxu0 %v1009
  %5770 = vmatprep.subr.mxu0 0.0
  %5771 = vmatpush1.msra.mxu0 %v1010
  %5772 = vmatprep.subr.mxu0 0.0
  %5773 = vmatpush1.msra.mxu0 %v1011
  %5774 = vmatprep.subr.mxu0 0.0
  %5775 = vmatpush1.msra.mxu0 %v1012
  %5776 = vmatprep.subr.mxu0 0.0
  %5777 = vmatpush1.msra.mxu0 %v1013
  %5778 = vmatprep.subr.mxu0 0.0
  %5779 = vmatpush1.msra.mxu0 %v1014
  %5780 = vmatprep.subr.mxu0 0.0
  %5781 = vmatpush1.msra.mxu0 %v1015
  %5782 = vmatprep.subr.mxu0 0.0
  %5783 = vmatpush1.msra.mxu0 %v1016
  %5784 = vmatprep.subr.mxu0 0.0
  %5785 = vmatpush1.msra.mxu0 %v1017
  %5786 = vmatprep.subr.mxu0 0.0
  %5787 = vmatpush1.msra.mxu0 %v1018
  %5788 = vmatprep.subr.mxu0 0.0
  %5789 = vmatpush1.msra.mxu0 %v1019
  %5790 = vmatprep.subr.mxu0 0.0
  %5791 = vmatpush1.msra.mxu0 %v1020
  %5792 = vmatprep.subr.mxu0 0.0
  %5793 = vmatpush1.msra.mxu0 %v1021
  %5794 = vmatprep.subr.mxu0 0.0
  %5795 = vmatpush1.msra.mxu0 %v1022
  %5796 = vmatprep.subr.mxu0 0.0
  %5797 = vmatpush1.msra.mxu0 %v1023
  %5798 = vmatprep.subr.mxu0 0.0
  %5799 = vmatpush1.msra.mxu0 %v1024
  %5800 = vmatprep.subr.mxu0 0.0
  %5801 = vmatpush1.msra.mxu0 %v1025
  %5802 = vmatprep.subr.mxu0 0.0
  %5803 = vmatpush1.msra.mxu0 0.0
  %5804 = vmatprep.subr.mxu0 0.0
  %5805 = vmatpush1.msra.mxu0 0.0
  %5806 = vmatprep.subr.mxu0 0.0
  %5807 = vmatpush1.msra.mxu0 0.0
  %5808 = vmatprep.subr.mxu0 0.0
  %5809 = vmatpush1.msra.mxu0 0.0
  %5810 = vmatprep.subr.mxu0 0.0
  %5811 = vmatpush1.msra.mxu0 0.0
  %5812 = vmatprep.subr.mxu0 0.0
  %5813 = vmatpush1.msra.mxu0 0.0
  %5814 = vmatprep.subr.mxu0 0.0
  %5815 = vmatpush1.msra.mxu0 0.0
  %5816 = vmatprep.subr.mxu0 0.0
  %5817 = vmatpush1.msra.mxu0 0.0
  %5818 = vmatprep.subr.mxu0 0.0
  %5819 = vmatpush1.msra.mxu0 0.0
  %5820 = vmatprep.subr.mxu0 0.0
  %5821 = vmatpush1.msra.mxu0 0.0
  %5822 = vmatprep.subr.mxu0 0.0
  %5823 = vmatpush1.msra.mxu0 0.0
  %5824 = vmatprep.subr.mxu0 0.0
  %5825 = vmatpush1.msra.mxu0 0.0
  %5826 = vmatprep.subr.mxu0 0.0
  %5827 = vmatpush1.msra.mxu0 0.0
  %5828 = vmatprep.subr.mxu0 0.0
  %5829 = vmatpush1.msra.mxu0 0.0
  %5830 = vmatprep.subr.mxu0 0.0
  %5831 = vmatpush1.msra.mxu0 0.0
  %5832 = vmatprep.mubr.f32.mxu0 %v5600
  %5833 = vmatmul.mubr.f32.gmra.mrb[0].mxu0 %v5549
  %v5834 = vpop.f32.mrb[0].mxu0
  %v5835 = vadd.f32 %v5705, %v5834
  %v5836 = vpop.f32.mrb[0].mxu0
  %5837 = vmatprep.mubr.f32.mxu0 %v5603
  %5838 = vmatmul.mubr.f32.gmra.mrb[0].mxu0 %v5553
  %v5839 = vpop.f32.mrb[0].mxu0
  %v5840 = vadd.f32 %v5710, %v5839
  %v5841 = vpop.f32.mrb[0].mxu0
  %5842 = vmatprep.mubr.f32.mxu0 %v5606
  %5843 = vmatmul.mubr.f32.gmra.mrb[0].mxu0 %v5557
  %v5844 = vpop.f32.mrb[0].mxu0
  %v5845 = vadd.f32 %v5715, %v5844
  %v5846 = vpop.f32.mrb[0].mxu0
  %5847 = vmatprep.mubr.f32.mxu0 %v5609
  %5848 = vmatmul.mubr.f32.gmra.mrb[0].mxu0 %v5561
  %v5849 = vpop.f32.mrb[0].mxu0
  %v5850 = vadd.f32 %v5720, %v5849
  %v5851 = vpop.f32.mrb[0].mxu0
  %5852 = vmatprep.mubr.f32.mxu0 %v5612
  %5853 = vmatmul.mubr.f32.gmra.mrb[0].mxu0 %v5565
  %v5854 = vpop.f32.mrb[0].mxu0
  %v5855 = vadd.f32 %v5725, %v5854
  %v5856 = vpop.f32.mrb[0].mxu0
  %5857 = vmatprep.mubr.f32.mxu0 %v5615
  %5858 = vmatmul.mubr.f32.gmra.mrb[0].mxu0 %v5569
  %v5859 = vpop.f32.mrb[0].mxu0
  %v5860 = vadd.f32 %v5730, %v5859
  %v5861 = vpop.f32.mrb[0].mxu0
  %5862 = vmatprep.mubr.f32.mxu0 %v5618
  %5863 = vmatmul.mubr.f32.gmra.mrb[0].mxu0 %v5573
  %v5864 = vpop.f32.mrb[0].mxu0
  %v5865 = vadd.f32 %v5735, %v5864
  %v5866 = vpop.f32.mrb[0].mxu0
  %5867 = vmatprep.mubr.f32.mxu0 %v5621
  %5868 = vmatmul.mubr.f32.gmra.mrb[0].mxu0 %v5577
  %v5869 = vpop.f32.mrb[0].mxu0
  %v5870 = vadd.f32 %v5740, %v5869
  %v5871 = vpop.f32.mrb[0].mxu0
  %5872 = vmatprep.mubr.f32.mxu0 %v5624
  %5873 = vmatmul.mubr.f32.gmra.mrb[0].mxu0 %v5581
  %v5874 = vpop.f32.mrb[0].mxu0
  %v5875 = vadd.f32 %v5745, %v5874
  %v5876 = vpop.f32.mrb[0].mxu0
  %5877 = vmatprep.mubr.f32.mxu0 %v5627
  %5878 = vmatmul.mubr.f32.gmra.mrb[0].mxu0 %v5585
  %v5879 = vpop.f32.mrb[0].mxu0
  %v5880 = vadd.f32 %v5750, %v5879
  %v5881 = vpop.f32.mrb[0].mxu0
  %5882 = vmatprep.mubr.f32.mxu0 %v5630
  %5883 = vmatmul.mubr.f32.gmra.mrb[0].mxu0 %v5589
  %v5884 = vpop.f32.mrb[0].mxu0
  %v5885 = vadd.f32 %v5755, %v5884
  %v5886 = vpop.f32.mrb[0].mxu0
  %5887 = vmatprep.mubr.f32.mxu0 %v5633
  %5888 = vmatmul.mubr.f32.gmra.mrb[0].mxu0 %v5593
  %v5889 = vpop.f32.mrb[0].mxu0
  %v5890 = vadd.f32 %v5760, %v5889
  %v5891 = vpop.f32.mrb[0].mxu0
  %5892 = vmatprep.mubr.f32.mxu0 %v5636
  %5893 = vmatmul.mubr.f32.gmra.mrb[0].mxu0 %v5597
  %v5894 = vpop.f32.mrb[0].mxu0
  %v5895 = vadd.f32 %v5765, %v5894
  %v5896 = vpop.f32.mrb[0].mxu0
  %5897 = vdwg.mxu0
  %s5898 = scalar_lea.vmem %s3, 32
  %v5899 = vld [vmem:[%s5898] sm:$0xf]
  %v5901 = vsel %vm601, %v5835, 0
  %v5904 = vsel %vm601, %v5840, 0
  %v5907 = vsel %vm601, %v5845, 0
  %v5910 = vsel %vm601, %v5850, 0
  %v5913 = vsel %vm601, %v5855, 0
  %v5916 = vsel %vm601, %v5860, 0
  %v5919 = vsel %vm601, %v5865, 0
  %v5922 = vsel %vm601, %v5870, 0
  %v5925 = vsel %vm601, %v5875, 0
  %v5928 = vsel %vm601, %v5880, 0
  %v5931 = vsel %vm601, %v5885, 0
  %v5934 = vsel %vm601, %v5890, 0
  %v5937 = vsel %vm601, %v5895, 0
  %v5940 = vsel %vm1824, %v5899, 0
  %5942 = vmatprep.subr.mxu0 0.0
  %5943 = vmatpush1.msra.mxu0 %v5940
  %5944 = vmatprep.subr.mxu0 0.0
  %5945 = vmatpush1.msra.mxu0 0.0
  %5946 = vmatprep.subr.mxu0 0.0
  %5947 = vmatpush1.msra.mxu0 0.0
  %5948 = vmatprep.subr.mxu0 0.0
  %5949 = vmatpush1.msra.mxu0 0.0
  %5950 = vmatprep.subr.mxu0 0.0
  %5951 = vmatpush1.msra.mxu0 0.0
  %5952 = vmatprep.subr.mxu0 0.0
  %5953 = vmatpush1.msra.mxu0 0.0
  %5954 = vmatprep.subr.mxu0 0.0
  %5955 = vmatpush1.msra.mxu0 0.0
  %5956 = vmatprep.subr.mxu0 0.0
  %5957 = vmatpush1.msra.mxu0 0.0
  %5958 = vmatprep.subr.mxu0 0.0
  %5959 = vmatpush1.msra.mxu0 0.0
  %5960 = vmatprep.subr.mxu0 0.0
  %5961 = vmatpush1.msra.mxu0 0.0
  %5962 = vmatprep.subr.mxu0 0.0
  %5963 = vmatpush1.msra.mxu0 0.0
  %5964 = vmatprep.subr.mxu0 0.0
  %5965 = vmatpush1.msra.mxu0 0.0
  %5966 = vmatprep.subr.mxu0 0.0
  %5967 = vmatpush1.msra.mxu0 0.0
  %5968 = vmatprep.subr.mxu0 0.0
  %5969 = vmatpush1.msra.mxu0 0.0
  %5970 = vmatprep.subr.mxu0 0.0
  %5971 = vmatpush1.msra.mxu0 0.0
  %5972 = vmatprep.subr.mxu0 0.0
  %5973 = vmatpush1.msra.mxu0 0.0
  %5974 = vmatprep.subr.mxu0 0.0
  %5975 = vmatpush1.msra.mxu0 0.0
  %5976 = vmatprep.subr.mxu0 0.0
  %5977 = vmatpush1.msra.mxu0 0.0
  %5978 = vmatprep.subr.mxu0 0.0
  %5979 = vmatpush1.msra.mxu0 0.0
  %5980 = vmatprep.subr.mxu0 0.0
  %5981 = vmatpush1.msra.mxu0 0.0
  %5982 = vmatprep.subr.mxu0 0.0
  %5983 = vmatpush1.msra.mxu0 0.0
  %5984 = vmatprep.subr.mxu0 0.0
  %5985 = vmatpush1.msra.mxu0 0.0
  %5986 = vmatprep.subr.mxu0 0.0
  %5987 = vmatpush1.msra.mxu0 0.0
  %5988 = vmatprep.subr.mxu0 0.0
  %5989 = vmatpush1.msra.mxu0 0.0
  %5990 = vmatprep.subr.mxu0 0.0
  %5991 = vmatpush1.msra.mxu0 0.0
  %5992 = vmatprep.subr.mxu0 0.0
  %5993 = vmatpush1.msra.mxu0 0.0
  %5994 = vmatprep.subr.mxu0 0.0
  %5995 = vmatpush1.msra.mxu0 0.0
  %5996 = vmatprep.subr.mxu0 0.0
  %5997 = vmatpush1.msra.mxu0 0.0
  %5998 = vmatprep.subr.mxu0 0.0
  %5999 = vmatpush1.msra.mxu0 0.0
  %6000 = vmatprep.subr.mxu0 0.0
  %6001 = vmatpush1.msra.mxu0 0.0
  %6002 = vmatprep.subr.mxu0 0.0
  %6003 = vmatpush1.msra.mxu0 0.0
  %6004 = vmatprep.subr.mxu0 0.0
  %6005 = vmatpush1.msra.mxu0 0.0
  %6006 = vmatprep.mubr.f32.mxu0 0.0
  %6007 = vmatmul.mubr.f32.gmra.mrb[0].mxu0 %v5901
  %v6008 = vpop.f32.mrb[0].mxu0
  %v6009 = vadd.f32 0.0, %v6008
  %v6010 = vpop.f32.mrb[0].mxu0
  %6011 = vmatprep.mubr.f32.mxu0 0.0
  %6012 = vmatmul.mubr.f32.gmra.mrb[0].mxu0 %v5904
  %v6013 = vpop.f32.mrb[0].mxu0
  %v6014 = vadd.f32 0.0, %v6013
  %v6015 = vpop.f32.mrb[0].mxu0
  %6016 = vmatprep.mubr.f32.mxu0 0.0
  %6017 = vmatmul.mubr.f32.gmra.mrb[0].mxu0 %v5907
  %v6018 = vpop.f32.mrb[0].mxu0
  %v6019 = vadd.f32 0.0, %v6018
  %v6020 = vpop.f32.mrb[0].mxu0
  %6021 = vmatprep.mubr.f32.mxu0 0.0
  %6022 = vmatmul.mubr.f32.gmra.mrb[0].mxu0 %v5910
  %v6023 = vpop.f32.mrb[0].mxu0
  %v6024 = vadd.f32 0.0, %v6023
  %v6025 = vpop.f32.mrb[0].mxu0
  %6026 = vmatprep.mubr.f32.mxu0 0.0
  %6027 = vmatmul.mubr.f32.gmra.mrb[0].mxu0 %v5913
  %v6028 = vpop.f32.mrb[0].mxu0
  %v6029 = vadd.f32 0.0, %v6028
  %v6030 = vpop.f32.mrb[0].mxu0
  %6031 = vmatprep.mubr.f32.mxu0 0.0
  %6032 = vmatmul.mubr.f32.gmra.mrb[0].mxu0 %v5916
  %v6033 = vpop.f32.mrb[0].mxu0
  %v6034 = vadd.f32 0.0, %v6033
  %v6035 = vpop.f32.mrb[0].mxu0
  %6036 = vmatprep.mubr.f32.mxu0 0.0
  %6037 = vmatmul.mubr.f32.gmra.mrb[0].mxu0 %v5919
  %v6038 = vpop.f32.mrb[0].mxu0
  %v6039 = vadd.f32 0.0, %v6038
  %v6040 = vpop.f32.mrb[0].mxu0
  %6041 = vmatprep.mubr.f32.mxu0 0.0
  %6042 = vmatmul.mubr.f32.gmra.mrb[0].mxu0 %v5922
  %v6043 = vpop.f32.mrb[0].mxu0
  %v6044 = vadd.f32 0.0, %v6043
  %v6045 = vpop.f32.mrb[0].mxu0
  %6046 = vmatprep.mubr.f32.mxu0 0.0
  %6047 = vmatmul.mubr.f32.gmra.mrb[0].mxu0 %v5925
  %v6048 = vpop.f32.mrb[0].mxu0
  %v6049 = vadd.f32 0.0, %v6048
  %v6050 = vpop.f32.mrb[0].mxu0
  %6051 = vmatprep.mubr.f32.mxu0 0.0
  %6052 = vmatmul.mubr.f32.gmra.mrb[0].mxu0 %v5928
  %v6053 = vpop.f32.mrb[0].mxu0
  %v6054 = vadd.f32 0.0, %v6053
  %v6055 = vpop.f32.mrb[0].mxu0
  %6056 = vmatprep.mubr.f32.mxu0 0.0
  %6057 = vmatmul.mubr.f32.gmra.mrb[0].mxu0 %v5931
  %v6058 = vpop.f32.mrb[0].mxu0
  %v6059 = vadd.f32 0.0, %v6058
  %v6060 = vpop.f32.mrb[0].mxu0
  %6061 = vmatprep.mubr.f32.mxu0 0.0
  %6062 = vmatmul.mubr.f32.gmra.mrb[0].mxu0 %v5934
  %v6063 = vpop.f32.mrb[0].mxu0
  %v6064 = vadd.f32 0.0, %v6063
  %v6065 = vpop.f32.mrb[0].mxu0
  %6066 = vmatprep.mubr.f32.mxu0 0.0
  %6067 = vmatmul.mubr.f32.gmra.mrb[0].mxu0 %v5937
  %v6068 = vpop.f32.mrb[0].mxu0
  %v6069 = vadd.f32 0.0, %v6068
  %v6070 = vpop.f32.mrb[0].mxu0
  %6071 = vdwg.mxu0
  %v6072 = vadd.f32 %v5507, %v6009
  %v6073 = vadd.f32 %v5508, %v6014
  %v6074 = vadd.f32 %v5509, %v6019
  %v6075 = vadd.f32 %v5510, %v6024
  %v6076 = vadd.f32 %v5511, %v6029
  %v6077 = vadd.f32 %v5512, %v6034
  %v6078 = vadd.f32 %v5513, %v6039
  %v6079 = vadd.f32 %v5514, %v6044
  %v6080 = vadd.f32 %v5515, %v6049
  %v6081 = vadd.f32 %v5516, %v6054
  %v6082 = vadd.f32 %v5517, %v6059
  %v6083 = vadd.f32 %v5518, %v6064
  %v6084 = vadd.f32 %v5519, %v6069
  %v6085 = vld [vmem:[%s10] sm:$0x1]
  %v6086 = vld [vmem:[%s11] sm:$0x1]
  %v6087 = vsel %vm1104, %v6072, 0.0
  %v6088 = vsel %vm1104, %v6073, 0.0
  %v6089 = vadd.f32 %v6087, %v6088
  %v6090 = vsel %vm1104, %v6074, 0.0
  %v6091 = vadd.f32 %v6089, %v6090
  %v6092 = vsel %vm1104, %v6075, 0.0
  %v6093 = vadd.f32 %v6091, %v6092
  %v6094 = vsel %vm1104, %v6076, 0.0
  %v6095 = vadd.f32 %v6093, %v6094
  %v6096 = vsel %vm1104, %v6077, 0.0
  %v6097 = vadd.f32 %v6095, %v6096
  %v6098 = vsel %vm1104, %v6078, 0.0
  %v6099 = vadd.f32 %v6097, %v6098
  %v6100 = vsel %vm1104, %v6079, 0.0
  %v6101 = vadd.f32 %v6099, %v6100
  %v6102 = vsel %vm1104, %v6080, 0.0
  %v6103 = vadd.f32 %v6101, %v6102
  %v6104 = vsel %vm1104, %v6081, 0.0
  %v6105 = vadd.f32 %v6103, %v6104
  %v6106 = vsel %vm1104, %v6082, 0.0
  %v6107 = vadd.f32 %v6105, %v6106
  %v6108 = vsel %vm1104, %v6083, 0.0
  %v6109 = vadd.f32 %v6107, %v6108
  %vm6110 = vcmask 58368
  %v6111 = vsel %vm6110, %v6084, 0.0
  %v6112 = vadd.f32 %v6109, %v6111
  %v6113 = vrot.slane %v6112, 4
  %v6114 = vadd.f32 %v6112, %v6113
  %v6115 = vrot.slane %v6114, 2
  %v6116 = vadd.f32 %v6114, %v6115
  %v6117 = vrot.slane %v6116, 1
  %v6118 = vadd.f32 %v6116, %v6117
  %v6119 = vmul.f32 %v6118, 0.010204081
  %v6120 = vmul.f32 %v6072, %v6072
  %v6121 = vmul.f32 %v6073, %v6073
  %v6122 = vmul.f32 %v6074, %v6074
  %v6123 = vmul.f32 %v6075, %v6075
  %v6124 = vmul.f32 %v6076, %v6076
  %v6125 = vmul.f32 %v6077, %v6077
  %v6126 = vmul.f32 %v6078, %v6078
  %v6127 = vmul.f32 %v6079, %v6079
  %v6128 = vmul.f32 %v6080, %v6080
  %v6129 = vmul.f32 %v6081, %v6081
  %v6130 = vmul.f32 %v6082, %v6082
  %v6131 = vmul.f32 %v6083, %v6083
  %v6132 = vmul.f32 %v6084, %v6084
  %v6133 = vsel %vm1104, %v6120, 0.0
  %v6134 = vsel %vm1104, %v6121, 0.0
  %v6135 = vadd.f32 %v6133, %v6134
  %v6136 = vsel %vm1104, %v6122, 0.0
  %v6137 = vadd.f32 %v6135, %v6136
  %v6138 = vsel %vm1104, %v6123, 0.0
  %v6139 = vadd.f32 %v6137, %v6138
  %v6140 = vsel %vm1104, %v6124, 0.0
  %v6141 = vadd.f32 %v6139, %v6140
  %v6142 = vsel %vm1104, %v6125, 0.0
  %v6143 = vadd.f32 %v6141, %v6142
  %v6144 = vsel %vm1104, %v6126, 0.0
  %v6145 = vadd.f32 %v6143, %v6144
  %v6146 = vsel %vm1104, %v6127, 0.0
  %v6147 = vadd.f32 %v6145, %v6146
  %v6148 = vsel %vm1104, %v6128, 0.0
  %v6149 = vadd.f32 %v6147, %v6148
  %v6150 = vsel %vm1104, %v6129, 0.0
  %v6151 = vadd.f32 %v6149, %v6150
  %v6152 = vsel %vm1104, %v6130, 0.0
  %v6153 = vadd.f32 %v6151, %v6152
  %v6154 = vsel %vm1104, %v6131, 0.0
  %v6155 = vadd.f32 %v6153, %v6154
  %v6156 = vsel %vm6110, %v6132, 0.0
  %v6157 = vadd.f32 %v6155, %v6156
  %v6158 = vrot.slane %v6157, 4
  %v6159 = vadd.f32 %v6157, %v6158
  %v6160 = vrot.slane %v6159, 2
  %v6161 = vadd.f32 %v6159, %v6160
  %v6162 = vrot.slane %v6161, 1
  %v6163 = vadd.f32 %v6161, %v6162
  %v6164 = vmul.f32 %v6163, 0.010204081
  %v6165 = vmul.f32 %v6119, %v6119
  %v6166 = vsub.f32 %v6164, %v6165
  %v6167 = vmax.f32 %v6166, 0.0
  %v6168 = vadd.f32 %v6167, 1e-05
  %v6169 = vrsqrt.pop %v6168
  %v6170 = vmul.f32 %v6085, %v6169
  %v6171 = vmul.f32 %v6119, %v6170
  %v6172 = vsub.f32 %v6086, %v6171
  %v6174 = vlaneseq
  %v6175 = vshrl.u32 %v6174, 7
  %v6176 = vsub.s32 0, %v6175
  %v6177 = vrot.slane %v6170, %v6176
  %v6179 = vmul.f32 %v6072, %v6177
  %v6180 = vmul.f32 %v6073, %v6177
  %v6181 = vmul.f32 %v6074, %v6177
  %v6182 = vmul.f32 %v6075, %v6177
  %v6183 = vmul.f32 %v6076, %v6177
  %v6184 = vmul.f32 %v6077, %v6177
  %v6185 = vmul.f32 %v6078, %v6177
  %v6186 = vmul.f32 %v6079, %v6177
  %v6187 = vmul.f32 %v6080, %v6177
  %v6188 = vmul.f32 %v6081, %v6177
  %v6189 = vmul.f32 %v6082, %v6177
  %v6190 = vmul.f32 %v6083, %v6177
  %v6191 = vmul.f32 %v6084, %v6177
  %v6193 = vlaneseq
  %v6194 = vshrl.u32 %v6193, 7
  %v6195 = vsub.s32 0, %v6194
  %v6196 = vrot.slane %v6172, %v6195
  %v6198 = vadd.f32 %v6179, %v6196
  %v6199 = vadd.f32 %v6180, %v6196
  %v6200 = vadd.f32 %v6181, %v6196
  %v6201 = vadd.f32 %v6182, %v6196
  %v6202 = vadd.f32 %v6183, %v6196
  %v6203 = vadd.f32 %v6184, %v6196
  %v6204 = vadd.f32 %v6185, %v6196
  %v6205 = vadd.f32 %v6186, %v6196
  %v6206 = vadd.f32 %v6187, %v6196
  %v6207 = vadd.f32 %v6188, %v6196
  %v6208 = vadd.f32 %v6189, %v6196
  %v6209 = vadd.f32 %v6190, %v6196
  %v6210 = vadd.f32 %v6191, %v6196
  %v6211 = vmax.f32 %v6198, 0.0
  %v6212 = vmax.f32 %v6199, 0.0
  %v6213 = vmax.f32 %v6200, 0.0
  %v6214 = vmax.f32 %v6201, 0.0
  %v6215 = vmax.f32 %v6202, 0.0
  %v6216 = vmax.f32 %v6203, 0.0
  %v6217 = vmax.f32 %v6204, 0.0
  %v6218 = vmax.f32 %v6205, 0.0
  %v6219 = vmax.f32 %v6206, 0.0
  %v6220 = vmax.f32 %v6207, 0.0
  %v6221 = vmax.f32 %v6208, 0.0
  %v6222 = vmax.f32 %v6209, 0.0
  %v6223 = vmax.f32 %v6210, 0.0
  %v6224 = vld [vmem:[%s4] sm:$0xf]
  %v6225 = vld [vmem:[%s4 + $0x4] sm:$0xf]
  %v6226 = vld [vmem:[%s4 + $0x8] sm:$0xf]
  %v6227 = vld [vmem:[%s4 + $0xc] sm:$0xf]
  %v6228 = vunpack.c.l.bf16 %v6224
  %v6229 = vunpack.c.l.bf16 %v6225
  %v6230 = vunpack.c.l.bf16 %v6226
  %v6231 = vunpack.c.l.bf16 %v6227
  %vm6232 = vcmask 801792
  %v6234 = vsel %vm6232, %v6228, 0
  %v6237 = vsel %vm6232, %v6229, 0
  %v6240 = vsel %vm6232, %v6230, 0
  %v6243 = vsel %vm6232, %v6231, 0
  %vm6245 = vcmask 1041408
  %v6247 = vsel %vm6245, %v6223, 0
  %6249 = vmatprep.subr.mxu0 0.0
  %6250 = vmatpush1.msra.mxu0 %v6211
  %6251 = vmatprep.subr.mxu0 0.0
  %6252 = vmatpush1.msra.mxu0 %v6212
  %6253 = vmatprep.subr.mxu0 0.0
  %6254 = vmatpush1.msra.mxu0 %v6213
  %6255 = vmatprep.subr.mxu0 0.0
  %6256 = vmatpush1.msra.mxu0 %v6214
  %6257 = vmatprep.subr.mxu0 0.0
  %6258 = vmatpush1.msra.mxu0 %v6215
  %6259 = vmatprep.subr.mxu0 0.0
  %6260 = vmatpush1.msra.mxu0 %v6216
  %6261 = vmatprep.subr.mxu0 0.0
  %6262 = vmatpush1.msra.mxu0 %v6217
  %6263 = vmatprep.subr.mxu0 0.0
  %6264 = vmatpush1.msra.mxu0 %v6218
  %6265 = vmatprep.subr.mxu0 0.0
  %6266 = vmatpush1.msra.mxu0 %v6219
  %6267 = vmatprep.subr.mxu0 0.0
  %6268 = vmatpush1.msra.mxu0 %v6220
  %6269 = vmatprep.subr.mxu0 0.0
  %6270 = vmatpush1.msra.mxu0 %v6221
  %6271 = vmatprep.subr.mxu0 0.0
  %6272 = vmatpush1.msra.mxu0 %v6222
  %6273 = vmatprep.subr.mxu0 0.0
  %6274 = vmatpush1.msra.mxu0 %v6247
  %6275 = vmatprep.subr.mxu0 0.0
  %6276 = vmatpush1.msra.mxu0 0.0
  %6277 = vmatprep.subr.mxu0 0.0
  %6278 = vmatpush1.msra.mxu0 0.0
  %6279 = vmatprep.subr.mxu0 0.0
  %6280 = vmatpush1.msra.mxu0 0.0
  %6281 = vmatprep.subr.mxu0 0.0
  %6282 = vmatpush1.msra.mxu0 0.0
  %6283 = vmatprep.subr.mxu0 0.0
  %6284 = vmatpush1.msra.mxu0 0.0
  %6285 = vmatprep.subr.mxu0 0.0
  %6286 = vmatpush1.msra.mxu0 0.0
  %6287 = vmatprep.subr.mxu0 0.0
  %6288 = vmatpush1.msra.mxu0 0.0
  %6289 = vmatprep.subr.mxu0 0.0
  %6290 = vmatpush1.msra.mxu0 0.0
  %6291 = vmatprep.subr.mxu0 0.0
  %6292 = vmatpush1.msra.mxu0 0.0
  %6293 = vmatprep.subr.mxu0 0.0
  %6294 = vmatpush1.msra.mxu0 0.0
  %6295 = vmatprep.subr.mxu0 0.0
  %6296 = vmatpush1.msra.mxu0 0.0
  %6297 = vmatprep.subr.mxu0 0.0
  %6298 = vmatpush1.msra.mxu0 0.0
  %6299 = vmatprep.subr.mxu0 0.0
  %6300 = vmatpush1.msra.mxu0 0.0
  %6301 = vmatprep.subr.mxu0 0.0
  %6302 = vmatpush1.msra.mxu0 0.0
  %6303 = vmatprep.subr.mxu0 0.0
  %6304 = vmatpush1.msra.mxu0 0.0
  %6305 = vmatprep.subr.mxu0 0.0
  %6306 = vmatpush1.msra.mxu0 0.0
  %6307 = vmatprep.subr.mxu0 0.0
  %6308 = vmatpush1.msra.mxu0 0.0
  %6309 = vmatprep.subr.mxu0 0.0
  %6310 = vmatpush1.msra.mxu0 0.0
  %6311 = vmatprep.subr.mxu0 0.0
  %6312 = vmatpush1.msra.mxu0 0.0
  %6313 = vmatprep.mubr.f32.mxu0 0.0
  %6314 = vmatmul.mubr.f32.gmra.mrb[0].mxu0 %v6234
  %v6315 = vpop.f32.mrb[0].mxu0
  %v6316 = vadd.f32 0.0, %v6315
  %v6317 = vpop.f32.mrb[0].mxu0
  %6318 = vmatprep.mubr.f32.mxu0 0.0
  %6319 = vmatmul.mubr.f32.gmra.mrb[0].mxu0 %v6237
  %v6320 = vpop.f32.mrb[0].mxu0
  %v6321 = vadd.f32 0.0, %v6320
  %v6322 = vpop.f32.mrb[0].mxu0
  %6323 = vmatprep.mubr.f32.mxu0 0.0
  %6324 = vmatmul.mubr.f32.gmra.mrb[0].mxu0 %v6240
  %v6325 = vpop.f32.mrb[0].mxu0
  %v6326 = vadd.f32 0.0, %v6325
  %v6327 = vpop.f32.mrb[0].mxu0
  %6328 = vmatprep.mubr.f32.mxu0 0.0
  %6329 = vmatmul.mubr.f32.gmra.mrb[0].mxu0 %v6243
  %v6330 = vpop.f32.mrb[0].mxu0
  %v6331 = vadd.f32 0.0, %v6330
  %v6332 = vpop.f32.mrb[0].mxu0
  %6333 = vdwg.mxu0
  %v6334 = vld [vmem:[%s5] sm:$0xff]
  %s6335 = scalar_lea.vmem %s4, 16
  %v6336 = vld [vmem:[%s6335] sm:$0xf]
  %v6337 = vld [vmem:[%s6335 + $0x4] sm:$0xf]
  %v6338 = vld [vmem:[%s6335 + $0x8] sm:$0xf]
  %v6339 = vld [vmem:[%s6335 + $0xc] sm:$0xf]
  %v6340 = vunpack.c.l.bf16 %v6336
  %v6341 = vunpack.c.l.bf16 %v6337
  %v6342 = vunpack.c.l.bf16 %v6338
  %v6343 = vunpack.c.l.bf16 %v6339
  %v6345 = vsel %vm6232, %v6340, 0
  %v6348 = vsel %vm6232, %v6341, 0
  %v6351 = vsel %vm6232, %v6342, 0
  %v6354 = vsel %vm6232, %v6343, 0
  %6356 = vmatprep.subr.mxu0 0.0
  %6357 = vmatpush1.msra.mxu0 %v6211
  %6358 = vmatprep.subr.mxu0 0.0
  %6359 = vmatpush1.msra.mxu0 %v6212
  %6360 = vmatprep.subr.mxu0 0.0
  %6361 = vmatpush1.msra.mxu0 %v6213
  %6362 = vmatprep.subr.mxu0 0.0
  %6363 = vmatpush1.msra.mxu0 %v6214
  %6364 = vmatprep.subr.mxu0 0.0
  %6365 = vmatpush1.msra.mxu0 %v6215
  %6366 = vmatprep.subr.mxu0 0.0
  %6367 = vmatpush1.msra.mxu0 %v6216
  %6368 = vmatprep.subr.mxu0 0.0
  %6369 = vmatpush1.msra.mxu0 %v6217
  %6370 = vmatprep.subr.mxu0 0.0
  %6371 = vmatpush1.msra.mxu0 %v6218
  %6372 = vmatprep.subr.mxu0 0.0
  %6373 = vmatpush1.msra.mxu0 %v6219
  %6374 = vmatprep.subr.mxu0 0.0
  %6375 = vmatpush1.msra.mxu0 %v6220
  %6376 = vmatprep.subr.mxu0 0.0
  %6377 = vmatpush1.msra.mxu0 %v6221
  %6378 = vmatprep.subr.mxu0 0.0
  %6379 = vmatpush1.msra.mxu0 %v6222
  %6380 = vmatprep.subr.mxu0 0.0
  %6381 = vmatpush1.msra.mxu0 %v6247
  %6382 = vmatprep.subr.mxu0 0.0
  %6383 = vmatpush1.msra.mxu0 0.0
  %6384 = vmatprep.subr.mxu0 0.0
  %6385 = vmatpush1.msra.mxu0 0.0
  %6386 = vmatprep.subr.mxu0 0.0
  %6387 = vmatpush1.msra.mxu0 0.0
  %6388 = vmatprep.subr.mxu0 0.0
  %6389 = vmatpush1.msra.mxu0 0.0
  %6390 = vmatprep.subr.mxu0 0.0
  %6391 = vmatpush1.msra.mxu0 0.0
  %6392 = vmatprep.subr.mxu0 0.0
  %6393 = vmatpush1.msra.mxu0 0.0
  %6394 = vmatprep.subr.mxu0 0.0
  %6395 = vmatpush1.msra.mxu0 0.0
  %6396 = vmatprep.subr.mxu0 0.0
  %6397 = vmatpush1.msra.mxu0 0.0
  %6398 = vmatprep.subr.mxu0 0.0
  %6399 = vmatpush1.msra.mxu0 0.0
  %6400 = vmatprep.subr.mxu0 0.0
  %6401 = vmatpush1.msra.mxu0 0.0
  %6402 = vmatprep.subr.mxu0 0.0
  %6403 = vmatpush1.msra.mxu0 0.0
  %6404 = vmatprep.subr.mxu0 0.0
  %6405 = vmatpush1.msra.mxu0 0.0
  %6406 = vmatprep.subr.mxu0 0.0
  %6407 = vmatpush1.msra.mxu0 0.0
  %6408 = vmatprep.subr.mxu0 0.0
  %6409 = vmatpush1.msra.mxu0 0.0
  %6410 = vmatprep.subr.mxu0 0.0
  %6411 = vmatpush1.msra.mxu0 0.0
  %6412 = vmatprep.subr.mxu0 0.0
  %6413 = vmatpush1.msra.mxu0 0.0
  %6414 = vmatprep.subr.mxu0 0.0
  %6415 = vmatpush1.msra.mxu0 0.0
  %6416 = vmatprep.subr.mxu0 0.0
  %6417 = vmatpush1.msra.mxu0 0.0
  %6418 = vmatprep.subr.mxu0 0.0
  %6419 = vmatpush1.msra.mxu0 0.0
  %6420 = vmatprep.mubr.f32.mxu0 0.0
  %6421 = vmatmul.mubr.f32.gmra.mrb[0].mxu0 %v6345
  %v6422 = vpop.f32.mrb[0].mxu0
  %v6423 = vadd.f32 0.0, %v6422
  %v6424 = vpop.f32.mrb[0].mxu0
  %6425 = vmatprep.mubr.f32.mxu0 0.0
  %6426 = vmatmul.mubr.f32.gmra.mrb[0].mxu0 %v6348
  %v6427 = vpop.f32.mrb[0].mxu0
  %v6428 = vadd.f32 0.0, %v6427
  %v6429 = vpop.f32.mrb[0].mxu0
  %6430 = vmatprep.mubr.f32.mxu0 0.0
  %6431 = vmatmul.mubr.f32.gmra.mrb[0].mxu0 %v6351
  %v6432 = vpop.f32.mrb[0].mxu0
  %v6433 = vadd.f32 0.0, %v6432
  %v6434 = vpop.f32.mrb[0].mxu0
  %6435 = vmatprep.mubr.f32.mxu0 0.0
  %6436 = vmatmul.mubr.f32.gmra.mrb[0].mxu0 %v6354
  %v6437 = vpop.f32.mrb[0].mxu0
  %v6438 = vadd.f32 0.0, %v6437
  %v6439 = vpop.f32.mrb[0].mxu0
  %6440 = vdwg.mxu0
  %s6441 = scalar_lea.vmem %s5, 8
  %v6442 = vld [vmem:[%s6441] sm:$0xff]
  %v6444 = vsel %vm1104, %v6423, 0
  %v6447 = vsel %vm1104, %v6428, 0
  %v6450 = vsel %vm1104, %v6433, 0
  %v6453 = vsel %vm1104, %v6438, 0
  %6455 = vmatprep.subr.mxu0 0.0
  %6456 = vmatpush1.msra.mxu0 %v6442
  %6457 = vmatprep.subr.mxu0 0.0
  %6458 = vmatpush1.msra.mxu0 0.0
  %6459 = vmatprep.subr.mxu0 0.0
  %6460 = vmatpush1.msra.mxu0 0.0
  %6461 = vmatprep.subr.mxu0 0.0
  %6462 = vmatpush1.msra.mxu0 0.0
  %6463 = vmatprep.subr.mxu0 0.0
  %6464 = vmatpush1.msra.mxu0 0.0
  %6465 = vmatprep.subr.mxu0 0.0
  %6466 = vmatpush1.msra.mxu0 0.0
  %6467 = vmatprep.subr.mxu0 0.0
  %6468 = vmatpush1.msra.mxu0 0.0
  %6469 = vmatprep.subr.mxu0 0.0
  %6470 = vmatpush1.msra.mxu0 0.0
  %6471 = vmatprep.subr.mxu0 0.0
  %6472 = vmatpush1.msra.mxu0 0.0
  %6473 = vmatprep.subr.mxu0 0.0
  %6474 = vmatpush1.msra.mxu0 0.0
  %6475 = vmatprep.subr.mxu0 0.0
  %6476 = vmatpush1.msra.mxu0 0.0
  %6477 = vmatprep.subr.mxu0 0.0
  %6478 = vmatpush1.msra.mxu0 0.0
  %6479 = vmatprep.subr.mxu0 0.0
  %6480 = vmatpush1.msra.mxu0 0.0
  %6481 = vmatprep.subr.mxu0 0.0
  %6482 = vmatpush1.msra.mxu0 0.0
  %6483 = vmatprep.subr.mxu0 0.0
  %6484 = vmatpush1.msra.mxu0 0.0
  %6485 = vmatprep.subr.mxu0 0.0
  %6486 = vmatpush1.msra.mxu0 0.0
  %6487 = vmatprep.subr.mxu0 0.0
  %6488 = vmatpush1.msra.mxu0 0.0
  %6489 = vmatprep.subr.mxu0 0.0
  %6490 = vmatpush1.msra.mxu0 0.0
  %6491 = vmatprep.subr.mxu0 0.0
  %6492 = vmatpush1.msra.mxu0 0.0
  %6493 = vmatprep.subr.mxu0 0.0
  %6494 = vmatpush1.msra.mxu0 0.0
  %6495 = vmatprep.subr.mxu0 0.0
  %6496 = vmatpush1.msra.mxu0 0.0
  %6497 = vmatprep.subr.mxu0 0.0
  %6498 = vmatpush1.msra.mxu0 0.0
  %6499 = vmatprep.subr.mxu0 0.0
  %6500 = vmatpush1.msra.mxu0 0.0
  %6501 = vmatprep.subr.mxu0 0.0
  %6502 = vmatpush1.msra.mxu0 0.0
  %6503 = vmatprep.subr.mxu0 0.0
  %6504 = vmatpush1.msra.mxu0 0.0
  %6505 = vmatprep.subr.mxu0 0.0
  %6506 = vmatpush1.msra.mxu0 0.0
  %6507 = vmatprep.subr.mxu0 0.0
  %6508 = vmatpush1.msra.mxu0 0.0
  %6509 = vmatprep.subr.mxu0 0.0
  %6510 = vmatpush1.msra.mxu0 0.0
  %6511 = vmatprep.subr.mxu0 0.0
  %6512 = vmatpush1.msra.mxu0 0.0
  %6513 = vmatprep.subr.mxu0 0.0
  %6514 = vmatpush1.msra.mxu0 0.0
  %6515 = vmatprep.subr.mxu0 0.0
  %6516 = vmatpush1.msra.mxu0 0.0
  %6517 = vmatprep.subr.mxu0 0.0
  %6518 = vmatpush1.msra.mxu0 0.0
  %6519 = vmatprep.mubr.f32.mxu0 0.0
  %6520 = vmatmul.mubr.f32.gmra.mrb[0].mxu0 %v6444
  %v6521 = vpop.f32.mrb[0].mxu0
  %v6522 = vadd.f32 0.0, %v6521
  %v6523 = vpop.f32.mrb[0].mxu0
  %6524 = vmatprep.mubr.f32.mxu0 0.0
  %6525 = vmatmul.mubr.f32.gmra.mrb[0].mxu0 %v6447
  %v6526 = vpop.f32.mrb[0].mxu0
  %v6527 = vadd.f32 0.0, %v6526
  %v6528 = vpop.f32.mrb[0].mxu0
  %6529 = vmatprep.mubr.f32.mxu0 0.0
  %6530 = vmatmul.mubr.f32.gmra.mrb[0].mxu0 %v6450
  %v6531 = vpop.f32.mrb[0].mxu0
  %v6532 = vadd.f32 0.0, %v6531
  %v6533 = vpop.f32.mrb[0].mxu0
  %6534 = vmatprep.mubr.f32.mxu0 0.0
  %6535 = vmatmul.mubr.f32.gmra.mrb[0].mxu0 %v6453
  %v6536 = vpop.f32.mrb[0].mxu0
  %v6537 = vadd.f32 0.0, %v6536
  %v6538 = vpop.f32.mrb[0].mxu0
  %6539 = vdwg.mxu0
  %v6541 = vsel %vm1104, %v6316, 0
  %v6544 = vsel %vm1104, %v6321, 0
  %v6547 = vsel %vm1104, %v6326, 0
  %v6550 = vsel %vm1104, %v6331, 0
  %6552 = vmatprep.subr.mxu0 0.0
  %6553 = vmatpush1.msra.mxu0 %v6334
  %6554 = vmatprep.subr.mxu0 0.0
  %6555 = vmatpush1.msra.mxu0 0.0
  %6556 = vmatprep.subr.mxu0 0.0
  %6557 = vmatpush1.msra.mxu0 0.0
  %6558 = vmatprep.subr.mxu0 0.0
  %6559 = vmatpush1.msra.mxu0 0.0
  %6560 = vmatprep.subr.mxu0 0.0
  %6561 = vmatpush1.msra.mxu0 0.0
  %6562 = vmatprep.subr.mxu0 0.0
  %6563 = vmatpush1.msra.mxu0 0.0
  %6564 = vmatprep.subr.mxu0 0.0
  %6565 = vmatpush1.msra.mxu0 0.0
  %6566 = vmatprep.subr.mxu0 0.0
  %6567 = vmatpush1.msra.mxu0 0.0
  %6568 = vmatprep.subr.mxu0 0.0
  %6569 = vmatpush1.msra.mxu0 0.0
  %6570 = vmatprep.subr.mxu0 0.0
  %6571 = vmatpush1.msra.mxu0 0.0
  %6572 = vmatprep.subr.mxu0 0.0
  %6573 = vmatpush1.msra.mxu0 0.0
  %6574 = vmatprep.subr.mxu0 0.0
  %6575 = vmatpush1.msra.mxu0 0.0
  %6576 = vmatprep.subr.mxu0 0.0
  %6577 = vmatpush1.msra.mxu0 0.0
  %6578 = vmatprep.subr.mxu0 0.0
  %6579 = vmatpush1.msra.mxu0 0.0
  %6580 = vmatprep.subr.mxu0 0.0
  %6581 = vmatpush1.msra.mxu0 0.0
  %6582 = vmatprep.subr.mxu0 0.0
  %6583 = vmatpush1.msra.mxu0 0.0
  %6584 = vmatprep.subr.mxu0 0.0
  %6585 = vmatpush1.msra.mxu0 0.0
  %6586 = vmatprep.subr.mxu0 0.0
  %6587 = vmatpush1.msra.mxu0 0.0
  %6588 = vmatprep.subr.mxu0 0.0
  %6589 = vmatpush1.msra.mxu0 0.0
  %6590 = vmatprep.subr.mxu0 0.0
  %6591 = vmatpush1.msra.mxu0 0.0
  %6592 = vmatprep.subr.mxu0 0.0
  %6593 = vmatpush1.msra.mxu0 0.0
  %6594 = vmatprep.subr.mxu0 0.0
  %6595 = vmatpush1.msra.mxu0 0.0
  %6596 = vmatprep.subr.mxu0 0.0
  %6597 = vmatpush1.msra.mxu0 0.0
  %6598 = vmatprep.subr.mxu0 0.0
  %6599 = vmatpush1.msra.mxu0 0.0
  %6600 = vmatprep.subr.mxu0 0.0
  %6601 = vmatpush1.msra.mxu0 0.0
  %6602 = vmatprep.subr.mxu0 0.0
  %6603 = vmatpush1.msra.mxu0 0.0
  %6604 = vmatprep.subr.mxu0 0.0
  %6605 = vmatpush1.msra.mxu0 0.0
  %6606 = vmatprep.subr.mxu0 0.0
  %6607 = vmatpush1.msra.mxu0 0.0
  %6608 = vmatprep.subr.mxu0 0.0
  %6609 = vmatpush1.msra.mxu0 0.0
  %6610 = vmatprep.subr.mxu0 0.0
  %6611 = vmatpush1.msra.mxu0 0.0
  %6612 = vmatprep.subr.mxu0 0.0
  %6613 = vmatpush1.msra.mxu0 0.0
  %6614 = vmatprep.subr.mxu0 0.0
  %6615 = vmatpush1.msra.mxu0 0.0
  %6616 = vmatprep.mubr.f32.mxu0 0.0
  %6617 = vmatmul.mubr.f32.gmra.mrb[0].mxu0 %v6541
  %v6618 = vpop.f32.mrb[0].mxu0
  %v6619 = vadd.f32 %v6522, %v6618
  %v6620 = vpop.f32.mrb[0].mxu0
  %6621 = vmatprep.mubr.f32.mxu0 0.0
  %6622 = vmatmul.mubr.f32.gmra.mrb[0].mxu0 %v6544
  %v6623 = vpop.f32.mrb[0].mxu0
  %v6624 = vadd.f32 %v6527, %v6623
  %v6625 = vpop.f32.mrb[0].mxu0
  %6626 = vmatprep.mubr.f32.mxu0 0.0
  %6627 = vmatmul.mubr.f32.gmra.mrb[0].mxu0 %v6547
  %v6628 = vpop.f32.mrb[0].mxu0
  %v6629 = vadd.f32 %v6532, %v6628
  %v6630 = vpop.f32.mrb[0].mxu0
  %6631 = vmatprep.mubr.f32.mxu0 0.0
  %6632 = vmatmul.mubr.f32.gmra.mrb[0].mxu0 %v6550
  %v6633 = vpop.f32.mrb[0].mxu0
  %v6634 = vadd.f32 %v6537, %v6633
  %v6635 = vpop.f32.mrb[0].mxu0
  %6636 = vdwg.mxu0
  %s6637 = scalar_lea.vmem %s4, 32
  %v6638 = vld [vmem:[%s6637] sm:$0xf]
  %v6639 = vld [vmem:[%s6637 + $0x4] sm:$0xf]
  %v6640 = vld [vmem:[%s6637 + $0x8] sm:$0xf]
  %v6641 = vld [vmem:[%s6637 + $0xc] sm:$0xf]
  %v6642 = vunpack.c.l.bf16 %v6638
  %v6643 = vunpack.c.l.bf16 %v6639
  %v6644 = vunpack.c.l.bf16 %v6640
  %v6645 = vunpack.c.l.bf16 %v6641
  %v6647 = vsel %vm6232, %v6642, 0
  %v6650 = vsel %vm6232, %v6643, 0
  %v6653 = vsel %vm6232, %v6644, 0
  %v6656 = vsel %vm6232, %v6645, 0
  %6658 = vmatprep.subr.mxu0 0.0
  %6659 = vmatpush1.msra.mxu0 %v6211
  %6660 = vmatprep.subr.mxu0 0.0
  %6661 = vmatpush1.msra.mxu0 %v6212
  %6662 = vmatprep.subr.mxu0 0.0
  %6663 = vmatpush1.msra.mxu0 %v6213
  %6664 = vmatprep.subr.mxu0 0.0
  %6665 = vmatpush1.msra.mxu0 %v6214
  %6666 = vmatprep.subr.mxu0 0.0
  %6667 = vmatpush1.msra.mxu0 %v6215
  %6668 = vmatprep.subr.mxu0 0.0
  %6669 = vmatpush1.msra.mxu0 %v6216
  %6670 = vmatprep.subr.mxu0 0.0
  %6671 = vmatpush1.msra.mxu0 %v6217
  %6672 = vmatprep.subr.mxu0 0.0
  %6673 = vmatpush1.msra.mxu0 %v6218
  %6674 = vmatprep.subr.mxu0 0.0
  %6675 = vmatpush1.msra.mxu0 %v6219
  %6676 = vmatprep.subr.mxu0 0.0
  %6677 = vmatpush1.msra.mxu0 %v6220
  %6678 = vmatprep.subr.mxu0 0.0
  %6679 = vmatpush1.msra.mxu0 %v6221
  %6680 = vmatprep.subr.mxu0 0.0
  %6681 = vmatpush1.msra.mxu0 %v6222
  %6682 = vmatprep.subr.mxu0 0.0
  %6683 = vmatpush1.msra.mxu0 %v6247
  %6684 = vmatprep.subr.mxu0 0.0
  %6685 = vmatpush1.msra.mxu0 0.0
  %6686 = vmatprep.subr.mxu0 0.0
  %6687 = vmatpush1.msra.mxu0 0.0
  %6688 = vmatprep.subr.mxu0 0.0
  %6689 = vmatpush1.msra.mxu0 0.0
  %6690 = vmatprep.subr.mxu0 0.0
  %6691 = vmatpush1.msra.mxu0 0.0
  %6692 = vmatprep.subr.mxu0 0.0
  %6693 = vmatpush1.msra.mxu0 0.0
  %6694 = vmatprep.subr.mxu0 0.0
  %6695 = vmatpush1.msra.mxu0 0.0
  %6696 = vmatprep.subr.mxu0 0.0
  %6697 = vmatpush1.msra.mxu0 0.0
  %6698 = vmatprep.subr.mxu0 0.0
  %6699 = vmatpush1.msra.mxu0 0.0
  %6700 = vmatprep.subr.mxu0 0.0
  %6701 = vmatpush1.msra.mxu0 0.0
  %6702 = vmatprep.subr.mxu0 0.0
  %6703 = vmatpush1.msra.mxu0 0.0
  %6704 = vmatprep.subr.mxu0 0.0
  %6705 = vmatpush1.msra.mxu0 0.0
  %6706 = vmatprep.subr.mxu0 0.0
  %6707 = vmatpush1.msra.mxu0 0.0
  %6708 = vmatprep.subr.mxu0 0.0
  %6709 = vmatpush1.msra.mxu0 0.0
  %6710 = vmatprep.subr.mxu0 0.0
  %6711 = vmatpush1.msra.mxu0 0.0
  %6712 = vmatprep.subr.mxu0 0.0
  %6713 = vmatpush1.msra.mxu0 0.0
  %6714 = vmatprep.subr.mxu0 0.0
  %6715 = vmatpush1.msra.mxu0 0.0
  %6716 = vmatprep.subr.mxu0 0.0
  %6717 = vmatpush1.msra.mxu0 0.0
  %6718 = vmatprep.subr.mxu0 0.0
  %6719 = vmatpush1.msra.mxu0 0.0
  %6720 = vmatprep.subr.mxu0 0.0
  %6721 = vmatpush1.msra.mxu0 0.0
  %6722 = vmatprep.mubr.f32.mxu0 0.0
  %6723 = vmatmul.mubr.f32.gmra.mrb[0].mxu0 %v6647
  %v6724 = vpop.f32.mrb[0].mxu0
  %v6725 = vadd.f32 0.0, %v6724
  %v6726 = vpop.f32.mrb[0].mxu0
  %6727 = vmatprep.mubr.f32.mxu0 0.0
  %6728 = vmatmul.mubr.f32.gmra.mrb[0].mxu0 %v6650
  %v6729 = vpop.f32.mrb[0].mxu0
  %v6730 = vadd.f32 0.0, %v6729
  %v6731 = vpop.f32.mrb[0].mxu0
  %6732 = vmatprep.mubr.f32.mxu0 0.0
  %6733 = vmatmul.mubr.f32.gmra.mrb[0].mxu0 %v6653
  %v6734 = vpop.f32.mrb[0].mxu0
  %v6735 = vadd.f32 0.0, %v6734
  %v6736 = vpop.f32.mrb[0].mxu0
  %6737 = vmatprep.mubr.f32.mxu0 0.0
  %6738 = vmatmul.mubr.f32.gmra.mrb[0].mxu0 %v6656
  %v6739 = vpop.f32.mrb[0].mxu0
  %v6740 = vadd.f32 0.0, %v6739
  %v6741 = vpop.f32.mrb[0].mxu0
  %6742 = vdwg.mxu0
  %s6743 = scalar_lea.vmem %s5, 16
  %v6744 = vld [vmem:[%s6743] sm:$0xff]
  %v6746 = vsel %vm1104, %v6725, 0
  %v6749 = vsel %vm1104, %v6730, 0
  %v6752 = vsel %vm1104, %v6735, 0
  %v6755 = vsel %vm1104, %v6740, 0
  %6757 = vmatprep.subr.mxu0 0.0
  %6758 = vmatpush1.msra.mxu0 %v6744
  %6759 = vmatprep.subr.mxu0 0.0
  %6760 = vmatpush1.msra.mxu0 0.0
  %6761 = vmatprep.subr.mxu0 0.0
  %6762 = vmatpush1.msra.mxu0 0.0
  %6763 = vmatprep.subr.mxu0 0.0
  %6764 = vmatpush1.msra.mxu0 0.0
  %6765 = vmatprep.subr.mxu0 0.0
  %6766 = vmatpush1.msra.mxu0 0.0
  %6767 = vmatprep.subr.mxu0 0.0
  %6768 = vmatpush1.msra.mxu0 0.0
  %6769 = vmatprep.subr.mxu0 0.0
  %6770 = vmatpush1.msra.mxu0 0.0
  %6771 = vmatprep.subr.mxu0 0.0
  %6772 = vmatpush1.msra.mxu0 0.0
  %6773 = vmatprep.subr.mxu0 0.0
  %6774 = vmatpush1.msra.mxu0 0.0
  %6775 = vmatprep.subr.mxu0 0.0
  %6776 = vmatpush1.msra.mxu0 0.0
  %6777 = vmatprep.subr.mxu0 0.0
  %6778 = vmatpush1.msra.mxu0 0.0
  %6779 = vmatprep.subr.mxu0 0.0
  %6780 = vmatpush1.msra.mxu0 0.0
  %6781 = vmatprep.subr.mxu0 0.0
  %6782 = vmatpush1.msra.mxu0 0.0
  %6783 = vmatprep.subr.mxu0 0.0
  %6784 = vmatpush1.msra.mxu0 0.0
  %6785 = vmatprep.subr.mxu0 0.0
  %6786 = vmatpush1.msra.mxu0 0.0
  %6787 = vmatprep.subr.mxu0 0.0
  %6788 = vmatpush1.msra.mxu0 0.0
  %6789 = vmatprep.subr.mxu0 0.0
  %6790 = vmatpush1.msra.mxu0 0.0
  %6791 = vmatprep.subr.mxu0 0.0
  %6792 = vmatpush1.msra.mxu0 0.0
  %6793 = vmatprep.subr.mxu0 0.0
  %6794 = vmatpush1.msra.mxu0 0.0
  %6795 = vmatprep.subr.mxu0 0.0
  %6796 = vmatpush1.msra.mxu0 0.0
  %6797 = vmatprep.subr.mxu0 0.0
  %6798 = vmatpush1.msra.mxu0 0.0
  %6799 = vmatprep.subr.mxu0 0.0
  %6800 = vmatpush1.msra.mxu0 0.0
  %6801 = vmatprep.subr.mxu0 0.0
  %6802 = vmatpush1.msra.mxu0 0.0
  %6803 = vmatprep.subr.mxu0 0.0
  %6804 = vmatpush1.msra.mxu0 0.0
  %6805 = vmatprep.subr.mxu0 0.0
  %6806 = vmatpush1.msra.mxu0 0.0
  %6807 = vmatprep.subr.mxu0 0.0
  %6808 = vmatpush1.msra.mxu0 0.0
  %6809 = vmatprep.subr.mxu0 0.0
  %6810 = vmatpush1.msra.mxu0 0.0
  %6811 = vmatprep.subr.mxu0 0.0
  %6812 = vmatpush1.msra.mxu0 0.0
  %6813 = vmatprep.subr.mxu0 0.0
  %6814 = vmatpush1.msra.mxu0 0.0
  %6815 = vmatprep.subr.mxu0 0.0
  %6816 = vmatpush1.msra.mxu0 0.0
  %6817 = vmatprep.subr.mxu0 0.0
  %6818 = vmatpush1.msra.mxu0 0.0
  %6819 = vmatprep.subr.mxu0 0.0
  %6820 = vmatpush1.msra.mxu0 0.0
  %6821 = vmatprep.mubr.f32.mxu0 0.0
  %6822 = vmatmul.mubr.f32.gmra.mrb[0].mxu0 %v6746
  %v6823 = vpop.f32.mrb[0].mxu0
  %v6824 = vadd.f32 0.0, %v6823
  %v6825 = vpop.f32.mrb[0].mxu0
  %6826 = vmatprep.mubr.f32.mxu0 0.0
  %6827 = vmatmul.mubr.f32.gmra.mrb[0].mxu0 %v6749
  %v6828 = vpop.f32.mrb[0].mxu0
  %v6829 = vadd.f32 0.0, %v6828
  %v6830 = vpop.f32.mrb[0].mxu0
  %6831 = vmatprep.mubr.f32.mxu0 0.0
  %6832 = vmatmul.mubr.f32.gmra.mrb[0].mxu0 %v6752
  %v6833 = vpop.f32.mrb[0].mxu0
  %v6834 = vadd.f32 0.0, %v6833
  %v6835 = vpop.f32.mrb[0].mxu0
  %6836 = vmatprep.mubr.f32.mxu0 0.0
  %6837 = vmatmul.mubr.f32.gmra.mrb[0].mxu0 %v6755
  %v6838 = vpop.f32.mrb[0].mxu0
  %v6839 = vadd.f32 0.0, %v6838
  %v6840 = vpop.f32.mrb[0].mxu0
  %6841 = vdwg.mxu0
  %v6842 = vadd.f32 %v6619, %v6824
  %v6843 = vadd.f32 %v6624, %v6829
  %v6844 = vadd.f32 %v6629, %v6834
  %v6845 = vadd.f32 %v6634, %v6839
  %s6846 = scalar_lea.vmem %s4, 48
  %v6847 = vld [vmem:[%s6846] sm:$0xf]
  %v6848 = vld [vmem:[%s6846 + $0x4] sm:$0xf]
  %v6849 = vld [vmem:[%s6846 + $0x8] sm:$0xf]
  %v6850 = vld [vmem:[%s6846 + $0xc] sm:$0xf]
  %v6851 = vunpack.c.l.bf16 %v6847
  %v6852 = vunpack.c.l.bf16 %v6848
  %v6853 = vunpack.c.l.bf16 %v6849
  %v6854 = vunpack.c.l.bf16 %v6850
  %v6856 = vsel %vm6232, %v6851, 0
  %v6859 = vsel %vm6232, %v6852, 0
  %v6862 = vsel %vm6232, %v6853, 0
  %v6865 = vsel %vm6232, %v6854, 0
  %6867 = vmatprep.subr.mxu0 0.0
  %6868 = vmatpush1.msra.mxu0 %v6211
  %6869 = vmatprep.subr.mxu0 0.0
  %6870 = vmatpush1.msra.mxu0 %v6212
  %6871 = vmatprep.subr.mxu0 0.0
  %6872 = vmatpush1.msra.mxu0 %v6213
  %6873 = vmatprep.subr.mxu0 0.0
  %6874 = vmatpush1.msra.mxu0 %v6214
  %6875 = vmatprep.subr.mxu0 0.0
  %6876 = vmatpush1.msra.mxu0 %v6215
  %6877 = vmatprep.subr.mxu0 0.0
  %6878 = vmatpush1.msra.mxu0 %v6216
  %6879 = vmatprep.subr.mxu0 0.0
  %6880 = vmatpush1.msra.mxu0 %v6217
  %6881 = vmatprep.subr.mxu0 0.0
  %6882 = vmatpush1.msra.mxu0 %v6218
  %6883 = vmatprep.subr.mxu0 0.0
  %6884 = vmatpush1.msra.mxu0 %v6219
  %6885 = vmatprep.subr.mxu0 0.0
  %6886 = vmatpush1.msra.mxu0 %v6220
  %6887 = vmatprep.subr.mxu0 0.0
  %6888 = vmatpush1.msra.mxu0 %v6221
  %6889 = vmatprep.subr.mxu0 0.0
  %6890 = vmatpush1.msra.mxu0 %v6222
  %6891 = vmatprep.subr.mxu0 0.0
  %6892 = vmatpush1.msra.mxu0 %v6247
  %6893 = vmatprep.subr.mxu0 0.0
  %6894 = vmatpush1.msra.mxu0 0.0
  %6895 = vmatprep.subr.mxu0 0.0
  %6896 = vmatpush1.msra.mxu0 0.0
  %6897 = vmatprep.subr.mxu0 0.0
  %6898 = vmatpush1.msra.mxu0 0.0
  %6899 = vmatprep.subr.mxu0 0.0
  %6900 = vmatpush1.msra.mxu0 0.0
  %6901 = vmatprep.subr.mxu0 0.0
  %6902 = vmatpush1.msra.mxu0 0.0
  %6903 = vmatprep.subr.mxu0 0.0
  %6904 = vmatpush1.msra.mxu0 0.0
  %6905 = vmatprep.subr.mxu0 0.0
  %6906 = vmatpush1.msra.mxu0 0.0
  %6907 = vmatprep.subr.mxu0 0.0
  %6908 = vmatpush1.msra.mxu0 0.0
  %6909 = vmatprep.subr.mxu0 0.0
  %6910 = vmatpush1.msra.mxu0 0.0
  %6911 = vmatprep.subr.mxu0 0.0
  %6912 = vmatpush1.msra.mxu0 0.0
  %6913 = vmatprep.subr.mxu0 0.0
  %6914 = vmatpush1.msra.mxu0 0.0
  %6915 = vmatprep.subr.mxu0 0.0
  %6916 = vmatpush1.msra.mxu0 0.0
  %6917 = vmatprep.subr.mxu0 0.0
  %6918 = vmatpush1.msra.mxu0 0.0
  %6919 = vmatprep.subr.mxu0 0.0
  %6920 = vmatpush1.msra.mxu0 0.0
  %6921 = vmatprep.subr.mxu0 0.0
  %6922 = vmatpush1.msra.mxu0 0.0
  %6923 = vmatprep.subr.mxu0 0.0
  %6924 = vmatpush1.msra.mxu0 0.0
  %6925 = vmatprep.subr.mxu0 0.0
  %6926 = vmatpush1.msra.mxu0 0.0
  %6927 = vmatprep.subr.mxu0 0.0
  %6928 = vmatpush1.msra.mxu0 0.0
  %6929 = vmatprep.subr.mxu0 0.0
  %6930 = vmatpush1.msra.mxu0 0.0
  %6931 = vmatprep.mubr.f32.mxu0 0.0
  %6932 = vmatmul.mubr.f32.gmra.mrb[0].mxu0 %v6856
  %v6933 = vpop.f32.mrb[0].mxu0
  %v6934 = vadd.f32 0.0, %v6933
  %v6935 = vpop.f32.mrb[0].mxu0
  %6936 = vmatprep.mubr.f32.mxu0 0.0
  %6937 = vmatmul.mubr.f32.gmra.mrb[0].mxu0 %v6859
  %v6938 = vpop.f32.mrb[0].mxu0
  %v6939 = vadd.f32 0.0, %v6938
  %v6940 = vpop.f32.mrb[0].mxu0
  %6941 = vmatprep.mubr.f32.mxu0 0.0
  %6942 = vmatmul.mubr.f32.gmra.mrb[0].mxu0 %v6862
  %v6943 = vpop.f32.mrb[0].mxu0
  %v6944 = vadd.f32 0.0, %v6943
  %v6945 = vpop.f32.mrb[0].mxu0
  %6946 = vmatprep.mubr.f32.mxu0 0.0
  %6947 = vmatmul.mubr.f32.gmra.mrb[0].mxu0 %v6865
  %v6948 = vpop.f32.mrb[0].mxu0
  %v6949 = vadd.f32 0.0, %v6948
  %v6950 = vpop.f32.mrb[0].mxu0
  %6951 = vdwg.mxu0
  %s6952 = scalar_lea.vmem %s5, 24
  %v6953 = vld [vmem:[%s6952] sm:$0xff]
  %v6955 = vsel %vm1104, %v6934, 0
  %v6958 = vsel %vm1104, %v6939, 0
  %v6961 = vsel %vm1104, %v6944, 0
  %v6964 = vsel %vm1104, %v6949, 0
  %6966 = vmatprep.subr.mxu0 0.0
  %6967 = vmatpush1.msra.mxu0 %v6953
  %6968 = vmatprep.subr.mxu0 0.0
  %6969 = vmatpush1.msra.mxu0 0.0
  %6970 = vmatprep.subr.mxu0 0.0
  %6971 = vmatpush1.msra.mxu0 0.0
  %6972 = vmatprep.subr.mxu0 0.0
  %6973 = vmatpush1.msra.mxu0 0.0
  %6974 = vmatprep.subr.mxu0 0.0
  %6975 = vmatpush1.msra.mxu0 0.0
  %6976 = vmatprep.subr.mxu0 0.0
  %6977 = vmatpush1.msra.mxu0 0.0
  %6978 = vmatprep.subr.mxu0 0.0
  %6979 = vmatpush1.msra.mxu0 0.0
  %6980 = vmatprep.subr.mxu0 0.0
  %6981 = vmatpush1.msra.mxu0 0.0
  %6982 = vmatprep.subr.mxu0 0.0
  %6983 = vmatpush1.msra.mxu0 0.0
  %6984 = vmatprep.subr.mxu0 0.0
  %6985 = vmatpush1.msra.mxu0 0.0
  %6986 = vmatprep.subr.mxu0 0.0
  %6987 = vmatpush1.msra.mxu0 0.0
  %6988 = vmatprep.subr.mxu0 0.0
  %6989 = vmatpush1.msra.mxu0 0.0
  %6990 = vmatprep.subr.mxu0 0.0
  %6991 = vmatpush1.msra.mxu0 0.0
  %6992 = vmatprep.subr.mxu0 0.0
  %6993 = vmatpush1.msra.mxu0 0.0
  %6994 = vmatprep.subr.mxu0 0.0
  %6995 = vmatpush1.msra.mxu0 0.0
  %6996 = vmatprep.subr.mxu0 0.0
  %6997 = vmatpush1.msra.mxu0 0.0
  %6998 = vmatprep.subr.mxu0 0.0
  %6999 = vmatpush1.msra.mxu0 0.0
  %7000 = vmatprep.subr.mxu0 0.0
  %7001 = vmatpush1.msra.mxu0 0.0
  %7002 = vmatprep.subr.mxu0 0.0
  %7003 = vmatpush1.msra.mxu0 0.0
  %7004 = vmatprep.subr.mxu0 0.0
  %7005 = vmatpush1.msra.mxu0 0.0
  %7006 = vmatprep.subr.mxu0 0.0
  %7007 = vmatpush1.msra.mxu0 0.0
  %7008 = vmatprep.subr.mxu0 0.0
  %7009 = vmatpush1.msra.mxu0 0.0
  %7010 = vmatprep.subr.mxu0 0.0
  %7011 = vmatpush1.msra.mxu0 0.0
  %7012 = vmatprep.subr.mxu0 0.0
  %7013 = vmatpush1.msra.mxu0 0.0
  %7014 = vmatprep.subr.mxu0 0.0
  %7015 = vmatpush1.msra.mxu0 0.0
  %7016 = vmatprep.subr.mxu0 0.0
  %7017 = vmatpush1.msra.mxu0 0.0
  %7018 = vmatprep.subr.mxu0 0.0
  %7019 = vmatpush1.msra.mxu0 0.0
  %7020 = vmatprep.subr.mxu0 0.0
  %7021 = vmatpush1.msra.mxu0 0.0
  %7022 = vmatprep.subr.mxu0 0.0
  %7023 = vmatpush1.msra.mxu0 0.0
  %7024 = vmatprep.subr.mxu0 0.0
  %7025 = vmatpush1.msra.mxu0 0.0
  %7026 = vmatprep.subr.mxu0 0.0
  %7027 = vmatpush1.msra.mxu0 0.0
  %7028 = vmatprep.subr.mxu0 0.0
  %7029 = vmatpush1.msra.mxu0 0.0
  %7030 = vmatprep.mubr.f32.mxu0 0.0
  %7031 = vmatmul.mubr.f32.gmra.mrb[0].mxu0 %v6955
  %v7032 = vpop.f32.mrb[0].mxu0
  %v7033 = vadd.f32 0.0, %v7032
  %v7034 = vpop.f32.mrb[0].mxu0
  %7035 = vmatprep.mubr.f32.mxu0 0.0
  %7036 = vmatmul.mubr.f32.gmra.mrb[0].mxu0 %v6958
  %v7037 = vpop.f32.mrb[0].mxu0
  %v7038 = vadd.f32 0.0, %v7037
  %v7039 = vpop.f32.mrb[0].mxu0
  %7040 = vmatprep.mubr.f32.mxu0 0.0
  %7041 = vmatmul.mubr.f32.gmra.mrb[0].mxu0 %v6961
  %v7042 = vpop.f32.mrb[0].mxu0
  %v7043 = vadd.f32 0.0, %v7042
  %v7044 = vpop.f32.mrb[0].mxu0
  %7045 = vmatprep.mubr.f32.mxu0 0.0
  %7046 = vmatmul.mubr.f32.gmra.mrb[0].mxu0 %v6964
  %v7047 = vpop.f32.mrb[0].mxu0
  %v7048 = vadd.f32 0.0, %v7047
  %v7049 = vpop.f32.mrb[0].mxu0
  %7050 = vdwg.mxu0
  %v7051 = vadd.f32 %v6842, %v7033
  %v7052 = vadd.f32 %v6843, %v7038
  %v7053 = vadd.f32 %v6844, %v7043
  %v7054 = vadd.f32 %v6845, %v7048
  %s7055 = scalar_lea.vmem %s4, 64
  %v7056 = vld [vmem:[%s7055] sm:$0xf]
  %v7057 = vld [vmem:[%s7055 + $0x4] sm:$0xf]
  %v7058 = vld [vmem:[%s7055 + $0x8] sm:$0xf]
  %v7059 = vld [vmem:[%s7055 + $0xc] sm:$0xf]
  %v7060 = vunpack.c.l.bf16 %v7056
  %v7061 = vunpack.c.l.bf16 %v7057
  %v7062 = vunpack.c.l.bf16 %v7058
  %v7063 = vunpack.c.l.bf16 %v7059
  %v7065 = vsel %vm6232, %v7060, 0
  %v7068 = vsel %vm6232, %v7061, 0
  %v7071 = vsel %vm6232, %v7062, 0
  %v7074 = vsel %vm6232, %v7063, 0
  %7076 = vmatprep.subr.mxu0 0.0
  %7077 = vmatpush1.msra.mxu0 %v6211
  %7078 = vmatprep.subr.mxu0 0.0
  %7079 = vmatpush1.msra.mxu0 %v6212
  %7080 = vmatprep.subr.mxu0 0.0
  %7081 = vmatpush1.msra.mxu0 %v6213
  %7082 = vmatprep.subr.mxu0 0.0
  %7083 = vmatpush1.msra.mxu0 %v6214
  %7084 = vmatprep.subr.mxu0 0.0
  %7085 = vmatpush1.msra.mxu0 %v6215
  %7086 = vmatprep.subr.mxu0 0.0
  %7087 = vmatpush1.msra.mxu0 %v6216
  %7088 = vmatprep.subr.mxu0 0.0
  %7089 = vmatpush1.msra.mxu0 %v6217
  %7090 = vmatprep.subr.mxu0 0.0
  %7091 = vmatpush1.msra.mxu0 %v6218
  %7092 = vmatprep.subr.mxu0 0.0
  %7093 = vmatpush1.msra.mxu0 %v6219
  %7094 = vmatprep.subr.mxu0 0.0
  %7095 = vmatpush1.msra.mxu0 %v6220
  %7096 = vmatprep.subr.mxu0 0.0
  %7097 = vmatpush1.msra.mxu0 %v6221
  %7098 = vmatprep.subr.mxu0 0.0
  %7099 = vmatpush1.msra.mxu0 %v6222
  %7100 = vmatprep.subr.mxu0 0.0
  %7101 = vmatpush1.msra.mxu0 %v6247
  %7102 = vmatprep.subr.mxu0 0.0
  %7103 = vmatpush1.msra.mxu0 0.0
  %7104 = vmatprep.subr.mxu0 0.0
  %7105 = vmatpush1.msra.mxu0 0.0
  %7106 = vmatprep.subr.mxu0 0.0
  %7107 = vmatpush1.msra.mxu0 0.0
  %7108 = vmatprep.subr.mxu0 0.0
  %7109 = vmatpush1.msra.mxu0 0.0
  %7110 = vmatprep.subr.mxu0 0.0
  %7111 = vmatpush1.msra.mxu0 0.0
  %7112 = vmatprep.subr.mxu0 0.0
  %7113 = vmatpush1.msra.mxu0 0.0
  %7114 = vmatprep.subr.mxu0 0.0
  %7115 = vmatpush1.msra.mxu0 0.0
  %7116 = vmatprep.subr.mxu0 0.0
  %7117 = vmatpush1.msra.mxu0 0.0
  %7118 = vmatprep.subr.mxu0 0.0
  %7119 = vmatpush1.msra.mxu0 0.0
  %7120 = vmatprep.subr.mxu0 0.0
  %7121 = vmatpush1.msra.mxu0 0.0
  %7122 = vmatprep.subr.mxu0 0.0
  %7123 = vmatpush1.msra.mxu0 0.0
  %7124 = vmatprep.subr.mxu0 0.0
  %7125 = vmatpush1.msra.mxu0 0.0
  %7126 = vmatprep.subr.mxu0 0.0
  %7127 = vmatpush1.msra.mxu0 0.0
  %7128 = vmatprep.subr.mxu0 0.0
  %7129 = vmatpush1.msra.mxu0 0.0
  %7130 = vmatprep.subr.mxu0 0.0
  %7131 = vmatpush1.msra.mxu0 0.0
  %7132 = vmatprep.subr.mxu0 0.0
  %7133 = vmatpush1.msra.mxu0 0.0
  %7134 = vmatprep.subr.mxu0 0.0
  %7135 = vmatpush1.msra.mxu0 0.0
  %7136 = vmatprep.subr.mxu0 0.0
  %7137 = vmatpush1.msra.mxu0 0.0
  %7138 = vmatprep.subr.mxu0 0.0
  %7139 = vmatpush1.msra.mxu0 0.0
  %7140 = vmatprep.mubr.f32.mxu0 0.0
  %7141 = vmatmul.mubr.f32.gmra.mrb[0].mxu0 %v7065
  %v7142 = vpop.f32.mrb[0].mxu0
  %v7143 = vadd.f32 0.0, %v7142
  %v7144 = vpop.f32.mrb[0].mxu0
  %7145 = vmatprep.mubr.f32.mxu0 0.0
  %7146 = vmatmul.mubr.f32.gmra.mrb[0].mxu0 %v7068
  %v7147 = vpop.f32.mrb[0].mxu0
  %v7148 = vadd.f32 0.0, %v7147
  %v7149 = vpop.f32.mrb[0].mxu0
  %7150 = vmatprep.mubr.f32.mxu0 0.0
  %7151 = vmatmul.mubr.f32.gmra.mrb[0].mxu0 %v7071
  %v7152 = vpop.f32.mrb[0].mxu0
  %v7153 = vadd.f32 0.0, %v7152
  %v7154 = vpop.f32.mrb[0].mxu0
  %7155 = vmatprep.mubr.f32.mxu0 0.0
  %7156 = vmatmul.mubr.f32.gmra.mrb[0].mxu0 %v7074
  %v7157 = vpop.f32.mrb[0].mxu0
  %v7158 = vadd.f32 0.0, %v7157
  %v7159 = vpop.f32.mrb[0].mxu0
  %7160 = vdwg.mxu0
  %s7161 = scalar_lea.vmem %s5, 32
  %v7162 = vld [vmem:[%s7161] sm:$0xff]
  %v7164 = vsel %vm1104, %v7143, 0
  %v7167 = vsel %vm1104, %v7148, 0
  %v7170 = vsel %vm1104, %v7153, 0
  %v7173 = vsel %vm1104, %v7158, 0
  %7175 = vmatprep.subr.mxu0 0.0
  %7176 = vmatpush1.msra.mxu0 %v7162
  %7177 = vmatprep.subr.mxu0 0.0
  %7178 = vmatpush1.msra.mxu0 0.0
  %7179 = vmatprep.subr.mxu0 0.0
  %7180 = vmatpush1.msra.mxu0 0.0
  %7181 = vmatprep.subr.mxu0 0.0
  %7182 = vmatpush1.msra.mxu0 0.0
  %7183 = vmatprep.subr.mxu0 0.0
  %7184 = vmatpush1.msra.mxu0 0.0
  %7185 = vmatprep.subr.mxu0 0.0
  %7186 = vmatpush1.msra.mxu0 0.0
  %7187 = vmatprep.subr.mxu0 0.0
  %7188 = vmatpush1.msra.mxu0 0.0
  %7189 = vmatprep.subr.mxu0 0.0
  %7190 = vmatpush1.msra.mxu0 0.0
  %7191 = vmatprep.subr.mxu0 0.0
  %7192 = vmatpush1.msra.mxu0 0.0
  %7193 = vmatprep.subr.mxu0 0.0
  %7194 = vmatpush1.msra.mxu0 0.0
  %7195 = vmatprep.subr.mxu0 0.0
  %7196 = vmatpush1.msra.mxu0 0.0
  %7197 = vmatprep.subr.mxu0 0.0
  %7198 = vmatpush1.msra.mxu0 0.0
  %7199 = vmatprep.subr.mxu0 0.0
  %7200 = vmatpush1.msra.mxu0 0.0
  %7201 = vmatprep.subr.mxu0 0.0
  %7202 = vmatpush1.msra.mxu0 0.0
  %7203 = vmatprep.subr.mxu0 0.0
  %7204 = vmatpush1.msra.mxu0 0.0
  %7205 = vmatprep.subr.mxu0 0.0
  %7206 = vmatpush1.msra.mxu0 0.0
  %7207 = vmatprep.subr.mxu0 0.0
  %7208 = vmatpush1.msra.mxu0 0.0
  %7209 = vmatprep.subr.mxu0 0.0
  %7210 = vmatpush1.msra.mxu0 0.0
  %7211 = vmatprep.subr.mxu0 0.0
  %7212 = vmatpush1.msra.mxu0 0.0
  %7213 = vmatprep.subr.mxu0 0.0
  %7214 = vmatpush1.msra.mxu0 0.0
  %7215 = vmatprep.subr.mxu0 0.0
  %7216 = vmatpush1.msra.mxu0 0.0
  %7217 = vmatprep.subr.mxu0 0.0
  %7218 = vmatpush1.msra.mxu0 0.0
  %7219 = vmatprep.subr.mxu0 0.0
  %7220 = vmatpush1.msra.mxu0 0.0
  %7221 = vmatprep.subr.mxu0 0.0
  %7222 = vmatpush1.msra.mxu0 0.0
  %7223 = vmatprep.subr.mxu0 0.0
  %7224 = vmatpush1.msra.mxu0 0.0
  %7225 = vmatprep.subr.mxu0 0.0
  %7226 = vmatpush1.msra.mxu0 0.0
  %7227 = vmatprep.subr.mxu0 0.0
  %7228 = vmatpush1.msra.mxu0 0.0
  %7229 = vmatprep.subr.mxu0 0.0
  %7230 = vmatpush1.msra.mxu0 0.0
  %7231 = vmatprep.subr.mxu0 0.0
  %7232 = vmatpush1.msra.mxu0 0.0
  %7233 = vmatprep.subr.mxu0 0.0
  %7234 = vmatpush1.msra.mxu0 0.0
  %7235 = vmatprep.subr.mxu0 0.0
  %7236 = vmatpush1.msra.mxu0 0.0
  %7237 = vmatprep.subr.mxu0 0.0
  %7238 = vmatpush1.msra.mxu0 0.0
  %7239 = vmatprep.mubr.f32.mxu0 0.0
  %7240 = vmatmul.mubr.f32.gmra.mrb[0].mxu0 %v7164
  %v7241 = vpop.f32.mrb[0].mxu0
  %v7242 = vadd.f32 0.0, %v7241
  %v7243 = vpop.f32.mrb[0].mxu0
  %7244 = vmatprep.mubr.f32.mxu0 0.0
  %7245 = vmatmul.mubr.f32.gmra.mrb[0].mxu0 %v7167
  %v7246 = vpop.f32.mrb[0].mxu0
  %v7247 = vadd.f32 0.0, %v7246
  %v7248 = vpop.f32.mrb[0].mxu0
  %7249 = vmatprep.mubr.f32.mxu0 0.0
  %7250 = vmatmul.mubr.f32.gmra.mrb[0].mxu0 %v7170
  %v7251 = vpop.f32.mrb[0].mxu0
  %v7252 = vadd.f32 0.0, %v7251
  %v7253 = vpop.f32.mrb[0].mxu0
  %7254 = vmatprep.mubr.f32.mxu0 0.0
  %7255 = vmatmul.mubr.f32.gmra.mrb[0].mxu0 %v7173
  %v7256 = vpop.f32.mrb[0].mxu0
  %v7257 = vadd.f32 0.0, %v7256
  %v7258 = vpop.f32.mrb[0].mxu0
  %7259 = vdwg.mxu0
  %v7260 = vadd.f32 %v7051, %v7242
  %v7261 = vadd.f32 %v7052, %v7247
  %v7262 = vadd.f32 %v7053, %v7252
  %v7263 = vadd.f32 %v7054, %v7257
  %s7264 = scalar_lea.vmem %s4, 80
  %v7265 = vld [vmem:[%s7264] sm:$0xf]
  %v7266 = vld [vmem:[%s7264 + $0x4] sm:$0xf]
  %v7267 = vld [vmem:[%s7264 + $0x8] sm:$0xf]
  %v7268 = vld [vmem:[%s7264 + $0xc] sm:$0xf]
  %v7269 = vunpack.c.l.bf16 %v7265
  %v7270 = vunpack.c.l.bf16 %v7266
  %v7271 = vunpack.c.l.bf16 %v7267
  %v7272 = vunpack.c.l.bf16 %v7268
  %v7274 = vsel %vm6232, %v7269, 0
  %v7277 = vsel %vm6232, %v7270, 0
  %v7280 = vsel %vm6232, %v7271, 0
  %v7283 = vsel %vm6232, %v7272, 0
  %7285 = vmatprep.subr.mxu0 0.0
  %7286 = vmatpush1.msra.mxu0 %v6211
  %7287 = vmatprep.subr.mxu0 0.0
  %7288 = vmatpush1.msra.mxu0 %v6212
  %7289 = vmatprep.subr.mxu0 0.0
  %7290 = vmatpush1.msra.mxu0 %v6213
  %7291 = vmatprep.subr.mxu0 0.0
  %7292 = vmatpush1.msra.mxu0 %v6214
  %7293 = vmatprep.subr.mxu0 0.0
  %7294 = vmatpush1.msra.mxu0 %v6215
  %7295 = vmatprep.subr.mxu0 0.0
  %7296 = vmatpush1.msra.mxu0 %v6216
  %7297 = vmatprep.subr.mxu0 0.0
  %7298 = vmatpush1.msra.mxu0 %v6217
  %7299 = vmatprep.subr.mxu0 0.0
  %7300 = vmatpush1.msra.mxu0 %v6218
  %7301 = vmatprep.subr.mxu0 0.0
  %7302 = vmatpush1.msra.mxu0 %v6219
  %7303 = vmatprep.subr.mxu0 0.0
  %7304 = vmatpush1.msra.mxu0 %v6220
  %7305 = vmatprep.subr.mxu0 0.0
  %7306 = vmatpush1.msra.mxu0 %v6221
  %7307 = vmatprep.subr.mxu0 0.0
  %7308 = vmatpush1.msra.mxu0 %v6222
  %7309 = vmatprep.subr.mxu0 0.0
  %7310 = vmatpush1.msra.mxu0 %v6247
  %7311 = vmatprep.subr.mxu0 0.0
  %7312 = vmatpush1.msra.mxu0 0.0
  %7313 = vmatprep.subr.mxu0 0.0
  %7314 = vmatpush1.msra.mxu0 0.0
  %7315 = vmatprep.subr.mxu0 0.0
  %7316 = vmatpush1.msra.mxu0 0.0
  %7317 = vmatprep.subr.mxu0 0.0
  %7318 = vmatpush1.msra.mxu0 0.0
  %7319 = vmatprep.subr.mxu0 0.0
  %7320 = vmatpush1.msra.mxu0 0.0
  %7321 = vmatprep.subr.mxu0 0.0
  %7322 = vmatpush1.msra.mxu0 0.0
  %7323 = vmatprep.subr.mxu0 0.0
  %7324 = vmatpush1.msra.mxu0 0.0
  %7325 = vmatprep.subr.mxu0 0.0
  %7326 = vmatpush1.msra.mxu0 0.0
  %7327 = vmatprep.subr.mxu0 0.0
  %7328 = vmatpush1.msra.mxu0 0.0
  %7329 = vmatprep.subr.mxu0 0.0
  %7330 = vmatpush1.msra.mxu0 0.0
  %7331 = vmatprep.subr.mxu0 0.0
  %7332 = vmatpush1.msra.mxu0 0.0
  %7333 = vmatprep.subr.mxu0 0.0
  %7334 = vmatpush1.msra.mxu0 0.0
  %7335 = vmatprep.subr.mxu0 0.0
  %7336 = vmatpush1.msra.mxu0 0.0
  %7337 = vmatprep.subr.mxu0 0.0
  %7338 = vmatpush1.msra.mxu0 0.0
  %7339 = vmatprep.subr.mxu0 0.0
  %7340 = vmatpush1.msra.mxu0 0.0
  %7341 = vmatprep.subr.mxu0 0.0
  %7342 = vmatpush1.msra.mxu0 0.0
  %7343 = vmatprep.subr.mxu0 0.0
  %7344 = vmatpush1.msra.mxu0 0.0
  %7345 = vmatprep.subr.mxu0 0.0
  %7346 = vmatpush1.msra.mxu0 0.0
  %7347 = vmatprep.subr.mxu0 0.0
  %7348 = vmatpush1.msra.mxu0 0.0
  %7349 = vmatprep.mubr.f32.mxu0 0.0
  %7350 = vmatmul.mubr.f32.gmra.mrb[0].mxu0 %v7274
  %v7351 = vpop.f32.mrb[0].mxu0
  %v7352 = vadd.f32 0.0, %v7351
  %v7353 = vpop.f32.mrb[0].mxu0
  %7354 = vmatprep.mubr.f32.mxu0 0.0
  %7355 = vmatmul.mubr.f32.gmra.mrb[0].mxu0 %v7277
  %v7356 = vpop.f32.mrb[0].mxu0
  %v7357 = vadd.f32 0.0, %v7356
  %v7358 = vpop.f32.mrb[0].mxu0
  %7359 = vmatprep.mubr.f32.mxu0 0.0
  %7360 = vmatmul.mubr.f32.gmra.mrb[0].mxu0 %v7280
  %v7361 = vpop.f32.mrb[0].mxu0
  %v7362 = vadd.f32 0.0, %v7361
  %v7363 = vpop.f32.mrb[0].mxu0
  %7364 = vmatprep.mubr.f32.mxu0 0.0
  %7365 = vmatmul.mubr.f32.gmra.mrb[0].mxu0 %v7283
  %v7366 = vpop.f32.mrb[0].mxu0
  %v7367 = vadd.f32 0.0, %v7366
  %v7368 = vpop.f32.mrb[0].mxu0
  %7369 = vdwg.mxu0
  %s7370 = scalar_lea.vmem %s5, 40
  %v7371 = vld [vmem:[%s7370] sm:$0xff]
  %v7373 = vsel %vm1104, %v7352, 0
  %v7376 = vsel %vm1104, %v7357, 0
  %v7379 = vsel %vm1104, %v7362, 0
  %v7382 = vsel %vm1104, %v7367, 0
  %7384 = vmatprep.subr.mxu0 0.0
  %7385 = vmatpush1.msra.mxu0 %v7371
  %7386 = vmatprep.subr.mxu0 0.0
  %7387 = vmatpush1.msra.mxu0 0.0
  %7388 = vmatprep.subr.mxu0 0.0
  %7389 = vmatpush1.msra.mxu0 0.0
  %7390 = vmatprep.subr.mxu0 0.0
  %7391 = vmatpush1.msra.mxu0 0.0
  %7392 = vmatprep.subr.mxu0 0.0
  %7393 = vmatpush1.msra.mxu0 0.0
  %7394 = vmatprep.subr.mxu0 0.0
  %7395 = vmatpush1.msra.mxu0 0.0
  %7396 = vmatprep.subr.mxu0 0.0
  %7397 = vmatpush1.msra.mxu0 0.0
  %7398 = vmatprep.subr.mxu0 0.0
  %7399 = vmatpush1.msra.mxu0 0.0
  %7400 = vmatprep.subr.mxu0 0.0
  %7401 = vmatpush1.msra.mxu0 0.0
  %7402 = vmatprep.subr.mxu0 0.0
  %7403 = vmatpush1.msra.mxu0 0.0
  %7404 = vmatprep.subr.mxu0 0.0
  %7405 = vmatpush1.msra.mxu0 0.0
  %7406 = vmatprep.subr.mxu0 0.0
  %7407 = vmatpush1.msra.mxu0 0.0
  %7408 = vmatprep.subr.mxu0 0.0
  %7409 = vmatpush1.msra.mxu0 0.0
  %7410 = vmatprep.subr.mxu0 0.0
  %7411 = vmatpush1.msra.mxu0 0.0
  %7412 = vmatprep.subr.mxu0 0.0
  %7413 = vmatpush1.msra.mxu0 0.0
  %7414 = vmatprep.subr.mxu0 0.0
  %7415 = vmatpush1.msra.mxu0 0.0
  %7416 = vmatprep.subr.mxu0 0.0
  %7417 = vmatpush1.msra.mxu0 0.0
  %7418 = vmatprep.subr.mxu0 0.0
  %7419 = vmatpush1.msra.mxu0 0.0
  %7420 = vmatprep.subr.mxu0 0.0
  %7421 = vmatpush1.msra.mxu0 0.0
  %7422 = vmatprep.subr.mxu0 0.0
  %7423 = vmatpush1.msra.mxu0 0.0
  %7424 = vmatprep.subr.mxu0 0.0
  %7425 = vmatpush1.msra.mxu0 0.0
  %7426 = vmatprep.subr.mxu0 0.0
  %7427 = vmatpush1.msra.mxu0 0.0
  %7428 = vmatprep.subr.mxu0 0.0
  %7429 = vmatpush1.msra.mxu0 0.0
  %7430 = vmatprep.subr.mxu0 0.0
  %7431 = vmatpush1.msra.mxu0 0.0
  %7432 = vmatprep.subr.mxu0 0.0
  %7433 = vmatpush1.msra.mxu0 0.0
  %7434 = vmatprep.subr.mxu0 0.0
  %7435 = vmatpush1.msra.mxu0 0.0
  %7436 = vmatprep.subr.mxu0 0.0
  %7437 = vmatpush1.msra.mxu0 0.0
  %7438 = vmatprep.subr.mxu0 0.0
  %7439 = vmatpush1.msra.mxu0 0.0
  %7440 = vmatprep.subr.mxu0 0.0
  %7441 = vmatpush1.msra.mxu0 0.0
  %7442 = vmatprep.subr.mxu0 0.0
  %7443 = vmatpush1.msra.mxu0 0.0
  %7444 = vmatprep.subr.mxu0 0.0
  %7445 = vmatpush1.msra.mxu0 0.0
  %7446 = vmatprep.subr.mxu0 0.0
  %7447 = vmatpush1.msra.mxu0 0.0
  %7448 = vmatprep.mubr.f32.mxu0 0.0
  %7449 = vmatmul.mubr.f32.gmra.mrb[0].mxu0 %v7373
  %v7450 = vpop.f32.mrb[0].mxu0
  %v7451 = vadd.f32 0.0, %v7450
  %v7452 = vpop.f32.mrb[0].mxu0
  %7453 = vmatprep.mubr.f32.mxu0 0.0
  %7454 = vmatmul.mubr.f32.gmra.mrb[0].mxu0 %v7376
  %v7455 = vpop.f32.mrb[0].mxu0
  %v7456 = vadd.f32 0.0, %v7455
  %v7457 = vpop.f32.mrb[0].mxu0
  %7458 = vmatprep.mubr.f32.mxu0 0.0
  %7459 = vmatmul.mubr.f32.gmra.mrb[0].mxu0 %v7379
  %v7460 = vpop.f32.mrb[0].mxu0
  %v7461 = vadd.f32 0.0, %v7460
  %v7462 = vpop.f32.mrb[0].mxu0
  %7463 = vmatprep.mubr.f32.mxu0 0.0
  %7464 = vmatmul.mubr.f32.gmra.mrb[0].mxu0 %v7382
  %v7465 = vpop.f32.mrb[0].mxu0
  %v7466 = vadd.f32 0.0, %v7465
  %v7467 = vpop.f32.mrb[0].mxu0
  %7468 = vdwg.mxu0
  %v7469 = vadd.f32 %v7260, %v7451
  %v7470 = vadd.f32 %v7261, %v7456
  %v7471 = vadd.f32 %v7262, %v7461
  %v7472 = vadd.f32 %v7263, %v7466
  %s7473 = scalar_lea.vmem %s4, 96
  %v7474 = vld [vmem:[%s7473] sm:$0xf]
  %v7475 = vld [vmem:[%s7473 + $0x4] sm:$0xf]
  %v7476 = vld [vmem:[%s7473 + $0x8] sm:$0xf]
  %v7477 = vld [vmem:[%s7473 + $0xc] sm:$0xf]
  %v7478 = vunpack.c.l.bf16 %v7474
  %v7479 = vunpack.c.l.bf16 %v7475
  %v7480 = vunpack.c.l.bf16 %v7476
  %v7481 = vunpack.c.l.bf16 %v7477
  %v7483 = vsel %vm6232, %v7478, 0
  %v7486 = vsel %vm6232, %v7479, 0
  %v7489 = vsel %vm6232, %v7480, 0
  %v7492 = vsel %vm6232, %v7481, 0
  %7494 = vmatprep.subr.mxu0 0.0
  %7495 = vmatpush1.msra.mxu0 %v6211
  %7496 = vmatprep.subr.mxu0 0.0
  %7497 = vmatpush1.msra.mxu0 %v6212
  %7498 = vmatprep.subr.mxu0 0.0
  %7499 = vmatpush1.msra.mxu0 %v6213
  %7500 = vmatprep.subr.mxu0 0.0
  %7501 = vmatpush1.msra.mxu0 %v6214
  %7502 = vmatprep.subr.mxu0 0.0
  %7503 = vmatpush1.msra.mxu0 %v6215
  %7504 = vmatprep.subr.mxu0 0.0
  %7505 = vmatpush1.msra.mxu0 %v6216
  %7506 = vmatprep.subr.mxu0 0.0
  %7507 = vmatpush1.msra.mxu0 %v6217
  %7508 = vmatprep.subr.mxu0 0.0
  %7509 = vmatpush1.msra.mxu0 %v6218
  %7510 = vmatprep.subr.mxu0 0.0
  %7511 = vmatpush1.msra.mxu0 %v6219
  %7512 = vmatprep.subr.mxu0 0.0
  %7513 = vmatpush1.msra.mxu0 %v6220
  %7514 = vmatprep.subr.mxu0 0.0
  %7515 = vmatpush1.msra.mxu0 %v6221
  %7516 = vmatprep.subr.mxu0 0.0
  %7517 = vmatpush1.msra.mxu0 %v6222
  %7518 = vmatprep.subr.mxu0 0.0
  %7519 = vmatpush1.msra.mxu0 %v6247
  %7520 = vmatprep.subr.mxu0 0.0
  %7521 = vmatpush1.msra.mxu0 0.0
  %7522 = vmatprep.subr.mxu0 0.0
  %7523 = vmatpush1.msra.mxu0 0.0
  %7524 = vmatprep.subr.mxu0 0.0
  %7525 = vmatpush1.msra.mxu0 0.0
  %7526 = vmatprep.subr.mxu0 0.0
  %7527 = vmatpush1.msra.mxu0 0.0
  %7528 = vmatprep.subr.mxu0 0.0
  %7529 = vmatpush1.msra.mxu0 0.0
  %7530 = vmatprep.subr.mxu0 0.0
  %7531 = vmatpush1.msra.mxu0 0.0
  %7532 = vmatprep.subr.mxu0 0.0
  %7533 = vmatpush1.msra.mxu0 0.0
  %7534 = vmatprep.subr.mxu0 0.0
  %7535 = vmatpush1.msra.mxu0 0.0
  %7536 = vmatprep.subr.mxu0 0.0
  %7537 = vmatpush1.msra.mxu0 0.0
  %7538 = vmatprep.subr.mxu0 0.0
  %7539 = vmatpush1.msra.mxu0 0.0
  %7540 = vmatprep.subr.mxu0 0.0
  %7541 = vmatpush1.msra.mxu0 0.0
  %7542 = vmatprep.subr.mxu0 0.0
  %7543 = vmatpush1.msra.mxu0 0.0
  %7544 = vmatprep.subr.mxu0 0.0
  %7545 = vmatpush1.msra.mxu0 0.0
  %7546 = vmatprep.subr.mxu0 0.0
  %7547 = vmatpush1.msra.mxu0 0.0
  %7548 = vmatprep.subr.mxu0 0.0
  %7549 = vmatpush1.msra.mxu0 0.0
  %7550 = vmatprep.subr.mxu0 0.0
  %7551 = vmatpush1.msra.mxu0 0.0
  %7552 = vmatprep.subr.mxu0 0.0
  %7553 = vmatpush1.msra.mxu0 0.0
  %7554 = vmatprep.subr.mxu0 0.0
  %7555 = vmatpush1.msra.mxu0 0.0
  %7556 = vmatprep.subr.mxu0 0.0
  %7557 = vmatpush1.msra.mxu0 0.0
  %7558 = vmatprep.mubr.f32.mxu0 0.0
  %7559 = vmatmul.mubr.f32.gmra.mrb[0].mxu0 %v7483
  %v7560 = vpop.f32.mrb[0].mxu0
  %v7561 = vadd.f32 0.0, %v7560
  %v7562 = vpop.f32.mrb[0].mxu0
  %7563 = vmatprep.mubr.f32.mxu0 0.0
  %7564 = vmatmul.mubr.f32.gmra.mrb[0].mxu0 %v7486
  %v7565 = vpop.f32.mrb[0].mxu0
  %v7566 = vadd.f32 0.0, %v7565
  %v7567 = vpop.f32.mrb[0].mxu0
  %7568 = vmatprep.mubr.f32.mxu0 0.0
  %7569 = vmatmul.mubr.f32.gmra.mrb[0].mxu0 %v7489
  %v7570 = vpop.f32.mrb[0].mxu0
  %v7571 = vadd.f32 0.0, %v7570
  %v7572 = vpop.f32.mrb[0].mxu0
  %7573 = vmatprep.mubr.f32.mxu0 0.0
  %7574 = vmatmul.mubr.f32.gmra.mrb[0].mxu0 %v7492
  %v7575 = vpop.f32.mrb[0].mxu0
  %v7576 = vadd.f32 0.0, %v7575
  %v7577 = vpop.f32.mrb[0].mxu0
  %7578 = vdwg.mxu0
  %s7579 = scalar_lea.vmem %s5, 48
  %v7580 = vld [vmem:[%s7579] sm:$0xff]
  %v7582 = vsel %vm1104, %v7561, 0
  %v7585 = vsel %vm1104, %v7566, 0
  %v7588 = vsel %vm1104, %v7571, 0
  %v7591 = vsel %vm1104, %v7576, 0
  %7593 = vmatprep.subr.mxu0 0.0
  %7594 = vmatpush1.msra.mxu0 %v7580
  %7595 = vmatprep.subr.mxu0 0.0
  %7596 = vmatpush1.msra.mxu0 0.0
  %7597 = vmatprep.subr.mxu0 0.0
  %7598 = vmatpush1.msra.mxu0 0.0
  %7599 = vmatprep.subr.mxu0 0.0
  %7600 = vmatpush1.msra.mxu0 0.0
  %7601 = vmatprep.subr.mxu0 0.0
  %7602 = vmatpush1.msra.mxu0 0.0
  %7603 = vmatprep.subr.mxu0 0.0
  %7604 = vmatpush1.msra.mxu0 0.0
  %7605 = vmatprep.subr.mxu0 0.0
  %7606 = vmatpush1.msra.mxu0 0.0
  %7607 = vmatprep.subr.mxu0 0.0
  %7608 = vmatpush1.msra.mxu0 0.0
  %7609 = vmatprep.subr.mxu0 0.0
  %7610 = vmatpush1.msra.mxu0 0.0
  %7611 = vmatprep.subr.mxu0 0.0
  %7612 = vmatpush1.msra.mxu0 0.0
  %7613 = vmatprep.subr.mxu0 0.0
  %7614 = vmatpush1.msra.mxu0 0.0
  %7615 = vmatprep.subr.mxu0 0.0
  %7616 = vmatpush1.msra.mxu0 0.0
  %7617 = vmatprep.subr.mxu0 0.0
  %7618 = vmatpush1.msra.mxu0 0.0
  %7619 = vmatprep.subr.mxu0 0.0
  %7620 = vmatpush1.msra.mxu0 0.0
  %7621 = vmatprep.subr.mxu0 0.0
  %7622 = vmatpush1.msra.mxu0 0.0
  %7623 = vmatprep.subr.mxu0 0.0
  %7624 = vmatpush1.msra.mxu0 0.0
  %7625 = vmatprep.subr.mxu0 0.0
  %7626 = vmatpush1.msra.mxu0 0.0
  %7627 = vmatprep.subr.mxu0 0.0
  %7628 = vmatpush1.msra.mxu0 0.0
  %7629 = vmatprep.subr.mxu0 0.0
  %7630 = vmatpush1.msra.mxu0 0.0
  %7631 = vmatprep.subr.mxu0 0.0
  %7632 = vmatpush1.msra.mxu0 0.0
  %7633 = vmatprep.subr.mxu0 0.0
  %7634 = vmatpush1.msra.mxu0 0.0
  %7635 = vmatprep.subr.mxu0 0.0
  %7636 = vmatpush1.msra.mxu0 0.0
  %7637 = vmatprep.subr.mxu0 0.0
  %7638 = vmatpush1.msra.mxu0 0.0
  %7639 = vmatprep.subr.mxu0 0.0
  %7640 = vmatpush1.msra.mxu0 0.0
  %7641 = vmatprep.subr.mxu0 0.0
  %7642 = vmatpush1.msra.mxu0 0.0
  %7643 = vmatprep.subr.mxu0 0.0
  %7644 = vmatpush1.msra.mxu0 0.0
  %7645 = vmatprep.subr.mxu0 0.0
  %7646 = vmatpush1.msra.mxu0 0.0
  %7647 = vmatprep.subr.mxu0 0.0
  %7648 = vmatpush1.msra.mxu0 0.0
  %7649 = vmatprep.subr.mxu0 0.0
  %7650 = vmatpush1.msra.mxu0 0.0
  %7651 = vmatprep.subr.mxu0 0.0
  %7652 = vmatpush1.msra.mxu0 0.0
  %7653 = vmatprep.subr.mxu0 0.0
  %7654 = vmatpush1.msra.mxu0 0.0
  %7655 = vmatprep.subr.mxu0 0.0
  %7656 = vmatpush1.msra.mxu0 0.0
  %7657 = vmatprep.mubr.f32.mxu0 0.0
  %7658 = vmatmul.mubr.f32.gmra.mrb[0].mxu0 %v7582
  %v7659 = vpop.f32.mrb[0].mxu0
  %v7660 = vadd.f32 0.0, %v7659
  %v7661 = vpop.f32.mrb[0].mxu0
  %7662 = vmatprep.mubr.f32.mxu0 0.0
  %7663 = vmatmul.mubr.f32.gmra.mrb[0].mxu0 %v7585
  %v7664 = vpop.f32.mrb[0].mxu0
  %v7665 = vadd.f32 0.0, %v7664
  %v7666 = vpop.f32.mrb[0].mxu0
  %7667 = vmatprep.mubr.f32.mxu0 0.0
  %7668 = vmatmul.mubr.f32.gmra.mrb[0].mxu0 %v7588
  %v7669 = vpop.f32.mrb[0].mxu0
  %v7670 = vadd.f32 0.0, %v7669
  %v7671 = vpop.f32.mrb[0].mxu0
  %7672 = vmatprep.mubr.f32.mxu0 0.0
  %7673 = vmatmul.mubr.f32.gmra.mrb[0].mxu0 %v7591
  %v7674 = vpop.f32.mrb[0].mxu0
  %v7675 = vadd.f32 0.0, %v7674
  %v7676 = vpop.f32.mrb[0].mxu0
  %7677 = vdwg.mxu0
  %v7678 = vadd.f32 %v7469, %v7660
  %v7679 = vadd.f32 %v7470, %v7665
  %v7680 = vadd.f32 %v7471, %v7670
  %v7681 = vadd.f32 %v7472, %v7675
  %s7682 = scalar_lea.vmem %s4, 112
  %v7683 = vld [vmem:[%s7682] sm:$0xf]
  %v7684 = vld [vmem:[%s7682 + $0x4] sm:$0xf]
  %v7685 = vld [vmem:[%s7682 + $0x8] sm:$0xf]
  %v7686 = vld [vmem:[%s7682 + $0xc] sm:$0xf]
  %v7687 = vunpack.c.l.bf16 %v7683
  %v7688 = vunpack.c.l.bf16 %v7684
  %v7689 = vunpack.c.l.bf16 %v7685
  %v7690 = vunpack.c.l.bf16 %v7686
  %v7692 = vsel %vm6232, %v7687, 0
  %v7695 = vsel %vm6232, %v7688, 0
  %v7698 = vsel %vm6232, %v7689, 0
  %v7701 = vsel %vm6232, %v7690, 0
  %7703 = vmatprep.subr.mxu0 0.0
  %7704 = vmatpush1.msra.mxu0 %v6211
  %7705 = vmatprep.subr.mxu0 0.0
  %7706 = vmatpush1.msra.mxu0 %v6212
  %7707 = vmatprep.subr.mxu0 0.0
  %7708 = vmatpush1.msra.mxu0 %v6213
  %7709 = vmatprep.subr.mxu0 0.0
  %7710 = vmatpush1.msra.mxu0 %v6214
  %7711 = vmatprep.subr.mxu0 0.0
  %7712 = vmatpush1.msra.mxu0 %v6215
  %7713 = vmatprep.subr.mxu0 0.0
  %7714 = vmatpush1.msra.mxu0 %v6216
  %7715 = vmatprep.subr.mxu0 0.0
  %7716 = vmatpush1.msra.mxu0 %v6217
  %7717 = vmatprep.subr.mxu0 0.0
  %7718 = vmatpush1.msra.mxu0 %v6218
  %7719 = vmatprep.subr.mxu0 0.0
  %7720 = vmatpush1.msra.mxu0 %v6219
  %7721 = vmatprep.subr.mxu0 0.0
  %7722 = vmatpush1.msra.mxu0 %v6220
  %7723 = vmatprep.subr.mxu0 0.0
  %7724 = vmatpush1.msra.mxu0 %v6221
  %7725 = vmatprep.subr.mxu0 0.0
  %7726 = vmatpush1.msra.mxu0 %v6222
  %7727 = vmatprep.subr.mxu0 0.0
  %7728 = vmatpush1.msra.mxu0 %v6247
  %7729 = vmatprep.subr.mxu0 0.0
  %7730 = vmatpush1.msra.mxu0 0.0
  %7731 = vmatprep.subr.mxu0 0.0
  %7732 = vmatpush1.msra.mxu0 0.0
  %7733 = vmatprep.subr.mxu0 0.0
  %7734 = vmatpush1.msra.mxu0 0.0
  %7735 = vmatprep.subr.mxu0 0.0
  %7736 = vmatpush1.msra.mxu0 0.0
  %7737 = vmatprep.subr.mxu0 0.0
  %7738 = vmatpush1.msra.mxu0 0.0
  %7739 = vmatprep.subr.mxu0 0.0
  %7740 = vmatpush1.msra.mxu0 0.0
  %7741 = vmatprep.subr.mxu0 0.0
  %7742 = vmatpush1.msra.mxu0 0.0
  %7743 = vmatprep.subr.mxu0 0.0
  %7744 = vmatpush1.msra.mxu0 0.0
  %7745 = vmatprep.subr.mxu0 0.0
  %7746 = vmatpush1.msra.mxu0 0.0
  %7747 = vmatprep.subr.mxu0 0.0
  %7748 = vmatpush1.msra.mxu0 0.0
  %7749 = vmatprep.subr.mxu0 0.0
  %7750 = vmatpush1.msra.mxu0 0.0
  %7751 = vmatprep.subr.mxu0 0.0
  %7752 = vmatpush1.msra.mxu0 0.0
  %7753 = vmatprep.subr.mxu0 0.0
  %7754 = vmatpush1.msra.mxu0 0.0
  %7755 = vmatprep.subr.mxu0 0.0
  %7756 = vmatpush1.msra.mxu0 0.0
  %7757 = vmatprep.subr.mxu0 0.0
  %7758 = vmatpush1.msra.mxu0 0.0
  %7759 = vmatprep.subr.mxu0 0.0
  %7760 = vmatpush1.msra.mxu0 0.0
  %7761 = vmatprep.subr.mxu0 0.0
  %7762 = vmatpush1.msra.mxu0 0.0
  %7763 = vmatprep.subr.mxu0 0.0
  %7764 = vmatpush1.msra.mxu0 0.0
  %7765 = vmatprep.subr.mxu0 0.0
  %7766 = vmatpush1.msra.mxu0 0.0
  %7767 = vmatprep.mubr.f32.mxu0 0.0
  %7768 = vmatmul.mubr.f32.gmra.mrb[0].mxu0 %v7692
  %v7769 = vpop.f32.mrb[0].mxu0
  %v7770 = vadd.f32 0.0, %v7769
  %v7771 = vpop.f32.mrb[0].mxu0
  %7772 = vmatprep.mubr.f32.mxu0 0.0
  %7773 = vmatmul.mubr.f32.gmra.mrb[0].mxu0 %v7695
  %v7774 = vpop.f32.mrb[0].mxu0
  %v7775 = vadd.f32 0.0, %v7774
  %v7776 = vpop.f32.mrb[0].mxu0
  %7777 = vmatprep.mubr.f32.mxu0 0.0
  %7778 = vmatmul.mubr.f32.gmra.mrb[0].mxu0 %v7698
  %v7779 = vpop.f32.mrb[0].mxu0
  %v7780 = vadd.f32 0.0, %v7779
  %v7781 = vpop.f32.mrb[0].mxu0
  %7782 = vmatprep.mubr.f32.mxu0 0.0
  %7783 = vmatmul.mubr.f32.gmra.mrb[0].mxu0 %v7701
  %v7784 = vpop.f32.mrb[0].mxu0
  %v7785 = vadd.f32 0.0, %v7784
  %v7786 = vpop.f32.mrb[0].mxu0
  %7787 = vdwg.mxu0
  %s7788 = scalar_lea.vmem %s5, 56
  %v7789 = vld [vmem:[%s7788] sm:$0xff]
  %v7791 = vsel %vm1104, %v7770, 0
  %v7794 = vsel %vm1104, %v7775, 0
  %v7797 = vsel %vm1104, %v7780, 0
  %v7800 = vsel %vm1104, %v7785, 0
  %7802 = vmatprep.subr.mxu0 0.0
  %7803 = vmatpush1.msra.mxu0 %v7789
  %7804 = vmatprep.subr.mxu0 0.0
  %7805 = vmatpush1.msra.mxu0 0.0
  %7806 = vmatprep.subr.mxu0 0.0
  %7807 = vmatpush1.msra.mxu0 0.0
  %7808 = vmatprep.subr.mxu0 0.0
  %7809 = vmatpush1.msra.mxu0 0.0
  %7810 = vmatprep.subr.mxu0 0.0
  %7811 = vmatpush1.msra.mxu0 0.0
  %7812 = vmatprep.subr.mxu0 0.0
  %7813 = vmatpush1.msra.mxu0 0.0
  %7814 = vmatprep.subr.mxu0 0.0
  %7815 = vmatpush1.msra.mxu0 0.0
  %7816 = vmatprep.subr.mxu0 0.0
  %7817 = vmatpush1.msra.mxu0 0.0
  %7818 = vmatprep.subr.mxu0 0.0
  %7819 = vmatpush1.msra.mxu0 0.0
  %7820 = vmatprep.subr.mxu0 0.0
  %7821 = vmatpush1.msra.mxu0 0.0
  %7822 = vmatprep.subr.mxu0 0.0
  %7823 = vmatpush1.msra.mxu0 0.0
  %7824 = vmatprep.subr.mxu0 0.0
  %7825 = vmatpush1.msra.mxu0 0.0
  %7826 = vmatprep.subr.mxu0 0.0
  %7827 = vmatpush1.msra.mxu0 0.0
  %7828 = vmatprep.subr.mxu0 0.0
  %7829 = vmatpush1.msra.mxu0 0.0
  %7830 = vmatprep.subr.mxu0 0.0
  %7831 = vmatpush1.msra.mxu0 0.0
  %7832 = vmatprep.subr.mxu0 0.0
  %7833 = vmatpush1.msra.mxu0 0.0
  %7834 = vmatprep.subr.mxu0 0.0
  %7835 = vmatpush1.msra.mxu0 0.0
  %7836 = vmatprep.subr.mxu0 0.0
  %7837 = vmatpush1.msra.mxu0 0.0
  %7838 = vmatprep.subr.mxu0 0.0
  %7839 = vmatpush1.msra.mxu0 0.0
  %7840 = vmatprep.subr.mxu0 0.0
  %7841 = vmatpush1.msra.mxu0 0.0
  %7842 = vmatprep.subr.mxu0 0.0
  %7843 = vmatpush1.msra.mxu0 0.0
  %7844 = vmatprep.subr.mxu0 0.0
  %7845 = vmatpush1.msra.mxu0 0.0
  %7846 = vmatprep.subr.mxu0 0.0
  %7847 = vmatpush1.msra.mxu0 0.0
  %7848 = vmatprep.subr.mxu0 0.0
  %7849 = vmatpush1.msra.mxu0 0.0
  %7850 = vmatprep.subr.mxu0 0.0
  %7851 = vmatpush1.msra.mxu0 0.0
  %7852 = vmatprep.subr.mxu0 0.0
  %7853 = vmatpush1.msra.mxu0 0.0
  %7854 = vmatprep.subr.mxu0 0.0
  %7855 = vmatpush1.msra.mxu0 0.0
  %7856 = vmatprep.subr.mxu0 0.0
  %7857 = vmatpush1.msra.mxu0 0.0
  %7858 = vmatprep.subr.mxu0 0.0
  %7859 = vmatpush1.msra.mxu0 0.0
  %7860 = vmatprep.subr.mxu0 0.0
  %7861 = vmatpush1.msra.mxu0 0.0
  %7862 = vmatprep.subr.mxu0 0.0
  %7863 = vmatpush1.msra.mxu0 0.0
  %7864 = vmatprep.subr.mxu0 0.0
  %7865 = vmatpush1.msra.mxu0 0.0
  %7866 = vmatprep.mubr.f32.mxu0 0.0
  %7867 = vmatmul.mubr.f32.gmra.mrb[0].mxu0 %v7791
  %v7868 = vpop.f32.mrb[0].mxu0
  %v7869 = vadd.f32 0.0, %v7868
  %v7870 = vpop.f32.mrb[0].mxu0
  %7871 = vmatprep.mubr.f32.mxu0 0.0
  %7872 = vmatmul.mubr.f32.gmra.mrb[0].mxu0 %v7794
  %v7873 = vpop.f32.mrb[0].mxu0
  %v7874 = vadd.f32 0.0, %v7873
  %v7875 = vpop.f32.mrb[0].mxu0
  %7876 = vmatprep.mubr.f32.mxu0 0.0
  %7877 = vmatmul.mubr.f32.gmra.mrb[0].mxu0 %v7797
  %v7878 = vpop.f32.mrb[0].mxu0
  %v7879 = vadd.f32 0.0, %v7878
  %v7880 = vpop.f32.mrb[0].mxu0
  %7881 = vmatprep.mubr.f32.mxu0 0.0
  %7882 = vmatmul.mubr.f32.gmra.mrb[0].mxu0 %v7800
  %v7883 = vpop.f32.mrb[0].mxu0
  %v7884 = vadd.f32 0.0, %v7883
  %v7885 = vpop.f32.mrb[0].mxu0
  %7886 = vdwg.mxu0
  %v7887 = vadd.f32 %v7678, %v7869
  %v7888 = vadd.f32 %v7679, %v7874
  %v7889 = vadd.f32 %v7680, %v7879
  %v7890 = vadd.f32 %v7681, %v7884
  %s7891 = scalar_lea.vmem %s4, 128
  %v7892 = vld [vmem:[%s7891] sm:$0xf]
  %v7893 = vld [vmem:[%s7891 + $0x4] sm:$0xf]
  %v7894 = vld [vmem:[%s7891 + $0x8] sm:$0xf]
  %v7895 = vld [vmem:[%s7891 + $0xc] sm:$0xf]
  %v7896 = vunpack.c.l.bf16 %v7892
  %v7897 = vunpack.c.l.bf16 %v7893
  %v7898 = vunpack.c.l.bf16 %v7894
  %v7899 = vunpack.c.l.bf16 %v7895
  %v7901 = vsel %vm6232, %v7896, 0
  %v7904 = vsel %vm6232, %v7897, 0
  %v7907 = vsel %vm6232, %v7898, 0
  %v7910 = vsel %vm6232, %v7899, 0
  %7912 = vmatprep.subr.mxu0 0.0
  %7913 = vmatpush1.msra.mxu0 %v6211
  %7914 = vmatprep.subr.mxu0 0.0
  %7915 = vmatpush1.msra.mxu0 %v6212
  %7916 = vmatprep.subr.mxu0 0.0
  %7917 = vmatpush1.msra.mxu0 %v6213
  %7918 = vmatprep.subr.mxu0 0.0
  %7919 = vmatpush1.msra.mxu0 %v6214
  %7920 = vmatprep.subr.mxu0 0.0
  %7921 = vmatpush1.msra.mxu0 %v6215
  %7922 = vmatprep.subr.mxu0 0.0
  %7923 = vmatpush1.msra.mxu0 %v6216
  %7924 = vmatprep.subr.mxu0 0.0
  %7925 = vmatpush1.msra.mxu0 %v6217
  %7926 = vmatprep.subr.mxu0 0.0
  %7927 = vmatpush1.msra.mxu0 %v6218
  %7928 = vmatprep.subr.mxu0 0.0
  %7929 = vmatpush1.msra.mxu0 %v6219
  %7930 = vmatprep.subr.mxu0 0.0
  %7931 = vmatpush1.msra.mxu0 %v6220
  %7932 = vmatprep.subr.mxu0 0.0
  %7933 = vmatpush1.msra.mxu0 %v6221
  %7934 = vmatprep.subr.mxu0 0.0
  %7935 = vmatpush1.msra.mxu0 %v6222
  %7936 = vmatprep.subr.mxu0 0.0
  %7937 = vmatpush1.msra.mxu0 %v6247
  %7938 = vmatprep.subr.mxu0 0.0
  %7939 = vmatpush1.msra.mxu0 0.0
  %7940 = vmatprep.subr.mxu0 0.0
  %7941 = vmatpush1.msra.mxu0 0.0
  %7942 = vmatprep.subr.mxu0 0.0
  %7943 = vmatpush1.msra.mxu0 0.0
  %7944 = vmatprep.subr.mxu0 0.0
  %7945 = vmatpush1.msra.mxu0 0.0
  %7946 = vmatprep.subr.mxu0 0.0
  %7947 = vmatpush1.msra.mxu0 0.0
  %7948 = vmatprep.subr.mxu0 0.0
  %7949 = vmatpush1.msra.mxu0 0.0
  %7950 = vmatprep.subr.mxu0 0.0
  %7951 = vmatpush1.msra.mxu0 0.0
  %7952 = vmatprep.subr.mxu0 0.0
  %7953 = vmatpush1.msra.mxu0 0.0
  %7954 = vmatprep.subr.mxu0 0.0
  %7955 = vmatpush1.msra.mxu0 0.0
  %7956 = vmatprep.subr.mxu0 0.0
  %7957 = vmatpush1.msra.mxu0 0.0
  %7958 = vmatprep.subr.mxu0 0.0
  %7959 = vmatpush1.msra.mxu0 0.0
  %7960 = vmatprep.subr.mxu0 0.0
  %7961 = vmatpush1.msra.mxu0 0.0
  %7962 = vmatprep.subr.mxu0 0.0
  %7963 = vmatpush1.msra.mxu0 0.0
  %7964 = vmatprep.subr.mxu0 0.0
  %7965 = vmatpush1.msra.mxu0 0.0
  %7966 = vmatprep.subr.mxu0 0.0
  %7967 = vmatpush1.msra.mxu0 0.0
  %7968 = vmatprep.subr.mxu0 0.0
  %7969 = vmatpush1.msra.mxu0 0.0
  %7970 = vmatprep.subr.mxu0 0.0
  %7971 = vmatpush1.msra.mxu0 0.0
  %7972 = vmatprep.subr.mxu0 0.0
  %7973 = vmatpush1.msra.mxu0 0.0
  %7974 = vmatprep.subr.mxu0 0.0
  %7975 = vmatpush1.msra.mxu0 0.0
  %7976 = vmatprep.mubr.f32.mxu0 0.0
  %7977 = vmatmul.mubr.f32.gmra.mrb[0].mxu0 %v7901
  %v7978 = vpop.f32.mrb[0].mxu0
  %v7979 = vadd.f32 0.0, %v7978
  %v7980 = vpop.f32.mrb[0].mxu0
  %7981 = vmatprep.mubr.f32.mxu0 0.0
  %7982 = vmatmul.mubr.f32.gmra.mrb[0].mxu0 %v7904
  %v7983 = vpop.f32.mrb[0].mxu0
  %v7984 = vadd.f32 0.0, %v7983
  %v7985 = vpop.f32.mrb[0].mxu0
  %7986 = vmatprep.mubr.f32.mxu0 0.0
  %7987 = vmatmul.mubr.f32.gmra.mrb[0].mxu0 %v7907
  %v7988 = vpop.f32.mrb[0].mxu0
  %v7989 = vadd.f32 0.0, %v7988
  %v7990 = vpop.f32.mrb[0].mxu0
  %7991 = vmatprep.mubr.f32.mxu0 0.0
  %7992 = vmatmul.mubr.f32.gmra.mrb[0].mxu0 %v7910
  %v7993 = vpop.f32.mrb[0].mxu0
  %v7994 = vadd.f32 0.0, %v7993
  %v7995 = vpop.f32.mrb[0].mxu0
  %7996 = vdwg.mxu0
  %s7997 = scalar_lea.vmem %s5, 64
  %v7998 = vld [vmem:[%s7997] sm:$0xff]
  %v8000 = vsel %vm1104, %v7979, 0
  %v8003 = vsel %vm1104, %v7984, 0
  %v8006 = vsel %vm1104, %v7989, 0
  %v8009 = vsel %vm1104, %v7994, 0
  %8011 = vmatprep.subr.mxu0 0.0
  %8012 = vmatpush1.msra.mxu0 %v7998
  %8013 = vmatprep.subr.mxu0 0.0
  %8014 = vmatpush1.msra.mxu0 0.0
  %8015 = vmatprep.subr.mxu0 0.0
  %8016 = vmatpush1.msra.mxu0 0.0
  %8017 = vmatprep.subr.mxu0 0.0
  %8018 = vmatpush1.msra.mxu0 0.0
  %8019 = vmatprep.subr.mxu0 0.0
  %8020 = vmatpush1.msra.mxu0 0.0
  %8021 = vmatprep.subr.mxu0 0.0
  %8022 = vmatpush1.msra.mxu0 0.0
  %8023 = vmatprep.subr.mxu0 0.0
  %8024 = vmatpush1.msra.mxu0 0.0
  %8025 = vmatprep.subr.mxu0 0.0
  %8026 = vmatpush1.msra.mxu0 0.0
  %8027 = vmatprep.subr.mxu0 0.0
  %8028 = vmatpush1.msra.mxu0 0.0
  %8029 = vmatprep.subr.mxu0 0.0
  %8030 = vmatpush1.msra.mxu0 0.0
  %8031 = vmatprep.subr.mxu0 0.0
  %8032 = vmatpush1.msra.mxu0 0.0
  %8033 = vmatprep.subr.mxu0 0.0
  %8034 = vmatpush1.msra.mxu0 0.0
  %8035 = vmatprep.subr.mxu0 0.0
  %8036 = vmatpush1.msra.mxu0 0.0
  %8037 = vmatprep.subr.mxu0 0.0
  %8038 = vmatpush1.msra.mxu0 0.0
  %8039 = vmatprep.subr.mxu0 0.0
  %8040 = vmatpush1.msra.mxu0 0.0
  %8041 = vmatprep.subr.mxu0 0.0
  %8042 = vmatpush1.msra.mxu0 0.0
  %8043 = vmatprep.subr.mxu0 0.0
  %8044 = vmatpush1.msra.mxu0 0.0
  %8045 = vmatprep.subr.mxu0 0.0
  %8046 = vmatpush1.msra.mxu0 0.0
  %8047 = vmatprep.subr.mxu0 0.0
  %8048 = vmatpush1.msra.mxu0 0.0
  %8049 = vmatprep.subr.mxu0 0.0
  %8050 = vmatpush1.msra.mxu0 0.0
  %8051 = vmatprep.subr.mxu0 0.0
  %8052 = vmatpush1.msra.mxu0 0.0
  %8053 = vmatprep.subr.mxu0 0.0
  %8054 = vmatpush1.msra.mxu0 0.0
  %8055 = vmatprep.subr.mxu0 0.0
  %8056 = vmatpush1.msra.mxu0 0.0
  %8057 = vmatprep.subr.mxu0 0.0
  %8058 = vmatpush1.msra.mxu0 0.0
  %8059 = vmatprep.subr.mxu0 0.0
  %8060 = vmatpush1.msra.mxu0 0.0
  %8061 = vmatprep.subr.mxu0 0.0
  %8062 = vmatpush1.msra.mxu0 0.0
  %8063 = vmatprep.subr.mxu0 0.0
  %8064 = vmatpush1.msra.mxu0 0.0
  %8065 = vmatprep.subr.mxu0 0.0
  %8066 = vmatpush1.msra.mxu0 0.0
  %8067 = vmatprep.subr.mxu0 0.0
  %8068 = vmatpush1.msra.mxu0 0.0
  %8069 = vmatprep.subr.mxu0 0.0
  %8070 = vmatpush1.msra.mxu0 0.0
  %8071 = vmatprep.subr.mxu0 0.0
  %8072 = vmatpush1.msra.mxu0 0.0
  %8073 = vmatprep.subr.mxu0 0.0
  %8074 = vmatpush1.msra.mxu0 0.0
  %8075 = vmatprep.mubr.f32.mxu0 0.0
  %8076 = vmatmul.mubr.f32.gmra.mrb[0].mxu0 %v8000
  %v8077 = vpop.f32.mrb[0].mxu0
  %v8078 = vadd.f32 0.0, %v8077
  %v8079 = vpop.f32.mrb[0].mxu0
  %8080 = vmatprep.mubr.f32.mxu0 0.0
  %8081 = vmatmul.mubr.f32.gmra.mrb[0].mxu0 %v8003
  %v8082 = vpop.f32.mrb[0].mxu0
  %v8083 = vadd.f32 0.0, %v8082
  %v8084 = vpop.f32.mrb[0].mxu0
  %8085 = vmatprep.mubr.f32.mxu0 0.0
  %8086 = vmatmul.mubr.f32.gmra.mrb[0].mxu0 %v8006
  %v8087 = vpop.f32.mrb[0].mxu0
  %v8088 = vadd.f32 0.0, %v8087
  %v8089 = vpop.f32.mrb[0].mxu0
  %8090 = vmatprep.mubr.f32.mxu0 0.0
  %8091 = vmatmul.mubr.f32.gmra.mrb[0].mxu0 %v8009
  %v8092 = vpop.f32.mrb[0].mxu0
  %v8093 = vadd.f32 0.0, %v8092
  %v8094 = vpop.f32.mrb[0].mxu0
  %8095 = vdwg.mxu0
  %v8096 = vadd.f32 %v7887, %v8078
  %v8097 = vadd.f32 %v7888, %v8083
  %v8098 = vadd.f32 %v7889, %v8088
  %v8099 = vadd.f32 %v7890, %v8093
  %v8100 = vld [vmem:[%s12] sm:$0x1]
  %v8101 = vld [vmem:[%s13] sm:$0x1]
  %vm8102 = vcmask 130048
  %v8103 = vsel %vm8102, %v8096, 0.0
  %v8104 = vsel %vm8102, %v8097, 0.0
  %v8105 = vadd.f32 %v8103, %v8104
  %v8106 = vsel %vm8102, %v8098, 0.0
  %v8107 = vadd.f32 %v8105, %v8106
  %v8108 = vsel %vm8102, %v8099, 0.0
  %v8109 = vadd.f32 %v8107, %v8108
  %v8110 = vrot.slane %v8109, 4
  %v8111 = vadd.f32 %v8109, %v8110
  %v8112 = vrot.slane %v8111, 2
  %v8113 = vadd.f32 %v8111, %v8112
  %v8114 = vrot.slane %v8113, 1
  %v8115 = vadd.f32 %v8113, %v8114
  %v8116 = vmul.f32 %v8115, 0.03125
  %v8117 = vmul.f32 %v8096, %v8096
  %v8118 = vmul.f32 %v8097, %v8097
  %v8119 = vmul.f32 %v8098, %v8098
  %v8120 = vmul.f32 %v8099, %v8099
  %v8121 = vsel %vm8102, %v8117, 0.0
  %v8122 = vsel %vm8102, %v8118, 0.0
  %v8123 = vadd.f32 %v8121, %v8122
  %v8124 = vsel %vm8102, %v8119, 0.0
  %v8125 = vadd.f32 %v8123, %v8124
  %v8126 = vsel %vm8102, %v8120, 0.0
  %v8127 = vadd.f32 %v8125, %v8126
  %v8128 = vrot.slane %v8127, 4
  %v8129 = vadd.f32 %v8127, %v8128
  %v8130 = vrot.slane %v8129, 2
  %v8131 = vadd.f32 %v8129, %v8130
  %v8132 = vrot.slane %v8131, 1
  %v8133 = vadd.f32 %v8131, %v8132
  %v8134 = vmul.f32 %v8133, 0.03125
  %v8135 = vmul.f32 %v8116, %v8116
  %v8136 = vsub.f32 %v8134, %v8135
  %v8137 = vmax.f32 %v8136, 0.0
  %v8138 = vadd.f32 %v8137, 1e-05
  %v8139 = vrsqrt.pop %v8138
  %v8140 = vmul.f32 %v8100, %v8139
  %v8141 = vmul.f32 %v8116, %v8140
  %v8142 = vsub.f32 %v8101, %v8141
  %v8144 = vlaneseq
  %v8145 = vshrl.u32 %v8144, 7
  %v8146 = vsub.s32 0, %v8145
  %v8147 = vrot.slane %v8140, %v8146
  %v8149 = vmul.f32 %v8096, %v8147
  %v8150 = vmul.f32 %v8097, %v8147
  %v8151 = vmul.f32 %v8098, %v8147
  %v8152 = vmul.f32 %v8099, %v8147
  %v8154 = vlaneseq
  %v8155 = vshrl.u32 %v8154, 7
  %v8156 = vsub.s32 0, %v8155
  %v8157 = vrot.slane %v8142, %v8156
  %v8159 = vadd.f32 %v8149, %v8157
  %v8160 = vadd.f32 %v8150, %v8157
  %v8161 = vadd.f32 %v8151, %v8157
  %v8162 = vadd.f32 %v8152, %v8157
  %v8163 = vmax.f32 %v8159, 0.0
  %v8164 = vmax.f32 %v8160, 0.0
  %v8165 = vmax.f32 %v8161, 0.0
  %v8166 = vmax.f32 %v8162, 0.0
  %v8167 = vld [vmem:[%s6] sm:$0xf]
  %v8168 = vunpack.c.l.bf16 %v8167
  %vm8169 = vcmask 261120
  %v8171 = vsel %vm8169, %v8168, 0
  %8173 = vmatprep.subr.mxu0 0.0
  %8174 = vmatpush1.msra.mxu0 %v8163
  %8175 = vmatprep.subr.mxu0 0.0
  %8176 = vmatpush1.msra.mxu0 %v8164
  %8177 = vmatprep.subr.mxu0 0.0
  %8178 = vmatpush1.msra.mxu0 %v8165
  %8179 = vmatprep.subr.mxu0 0.0
  %8180 = vmatpush1.msra.mxu0 %v8166
  %8181 = vmatprep.subr.mxu0 0.0
  %8182 = vmatpush1.msra.mxu0 0.0
  %8183 = vmatprep.subr.mxu0 0.0
  %8184 = vmatpush1.msra.mxu0 0.0
  %8185 = vmatprep.subr.mxu0 0.0
  %8186 = vmatpush1.msra.mxu0 0.0
  %8187 = vmatprep.subr.mxu0 0.0
  %8188 = vmatpush1.msra.mxu0 0.0
  %8189 = vmatprep.subr.mxu0 0.0
  %8190 = vmatpush1.msra.mxu0 0.0
  %8191 = vmatprep.subr.mxu0 0.0
  %8192 = vmatpush1.msra.mxu0 0.0
  %8193 = vmatprep.subr.mxu0 0.0
  %8194 = vmatpush1.msra.mxu0 0.0
  %8195 = vmatprep.subr.mxu0 0.0
  %8196 = vmatpush1.msra.mxu0 0.0
  %8197 = vmatprep.subr.mxu0 0.0
  %8198 = vmatpush1.msra.mxu0 0.0
  %8199 = vmatprep.subr.mxu0 0.0
  %8200 = vmatpush1.msra.mxu0 0.0
  %8201 = vmatprep.subr.mxu0 0.0
  %8202 = vmatpush1.msra.mxu0 0.0
  %8203 = vmatprep.subr.mxu0 0.0
  %8204 = vmatpush1.msra.mxu0 0.0
  %8205 = vmatprep.subr.mxu0 0.0
  %8206 = vmatpush1.msra.mxu0 0.0
  %8207 = vmatprep.subr.mxu0 0.0
  %8208 = vmatpush1.msra.mxu0 0.0
  %8209 = vmatprep.subr.mxu0 0.0
  %8210 = vmatpush1.msra.mxu0 0.0
  %8211 = vmatprep.subr.mxu0 0.0
  %8212 = vmatpush1.msra.mxu0 0.0
  %8213 = vmatprep.subr.mxu0 0.0
  %8214 = vmatpush1.msra.mxu0 0.0
  %8215 = vmatprep.subr.mxu0 0.0
  %8216 = vmatpush1.msra.mxu0 0.0
  %8217 = vmatprep.subr.mxu0 0.0
  %8218 = vmatpush1.msra.mxu0 0.0
  %8219 = vmatprep.subr.mxu0 0.0
  %8220 = vmatpush1.msra.mxu0 0.0
  %8221 = vmatprep.subr.mxu0 0.0
  %8222 = vmatpush1.msra.mxu0 0.0
  %8223 = vmatprep.subr.mxu0 0.0
  %8224 = vmatpush1.msra.mxu0 0.0
  %8225 = vmatprep.subr.mxu0 0.0
  %8226 = vmatpush1.msra.mxu0 0.0
  %8227 = vmatprep.subr.mxu0 0.0
  %8228 = vmatpush1.msra.mxu0 0.0
  %8229 = vmatprep.subr.mxu0 0.0
  %8230 = vmatpush1.msra.mxu0 0.0
  %8231 = vmatprep.subr.mxu0 0.0
  %8232 = vmatpush1.msra.mxu0 0.0
  %8233 = vmatprep.subr.mxu0 0.0
  %8234 = vmatpush1.msra.mxu0 0.0
  %8235 = vmatprep.subr.mxu0 0.0
  %8236 = vmatpush1.msra.mxu0 0.0
  %8237 = vmatprep.mubr.f32.mxu0 0.0
  %8238 = vmatmul.mubr.f32.gmra.mrb[0].mxu0 %v8171
  %v8239 = vpop.f32.mrb[0].mxu0
  %v8240 = vadd.f32 0.0, %v8239
  %v8241 = vpop.f32.mrb[0].mxu0
  %8242 = vdwg.mxu0
  %v8243 = vld [vmem:[%s7] sm:$0xff]
  %v8244 = vld [vmem:[%s7 + $0x8] sm:$0xff]
  %s8245 = scalar_lea.vmem %s6, 4
  %v8246 = vld [vmem:[%s8245] sm:$0xf]
  %v8247 = vunpack.c.l.bf16 %v8246
  %v8249 = vsel %vm8169, %v8247, 0
  %8251 = vmatprep.subr.mxu0 0.0
  %8252 = vmatpush1.msra.mxu0 %v8163
  %8253 = vmatprep.subr.mxu0 0.0
  %8254 = vmatpush1.msra.mxu0 %v8164
  %8255 = vmatprep.subr.mxu0 0.0
  %8256 = vmatpush1.msra.mxu0 %v8165
  %8257 = vmatprep.subr.mxu0 0.0
  %8258 = vmatpush1.msra.mxu0 %v8166
  %8259 = vmatprep.subr.mxu0 0.0
  %8260 = vmatpush1.msra.mxu0 0.0
  %8261 = vmatprep.subr.mxu0 0.0
  %8262 = vmatpush1.msra.mxu0 0.0
  %8263 = vmatprep.subr.mxu0 0.0
  %8264 = vmatpush1.msra.mxu0 0.0
  %8265 = vmatprep.subr.mxu0 0.0
  %8266 = vmatpush1.msra.mxu0 0.0
  %8267 = vmatprep.subr.mxu0 0.0
  %8268 = vmatpush1.msra.mxu0 0.0
  %8269 = vmatprep.subr.mxu0 0.0
  %8270 = vmatpush1.msra.mxu0 0.0
  %8271 = vmatprep.subr.mxu0 0.0
  %8272 = vmatpush1.msra.mxu0 0.0
  %8273 = vmatprep.subr.mxu0 0.0
  %8274 = vmatpush1.msra.mxu0 0.0
  %8275 = vmatprep.subr.mxu0 0.0
  %8276 = vmatpush1.msra.mxu0 0.0
  %8277 = vmatprep.subr.mxu0 0.0
  %8278 = vmatpush1.msra.mxu0 0.0
  %8279 = vmatprep.subr.mxu0 0.0
  %8280 = vmatpush1.msra.mxu0 0.0
  %8281 = vmatprep.subr.mxu0 0.0
  %8282 = vmatpush1.msra.mxu0 0.0
  %8283 = vmatprep.subr.mxu0 0.0
  %8284 = vmatpush1.msra.mxu0 0.0
  %8285 = vmatprep.subr.mxu0 0.0
  %8286 = vmatpush1.msra.mxu0 0.0
  %8287 = vmatprep.subr.mxu0 0.0
  %8288 = vmatpush1.msra.mxu0 0.0
  %8289 = vmatprep.subr.mxu0 0.0
  %8290 = vmatpush1.msra.mxu0 0.0
  %8291 = vmatprep.subr.mxu0 0.0
  %8292 = vmatpush1.msra.mxu0 0.0
  %8293 = vmatprep.subr.mxu0 0.0
  %8294 = vmatpush1.msra.mxu0 0.0
  %8295 = vmatprep.subr.mxu0 0.0
  %8296 = vmatpush1.msra.mxu0 0.0
  %8297 = vmatprep.subr.mxu0 0.0
  %8298 = vmatpush1.msra.mxu0 0.0
  %8299 = vmatprep.subr.mxu0 0.0
  %8300 = vmatpush1.msra.mxu0 0.0
  %8301 = vmatprep.subr.mxu0 0.0
  %8302 = vmatpush1.msra.mxu0 0.0
  %8303 = vmatprep.subr.mxu0 0.0
  %8304 = vmatpush1.msra.mxu0 0.0
  %8305 = vmatprep.subr.mxu0 0.0
  %8306 = vmatpush1.msra.mxu0 0.0
  %8307 = vmatprep.subr.mxu0 0.0
  %8308 = vmatpush1.msra.mxu0 0.0
  %8309 = vmatprep.subr.mxu0 0.0
  %8310 = vmatpush1.msra.mxu0 0.0
  %8311 = vmatprep.subr.mxu0 0.0
  %8312 = vmatpush1.msra.mxu0 0.0
  %8313 = vmatprep.subr.mxu0 0.0
  %8314 = vmatpush1.msra.mxu0 0.0
  %8315 = vmatprep.mubr.f32.mxu0 0.0
  %8316 = vmatmul.mubr.f32.gmra.mrb[0].mxu0 %v8249
  %v8317 = vpop.f32.mrb[0].mxu0
  %v8318 = vadd.f32 0.0, %v8317
  %v8319 = vpop.f32.mrb[0].mxu0
  %8320 = vdwg.mxu0
  %s8321 = scalar_lea.vmem %s7, 16
  %v8322 = vld [vmem:[%s8321] sm:$0xff]
  %v8323 = vld [vmem:[%s8321 + $0x8] sm:$0xff]
  %v8325 = vsel %vm8102, %v8318, 0
  %8327 = vmatprep.subr.mxu0 0.0
  %8328 = vmatpush1.msra.mxu0 %v8322
  %8329 = vmatprep.subr.mxu0 0.0
  %8330 = vmatpush1.msra.mxu0 %v8323
  %8331 = vmatprep.subr.mxu0 0.0
  %8332 = vmatpush1.msra.mxu0 0.0
  %8333 = vmatprep.subr.mxu0 0.0
  %8334 = vmatpush1.msra.mxu0 0.0
  %8335 = vmatprep.subr.mxu0 0.0
  %8336 = vmatpush1.msra.mxu0 0.0
  %8337 = vmatprep.subr.mxu0 0.0
  %8338 = vmatpush1.msra.mxu0 0.0
  %8339 = vmatprep.subr.mxu0 0.0
  %8340 = vmatpush1.msra.mxu0 0.0
  %8341 = vmatprep.subr.mxu0 0.0
  %8342 = vmatpush1.msra.mxu0 0.0
  %8343 = vmatprep.subr.mxu0 0.0
  %8344 = vmatpush1.msra.mxu0 0.0
  %8345 = vmatprep.subr.mxu0 0.0
  %8346 = vmatpush1.msra.mxu0 0.0
  %8347 = vmatprep.subr.mxu0 0.0
  %8348 = vmatpush1.msra.mxu0 0.0
  %8349 = vmatprep.subr.mxu0 0.0
  %8350 = vmatpush1.msra.mxu0 0.0
  %8351 = vmatprep.subr.mxu0 0.0
  %8352 = vmatpush1.msra.mxu0 0.0
  %8353 = vmatprep.subr.mxu0 0.0
  %8354 = vmatpush1.msra.mxu0 0.0
  %8355 = vmatprep.subr.mxu0 0.0
  %8356 = vmatpush1.msra.mxu0 0.0
  %8357 = vmatprep.subr.mxu0 0.0
  %8358 = vmatpush1.msra.mxu0 0.0
  %8359 = vmatprep.subr.mxu0 0.0
  %8360 = vmatpush1.msra.mxu0 0.0
  %8361 = vmatprep.subr.mxu0 0.0
  %8362 = vmatpush1.msra.mxu0 0.0
  %8363 = vmatprep.subr.mxu0 0.0
  %8364 = vmatpush1.msra.mxu0 0.0
  %8365 = vmatprep.subr.mxu0 0.0
  %8366 = vmatpush1.msra.mxu0 0.0
  %8367 = vmatprep.subr.mxu0 0.0
  %8368 = vmatpush1.msra.mxu0 0.0
  %8369 = vmatprep.subr.mxu0 0.0
  %8370 = vmatpush1.msra.mxu0 0.0
  %8371 = vmatprep.subr.mxu0 0.0
  %8372 = vmatpush1.msra.mxu0 0.0
  %8373 = vmatprep.subr.mxu0 0.0
  %8374 = vmatpush1.msra.mxu0 0.0
  %8375 = vmatprep.subr.mxu0 0.0
  %8376 = vmatpush1.msra.mxu0 0.0
  %8377 = vmatprep.subr.mxu0 0.0
  %8378 = vmatpush1.msra.mxu0 0.0
  %8379 = vmatprep.subr.mxu0 0.0
  %8380 = vmatpush1.msra.mxu0 0.0
  %8381 = vmatprep.subr.mxu0 0.0
  %8382 = vmatpush1.msra.mxu0 0.0
  %8383 = vmatprep.subr.mxu0 0.0
  %8384 = vmatpush1.msra.mxu0 0.0
  %8385 = vmatprep.subr.mxu0 0.0
  %8386 = vmatpush1.msra.mxu0 0.0
  %8387 = vmatprep.subr.mxu0 0.0
  %8388 = vmatpush1.msra.mxu0 0.0
  %8389 = vmatprep.subr.mxu0 0.0
  %8390 = vmatpush1.msra.mxu0 0.0
  %8391 = vmatprep.mubr.f32.mxu0 0.0
  %8392 = vmatmul.mubr.f32.gmra.mrb[0].mxu0 %v8325
  %v8393 = vpop.f32.mrb[0].mxu0
  %v8394 = vadd.f32 0.0, %v8393
  %v8395 = vpop.f32.mrb[0].mxu0
  %8396 = vdwg.mxu0
  %v8398 = vsel %vm8102, %v8240, 0
  %8400 = vmatprep.subr.mxu0 0.0
  %8401 = vmatpush1.msra.mxu0 %v8243
  %8402 = vmatprep.subr.mxu0 0.0
  %8403 = vmatpush1.msra.mxu0 %v8244
  %8404 = vmatprep.subr.mxu0 0.0
  %8405 = vmatpush1.msra.mxu0 0.0
  %8406 = vmatprep.subr.mxu0 0.0
  %8407 = vmatpush1.msra.mxu0 0.0
  %8408 = vmatprep.subr.mxu0 0.0
  %8409 = vmatpush1.msra.mxu0 0.0
  %8410 = vmatprep.subr.mxu0 0.0
  %8411 = vmatpush1.msra.mxu0 0.0
  %8412 = vmatprep.subr.mxu0 0.0
  %8413 = vmatpush1.msra.mxu0 0.0
  %8414 = vmatprep.subr.mxu0 0.0
  %8415 = vmatpush1.msra.mxu0 0.0
  %8416 = vmatprep.subr.mxu0 0.0
  %8417 = vmatpush1.msra.mxu0 0.0
  %8418 = vmatprep.subr.mxu0 0.0
  %8419 = vmatpush1.msra.mxu0 0.0
  %8420 = vmatprep.subr.mxu0 0.0
  %8421 = vmatpush1.msra.mxu0 0.0
  %8422 = vmatprep.subr.mxu0 0.0
  %8423 = vmatpush1.msra.mxu0 0.0
  %8424 = vmatprep.subr.mxu0 0.0
  %8425 = vmatpush1.msra.mxu0 0.0
  %8426 = vmatprep.subr.mxu0 0.0
  %8427 = vmatpush1.msra.mxu0 0.0
  %8428 = vmatprep.subr.mxu0 0.0
  %8429 = vmatpush1.msra.mxu0 0.0
  %8430 = vmatprep.subr.mxu0 0.0
  %8431 = vmatpush1.msra.mxu0 0.0
  %8432 = vmatprep.subr.mxu0 0.0
  %8433 = vmatpush1.msra.mxu0 0.0
  %8434 = vmatprep.subr.mxu0 0.0
  %8435 = vmatpush1.msra.mxu0 0.0
  %8436 = vmatprep.subr.mxu0 0.0
  %8437 = vmatpush1.msra.mxu0 0.0
  %8438 = vmatprep.subr.mxu0 0.0
  %8439 = vmatpush1.msra.mxu0 0.0
  %8440 = vmatprep.subr.mxu0 0.0
  %8441 = vmatpush1.msra.mxu0 0.0
  %8442 = vmatprep.subr.mxu0 0.0
  %8443 = vmatpush1.msra.mxu0 0.0
  %8444 = vmatprep.subr.mxu0 0.0
  %8445 = vmatpush1.msra.mxu0 0.0
  %8446 = vmatprep.subr.mxu0 0.0
  %8447 = vmatpush1.msra.mxu0 0.0
  %8448 = vmatprep.subr.mxu0 0.0
  %8449 = vmatpush1.msra.mxu0 0.0
  %8450 = vmatprep.subr.mxu0 0.0
  %8451 = vmatpush1.msra.mxu0 0.0
  %8452 = vmatprep.subr.mxu0 0.0
  %8453 = vmatpush1.msra.mxu0 0.0
  %8454 = vmatprep.subr.mxu0 0.0
  %8455 = vmatpush1.msra.mxu0 0.0
  %8456 = vmatprep.subr.mxu0 0.0
  %8457 = vmatpush1.msra.mxu0 0.0
  %8458 = vmatprep.subr.mxu0 0.0
  %8459 = vmatpush1.msra.mxu0 0.0
  %8460 = vmatprep.subr.mxu0 0.0
  %8461 = vmatpush1.msra.mxu0 0.0
  %8462 = vmatprep.subr.mxu0 0.0
  %8463 = vmatpush1.msra.mxu0 0.0
  %8464 = vmatprep.mubr.f32.mxu0 0.0
  %8465 = vmatmul.mubr.f32.gmra.mrb[0].mxu0 %v8398
  %v8466 = vpop.f32.mrb[0].mxu0
  %v8467 = vadd.f32 %v8394, %v8466
  %v8468 = vpop.f32.mrb[0].mxu0
  %8469 = vdwg.mxu0
  %s8470 = scalar_lea.vmem %s6, 8
  %v8471 = vld [vmem:[%s8470] sm:$0xf]
  %v8472 = vunpack.c.l.bf16 %v8471
  %v8474 = vsel %vm8169, %v8472, 0
  %8476 = vmatprep.subr.mxu0 0.0
  %8477 = vmatpush1.msra.mxu0 %v8163
  %8478 = vmatprep.subr.mxu0 0.0
  %8479 = vmatpush1.msra.mxu0 %v8164
  %8480 = vmatprep.subr.mxu0 0.0
  %8481 = vmatpush1.msra.mxu0 %v8165
  %8482 = vmatprep.subr.mxu0 0.0
  %8483 = vmatpush1.msra.mxu0 %v8166
  %8484 = vmatprep.subr.mxu0 0.0
  %8485 = vmatpush1.msra.mxu0 0.0
  %8486 = vmatprep.subr.mxu0 0.0
  %8487 = vmatpush1.msra.mxu0 0.0
  %8488 = vmatprep.subr.mxu0 0.0
  %8489 = vmatpush1.msra.mxu0 0.0
  %8490 = vmatprep.subr.mxu0 0.0
  %8491 = vmatpush1.msra.mxu0 0.0
  %8492 = vmatprep.subr.mxu0 0.0
  %8493 = vmatpush1.msra.mxu0 0.0
  %8494 = vmatprep.subr.mxu0 0.0
  %8495 = vmatpush1.msra.mxu0 0.0
  %8496 = vmatprep.subr.mxu0 0.0
  %8497 = vmatpush1.msra.mxu0 0.0
  %8498 = vmatprep.subr.mxu0 0.0
  %8499 = vmatpush1.msra.mxu0 0.0
  %8500 = vmatprep.subr.mxu0 0.0
  %8501 = vmatpush1.msra.mxu0 0.0
  %8502 = vmatprep.subr.mxu0 0.0
  %8503 = vmatpush1.msra.mxu0 0.0
  %8504 = vmatprep.subr.mxu0 0.0
  %8505 = vmatpush1.msra.mxu0 0.0
  %8506 = vmatprep.subr.mxu0 0.0
  %8507 = vmatpush1.msra.mxu0 0.0
  %8508 = vmatprep.subr.mxu0 0.0
  %8509 = vmatpush1.msra.mxu0 0.0
  %8510 = vmatprep.subr.mxu0 0.0
  %8511 = vmatpush1.msra.mxu0 0.0
  %8512 = vmatprep.subr.mxu0 0.0
  %8513 = vmatpush1.msra.mxu0 0.0
  %8514 = vmatprep.subr.mxu0 0.0
  %8515 = vmatpush1.msra.mxu0 0.0
  %8516 = vmatprep.subr.mxu0 0.0
  %8517 = vmatpush1.msra.mxu0 0.0
  %8518 = vmatprep.subr.mxu0 0.0
  %8519 = vmatpush1.msra.mxu0 0.0
  %8520 = vmatprep.subr.mxu0 0.0
  %8521 = vmatpush1.msra.mxu0 0.0
  %8522 = vmatprep.subr.mxu0 0.0
  %8523 = vmatpush1.msra.mxu0 0.0
  %8524 = vmatprep.subr.mxu0 0.0
  %8525 = vmatpush1.msra.mxu0 0.0
  %8526 = vmatprep.subr.mxu0 0.0
  %8527 = vmatpush1.msra.mxu0 0.0
  %8528 = vmatprep.subr.mxu0 0.0
  %8529 = vmatpush1.msra.mxu0 0.0
  %8530 = vmatprep.subr.mxu0 0.0
  %8531 = vmatpush1.msra.mxu0 0.0
  %8532 = vmatprep.subr.mxu0 0.0
  %8533 = vmatpush1.msra.mxu0 0.0
  %8534 = vmatprep.subr.mxu0 0.0
  %8535 = vmatpush1.msra.mxu0 0.0
  %8536 = vmatprep.subr.mxu0 0.0
  %8537 = vmatpush1.msra.mxu0 0.0
  %8538 = vmatprep.subr.mxu0 0.0
  %8539 = vmatpush1.msra.mxu0 0.0
  %8540 = vmatprep.mubr.f32.mxu0 0.0
  %8541 = vmatmul.mubr.f32.gmra.mrb[0].mxu0 %v8474
  %v8542 = vpop.f32.mrb[0].mxu0
  %v8543 = vadd.f32 0.0, %v8542
  %v8544 = vpop.f32.mrb[0].mxu0
  %8545 = vdwg.mxu0
  %s8546 = scalar_lea.vmem %s7, 32
  %v8547 = vld [vmem:[%s8546] sm:$0xff]
  %v8548 = vld [vmem:[%s8546 + $0x8] sm:$0xff]
  %v8550 = vsel %vm8102, %v8543, 0
  %8552 = vmatprep.subr.mxu0 0.0
  %8553 = vmatpush1.msra.mxu0 %v8547
  %8554 = vmatprep.subr.mxu0 0.0
  %8555 = vmatpush1.msra.mxu0 %v8548
  %8556 = vmatprep.subr.mxu0 0.0
  %8557 = vmatpush1.msra.mxu0 0.0
  %8558 = vmatprep.subr.mxu0 0.0
  %8559 = vmatpush1.msra.mxu0 0.0
  %8560 = vmatprep.subr.mxu0 0.0
  %8561 = vmatpush1.msra.mxu0 0.0
  %8562 = vmatprep.subr.mxu0 0.0
  %8563 = vmatpush1.msra.mxu0 0.0
  %8564 = vmatprep.subr.mxu0 0.0
  %8565 = vmatpush1.msra.mxu0 0.0
  %8566 = vmatprep.subr.mxu0 0.0
  %8567 = vmatpush1.msra.mxu0 0.0
  %8568 = vmatprep.subr.mxu0 0.0
  %8569 = vmatpush1.msra.mxu0 0.0
  %8570 = vmatprep.subr.mxu0 0.0
  %8571 = vmatpush1.msra.mxu0 0.0
  %8572 = vmatprep.subr.mxu0 0.0
  %8573 = vmatpush1.msra.mxu0 0.0
  %8574 = vmatprep.subr.mxu0 0.0
  %8575 = vmatpush1.msra.mxu0 0.0
  %8576 = vmatprep.subr.mxu0 0.0
  %8577 = vmatpush1.msra.mxu0 0.0
  %8578 = vmatprep.subr.mxu0 0.0
  %8579 = vmatpush1.msra.mxu0 0.0
  %8580 = vmatprep.subr.mxu0 0.0
  %8581 = vmatpush1.msra.mxu0 0.0
  %8582 = vmatprep.subr.mxu0 0.0
  %8583 = vmatpush1.msra.mxu0 0.0
  %8584 = vmatprep.subr.mxu0 0.0
  %8585 = vmatpush1.msra.mxu0 0.0
  %8586 = vmatprep.subr.mxu0 0.0
  %8587 = vmatpush1.msra.mxu0 0.0
  %8588 = vmatprep.subr.mxu0 0.0
  %8589 = vmatpush1.msra.mxu0 0.0
  %8590 = vmatprep.subr.mxu0 0.0
  %8591 = vmatpush1.msra.mxu0 0.0
  %8592 = vmatprep.subr.mxu0 0.0
  %8593 = vmatpush1.msra.mxu0 0.0
  %8594 = vmatprep.subr.mxu0 0.0
  %8595 = vmatpush1.msra.mxu0 0.0
  %8596 = vmatprep.subr.mxu0 0.0
  %8597 = vmatpush1.msra.mxu0 0.0
  %8598 = vmatprep.subr.mxu0 0.0
  %8599 = vmatpush1.msra.mxu0 0.0
  %8600 = vmatprep.subr.mxu0 0.0
  %8601 = vmatpush1.msra.mxu0 0.0
  %8602 = vmatprep.subr.mxu0 0.0
  %8603 = vmatpush1.msra.mxu0 0.0
  %8604 = vmatprep.subr.mxu0 0.0
  %8605 = vmatpush1.msra.mxu0 0.0
  %8606 = vmatprep.subr.mxu0 0.0
  %8607 = vmatpush1.msra.mxu0 0.0
  %8608 = vmatprep.subr.mxu0 0.0
  %8609 = vmatpush1.msra.mxu0 0.0
  %8610 = vmatprep.subr.mxu0 0.0
  %8611 = vmatpush1.msra.mxu0 0.0
  %8612 = vmatprep.subr.mxu0 0.0
  %8613 = vmatpush1.msra.mxu0 0.0
  %8614 = vmatprep.subr.mxu0 0.0
  %8615 = vmatpush1.msra.mxu0 0.0
  %8616 = vmatprep.mubr.f32.mxu0 0.0
  %8617 = vmatmul.mubr.f32.gmra.mrb[0].mxu0 %v8550
  %v8618 = vpop.f32.mrb[0].mxu0
  %v8619 = vadd.f32 0.0, %v8618
  %v8620 = vpop.f32.mrb[0].mxu0
  %8621 = vdwg.mxu0
  %v8622 = vadd.f32 %v8467, %v8619
  %s8623 = scalar_lea.vmem %s6, 12
  %v8624 = vld [vmem:[%s8623] sm:$0xf]
  %v8625 = vunpack.c.l.bf16 %v8624
  %v8627 = vsel %vm8169, %v8625, 0
  %8629 = vmatprep.subr.mxu0 0.0
  %8630 = vmatpush1.msra.mxu0 %v8163
  %8631 = vmatprep.subr.mxu0 0.0
  %8632 = vmatpush1.msra.mxu0 %v8164
  %8633 = vmatprep.subr.mxu0 0.0
  %8634 = vmatpush1.msra.mxu0 %v8165
  %8635 = vmatprep.subr.mxu0 0.0
  %8636 = vmatpush1.msra.mxu0 %v8166
  %8637 = vmatprep.subr.mxu0 0.0
  %8638 = vmatpush1.msra.mxu0 0.0
  %8639 = vmatprep.subr.mxu0 0.0
  %8640 = vmatpush1.msra.mxu0 0.0
  %8641 = vmatprep.subr.mxu0 0.0
  %8642 = vmatpush1.msra.mxu0 0.0
  %8643 = vmatprep.subr.mxu0 0.0
  %8644 = vmatpush1.msra.mxu0 0.0
  %8645 = vmatprep.subr.mxu0 0.0
  %8646 = vmatpush1.msra.mxu0 0.0
  %8647 = vmatprep.subr.mxu0 0.0
  %8648 = vmatpush1.msra.mxu0 0.0
  %8649 = vmatprep.subr.mxu0 0.0
  %8650 = vmatpush1.msra.mxu0 0.0
  %8651 = vmatprep.subr.mxu0 0.0
  %8652 = vmatpush1.msra.mxu0 0.0
  %8653 = vmatprep.subr.mxu0 0.0
  %8654 = vmatpush1.msra.mxu0 0.0
  %8655 = vmatprep.subr.mxu0 0.0
  %8656 = vmatpush1.msra.mxu0 0.0
  %8657 = vmatprep.subr.mxu0 0.0
  %8658 = vmatpush1.msra.mxu0 0.0
  %8659 = vmatprep.subr.mxu0 0.0
  %8660 = vmatpush1.msra.mxu0 0.0
  %8661 = vmatprep.subr.mxu0 0.0
  %8662 = vmatpush1.msra.mxu0 0.0
  %8663 = vmatprep.subr.mxu0 0.0
  %8664 = vmatpush1.msra.mxu0 0.0
  %8665 = vmatprep.subr.mxu0 0.0
  %8666 = vmatpush1.msra.mxu0 0.0
  %8667 = vmatprep.subr.mxu0 0.0
  %8668 = vmatpush1.msra.mxu0 0.0
  %8669 = vmatprep.subr.mxu0 0.0
  %8670 = vmatpush1.msra.mxu0 0.0
  %8671 = vmatprep.subr.mxu0 0.0
  %8672 = vmatpush1.msra.mxu0 0.0
  %8673 = vmatprep.subr.mxu0 0.0
  %8674 = vmatpush1.msra.mxu0 0.0
  %8675 = vmatprep.subr.mxu0 0.0
  %8676 = vmatpush1.msra.mxu0 0.0
  %8677 = vmatprep.subr.mxu0 0.0
  %8678 = vmatpush1.msra.mxu0 0.0
  %8679 = vmatprep.subr.mxu0 0.0
  %8680 = vmatpush1.msra.mxu0 0.0
  %8681 = vmatprep.subr.mxu0 0.0
  %8682 = vmatpush1.msra.mxu0 0.0
  %8683 = vmatprep.subr.mxu0 0.0
  %8684 = vmatpush1.msra.mxu0 0.0
  %8685 = vmatprep.subr.mxu0 0.0
  %8686 = vmatpush1.msra.mxu0 0.0
  %8687 = vmatprep.subr.mxu0 0.0
  %8688 = vmatpush1.msra.mxu0 0.0
  %8689 = vmatprep.subr.mxu0 0.0
  %8690 = vmatpush1.msra.mxu0 0.0
  %8691 = vmatprep.subr.mxu0 0.0
  %8692 = vmatpush1.msra.mxu0 0.0
  %8693 = vmatprep.mubr.f32.mxu0 0.0
  %8694 = vmatmul.mubr.f32.gmra.mrb[0].mxu0 %v8627
  %v8695 = vpop.f32.mrb[0].mxu0
  %v8696 = vadd.f32 0.0, %v8695
  %v8697 = vpop.f32.mrb[0].mxu0
  %8698 = vdwg.mxu0
  %s8699 = scalar_lea.vmem %s7, 48
  %v8700 = vld [vmem:[%s8699] sm:$0xff]
  %v8701 = vld [vmem:[%s8699 + $0x8] sm:$0xff]
  %v8703 = vsel %vm8102, %v8696, 0
  %8705 = vmatprep.subr.mxu0 0.0
  %8706 = vmatpush1.msra.mxu0 %v8700
  %8707 = vmatprep.subr.mxu0 0.0
  %8708 = vmatpush1.msra.mxu0 %v8701
  %8709 = vmatprep.subr.mxu0 0.0
  %8710 = vmatpush1.msra.mxu0 0.0
  %8711 = vmatprep.subr.mxu0 0.0
  %8712 = vmatpush1.msra.mxu0 0.0
  %8713 = vmatprep.subr.mxu0 0.0
  %8714 = vmatpush1.msra.mxu0 0.0
  %8715 = vmatprep.subr.mxu0 0.0
  %8716 = vmatpush1.msra.mxu0 0.0
  %8717 = vmatprep.subr.mxu0 0.0
  %8718 = vmatpush1.msra.mxu0 0.0
  %8719 = vmatprep.subr.mxu0 0.0
  %8720 = vmatpush1.msra.mxu0 0.0
  %8721 = vmatprep.subr.mxu0 0.0
  %8722 = vmatpush1.msra.mxu0 0.0
  %8723 = vmatprep.subr.mxu0 0.0
  %8724 = vmatpush1.msra.mxu0 0.0
  %8725 = vmatprep.subr.mxu0 0.0
  %8726 = vmatpush1.msra.mxu0 0.0
  %8727 = vmatprep.subr.mxu0 0.0
  %8728 = vmatpush1.msra.mxu0 0.0
  %8729 = vmatprep.subr.mxu0 0.0
  %8730 = vmatpush1.msra.mxu0 0.0
  %8731 = vmatprep.subr.mxu0 0.0
  %8732 = vmatpush1.msra.mxu0 0.0
  %8733 = vmatprep.subr.mxu0 0.0
  %8734 = vmatpush1.msra.mxu0 0.0
  %8735 = vmatprep.subr.mxu0 0.0
  %8736 = vmatpush1.msra.mxu0 0.0
  %8737 = vmatprep.subr.mxu0 0.0
  %8738 = vmatpush1.msra.mxu0 0.0
  %8739 = vmatprep.subr.mxu0 0.0
  %8740 = vmatpush1.msra.mxu0 0.0
  %8741 = vmatprep.subr.mxu0 0.0
  %8742 = vmatpush1.msra.mxu0 0.0
  %8743 = vmatprep.subr.mxu0 0.0
  %8744 = vmatpush1.msra.mxu0 0.0
  %8745 = vmatprep.subr.mxu0 0.0
  %8746 = vmatpush1.msra.mxu0 0.0
  %8747 = vmatprep.subr.mxu0 0.0
  %8748 = vmatpush1.msra.mxu0 0.0
  %8749 = vmatprep.subr.mxu0 0.0
  %8750 = vmatpush1.msra.mxu0 0.0
  %8751 = vmatprep.subr.mxu0 0.0
  %8752 = vmatpush1.msra.mxu0 0.0
  %8753 = vmatprep.subr.mxu0 0.0
  %8754 = vmatpush1.msra.mxu0 0.0
  %8755 = vmatprep.subr.mxu0 0.0
  %8756 = vmatpush1.msra.mxu0 0.0
  %8757 = vmatprep.subr.mxu0 0.0
  %8758 = vmatpush1.msra.mxu0 0.0
  %8759 = vmatprep.subr.mxu0 0.0
  %8760 = vmatpush1.msra.mxu0 0.0
  %8761 = vmatprep.subr.mxu0 0.0
  %8762 = vmatpush1.msra.mxu0 0.0
  %8763 = vmatprep.subr.mxu0 0.0
  %8764 = vmatpush1.msra.mxu0 0.0
  %8765 = vmatprep.subr.mxu0 0.0
  %8766 = vmatpush1.msra.mxu0 0.0
  %8767 = vmatprep.subr.mxu0 0.0
  %8768 = vmatpush1.msra.mxu0 0.0
  %8769 = vmatprep.mubr.f32.mxu0 0.0
  %8770 = vmatmul.mubr.f32.gmra.mrb[0].mxu0 %v8703
  %v8771 = vpop.f32.mrb[0].mxu0
  %v8772 = vadd.f32 0.0, %v8771
  %v8773 = vpop.f32.mrb[0].mxu0
  %8774 = vdwg.mxu0
  %v8775 = vadd.f32 %v8622, %v8772
  %s8776 = scalar_lea.vmem %s6, 16
  %v8777 = vld [vmem:[%s8776] sm:$0xf]
  %v8778 = vunpack.c.l.bf16 %v8777
  %v8780 = vsel %vm8169, %v8778, 0
  %8782 = vmatprep.subr.mxu0 0.0
  %8783 = vmatpush1.msra.mxu0 %v8163
  %8784 = vmatprep.subr.mxu0 0.0
  %8785 = vmatpush1.msra.mxu0 %v8164
  %8786 = vmatprep.subr.mxu0 0.0
  %8787 = vmatpush1.msra.mxu0 %v8165
  %8788 = vmatprep.subr.mxu0 0.0
  %8789 = vmatpush1.msra.mxu0 %v8166
  %8790 = vmatprep.subr.mxu0 0.0
  %8791 = vmatpush1.msra.mxu0 0.0
  %8792 = vmatprep.subr.mxu0 0.0
  %8793 = vmatpush1.msra.mxu0 0.0
  %8794 = vmatprep.subr.mxu0 0.0
  %8795 = vmatpush1.msra.mxu0 0.0
  %8796 = vmatprep.subr.mxu0 0.0
  %8797 = vmatpush1.msra.mxu0 0.0
  %8798 = vmatprep.subr.mxu0 0.0
  %8799 = vmatpush1.msra.mxu0 0.0
  %8800 = vmatprep.subr.mxu0 0.0
  %8801 = vmatpush1.msra.mxu0 0.0
  %8802 = vmatprep.subr.mxu0 0.0
  %8803 = vmatpush1.msra.mxu0 0.0
  %8804 = vmatprep.subr.mxu0 0.0
  %8805 = vmatpush1.msra.mxu0 0.0
  %8806 = vmatprep.subr.mxu0 0.0
  %8807 = vmatpush1.msra.mxu0 0.0
  %8808 = vmatprep.subr.mxu0 0.0
  %8809 = vmatpush1.msra.mxu0 0.0
  %8810 = vmatprep.subr.mxu0 0.0
  %8811 = vmatpush1.msra.mxu0 0.0
  %8812 = vmatprep.subr.mxu0 0.0
  %8813 = vmatpush1.msra.mxu0 0.0
  %8814 = vmatprep.subr.mxu0 0.0
  %8815 = vmatpush1.msra.mxu0 0.0
  %8816 = vmatprep.subr.mxu0 0.0
  %8817 = vmatpush1.msra.mxu0 0.0
  %8818 = vmatprep.subr.mxu0 0.0
  %8819 = vmatpush1.msra.mxu0 0.0
  %8820 = vmatprep.subr.mxu0 0.0
  %8821 = vmatpush1.msra.mxu0 0.0
  %8822 = vmatprep.subr.mxu0 0.0
  %8823 = vmatpush1.msra.mxu0 0.0
  %8824 = vmatprep.subr.mxu0 0.0
  %8825 = vmatpush1.msra.mxu0 0.0
  %8826 = vmatprep.subr.mxu0 0.0
  %8827 = vmatpush1.msra.mxu0 0.0
  %8828 = vmatprep.subr.mxu0 0.0
  %8829 = vmatpush1.msra.mxu0 0.0
  %8830 = vmatprep.subr.mxu0 0.0
  %8831 = vmatpush1.msra.mxu0 0.0
  %8832 = vmatprep.subr.mxu0 0.0
  %8833 = vmatpush1.msra.mxu0 0.0
  %8834 = vmatprep.subr.mxu0 0.0
  %8835 = vmatpush1.msra.mxu0 0.0
  %8836 = vmatprep.subr.mxu0 0.0
  %8837 = vmatpush1.msra.mxu0 0.0
  %8838 = vmatprep.subr.mxu0 0.0
  %8839 = vmatpush1.msra.mxu0 0.0
  %8840 = vmatprep.subr.mxu0 0.0
  %8841 = vmatpush1.msra.mxu0 0.0
  %8842 = vmatprep.subr.mxu0 0.0
  %8843 = vmatpush1.msra.mxu0 0.0
  %8844 = vmatprep.subr.mxu0 0.0
  %8845 = vmatpush1.msra.mxu0 0.0
  %8846 = vmatprep.mubr.f32.mxu0 0.0
  %8847 = vmatmul.mubr.f32.gmra.mrb[0].mxu0 %v8780
  %v8848 = vpop.f32.mrb[0].mxu0
  %v8849 = vadd.f32 0.0, %v8848
  %v8850 = vpop.f32.mrb[0].mxu0
  %8851 = vdwg.mxu0
  %s8852 = scalar_lea.vmem %s7, 64
  %v8853 = vld [vmem:[%s8852] sm:$0xff]
  %v8854 = vld [vmem:[%s8852 + $0x8] sm:$0xff]
  %v8856 = vsel %vm8102, %v8849, 0
  %8858 = vmatprep.subr.mxu0 0.0
  %8859 = vmatpush1.msra.mxu0 %v8853
  %8860 = vmatprep.subr.mxu0 0.0
  %8861 = vmatpush1.msra.mxu0 %v8854
  %8862 = vmatprep.subr.mxu0 0.0
  %8863 = vmatpush1.msra.mxu0 0.0
  %8864 = vmatprep.subr.mxu0 0.0
  %8865 = vmatpush1.msra.mxu0 0.0
  %8866 = vmatprep.subr.mxu0 0.0
  %8867 = vmatpush1.msra.mxu0 0.0
  %8868 = vmatprep.subr.mxu0 0.0
  %8869 = vmatpush1.msra.mxu0 0.0
  %8870 = vmatprep.subr.mxu0 0.0
  %8871 = vmatpush1.msra.mxu0 0.0
  %8872 = vmatprep.subr.mxu0 0.0
  %8873 = vmatpush1.msra.mxu0 0.0
  %8874 = vmatprep.subr.mxu0 0.0
  %8875 = vmatpush1.msra.mxu0 0.0
  %8876 = vmatprep.subr.mxu0 0.0
  %8877 = vmatpush1.msra.mxu0 0.0
  %8878 = vmatprep.subr.mxu0 0.0
  %8879 = vmatpush1.msra.mxu0 0.0
  %8880 = vmatprep.subr.mxu0 0.0
  %8881 = vmatpush1.msra.mxu0 0.0
  %8882 = vmatprep.subr.mxu0 0.0
  %8883 = vmatpush1.msra.mxu0 0.0
  %8884 = vmatprep.subr.mxu0 0.0
  %8885 = vmatpush1.msra.mxu0 0.0
  %8886 = vmatprep.subr.mxu0 0.0
  %8887 = vmatpush1.msra.mxu0 0.0
  %8888 = vmatprep.subr.mxu0 0.0
  %8889 = vmatpush1.msra.mxu0 0.0
  %8890 = vmatprep.subr.mxu0 0.0
  %8891 = vmatpush1.msra.mxu0 0.0
  %8892 = vmatprep.subr.mxu0 0.0
  %8893 = vmatpush1.msra.mxu0 0.0
  %8894 = vmatprep.subr.mxu0 0.0
  %8895 = vmatpush1.msra.mxu0 0.0
  %8896 = vmatprep.subr.mxu0 0.0
  %8897 = vmatpush1.msra.mxu0 0.0
  %8898 = vmatprep.subr.mxu0 0.0
  %8899 = vmatpush1.msra.mxu0 0.0
  %8900 = vmatprep.subr.mxu0 0.0
  %8901 = vmatpush1.msra.mxu0 0.0
  %8902 = vmatprep.subr.mxu0 0.0
  %8903 = vmatpush1.msra.mxu0 0.0
  %8904 = vmatprep.subr.mxu0 0.0
  %8905 = vmatpush1.msra.mxu0 0.0
  %8906 = vmatprep.subr.mxu0 0.0
  %8907 = vmatpush1.msra.mxu0 0.0
  %8908 = vmatprep.subr.mxu0 0.0
  %8909 = vmatpush1.msra.mxu0 0.0
  %8910 = vmatprep.subr.mxu0 0.0
  %8911 = vmatpush1.msra.mxu0 0.0
  %8912 = vmatprep.subr.mxu0 0.0
  %8913 = vmatpush1.msra.mxu0 0.0
  %8914 = vmatprep.subr.mxu0 0.0
  %8915 = vmatpush1.msra.mxu0 0.0
  %8916 = vmatprep.subr.mxu0 0.0
  %8917 = vmatpush1.msra.mxu0 0.0
  %8918 = vmatprep.subr.mxu0 0.0
  %8919 = vmatpush1.msra.mxu0 0.0
  %8920 = vmatprep.subr.mxu0 0.0
  %8921 = vmatpush1.msra.mxu0 0.0
  %8922 = vmatprep.mubr.f32.mxu0 0.0
  %8923 = vmatmul.mubr.f32.gmra.mrb[0].mxu0 %v8856
  %v8924 = vpop.f32.mrb[0].mxu0
  %v8925 = vadd.f32 0.0, %v8924
  %v8926 = vpop.f32.mrb[0].mxu0
  %8927 = vdwg.mxu0
  %v8928 = vadd.f32 %v8775, %v8925
  %s8929 = scalar_lea.vmem %s6, 20
  %v8930 = vld [vmem:[%s8929] sm:$0xf]
  %v8931 = vunpack.c.l.bf16 %v8930
  %v8933 = vsel %vm8169, %v8931, 0
  %8935 = vmatprep.subr.mxu0 0.0
  %8936 = vmatpush1.msra.mxu0 %v8163
  %8937 = vmatprep.subr.mxu0 0.0
  %8938 = vmatpush1.msra.mxu0 %v8164
  %8939 = vmatprep.subr.mxu0 0.0
  %8940 = vmatpush1.msra.mxu0 %v8165
  %8941 = vmatprep.subr.mxu0 0.0
  %8942 = vmatpush1.msra.mxu0 %v8166
  %8943 = vmatprep.subr.mxu0 0.0
  %8944 = vmatpush1.msra.mxu0 0.0
  %8945 = vmatprep.subr.mxu0 0.0
  %8946 = vmatpush1.msra.mxu0 0.0
  %8947 = vmatprep.subr.mxu0 0.0
  %8948 = vmatpush1.msra.mxu0 0.0
  %8949 = vmatprep.subr.mxu0 0.0
  %8950 = vmatpush1.msra.mxu0 0.0
  %8951 = vmatprep.subr.mxu0 0.0
  %8952 = vmatpush1.msra.mxu0 0.0
  %8953 = vmatprep.subr.mxu0 0.0
  %8954 = vmatpush1.msra.mxu0 0.0
  %8955 = vmatprep.subr.mxu0 0.0
  %8956 = vmatpush1.msra.mxu0 0.0
  %8957 = vmatprep.subr.mxu0 0.0
  %8958 = vmatpush1.msra.mxu0 0.0
  %8959 = vmatprep.subr.mxu0 0.0
  %8960 = vmatpush1.msra.mxu0 0.0
  %8961 = vmatprep.subr.mxu0 0.0
  %8962 = vmatpush1.msra.mxu0 0.0
  %8963 = vmatprep.subr.mxu0 0.0
  %8964 = vmatpush1.msra.mxu0 0.0
  %8965 = vmatprep.subr.mxu0 0.0
  %8966 = vmatpush1.msra.mxu0 0.0
  %8967 = vmatprep.subr.mxu0 0.0
  %8968 = vmatpush1.msra.mxu0 0.0
  %8969 = vmatprep.subr.mxu0 0.0
  %8970 = vmatpush1.msra.mxu0 0.0
  %8971 = vmatprep.subr.mxu0 0.0
  %8972 = vmatpush1.msra.mxu0 0.0
  %8973 = vmatprep.subr.mxu0 0.0
  %8974 = vmatpush1.msra.mxu0 0.0
  %8975 = vmatprep.subr.mxu0 0.0
  %8976 = vmatpush1.msra.mxu0 0.0
  %8977 = vmatprep.subr.mxu0 0.0
  %8978 = vmatpush1.msra.mxu0 0.0
  %8979 = vmatprep.subr.mxu0 0.0
  %8980 = vmatpush1.msra.mxu0 0.0
  %8981 = vmatprep.subr.mxu0 0.0
  %8982 = vmatpush1.msra.mxu0 0.0
  %8983 = vmatprep.subr.mxu0 0.0
  %8984 = vmatpush1.msra.mxu0 0.0
  %8985 = vmatprep.subr.mxu0 0.0
  %8986 = vmatpush1.msra.mxu0 0.0
  %8987 = vmatprep.subr.mxu0 0.0
  %8988 = vmatpush1.msra.mxu0 0.0
  %8989 = vmatprep.subr.mxu0 0.0
  %8990 = vmatpush1.msra.mxu0 0.0
  %8991 = vmatprep.subr.mxu0 0.0
  %8992 = vmatpush1.msra.mxu0 0.0
  %8993 = vmatprep.subr.mxu0 0.0
  %8994 = vmatpush1.msra.mxu0 0.0
  %8995 = vmatprep.subr.mxu0 0.0
  %8996 = vmatpush1.msra.mxu0 0.0
  %8997 = vmatprep.subr.mxu0 0.0
  %8998 = vmatpush1.msra.mxu0 0.0
  %8999 = vmatprep.mubr.f32.mxu0 0.0
  %9000 = vmatmul.mubr.f32.gmra.mrb[0].mxu0 %v8933
  %v9001 = vpop.f32.mrb[0].mxu0
  %v9002 = vadd.f32 0.0, %v9001
  %v9003 = vpop.f32.mrb[0].mxu0
  %9004 = vdwg.mxu0
  %s9005 = scalar_lea.vmem %s7, 80
  %v9006 = vld [vmem:[%s9005] sm:$0xff]
  %v9007 = vld [vmem:[%s9005 + $0x8] sm:$0xff]
  %v9009 = vsel %vm8102, %v9002, 0
  %9011 = vmatprep.subr.mxu0 0.0
  %9012 = vmatpush1.msra.mxu0 %v9006
  %9013 = vmatprep.subr.mxu0 0.0
  %9014 = vmatpush1.msra.mxu0 %v9007
  %9015 = vmatprep.subr.mxu0 0.0
  %9016 = vmatpush1.msra.mxu0 0.0
  %9017 = vmatprep.subr.mxu0 0.0
  %9018 = vmatpush1.msra.mxu0 0.0
  %9019 = vmatprep.subr.mxu0 0.0
  %9020 = vmatpush1.msra.mxu0 0.0
  %9021 = vmatprep.subr.mxu0 0.0
  %9022 = vmatpush1.msra.mxu0 0.0
  %9023 = vmatprep.subr.mxu0 0.0
  %9024 = vmatpush1.msra.mxu0 0.0
  %9025 = vmatprep.subr.mxu0 0.0
  %9026 = vmatpush1.msra.mxu0 0.0
  %9027 = vmatprep.subr.mxu0 0.0
  %9028 = vmatpush1.msra.mxu0 0.0
  %9029 = vmatprep.subr.mxu0 0.0
  %9030 = vmatpush1.msra.mxu0 0.0
  %9031 = vmatprep.subr.mxu0 0.0
  %9032 = vmatpush1.msra.mxu0 0.0
  %9033 = vmatprep.subr.mxu0 0.0
  %9034 = vmatpush1.msra.mxu0 0.0
  %9035 = vmatprep.subr.mxu0 0.0
  %9036 = vmatpush1.msra.mxu0 0.0
  %9037 = vmatprep.subr.mxu0 0.0
  %9038 = vmatpush1.msra.mxu0 0.0
  %9039 = vmatprep.subr.mxu0 0.0
  %9040 = vmatpush1.msra.mxu0 0.0
  %9041 = vmatprep.subr.mxu0 0.0
  %9042 = vmatpush1.msra.mxu0 0.0
  %9043 = vmatprep.subr.mxu0 0.0
  %9044 = vmatpush1.msra.mxu0 0.0
  %9045 = vmatprep.subr.mxu0 0.0
  %9046 = vmatpush1.msra.mxu0 0.0
  %9047 = vmatprep.subr.mxu0 0.0
  %9048 = vmatpush1.msra.mxu0 0.0
  %9049 = vmatprep.subr.mxu0 0.0
  %9050 = vmatpush1.msra.mxu0 0.0
  %9051 = vmatprep.subr.mxu0 0.0
  %9052 = vmatpush1.msra.mxu0 0.0
  %9053 = vmatprep.subr.mxu0 0.0
  %9054 = vmatpush1.msra.mxu0 0.0
  %9055 = vmatprep.subr.mxu0 0.0
  %9056 = vmatpush1.msra.mxu0 0.0
  %9057 = vmatprep.subr.mxu0 0.0
  %9058 = vmatpush1.msra.mxu0 0.0
  %9059 = vmatprep.subr.mxu0 0.0
  %9060 = vmatpush1.msra.mxu0 0.0
  %9061 = vmatprep.subr.mxu0 0.0
  %9062 = vmatpush1.msra.mxu0 0.0
  %9063 = vmatprep.subr.mxu0 0.0
  %9064 = vmatpush1.msra.mxu0 0.0
  %9065 = vmatprep.subr.mxu0 0.0
  %9066 = vmatpush1.msra.mxu0 0.0
  %9067 = vmatprep.subr.mxu0 0.0
  %9068 = vmatpush1.msra.mxu0 0.0
  %9069 = vmatprep.subr.mxu0 0.0
  %9070 = vmatpush1.msra.mxu0 0.0
  %9071 = vmatprep.subr.mxu0 0.0
  %9072 = vmatpush1.msra.mxu0 0.0
  %9073 = vmatprep.subr.mxu0 0.0
  %9074 = vmatpush1.msra.mxu0 0.0
  %9075 = vmatprep.mubr.f32.mxu0 0.0
  %9076 = vmatmul.mubr.f32.gmra.mrb[0].mxu0 %v9009
  %v9077 = vpop.f32.mrb[0].mxu0
  %v9078 = vadd.f32 0.0, %v9077
  %v9079 = vpop.f32.mrb[0].mxu0
  %9080 = vdwg.mxu0
  %v9081 = vadd.f32 %v8928, %v9078
  %s9082 = scalar_lea.vmem %s6, 24
  %v9083 = vld [vmem:[%s9082] sm:$0xf]
  %v9084 = vunpack.c.l.bf16 %v9083
  %v9086 = vsel %vm8169, %v9084, 0
  %9088 = vmatprep.subr.mxu0 0.0
  %9089 = vmatpush1.msra.mxu0 %v8163
  %9090 = vmatprep.subr.mxu0 0.0
  %9091 = vmatpush1.msra.mxu0 %v8164
  %9092 = vmatprep.subr.mxu0 0.0
  %9093 = vmatpush1.msra.mxu0 %v8165
  %9094 = vmatprep.subr.mxu0 0.0
  %9095 = vmatpush1.msra.mxu0 %v8166
  %9096 = vmatprep.subr.mxu0 0.0
  %9097 = vmatpush1.msra.mxu0 0.0
  %9098 = vmatprep.subr.mxu0 0.0
  %9099 = vmatpush1.msra.mxu0 0.0
  %9100 = vmatprep.subr.mxu0 0.0
  %9101 = vmatpush1.msra.mxu0 0.0
  %9102 = vmatprep.subr.mxu0 0.0
  %9103 = vmatpush1.msra.mxu0 0.0
  %9104 = vmatprep.subr.mxu0 0.0
  %9105 = vmatpush1.msra.mxu0 0.0
  %9106 = vmatprep.subr.mxu0 0.0
  %9107 = vmatpush1.msra.mxu0 0.0
  %9108 = vmatprep.subr.mxu0 0.0
  %9109 = vmatpush1.msra.mxu0 0.0
  %9110 = vmatprep.subr.mxu0 0.0
  %9111 = vmatpush1.msra.mxu0 0.0
  %9112 = vmatprep.subr.mxu0 0.0
  %9113 = vmatpush1.msra.mxu0 0.0
  %9114 = vmatprep.subr.mxu0 0.0
  %9115 = vmatpush1.msra.mxu0 0.0
  %9116 = vmatprep.subr.mxu0 0.0
  %9117 = vmatpush1.msra.mxu0 0.0
  %9118 = vmatprep.subr.mxu0 0.0
  %9119 = vmatpush1.msra.mxu0 0.0
  %9120 = vmatprep.subr.mxu0 0.0
  %9121 = vmatpush1.msra.mxu0 0.0
  %9122 = vmatprep.subr.mxu0 0.0
  %9123 = vmatpush1.msra.mxu0 0.0
  %9124 = vmatprep.subr.mxu0 0.0
  %9125 = vmatpush1.msra.mxu0 0.0
  %9126 = vmatprep.subr.mxu0 0.0
  %9127 = vmatpush1.msra.mxu0 0.0
  %9128 = vmatprep.subr.mxu0 0.0
  %9129 = vmatpush1.msra.mxu0 0.0
  %9130 = vmatprep.subr.mxu0 0.0
  %9131 = vmatpush1.msra.mxu0 0.0
  %9132 = vmatprep.subr.mxu0 0.0
  %9133 = vmatpush1.msra.mxu0 0.0
  %9134 = vmatprep.subr.mxu0 0.0
  %9135 = vmatpush1.msra.mxu0 0.0
  %9136 = vmatprep.subr.mxu0 0.0
  %9137 = vmatpush1.msra.mxu0 0.0
  %9138 = vmatprep.subr.mxu0 0.0
  %9139 = vmatpush1.msra.mxu0 0.0
  %9140 = vmatprep.subr.mxu0 0.0
  %9141 = vmatpush1.msra.mxu0 0.0
  %9142 = vmatprep.subr.mxu0 0.0
  %9143 = vmatpush1.msra.mxu0 0.0
  %9144 = vmatprep.subr.mxu0 0.0
  %9145 = vmatpush1.msra.mxu0 0.0
  %9146 = vmatprep.subr.mxu0 0.0
  %9147 = vmatpush1.msra.mxu0 0.0
  %9148 = vmatprep.subr.mxu0 0.0
  %9149 = vmatpush1.msra.mxu0 0.0
  %9150 = vmatprep.subr.mxu0 0.0
  %9151 = vmatpush1.msra.mxu0 0.0
  %9152 = vmatprep.mubr.f32.mxu0 0.0
  %9153 = vmatmul.mubr.f32.gmra.mrb[0].mxu0 %v9086
  %v9154 = vpop.f32.mrb[0].mxu0
  %v9155 = vadd.f32 0.0, %v9154
  %v9156 = vpop.f32.mrb[0].mxu0
  %9157 = vdwg.mxu0
  %s9158 = scalar_lea.vmem %s7, 96
  %v9159 = vld [vmem:[%s9158] sm:$0xff]
  %v9160 = vld [vmem:[%s9158 + $0x8] sm:$0xff]
  %v9162 = vsel %vm8102, %v9155, 0
  %9164 = vmatprep.subr.mxu0 0.0
  %9165 = vmatpush1.msra.mxu0 %v9159
  %9166 = vmatprep.subr.mxu0 0.0
  %9167 = vmatpush1.msra.mxu0 %v9160
  %9168 = vmatprep.subr.mxu0 0.0
  %9169 = vmatpush1.msra.mxu0 0.0
  %9170 = vmatprep.subr.mxu0 0.0
  %9171 = vmatpush1.msra.mxu0 0.0
  %9172 = vmatprep.subr.mxu0 0.0
  %9173 = vmatpush1.msra.mxu0 0.0
  %9174 = vmatprep.subr.mxu0 0.0
  %9175 = vmatpush1.msra.mxu0 0.0
  %9176 = vmatprep.subr.mxu0 0.0
  %9177 = vmatpush1.msra.mxu0 0.0
  %9178 = vmatprep.subr.mxu0 0.0
  %9179 = vmatpush1.msra.mxu0 0.0
  %9180 = vmatprep.subr.mxu0 0.0
  %9181 = vmatpush1.msra.mxu0 0.0
  %9182 = vmatprep.subr.mxu0 0.0
  %9183 = vmatpush1.msra.mxu0 0.0
  %9184 = vmatprep.subr.mxu0 0.0
  %9185 = vmatpush1.msra.mxu0 0.0
  %9186 = vmatprep.subr.mxu0 0.0
  %9187 = vmatpush1.msra.mxu0 0.0
  %9188 = vmatprep.subr.mxu0 0.0
  %9189 = vmatpush1.msra.mxu0 0.0
  %9190 = vmatprep.subr.mxu0 0.0
  %9191 = vmatpush1.msra.mxu0 0.0
  %9192 = vmatprep.subr.mxu0 0.0
  %9193 = vmatpush1.msra.mxu0 0.0
  %9194 = vmatprep.subr.mxu0 0.0
  %9195 = vmatpush1.msra.mxu0 0.0
  %9196 = vmatprep.subr.mxu0 0.0
  %9197 = vmatpush1.msra.mxu0 0.0
  %9198 = vmatprep.subr.mxu0 0.0
  %9199 = vmatpush1.msra.mxu0 0.0
  %9200 = vmatprep.subr.mxu0 0.0
  %9201 = vmatpush1.msra.mxu0 0.0
  %9202 = vmatprep.subr.mxu0 0.0
  %9203 = vmatpush1.msra.mxu0 0.0
  %9204 = vmatprep.subr.mxu0 0.0
  %9205 = vmatpush1.msra.mxu0 0.0
  %9206 = vmatprep.subr.mxu0 0.0
  %9207 = vmatpush1.msra.mxu0 0.0
  %9208 = vmatprep.subr.mxu0 0.0
  %9209 = vmatpush1.msra.mxu0 0.0
  %9210 = vmatprep.subr.mxu0 0.0
  %9211 = vmatpush1.msra.mxu0 0.0
  %9212 = vmatprep.subr.mxu0 0.0
  %9213 = vmatpush1.msra.mxu0 0.0
  %9214 = vmatprep.subr.mxu0 0.0
  %9215 = vmatpush1.msra.mxu0 0.0
  %9216 = vmatprep.subr.mxu0 0.0
  %9217 = vmatpush1.msra.mxu0 0.0
  %9218 = vmatprep.subr.mxu0 0.0
  %9219 = vmatpush1.msra.mxu0 0.0
  %9220 = vmatprep.subr.mxu0 0.0
  %9221 = vmatpush1.msra.mxu0 0.0
  %9222 = vmatprep.subr.mxu0 0.0
  %9223 = vmatpush1.msra.mxu0 0.0
  %9224 = vmatprep.subr.mxu0 0.0
  %9225 = vmatpush1.msra.mxu0 0.0
  %9226 = vmatprep.subr.mxu0 0.0
  %9227 = vmatpush1.msra.mxu0 0.0
  %9228 = vmatprep.mubr.f32.mxu0 0.0
  %9229 = vmatmul.mubr.f32.gmra.mrb[0].mxu0 %v9162
  %v9230 = vpop.f32.mrb[0].mxu0
  %v9231 = vadd.f32 0.0, %v9230
  %v9232 = vpop.f32.mrb[0].mxu0
  %9233 = vdwg.mxu0
  %v9234 = vadd.f32 %v9081, %v9231
  %s9235 = scalar_lea.vmem %s6, 28
  %v9236 = vld [vmem:[%s9235] sm:$0xf]
  %v9237 = vunpack.c.l.bf16 %v9236
  %v9239 = vsel %vm8169, %v9237, 0
  %9241 = vmatprep.subr.mxu0 0.0
  %9242 = vmatpush1.msra.mxu0 %v8163
  %9243 = vmatprep.subr.mxu0 0.0
  %9244 = vmatpush1.msra.mxu0 %v8164
  %9245 = vmatprep.subr.mxu0 0.0
  %9246 = vmatpush1.msra.mxu0 %v8165
  %9247 = vmatprep.subr.mxu0 0.0
  %9248 = vmatpush1.msra.mxu0 %v8166
  %9249 = vmatprep.subr.mxu0 0.0
  %9250 = vmatpush1.msra.mxu0 0.0
  %9251 = vmatprep.subr.mxu0 0.0
  %9252 = vmatpush1.msra.mxu0 0.0
  %9253 = vmatprep.subr.mxu0 0.0
  %9254 = vmatpush1.msra.mxu0 0.0
  %9255 = vmatprep.subr.mxu0 0.0
  %9256 = vmatpush1.msra.mxu0 0.0
  %9257 = vmatprep.subr.mxu0 0.0
  %9258 = vmatpush1.msra.mxu0 0.0
  %9259 = vmatprep.subr.mxu0 0.0
  %9260 = vmatpush1.msra.mxu0 0.0
  %9261 = vmatprep.subr.mxu0 0.0
  %9262 = vmatpush1.msra.mxu0 0.0
  %9263 = vmatprep.subr.mxu0 0.0
  %9264 = vmatpush1.msra.mxu0 0.0
  %9265 = vmatprep.subr.mxu0 0.0
  %9266 = vmatpush1.msra.mxu0 0.0
  %9267 = vmatprep.subr.mxu0 0.0
  %9268 = vmatpush1.msra.mxu0 0.0
  %9269 = vmatprep.subr.mxu0 0.0
  %9270 = vmatpush1.msra.mxu0 0.0
  %9271 = vmatprep.subr.mxu0 0.0
  %9272 = vmatpush1.msra.mxu0 0.0
  %9273 = vmatprep.subr.mxu0 0.0
  %9274 = vmatpush1.msra.mxu0 0.0
  %9275 = vmatprep.subr.mxu0 0.0
  %9276 = vmatpush1.msra.mxu0 0.0
  %9277 = vmatprep.subr.mxu0 0.0
  %9278 = vmatpush1.msra.mxu0 0.0
  %9279 = vmatprep.subr.mxu0 0.0
  %9280 = vmatpush1.msra.mxu0 0.0
  %9281 = vmatprep.subr.mxu0 0.0
  %9282 = vmatpush1.msra.mxu0 0.0
  %9283 = vmatprep.subr.mxu0 0.0
  %9284 = vmatpush1.msra.mxu0 0.0
  %9285 = vmatprep.subr.mxu0 0.0
  %9286 = vmatpush1.msra.mxu0 0.0
  %9287 = vmatprep.subr.mxu0 0.0
  %9288 = vmatpush1.msra.mxu0 0.0
  %9289 = vmatprep.subr.mxu0 0.0
  %9290 = vmatpush1.msra.mxu0 0.0
  %9291 = vmatprep.subr.mxu0 0.0
  %9292 = vmatpush1.msra.mxu0 0.0
  %9293 = vmatprep.subr.mxu0 0.0
  %9294 = vmatpush1.msra.mxu0 0.0
  %9295 = vmatprep.subr.mxu0 0.0
  %9296 = vmatpush1.msra.mxu0 0.0
  %9297 = vmatprep.subr.mxu0 0.0
  %9298 = vmatpush1.msra.mxu0 0.0
  %9299 = vmatprep.subr.mxu0 0.0
  %9300 = vmatpush1.msra.mxu0 0.0
  %9301 = vmatprep.subr.mxu0 0.0
  %9302 = vmatpush1.msra.mxu0 0.0
  %9303 = vmatprep.subr.mxu0 0.0
  %9304 = vmatpush1.msra.mxu0 0.0
  %9305 = vmatprep.mubr.f32.mxu0 0.0
  %9306 = vmatmul.mubr.f32.gmra.mrb[0].mxu0 %v9239
  %v9307 = vpop.f32.mrb[0].mxu0
  %v9308 = vadd.f32 0.0, %v9307
  %v9309 = vpop.f32.mrb[0].mxu0
  %9310 = vdwg.mxu0
  %s9311 = scalar_lea.vmem %s7, 112
  %v9312 = vld [vmem:[%s9311] sm:$0xff]
  %v9313 = vld [vmem:[%s9311 + $0x8] sm:$0xff]
  %v9315 = vsel %vm8102, %v9308, 0
  %9317 = vmatprep.subr.mxu0 0.0
  %9318 = vmatpush1.msra.mxu0 %v9312
  %9319 = vmatprep.subr.mxu0 0.0
  %9320 = vmatpush1.msra.mxu0 %v9313
  %9321 = vmatprep.subr.mxu0 0.0
  %9322 = vmatpush1.msra.mxu0 0.0
  %9323 = vmatprep.subr.mxu0 0.0
  %9324 = vmatpush1.msra.mxu0 0.0
  %9325 = vmatprep.subr.mxu0 0.0
  %9326 = vmatpush1.msra.mxu0 0.0
  %9327 = vmatprep.subr.mxu0 0.0
  %9328 = vmatpush1.msra.mxu0 0.0
  %9329 = vmatprep.subr.mxu0 0.0
  %9330 = vmatpush1.msra.mxu0 0.0
  %9331 = vmatprep.subr.mxu0 0.0
  %9332 = vmatpush1.msra.mxu0 0.0
  %9333 = vmatprep.subr.mxu0 0.0
  %9334 = vmatpush1.msra.mxu0 0.0
  %9335 = vmatprep.subr.mxu0 0.0
  %9336 = vmatpush1.msra.mxu0 0.0
  %9337 = vmatprep.subr.mxu0 0.0
  %9338 = vmatpush1.msra.mxu0 0.0
  %9339 = vmatprep.subr.mxu0 0.0
  %9340 = vmatpush1.msra.mxu0 0.0
  %9341 = vmatprep.subr.mxu0 0.0
  %9342 = vmatpush1.msra.mxu0 0.0
  %9343 = vmatprep.subr.mxu0 0.0
  %9344 = vmatpush1.msra.mxu0 0.0
  %9345 = vmatprep.subr.mxu0 0.0
  %9346 = vmatpush1.msra.mxu0 0.0
  %9347 = vmatprep.subr.mxu0 0.0
  %9348 = vmatpush1.msra.mxu0 0.0
  %9349 = vmatprep.subr.mxu0 0.0
  %9350 = vmatpush1.msra.mxu0 0.0
  %9351 = vmatprep.subr.mxu0 0.0
  %9352 = vmatpush1.msra.mxu0 0.0
  %9353 = vmatprep.subr.mxu0 0.0
  %9354 = vmatpush1.msra.mxu0 0.0
  %9355 = vmatprep.subr.mxu0 0.0
  %9356 = vmatpush1.msra.mxu0 0.0
  %9357 = vmatprep.subr.mxu0 0.0
  %9358 = vmatpush1.msra.mxu0 0.0
  %9359 = vmatprep.subr.mxu0 0.0
  %9360 = vmatpush1.msra.mxu0 0.0
  %9361 = vmatprep.subr.mxu0 0.0
  %9362 = vmatpush1.msra.mxu0 0.0
  %9363 = vmatprep.subr.mxu0 0.0
  %9364 = vmatpush1.msra.mxu0 0.0
  %9365 = vmatprep.subr.mxu0 0.0
  %9366 = vmatpush1.msra.mxu0 0.0
  %9367 = vmatprep.subr.mxu0 0.0
  %9368 = vmatpush1.msra.mxu0 0.0
  %9369 = vmatprep.subr.mxu0 0.0
  %9370 = vmatpush1.msra.mxu0 0.0
  %9371 = vmatprep.subr.mxu0 0.0
  %9372 = vmatpush1.msra.mxu0 0.0
  %9373 = vmatprep.subr.mxu0 0.0
  %9374 = vmatpush1.msra.mxu0 0.0
  %9375 = vmatprep.subr.mxu0 0.0
  %9376 = vmatpush1.msra.mxu0 0.0
  %9377 = vmatprep.subr.mxu0 0.0
  %9378 = vmatpush1.msra.mxu0 0.0
  %9379 = vmatprep.subr.mxu0 0.0
  %9380 = vmatpush1.msra.mxu0 0.0
  %9381 = vmatprep.mubr.f32.mxu0 0.0
  %9382 = vmatmul.mubr.f32.gmra.mrb[0].mxu0 %v9315
  %v9383 = vpop.f32.mrb[0].mxu0
  %v9384 = vadd.f32 0.0, %v9383
  %v9385 = vpop.f32.mrb[0].mxu0
  %9386 = vdwg.mxu0
  %v9387 = vadd.f32 %v9234, %v9384
  %s9388 = scalar_lea.vmem %s6, 32
  %v9389 = vld [vmem:[%s9388] sm:$0xf]
  %v9390 = vunpack.c.l.bf16 %v9389
  %v9392 = vsel %vm8169, %v9390, 0
  %9394 = vmatprep.subr.mxu0 0.0
  %9395 = vmatpush1.msra.mxu0 %v8163
  %9396 = vmatprep.subr.mxu0 0.0
  %9397 = vmatpush1.msra.mxu0 %v8164
  %9398 = vmatprep.subr.mxu0 0.0
  %9399 = vmatpush1.msra.mxu0 %v8165
  %9400 = vmatprep.subr.mxu0 0.0
  %9401 = vmatpush1.msra.mxu0 %v8166
  %9402 = vmatprep.subr.mxu0 0.0
  %9403 = vmatpush1.msra.mxu0 0.0
  %9404 = vmatprep.subr.mxu0 0.0
  %9405 = vmatpush1.msra.mxu0 0.0
  %9406 = vmatprep.subr.mxu0 0.0
  %9407 = vmatpush1.msra.mxu0 0.0
  %9408 = vmatprep.subr.mxu0 0.0
  %9409 = vmatpush1.msra.mxu0 0.0
  %9410 = vmatprep.subr.mxu0 0.0
  %9411 = vmatpush1.msra.mxu0 0.0
  %9412 = vmatprep.subr.mxu0 0.0
  %9413 = vmatpush1.msra.mxu0 0.0
  %9414 = vmatprep.subr.mxu0 0.0
  %9415 = vmatpush1.msra.mxu0 0.0
  %9416 = vmatprep.subr.mxu0 0.0
  %9417 = vmatpush1.msra.mxu0 0.0
  %9418 = vmatprep.subr.mxu0 0.0
  %9419 = vmatpush1.msra.mxu0 0.0
  %9420 = vmatprep.subr.mxu0 0.0
  %9421 = vmatpush1.msra.mxu0 0.0
  %9422 = vmatprep.subr.mxu0 0.0
  %9423 = vmatpush1.msra.mxu0 0.0
  %9424 = vmatprep.subr.mxu0 0.0
  %9425 = vmatpush1.msra.mxu0 0.0
  %9426 = vmatprep.subr.mxu0 0.0
  %9427 = vmatpush1.msra.mxu0 0.0
  %9428 = vmatprep.subr.mxu0 0.0
  %9429 = vmatpush1.msra.mxu0 0.0
  %9430 = vmatprep.subr.mxu0 0.0
  %9431 = vmatpush1.msra.mxu0 0.0
  %9432 = vmatprep.subr.mxu0 0.0
  %9433 = vmatpush1.msra.mxu0 0.0
  %9434 = vmatprep.subr.mxu0 0.0
  %9435 = vmatpush1.msra.mxu0 0.0
  %9436 = vmatprep.subr.mxu0 0.0
  %9437 = vmatpush1.msra.mxu0 0.0
  %9438 = vmatprep.subr.mxu0 0.0
  %9439 = vmatpush1.msra.mxu0 0.0
  %9440 = vmatprep.subr.mxu0 0.0
  %9441 = vmatpush1.msra.mxu0 0.0
  %9442 = vmatprep.subr.mxu0 0.0
  %9443 = vmatpush1.msra.mxu0 0.0
  %9444 = vmatprep.subr.mxu0 0.0
  %9445 = vmatpush1.msra.mxu0 0.0
  %9446 = vmatprep.subr.mxu0 0.0
  %9447 = vmatpush1.msra.mxu0 0.0
  %9448 = vmatprep.subr.mxu0 0.0
  %9449 = vmatpush1.msra.mxu0 0.0
  %9450 = vmatprep.subr.mxu0 0.0
  %9451 = vmatpush1.msra.mxu0 0.0
  %9452 = vmatprep.subr.mxu0 0.0
  %9453 = vmatpush1.msra.mxu0 0.0
  %9454 = vmatprep.subr.mxu0 0.0
  %9455 = vmatpush1.msra.mxu0 0.0
  %9456 = vmatprep.subr.mxu0 0.0
  %9457 = vmatpush1.msra.mxu0 0.0
  %9458 = vmatprep.mubr.f32.mxu0 0.0
  %9459 = vmatmul.mubr.f32.gmra.mrb[0].mxu0 %v9392
  %v9460 = vpop.f32.mrb[0].mxu0
  %v9461 = vadd.f32 0.0, %v9460
  %v9462 = vpop.f32.mrb[0].mxu0
  %9463 = vdwg.mxu0
  %s9464 = scalar_lea.vmem %s7, 128
  %v9465 = vld [vmem:[%s9464] sm:$0xff]
  %v9466 = vld [vmem:[%s9464 + $0x8] sm:$0xff]
  %v9468 = vsel %vm8102, %v9461, 0
  %9470 = vmatprep.subr.mxu0 0.0
  %9471 = vmatpush1.msra.mxu0 %v9465
  %9472 = vmatprep.subr.mxu0 0.0
  %9473 = vmatpush1.msra.mxu0 %v9466
  %9474 = vmatprep.subr.mxu0 0.0
  %9475 = vmatpush1.msra.mxu0 0.0
  %9476 = vmatprep.subr.mxu0 0.0
  %9477 = vmatpush1.msra.mxu0 0.0
  %9478 = vmatprep.subr.mxu0 0.0
  %9479 = vmatpush1.msra.mxu0 0.0
  %9480 = vmatprep.subr.mxu0 0.0
  %9481 = vmatpush1.msra.mxu0 0.0
  %9482 = vmatprep.subr.mxu0 0.0
  %9483 = vmatpush1.msra.mxu0 0.0
  %9484 = vmatprep.subr.mxu0 0.0
  %9485 = vmatpush1.msra.mxu0 0.0
  %9486 = vmatprep.subr.mxu0 0.0
  %9487 = vmatpush1.msra.mxu0 0.0
  %9488 = vmatprep.subr.mxu0 0.0
  %9489 = vmatpush1.msra.mxu0 0.0
  %9490 = vmatprep.subr.mxu0 0.0
  %9491 = vmatpush1.msra.mxu0 0.0
  %9492 = vmatprep.subr.mxu0 0.0
  %9493 = vmatpush1.msra.mxu0 0.0
  %9494 = vmatprep.subr.mxu0 0.0
  %9495 = vmatpush1.msra.mxu0 0.0
  %9496 = vmatprep.subr.mxu0 0.0
  %9497 = vmatpush1.msra.mxu0 0.0
  %9498 = vmatprep.subr.mxu0 0.0
  %9499 = vmatpush1.msra.mxu0 0.0
  %9500 = vmatprep.subr.mxu0 0.0
  %9501 = vmatpush1.msra.mxu0 0.0
  %9502 = vmatprep.subr.mxu0 0.0
  %9503 = vmatpush1.msra.mxu0 0.0
  %9504 = vmatprep.subr.mxu0 0.0
  %9505 = vmatpush1.msra.mxu0 0.0
  %9506 = vmatprep.subr.mxu0 0.0
  %9507 = vmatpush1.msra.mxu0 0.0
  %9508 = vmatprep.subr.mxu0 0.0
  %9509 = vmatpush1.msra.mxu0 0.0
  %9510 = vmatprep.subr.mxu0 0.0
  %9511 = vmatpush1.msra.mxu0 0.0
  %9512 = vmatprep.subr.mxu0 0.0
  %9513 = vmatpush1.msra.mxu0 0.0
  %9514 = vmatprep.subr.mxu0 0.0
  %9515 = vmatpush1.msra.mxu0 0.0
  %9516 = vmatprep.subr.mxu0 0.0
  %9517 = vmatpush1.msra.mxu0 0.0
  %9518 = vmatprep.subr.mxu0 0.0
  %9519 = vmatpush1.msra.mxu0 0.0
  %9520 = vmatprep.subr.mxu0 0.0
  %9521 = vmatpush1.msra.mxu0 0.0
  %9522 = vmatprep.subr.mxu0 0.0
  %9523 = vmatpush1.msra.mxu0 0.0
  %9524 = vmatprep.subr.mxu0 0.0
  %9525 = vmatpush1.msra.mxu0 0.0
  %9526 = vmatprep.subr.mxu0 0.0
  %9527 = vmatpush1.msra.mxu0 0.0
  %9528 = vmatprep.subr.mxu0 0.0
  %9529 = vmatpush1.msra.mxu0 0.0
  %9530 = vmatprep.subr.mxu0 0.0
  %9531 = vmatpush1.msra.mxu0 0.0
  %9532 = vmatprep.subr.mxu0 0.0
  %9533 = vmatpush1.msra.mxu0 0.0
  %9534 = vmatprep.mubr.f32.mxu0 0.0
  %9535 = vmatmul.mubr.f32.gmra.mrb[0].mxu0 %v9468
  %v9536 = vpop.f32.mrb[0].mxu0
  %v9537 = vadd.f32 0.0, %v9536
  %v9538 = vpop.f32.mrb[0].mxu0
  %9539 = vdwg.mxu0
  %v9540 = vadd.f32 %v9387, %v9537
  %v9541 = vld [vmem:[%s14] sm:$0x1]
  %v9542 = vld [vmem:[%s15] sm:$0x1]
  %v9543 = vsel %vm8169, %v9540, 0.0
  %v9544 = vrot.slane %v9543, 4
  %v9545 = vadd.f32 %v9543, %v9544
  %v9546 = vrot.slane %v9545, 2
  %v9547 = vadd.f32 %v9545, %v9546
  %v9548 = vrot.slane %v9547, 1
  %v9549 = vadd.f32 %v9547, %v9548
  %v9550 = vmul.f32 %v9549, 0.125
  %v9551 = vmul.f32 %v9540, %v9540
  %v9552 = vsel %vm8169, %v9551, 0.0
  %v9553 = vrot.slane %v9552, 4
  %v9554 = vadd.f32 %v9552, %v9553
  %v9555 = vrot.slane %v9554, 2
  %v9556 = vadd.f32 %v9554, %v9555
  %v9557 = vrot.slane %v9556, 1
  %v9558 = vadd.f32 %v9556, %v9557
  %v9559 = vmul.f32 %v9558, 0.125
  %v9560 = vmul.f32 %v9550, %v9550
  %v9561 = vsub.f32 %v9559, %v9560
  %v9562 = vmax.f32 %v9561, 0.0
  %v9563 = vadd.f32 %v9562, 1e-05
  %v9564 = vrsqrt.pop %v9563
  %v9565 = vmul.f32 %v9541, %v9564
  %v9566 = vmul.f32 %v9550, %v9565
  %v9567 = vsub.f32 %v9542, %v9566
  %v9569 = vlaneseq
  %v9570 = vshrl.u32 %v9569, 7
  %v9571 = vsub.s32 0, %v9570
  %v9572 = vrot.slane %v9565, %v9571
  %v9574 = vmul.f32 %v9540, %v9572
  %v9576 = vlaneseq
  %v9577 = vshrl.u32 %v9576, 7
  %v9578 = vsub.s32 0, %v9577
  %v9579 = vrot.slane %v9567, %v9578
  %v9581 = vadd.f32 %v9574, %v9579
  %v9582 = vmax.f32 %v9581, 0.0
  %v9583 = vlaneseq
  %v9584 = vshrl.u32 %v9583, 7
  %v9585 = vlaneseq
  %v9586 = vand.u32 %v9585, 127
  %v9587 = vmul.u32 %v9584, 4
  %vm9588 = vcmp.ge.s32.totalorder %v9586, %v9587
  %v9589 = vadd.s32 %v9584, 1
  %v9590 = vmul.u32 %v9589, 4
  %vm9591 = vcmp.lt.s32.totalorder %v9586, %v9590
  %vm9592 = vmand %vm9588, %vm9591
  %v9593 = vsel %vm9592, 0.25, 0.0
  %v9595 = vsel %vm1104, %v9593, 0
  %9597 = vmatprep.subr.mxu0 0.0
  %9598 = vmatpush1.msra.mxu0 %v9582
  %9599 = vmatprep.subr.mxu0 0.0
  %9600 = vmatpush1.msra.mxu0 0.0
  %9601 = vmatprep.subr.mxu0 0.0
  %9602 = vmatpush1.msra.mxu0 0.0
  %9603 = vmatprep.subr.mxu0 0.0
  %9604 = vmatpush1.msra.mxu0 0.0
  %9605 = vmatprep.subr.mxu0 0.0
  %9606 = vmatpush1.msra.mxu0 0.0
  %9607 = vmatprep.subr.mxu0 0.0
  %9608 = vmatpush1.msra.mxu0 0.0
  %9609 = vmatprep.subr.mxu0 0.0
  %9610 = vmatpush1.msra.mxu0 0.0
  %9611 = vmatprep.subr.mxu0 0.0
  %9612 = vmatpush1.msra.mxu0 0.0
  %9613 = vmatprep.subr.mxu0 0.0
  %9614 = vmatpush1.msra.mxu0 0.0
  %9615 = vmatprep.subr.mxu0 0.0
  %9616 = vmatpush1.msra.mxu0 0.0
  %9617 = vmatprep.subr.mxu0 0.0
  %9618 = vmatpush1.msra.mxu0 0.0
  %9619 = vmatprep.subr.mxu0 0.0
  %9620 = vmatpush1.msra.mxu0 0.0
  %9621 = vmatprep.subr.mxu0 0.0
  %9622 = vmatpush1.msra.mxu0 0.0
  %9623 = vmatprep.subr.mxu0 0.0
  %9624 = vmatpush1.msra.mxu0 0.0
  %9625 = vmatprep.subr.mxu0 0.0
  %9626 = vmatpush1.msra.mxu0 0.0
  %9627 = vmatprep.subr.mxu0 0.0
  %9628 = vmatpush1.msra.mxu0 0.0
  %9629 = vmatprep.subr.mxu0 0.0
  %9630 = vmatpush1.msra.mxu0 0.0
  %9631 = vmatprep.subr.mxu0 0.0
  %9632 = vmatpush1.msra.mxu0 0.0
  %9633 = vmatprep.subr.mxu0 0.0
  %9634 = vmatpush1.msra.mxu0 0.0
  %9635 = vmatprep.subr.mxu0 0.0
  %9636 = vmatpush1.msra.mxu0 0.0
  %9637 = vmatprep.subr.mxu0 0.0
  %9638 = vmatpush1.msra.mxu0 0.0
  %9639 = vmatprep.subr.mxu0 0.0
  %9640 = vmatpush1.msra.mxu0 0.0
  %9641 = vmatprep.subr.mxu0 0.0
  %9642 = vmatpush1.msra.mxu0 0.0
  %9643 = vmatprep.subr.mxu0 0.0
  %9644 = vmatpush1.msra.mxu0 0.0
  %9645 = vmatprep.subr.mxu0 0.0
  %9646 = vmatpush1.msra.mxu0 0.0
  %9647 = vmatprep.subr.mxu0 0.0
  %9648 = vmatpush1.msra.mxu0 0.0
  %9649 = vmatprep.subr.mxu0 0.0
  %9650 = vmatpush1.msra.mxu0 0.0
  %9651 = vmatprep.subr.mxu0 0.0
  %9652 = vmatpush1.msra.mxu0 0.0
  %9653 = vmatprep.subr.mxu0 0.0
  %9654 = vmatpush1.msra.mxu0 0.0
  %9655 = vmatprep.subr.mxu0 0.0
  %9656 = vmatpush1.msra.mxu0 0.0
  %9657 = vmatprep.subr.mxu0 0.0
  %9658 = vmatpush1.msra.mxu0 0.0
  %9659 = vmatprep.subr.mxu0 0.0
  %9660 = vmatpush1.msra.mxu0 0.0
  %9661 = vmatprep.mubr.f32.mxu0 0.0
  %9662 = vmatmul.mubr.f32.gmra.mrb[0].mxu0 %v9595
  %v9663 = vpop.f32.mrb[0].mxu0
  %v9664 = vadd.f32 0.0, %v9663
  %v9665 = vpop.f32.mrb[0].mxu0
  %9666 = vdwg.mxu0
  %v9667 = vld [vmem:[%s16] sm:$0xff]
  %v9668 = vld [vmem:[%s16 + $0x8] sm:$0xff]
  %v9669 = vld [vmem:[%s16 + $0x10] sm:$0xff]
  %v9670 = vld [vmem:[%s16 + $0x18] sm:$0xff]
  %v9671 = vld [vmem:[%s17] sm:$0x1]
  %v9673 = vlaneseq
  %v9674 = vshrl.u32 %v9673, 7
  %v9675 = vsub.s32 0, %v9674
  %v9676 = vrot.slane %v9671, %v9675
  %v9679 = vsel %vm8169, %v9664, 0
  %9681 = vmatprep.subr.mxu0 0.0
  %9682 = vmatpush1.msra.mxu0 %v9667
  %9683 = vmatprep.subr.mxu0 0.0
  %9684 = vmatpush1.msra.mxu0 %v9668
  %9685 = vmatprep.subr.mxu0 0.0
  %9686 = vmatpush1.msra.mxu0 %v9669
  %9687 = vmatprep.subr.mxu0 0.0
  %9688 = vmatpush1.msra.mxu0 %v9670
  %9689 = vmatprep.subr.mxu0 0.0
  %9690 = vmatpush1.msra.mxu0 0.0
  %9691 = vmatprep.subr.mxu0 0.0
  %9692 = vmatpush1.msra.mxu0 0.0
  %9693 = vmatprep.subr.mxu0 0.0
  %9694 = vmatpush1.msra.mxu0 0.0
  %9695 = vmatprep.subr.mxu0 0.0
  %9696 = vmatpush1.msra.mxu0 0.0
  %9697 = vmatprep.subr.mxu0 0.0
  %9698 = vmatpush1.msra.mxu0 0.0
  %9699 = vmatprep.subr.mxu0 0.0
  %9700 = vmatpush1.msra.mxu0 0.0
  %9701 = vmatprep.subr.mxu0 0.0
  %9702 = vmatpush1.msra.mxu0 0.0
  %9703 = vmatprep.subr.mxu0 0.0
  %9704 = vmatpush1.msra.mxu0 0.0
  %9705 = vmatprep.subr.mxu0 0.0
  %9706 = vmatpush1.msra.mxu0 0.0
  %9707 = vmatprep.subr.mxu0 0.0
  %9708 = vmatpush1.msra.mxu0 0.0
  %9709 = vmatprep.subr.mxu0 0.0
  %9710 = vmatpush1.msra.mxu0 0.0
  %9711 = vmatprep.subr.mxu0 0.0
  %9712 = vmatpush1.msra.mxu0 0.0
  %9713 = vmatprep.subr.mxu0 0.0
  %9714 = vmatpush1.msra.mxu0 0.0
  %9715 = vmatprep.subr.mxu0 0.0
  %9716 = vmatpush1.msra.mxu0 0.0
  %9717 = vmatprep.subr.mxu0 0.0
  %9718 = vmatpush1.msra.mxu0 0.0
  %9719 = vmatprep.subr.mxu0 0.0
  %9720 = vmatpush1.msra.mxu0 0.0
  %9721 = vmatprep.subr.mxu0 0.0
  %9722 = vmatpush1.msra.mxu0 0.0
  %9723 = vmatprep.subr.mxu0 0.0
  %9724 = vmatpush1.msra.mxu0 0.0
  %9725 = vmatprep.subr.mxu0 0.0
  %9726 = vmatpush1.msra.mxu0 0.0
  %9727 = vmatprep.subr.mxu0 0.0
  %9728 = vmatpush1.msra.mxu0 0.0
  %9729 = vmatprep.subr.mxu0 0.0
  %9730 = vmatpush1.msra.mxu0 0.0
  %9731 = vmatprep.subr.mxu0 0.0
  %9732 = vmatpush1.msra.mxu0 0.0
  %9733 = vmatprep.subr.mxu0 0.0
  %9734 = vmatpush1.msra.mxu0 0.0
  %9735 = vmatprep.subr.mxu0 0.0
  %9736 = vmatpush1.msra.mxu0 0.0
  %9737 = vmatprep.subr.mxu0 0.0
  %9738 = vmatpush1.msra.mxu0 0.0
  %9739 = vmatprep.subr.mxu0 0.0
  %9740 = vmatpush1.msra.mxu0 0.0
  %9741 = vmatprep.subr.mxu0 0.0
  %9742 = vmatpush1.msra.mxu0 0.0
  %9743 = vmatprep.subr.mxu0 0.0
  %9744 = vmatpush1.msra.mxu0 0.0
  %9745 = vmatprep.mubr.f32.mxu0 0.0
  %9746 = vmatmul.mubr.f32.gmra.mrb[0].mxu0 %v9679
  %v9747 = vpop.f32.mrb[0].mxu0
  %v9748 = vadd.f32 %v9676, %v9747
  %v9749 = vpop.f32.mrb[0].mxu0
  %9750 = vdwg.mxu0
  %v9751 = vld [vmem:[%s20] sm:$0xff]
  %v9752 = vld [vmem:[%s20 + $0x8] sm:$0xff]
  %v9753 = vld [vmem:[%s20 + $0x10] sm:$0xff]
  %v9754 = vld [vmem:[%s20 + $0x18] sm:$0xff]
  %v9755 = vld [vmem:[%s21] sm:$0x1]
  %v9757 = vlaneseq
  %v9758 = vshrl.u32 %v9757, 7
  %v9759 = vsub.s32 0, %v9758
  %v9760 = vrot.slane %v9755, %v9759
  %9762 = vmatprep.subr.mxu0 0.0
  %9763 = vmatpush1.msra.mxu0 %v9751
  %9764 = vmatprep.subr.mxu0 0.0
  %9765 = vmatpush1.msra.mxu0 %v9752
  %9766 = vmatprep.subr.mxu0 0.0
  %9767 = vmatpush1.msra.mxu0 %v9753
  %9768 = vmatprep.subr.mxu0 0.0
  %9769 = vmatpush1.msra.mxu0 %v9754
  %9770 = vmatprep.subr.mxu0 0.0
  %9771 = vmatpush1.msra.mxu0 0.0
  %9772 = vmatprep.subr.mxu0 0.0
  %9773 = vmatpush1.msra.mxu0 0.0
  %9774 = vmatprep.subr.mxu0 0.0
  %9775 = vmatpush1.msra.mxu0 0.0
  %9776 = vmatprep.subr.mxu0 0.0
  %9777 = vmatpush1.msra.mxu0 0.0
  %9778 = vmatprep.subr.mxu0 0.0
  %9779 = vmatpush1.msra.mxu0 0.0
  %9780 = vmatprep.subr.mxu0 0.0
  %9781 = vmatpush1.msra.mxu0 0.0
  %9782 = vmatprep.subr.mxu0 0.0
  %9783 = vmatpush1.msra.mxu0 0.0
  %9784 = vmatprep.subr.mxu0 0.0
  %9785 = vmatpush1.msra.mxu0 0.0
  %9786 = vmatprep.subr.mxu0 0.0
  %9787 = vmatpush1.msra.mxu0 0.0
  %9788 = vmatprep.subr.mxu0 0.0
  %9789 = vmatpush1.msra.mxu0 0.0
  %9790 = vmatprep.subr.mxu0 0.0
  %9791 = vmatpush1.msra.mxu0 0.0
  %9792 = vmatprep.subr.mxu0 0.0
  %9793 = vmatpush1.msra.mxu0 0.0
  %9794 = vmatprep.subr.mxu0 0.0
  %9795 = vmatpush1.msra.mxu0 0.0
  %9796 = vmatprep.subr.mxu0 0.0
  %9797 = vmatpush1.msra.mxu0 0.0
  %9798 = vmatprep.subr.mxu0 0.0
  %9799 = vmatpush1.msra.mxu0 0.0
  %9800 = vmatprep.subr.mxu0 0.0
  %9801 = vmatpush1.msra.mxu0 0.0
  %9802 = vmatprep.subr.mxu0 0.0
  %9803 = vmatpush1.msra.mxu0 0.0
  %9804 = vmatprep.subr.mxu0 0.0
  %9805 = vmatpush1.msra.mxu0 0.0
  %9806 = vmatprep.subr.mxu0 0.0
  %9807 = vmatpush1.msra.mxu0 0.0
  %9808 = vmatprep.subr.mxu0 0.0
  %9809 = vmatpush1.msra.mxu0 0.0
  %9810 = vmatprep.subr.mxu0 0.0
  %9811 = vmatpush1.msra.mxu0 0.0
  %9812 = vmatprep.subr.mxu0 0.0
  %9813 = vmatpush1.msra.mxu0 0.0
  %9814 = vmatprep.subr.mxu0 0.0
  %9815 = vmatpush1.msra.mxu0 0.0
  %9816 = vmatprep.subr.mxu0 0.0
  %9817 = vmatpush1.msra.mxu0 0.0
  %9818 = vmatprep.subr.mxu0 0.0
  %9819 = vmatpush1.msra.mxu0 0.0
  %9820 = vmatprep.subr.mxu0 0.0
  %9821 = vmatpush1.msra.mxu0 0.0
  %9822 = vmatprep.subr.mxu0 0.0
  %9823 = vmatpush1.msra.mxu0 0.0
  %9824 = vmatprep.subr.mxu0 0.0
  %9825 = vmatpush1.msra.mxu0 0.0
  %9826 = vmatprep.mubr.f32.mxu0 0.0
  %9827 = vmatmul.mubr.f32.gmra.mrb[0].mxu0 %v9679
  %v9828 = vpop.f32.mrb[0].mxu0
  %v9829 = vadd.f32 %v9760, %v9828
  %v9830 = vpop.f32.mrb[0].mxu0
  %9831 = vdwg.mxu0
  %v9832 = vld [vmem:[%s18] sm:$0xff]
  %v9833 = vld [vmem:[%s18 + $0x8] sm:$0xff]
  %v9834 = vld [vmem:[%s18 + $0x10] sm:$0xff]
  %v9835 = vld [vmem:[%s18 + $0x18] sm:$0xff]
  %v9836 = vld [vmem:[%s19] sm:$0x1]
  %v9837 = vld [vmem:[%s22] sm:$0xff]
  %v9838 = vld [vmem:[%s22 + $0x8] sm:$0xff]
  %v9839 = vld [vmem:[%s22 + $0x10] sm:$0xff]
  %v9840 = vld [vmem:[%s22 + $0x18] sm:$0xff]
  %v9841 = vld [vmem:[%s23] sm:$0x1]
  %v9843 = vsel %vm8169, 0.0, 0
  %9845 = vmatprep.subr.mxu0 0.0
  %9846 = vmatpush1.msra.mxu0 %v9832
  %9847 = vmatprep.subr.mxu0 0.0
  %9848 = vmatpush1.msra.mxu0 %v9833
  %9849 = vmatprep.subr.mxu0 0.0
  %9850 = vmatpush1.msra.mxu0 %v9834
  %9851 = vmatprep.subr.mxu0 0.0
  %9852 = vmatpush1.msra.mxu0 %v9835
  %9853 = vmatprep.subr.mxu0 0.0
  %9854 = vmatpush1.msra.mxu0 0.0
  %9855 = vmatprep.subr.mxu0 0.0
  %9856 = vmatpush1.msra.mxu0 0.0
  %9857 = vmatprep.subr.mxu0 0.0
  %9858 = vmatpush1.msra.mxu0 0.0
  %9859 = vmatprep.subr.mxu0 0.0
  %9860 = vmatpush1.msra.mxu0 0.0
  %9861 = vmatprep.subr.mxu0 0.0
  %9862 = vmatpush1.msra.mxu0 0.0
  %9863 = vmatprep.subr.mxu0 0.0
  %9864 = vmatpush1.msra.mxu0 0.0
  %9865 = vmatprep.subr.mxu0 0.0
  %9866 = vmatpush1.msra.mxu0 0.0
  %9867 = vmatprep.subr.mxu0 0.0
  %9868 = vmatpush1.msra.mxu0 0.0
  %9869 = vmatprep.subr.mxu0 0.0
  %9870 = vmatpush1.msra.mxu0 0.0
  %9871 = vmatprep.subr.mxu0 0.0
  %9872 = vmatpush1.msra.mxu0 0.0
  %9873 = vmatprep.subr.mxu0 0.0
  %9874 = vmatpush1.msra.mxu0 0.0
  %9875 = vmatprep.subr.mxu0 0.0
  %9876 = vmatpush1.msra.mxu0 0.0
  %9877 = vmatprep.subr.mxu0 0.0
  %9878 = vmatpush1.msra.mxu0 0.0
  %9879 = vmatprep.subr.mxu0 0.0
  %9880 = vmatpush1.msra.mxu0 0.0
  %9881 = vmatprep.subr.mxu0 0.0
  %9882 = vmatpush1.msra.mxu0 0.0
  %9883 = vmatprep.subr.mxu0 0.0
  %9884 = vmatpush1.msra.mxu0 0.0
  %9885 = vmatprep.subr.mxu0 0.0
  %9886 = vmatpush1.msra.mxu0 0.0
  %9887 = vmatprep.subr.mxu0 0.0
  %9888 = vmatpush1.msra.mxu0 0.0
  %9889 = vmatprep.subr.mxu0 0.0
  %9890 = vmatpush1.msra.mxu0 0.0
  %9891 = vmatprep.subr.mxu0 0.0
  %9892 = vmatpush1.msra.mxu0 0.0
  %9893 = vmatprep.subr.mxu0 0.0
  %9894 = vmatpush1.msra.mxu0 0.0
  %9895 = vmatprep.subr.mxu0 0.0
  %9896 = vmatpush1.msra.mxu0 0.0
  %9897 = vmatprep.subr.mxu0 0.0
  %9898 = vmatpush1.msra.mxu0 0.0
  %9899 = vmatprep.subr.mxu0 0.0
  %9900 = vmatpush1.msra.mxu0 0.0
  %9901 = vmatprep.subr.mxu0 0.0
  %9902 = vmatpush1.msra.mxu0 0.0
  %9903 = vmatprep.subr.mxu0 0.0
  %9904 = vmatpush1.msra.mxu0 0.0
  %9905 = vmatprep.subr.mxu0 0.0
  %9906 = vmatpush1.msra.mxu0 0.0
  %9907 = vmatprep.subr.mxu0 0.0
  %9908 = vmatpush1.msra.mxu0 0.0
  %9909 = vmatprep.mubr.f32.mxu0 0.0
  %9910 = vmatmul.mubr.f32.gmra.mrb[0].mxu0 %v9843
  %v9911 = vpop.f32.mrb[0].mxu0
  %v9912 = vadd.f32 %v9836, %v9911
  %v9913 = vpop.f32.mrb[0].mxu0
  %9914 = vdwg.mxu0
  %v9915 = vadd.f32 %v9748, %v9912
  %v9916 = vsub.f32 0.0, %v9915
  %v9917 = vmul.f32 %v9916, 1.442695
  %v9918 = vpow.pop %v9917
  %v9919 = vadd.f32 %v9918, 1.0
  %v9920 = vrcp.pop %v9919
  %v9921 = vmul.f32 1.0, %v9920
  %9923 = vrot.lane.b32.xlu0 %v9912, 64
  %v9924 = vpop.permute.xlu0 %9923
  %v9926 = vmul.f32 %v9921, %v9924
  %9928 = vrot.lane.b32.xlu0 %v9926, 64
  %v9929 = vpop.permute.xlu0 %9928
  %v9931 = vadd.f32 %v9748, %v9929
  %v9932 = vtanh.pop %v9931
  %v9933 = vsub.f32 1.0, %v9921
  %9935 = vrot.lane.b32.xlu0 %v9932, 96
  %v9936 = vpop.permute.xlu0 %9935
  %v9938 = vmul.f32 %v9933, %v9936
  %v9939 = vmul.f32 %v9921, 0.0
  %v9940 = vadd.f32 %v9938, %v9939
  %9941 = vmatprep.subr.mxu0 0.0
  %9942 = vmatpush1.msra.mxu0 %v9837
  %9943 = vmatprep.subr.mxu0 0.0
  %9944 = vmatpush1.msra.mxu0 %v9838
  %9945 = vmatprep.subr.mxu0 0.0
  %9946 = vmatpush1.msra.mxu0 %v9839
  %9947 = vmatprep.subr.mxu0 0.0
  %9948 = vmatpush1.msra.mxu0 %v9840
  %9949 = vmatprep.subr.mxu0 0.0
  %9950 = vmatpush1.msra.mxu0 0.0
  %9951 = vmatprep.subr.mxu0 0.0
  %9952 = vmatpush1.msra.mxu0 0.0
  %9953 = vmatprep.subr.mxu0 0.0
  %9954 = vmatpush1.msra.mxu0 0.0
  %9955 = vmatprep.subr.mxu0 0.0
  %9956 = vmatpush1.msra.mxu0 0.0
  %9957 = vmatprep.subr.mxu0 0.0
  %9958 = vmatpush1.msra.mxu0 0.0
  %9959 = vmatprep.subr.mxu0 0.0
  %9960 = vmatpush1.msra.mxu0 0.0
  %9961 = vmatprep.subr.mxu0 0.0
  %9962 = vmatpush1.msra.mxu0 0.0
  %9963 = vmatprep.subr.mxu0 0.0
  %9964 = vmatpush1.msra.mxu0 0.0
  %9965 = vmatprep.subr.mxu0 0.0
  %9966 = vmatpush1.msra.mxu0 0.0
  %9967 = vmatprep.subr.mxu0 0.0
  %9968 = vmatpush1.msra.mxu0 0.0
  %9969 = vmatprep.subr.mxu0 0.0
  %9970 = vmatpush1.msra.mxu0 0.0
  %9971 = vmatprep.subr.mxu0 0.0
  %9972 = vmatpush1.msra.mxu0 0.0
  %9973 = vmatprep.subr.mxu0 0.0
  %9974 = vmatpush1.msra.mxu0 0.0
  %9975 = vmatprep.subr.mxu0 0.0
  %9976 = vmatpush1.msra.mxu0 0.0
  %9977 = vmatprep.subr.mxu0 0.0
  %9978 = vmatpush1.msra.mxu0 0.0
  %9979 = vmatprep.subr.mxu0 0.0
  %9980 = vmatpush1.msra.mxu0 0.0
  %9981 = vmatprep.subr.mxu0 0.0
  %9982 = vmatpush1.msra.mxu0 0.0
  %9983 = vmatprep.subr.mxu0 0.0
  %9984 = vmatpush1.msra.mxu0 0.0
  %9985 = vmatprep.subr.mxu0 0.0
  %9986 = vmatpush1.msra.mxu0 0.0
  %9987 = vmatprep.subr.mxu0 0.0
  %9988 = vmatpush1.msra.mxu0 0.0
  %9989 = vmatprep.subr.mxu0 0.0
  %9990 = vmatpush1.msra.mxu0 0.0
  %9991 = vmatprep.subr.mxu0 0.0
  %9992 = vmatpush1.msra.mxu0 0.0
  %9993 = vmatprep.subr.mxu0 0.0
  %9994 = vmatpush1.msra.mxu0 0.0
  %9995 = vmatprep.subr.mxu0 0.0
  %9996 = vmatpush1.msra.mxu0 0.0
  %9997 = vmatprep.subr.mxu0 0.0
  %9998 = vmatpush1.msra.mxu0 0.0
  %9999 = vmatprep.subr.mxu0 0.0
  %10000 = vmatpush1.msra.mxu0 0.0
  %10001 = vmatprep.subr.mxu0 0.0
  %10002 = vmatpush1.msra.mxu0 0.0
  %10003 = vmatprep.subr.mxu0 0.0
  %10004 = vmatpush1.msra.mxu0 0.0
  %10005 = vmatprep.mubr.f32.mxu0 0.0
  %10006 = vmatmul.mubr.f32.gmra.mrb[0].mxu0 %v9843
  %v10007 = vpop.f32.mrb[0].mxu0
  %v10008 = vadd.f32 %v9841, %v10007
  %v10009 = vpop.f32.mrb[0].mxu0
  %10010 = vdwg.mxu0
  %v10012 = vrot.slane %v10008, 7
  %v10014 = vadd.f32 %v9829, %v10012
  %v10015 = vsub.f32 0.0, %v10014
  %v10016 = vmul.f32 %v10015, 1.442695
  %v10017 = vpow.pop %v10016
  %v10018 = vadd.f32 %v10017, 1.0
  %v10019 = vrcp.pop %v10018
  %v10020 = vmul.f32 1.0, %v10019
  %10021 = vrot.lane.b32.xlu0 %v10012, 64
  %v10022 = vpop.permute.xlu0 %10021
  %v10024 = vmul.f32 %v10020, %v10022
  %10026 = vrot.lane.b32.xlu0 %v10024, 64
  %v10027 = vpop.permute.xlu0 %10026
  %v10029 = vadd.f32 %v9829, %v10027
  %v10030 = vtanh.pop %v10029
  %v10031 = vsub.f32 1.0, %v10020
  %10033 = vrot.lane.b32.xlu0 %v10030, 96
  %v10034 = vpop.permute.xlu0 %10033
  %v10036 = vmul.f32 %v10031, %v10034
  %v10037 = vmul.f32 %v10020, 0.0
  %v10038 = vadd.f32 %v10036, %v10037
  %10040 = vrot.lane.b32.xlu0 %v9940, 96
  %v10041 = vpop.permute.xlu0 %10040
  %v10042 = vsel %vm8169, %v10041, 0
  %10044 = vmatprep.subr.mxu0 0.0
  %10045 = vmatpush1.msra.mxu0 %v9832
  %10046 = vmatprep.subr.mxu0 0.0
  %10047 = vmatpush1.msra.mxu0 %v9833
  %10048 = vmatprep.subr.mxu0 0.0
  %10049 = vmatpush1.msra.mxu0 %v9834
  %10050 = vmatprep.subr.mxu0 0.0
  %10051 = vmatpush1.msra.mxu0 %v9835
  %10052 = vmatprep.subr.mxu0 0.0
  %10053 = vmatpush1.msra.mxu0 0.0
  %10054 = vmatprep.subr.mxu0 0.0
  %10055 = vmatpush1.msra.mxu0 0.0
  %10056 = vmatprep.subr.mxu0 0.0
  %10057 = vmatpush1.msra.mxu0 0.0
  %10058 = vmatprep.subr.mxu0 0.0
  %10059 = vmatpush1.msra.mxu0 0.0
  %10060 = vmatprep.subr.mxu0 0.0
  %10061 = vmatpush1.msra.mxu0 0.0
  %10062 = vmatprep.subr.mxu0 0.0
  %10063 = vmatpush1.msra.mxu0 0.0
  %10064 = vmatprep.subr.mxu0 0.0
  %10065 = vmatpush1.msra.mxu0 0.0
  %10066 = vmatprep.subr.mxu0 0.0
  %10067 = vmatpush1.msra.mxu0 0.0
  %10068 = vmatprep.subr.mxu0 0.0
  %10069 = vmatpush1.msra.mxu0 0.0
  %10070 = vmatprep.subr.mxu0 0.0
  %10071 = vmatpush1.msra.mxu0 0.0
  %10072 = vmatprep.subr.mxu0 0.0
  %10073 = vmatpush1.msra.mxu0 0.0
  %10074 = vmatprep.subr.mxu0 0.0
  %10075 = vmatpush1.msra.mxu0 0.0
  %10076 = vmatprep.subr.mxu0 0.0
  %10077 = vmatpush1.msra.mxu0 0.0
  %10078 = vmatprep.subr.mxu0 0.0
  %10079 = vmatpush1.msra.mxu0 0.0
  %10080 = vmatprep.subr.mxu0 0.0
  %10081 = vmatpush1.msra.mxu0 0.0
  %10082 = vmatprep.subr.mxu0 0.0
  %10083 = vmatpush1.msra.mxu0 0.0
  %10084 = vmatprep.subr.mxu0 0.0
  %10085 = vmatpush1.msra.mxu0 0.0
  %10086 = vmatprep.subr.mxu0 0.0
  %10087 = vmatpush1.msra.mxu0 0.0
  %10088 = vmatprep.subr.mxu0 0.0
  %10089 = vmatpush1.msra.mxu0 0.0
  %10090 = vmatprep.subr.mxu0 0.0
  %10091 = vmatpush1.msra.mxu0 0.0
  %10092 = vmatprep.subr.mxu0 0.0
  %10093 = vmatpush1.msra.mxu0 0.0
  %10094 = vmatprep.subr.mxu0 0.0
  %10095 = vmatpush1.msra.mxu0 0.0
  %10096 = vmatprep.subr.mxu0 0.0
  %10097 = vmatpush1.msra.mxu0 0.0
  %10098 = vmatprep.subr.mxu0 0.0
  %10099 = vmatpush1.msra.mxu0 0.0
  %10100 = vmatprep.subr.mxu0 0.0
  %10101 = vmatpush1.msra.mxu0 0.0
  %10102 = vmatprep.subr.mxu0 0.0
  %10103 = vmatpush1.msra.mxu0 0.0
  %10104 = vmatprep.subr.mxu0 0.0
  %10105 = vmatpush1.msra.mxu0 0.0
  %10106 = vmatprep.subr.mxu0 0.0
  %10107 = vmatpush1.msra.mxu0 0.0
  %10108 = vmatprep.mubr.f32.mxu0 0.0
  %10109 = vmatmul.mubr.f32.gmra.mrb[0].mxu0 %v10042
  %v10110 = vpop.f32.mrb[0].mxu0
  %v10111 = vadd.f32 %v9836, %v10110
  %v10112 = vpop.f32.mrb[0].mxu0
  %10113 = vdwg.mxu0
  %v10115 = vrot.slane %v10111, 7
  %v10117 = vadd.f32 %v9748, %v10115
  %v10118 = vsub.f32 0.0, %v10117
  %v10119 = vmul.f32 %v10118, 1.442695
  %v10120 = vpow.pop %v10119
  %v10121 = vadd.f32 %v10120, 1.0
  %v10122 = vrcp.pop %v10121
  %v10123 = vmul.f32 1.0, %v10122
  %10124 = vrot.lane.b32.xlu0 %v10115, 64
  %v10125 = vpop.permute.xlu0 %10124
  %v10127 = vmul.f32 %v10123, %v10125
  %10129 = vrot.lane.b32.xlu0 %v10127, 64
  %v10130 = vpop.permute.xlu0 %10129
  %v10132 = vadd.f32 %v9748, %v10130
  %v10133 = vtanh.pop %v10132
  %v10134 = vsub.f32 1.0, %v10123
  %10136 = vrot.lane.b32.xlu0 %v10133, 96
  %v10137 = vpop.permute.xlu0 %10136
  %v10139 = vmul.f32 %v10134, %v10137
  %v10140 = vrot.slane %v9940, 7
  %v10142 = vmul.f32 %v10123, %v10140
  %v10143 = vadd.f32 %v10139, %v10142
  %v10145 = vrot.slane %v10038, 1
  %10146 = vrot.lane.b32.xlu0 %v10145, 96
  %v10147 = vpop.permute.xlu0 %10146
  %v10148 = vsel %vm8169, %v10147, 0
  %10150 = vmatprep.subr.mxu0 0.0
  %10151 = vmatpush1.msra.mxu0 %v9837
  %10152 = vmatprep.subr.mxu0 0.0
  %10153 = vmatpush1.msra.mxu0 %v9838
  %10154 = vmatprep.subr.mxu0 0.0
  %10155 = vmatpush1.msra.mxu0 %v9839
  %10156 = vmatprep.subr.mxu0 0.0
  %10157 = vmatpush1.msra.mxu0 %v9840
  %10158 = vmatprep.subr.mxu0 0.0
  %10159 = vmatpush1.msra.mxu0 0.0
  %10160 = vmatprep.subr.mxu0 0.0
  %10161 = vmatpush1.msra.mxu0 0.0
  %10162 = vmatprep.subr.mxu0 0.0
  %10163 = vmatpush1.msra.mxu0 0.0
  %10164 = vmatprep.subr.mxu0 0.0
  %10165 = vmatpush1.msra.mxu0 0.0
  %10166 = vmatprep.subr.mxu0 0.0
  %10167 = vmatpush1.msra.mxu0 0.0
  %10168 = vmatprep.subr.mxu0 0.0
  %10169 = vmatpush1.msra.mxu0 0.0
  %10170 = vmatprep.subr.mxu0 0.0
  %10171 = vmatpush1.msra.mxu0 0.0
  %10172 = vmatprep.subr.mxu0 0.0
  %10173 = vmatpush1.msra.mxu0 0.0
  %10174 = vmatprep.subr.mxu0 0.0
  %10175 = vmatpush1.msra.mxu0 0.0
  %10176 = vmatprep.subr.mxu0 0.0
  %10177 = vmatpush1.msra.mxu0 0.0
  %10178 = vmatprep.subr.mxu0 0.0
  %10179 = vmatpush1.msra.mxu0 0.0
  %10180 = vmatprep.subr.mxu0 0.0
  %10181 = vmatpush1.msra.mxu0 0.0
  %10182 = vmatprep.subr.mxu0 0.0
  %10183 = vmatpush1.msra.mxu0 0.0
  %10184 = vmatprep.subr.mxu0 0.0
  %10185 = vmatpush1.msra.mxu0 0.0
  %10186 = vmatprep.subr.mxu0 0.0
  %10187 = vmatpush1.msra.mxu0 0.0
  %10188 = vmatprep.subr.mxu0 0.0
  %10189 = vmatpush1.msra.mxu0 0.0
  %10190 = vmatprep.subr.mxu0 0.0
  %10191 = vmatpush1.msra.mxu0 0.0
  %10192 = vmatprep.subr.mxu0 0.0
  %10193 = vmatpush1.msra.mxu0 0.0
  %10194 = vmatprep.subr.mxu0 0.0
  %10195 = vmatpush1.msra.mxu0 0.0
  %10196 = vmatprep.subr.mxu0 0.0
  %10197 = vmatpush1.msra.mxu0 0.0
  %10198 = vmatprep.subr.mxu0 0.0
  %10199 = vmatpush1.msra.mxu0 0.0
  %10200 = vmatprep.subr.mxu0 0.0
  %10201 = vmatpush1.msra.mxu0 0.0
  %10202 = vmatprep.subr.mxu0 0.0
  %10203 = vmatpush1.msra.mxu0 0.0
  %10204 = vmatprep.subr.mxu0 0.0
  %10205 = vmatpush1.msra.mxu0 0.0
  %10206 = vmatprep.subr.mxu0 0.0
  %10207 = vmatpush1.msra.mxu0 0.0
  %10208 = vmatprep.subr.mxu0 0.0
  %10209 = vmatpush1.msra.mxu0 0.0
  %10210 = vmatprep.subr.mxu0 0.0
  %10211 = vmatpush1.msra.mxu0 0.0
  %10212 = vmatprep.subr.mxu0 0.0
  %10213 = vmatpush1.msra.mxu0 0.0
  %10214 = vmatprep.mubr.f32.mxu0 0.0
  %10215 = vmatmul.mubr.f32.gmra.mrb[0].mxu0 %v10148
  %v10216 = vpop.f32.mrb[0].mxu0
  %v10217 = vadd.f32 %v9841, %v10216
  %v10218 = vpop.f32.mrb[0].mxu0
  %10219 = vdwg.mxu0
  %v10220 = vadd.f32 %v9829, %v10217
  %v10221 = vsub.f32 0.0, %v10220
  %v10222 = vmul.f32 %v10221, 1.442695
  %v10223 = vpow.pop %v10222
  %v10224 = vadd.f32 %v10223, 1.0
  %v10225 = vrcp.pop %v10224
  %v10226 = vmul.f32 1.0, %v10225
  %10228 = vrot.lane.b32.xlu0 %v10217, 64
  %v10229 = vpop.permute.xlu0 %10228
  %v10231 = vmul.f32 %v10226, %v10229
  %10233 = vrot.lane.b32.xlu0 %v10231, 64
  %v10234 = vpop.permute.xlu0 %10233
  %v10236 = vadd.f32 %v9829, %v10234
  %v10237 = vtanh.pop %v10236
  %v10238 = vsub.f32 1.0, %v10226
  %10240 = vrot.lane.b32.xlu0 %v10237, 96
  %v10241 = vpop.permute.xlu0 %10240
  %v10243 = vmul.f32 %v10238, %v10241
  %v10245 = vmul.f32 %v10226, %v10145
  %v10246 = vadd.f32 %v10243, %v10245
  %v10247 = vld [vmem:[%s24] sm:$0xff]
  %v10248 = vld [vmem:[%s24 + $0x8] sm:$0xff]
  %v10249 = vld [vmem:[%s24 + $0x10] sm:$0xff]
  %v10250 = vld [vmem:[%s24 + $0x18] sm:$0xff]
  %v10251 = vld [vmem:[%s25] sm:$0xff]
  %v10252 = vld [vmem:[%s25 + $0x8] sm:$0xff]
  %v10253 = vld [vmem:[%s25 + $0x10] sm:$0xff]
  %v10254 = vld [vmem:[%s25 + $0x18] sm:$0xff]
  %10256 = vrot.lane.b32.xlu0 %v10246, 96
  %v10257 = vpop.permute.xlu0 %10256
  %v10258 = vsel %vm8169, %v10257, 0
  %10260 = vmatprep.subr.mxu0 0.0
  %10261 = vmatpush1.msra.mxu0 %v10251
  %10262 = vmatprep.subr.mxu0 0.0
  %10263 = vmatpush1.msra.mxu0 %v10252
  %10264 = vmatprep.subr.mxu0 0.0
  %10265 = vmatpush1.msra.mxu0 %v10253
  %10266 = vmatprep.subr.mxu0 0.0
  %10267 = vmatpush1.msra.mxu0 %v10254
  %10268 = vmatprep.subr.mxu0 0.0
  %10269 = vmatpush1.msra.mxu0 0.0
  %10270 = vmatprep.subr.mxu0 0.0
  %10271 = vmatpush1.msra.mxu0 0.0
  %10272 = vmatprep.subr.mxu0 0.0
  %10273 = vmatpush1.msra.mxu0 0.0
  %10274 = vmatprep.subr.mxu0 0.0
  %10275 = vmatpush1.msra.mxu0 0.0
  %10276 = vmatprep.subr.mxu0 0.0
  %10277 = vmatpush1.msra.mxu0 0.0
  %10278 = vmatprep.subr.mxu0 0.0
  %10279 = vmatpush1.msra.mxu0 0.0
  %10280 = vmatprep.subr.mxu0 0.0
  %10281 = vmatpush1.msra.mxu0 0.0
  %10282 = vmatprep.subr.mxu0 0.0
  %10283 = vmatpush1.msra.mxu0 0.0
  %10284 = vmatprep.subr.mxu0 0.0
  %10285 = vmatpush1.msra.mxu0 0.0
  %10286 = vmatprep.subr.mxu0 0.0
  %10287 = vmatpush1.msra.mxu0 0.0
  %10288 = vmatprep.subr.mxu0 0.0
  %10289 = vmatpush1.msra.mxu0 0.0
  %10290 = vmatprep.subr.mxu0 0.0
  %10291 = vmatpush1.msra.mxu0 0.0
  %10292 = vmatprep.subr.mxu0 0.0
  %10293 = vmatpush1.msra.mxu0 0.0
  %10294 = vmatprep.subr.mxu0 0.0
  %10295 = vmatpush1.msra.mxu0 0.0
  %10296 = vmatprep.subr.mxu0 0.0
  %10297 = vmatpush1.msra.mxu0 0.0
  %10298 = vmatprep.subr.mxu0 0.0
  %10299 = vmatpush1.msra.mxu0 0.0
  %10300 = vmatprep.subr.mxu0 0.0
  %10301 = vmatpush1.msra.mxu0 0.0
  %10302 = vmatprep.subr.mxu0 0.0
  %10303 = vmatpush1.msra.mxu0 0.0
  %10304 = vmatprep.subr.mxu0 0.0
  %10305 = vmatpush1.msra.mxu0 0.0
  %10306 = vmatprep.subr.mxu0 0.0
  %10307 = vmatpush1.msra.mxu0 0.0
  %10308 = vmatprep.subr.mxu0 0.0
  %10309 = vmatpush1.msra.mxu0 0.0
  %10310 = vmatprep.subr.mxu0 0.0
  %10311 = vmatpush1.msra.mxu0 0.0
  %10312 = vmatprep.subr.mxu0 0.0
  %10313 = vmatpush1.msra.mxu0 0.0
  %10314 = vmatprep.subr.mxu0 0.0
  %10315 = vmatpush1.msra.mxu0 0.0
  %10316 = vmatprep.subr.mxu0 0.0
  %10317 = vmatpush1.msra.mxu0 0.0
  %10318 = vmatprep.subr.mxu0 0.0
  %10319 = vmatpush1.msra.mxu0 0.0
  %10320 = vmatprep.subr.mxu0 0.0
  %10321 = vmatpush1.msra.mxu0 0.0
  %10322 = vmatprep.subr.mxu0 0.0
  %10323 = vmatpush1.msra.mxu0 0.0
  %10324 = vmatprep.mubr.f32.mxu0 0.0
  %10325 = vmatmul.mubr.f32.gmra.mrb[0].mxu0 %v10258
  %v10326 = vpop.f32.mrb[0].mxu0
  %v10327 = vadd.f32 0.0, %v10326
  %v10328 = vpop.f32.mrb[0].mxu0
  %10329 = vdwg.mxu0
  %v10331 = vrot.slane %v10143, 1
  %10332 = vrot.lane.b32.xlu0 %v10331, 96
  %v10333 = vpop.permute.xlu0 %10332
  %v10334 = vsel %vm8169, %v10333, 0
  %10336 = vmatprep.subr.mxu0 0.0
  %10337 = vmatpush1.msra.mxu0 %v10247
  %10338 = vmatprep.subr.mxu0 0.0
  %10339 = vmatpush1.msra.mxu0 %v10248
  %10340 = vmatprep.subr.mxu0 0.0
  %10341 = vmatpush1.msra.mxu0 %v10249
  %10342 = vmatprep.subr.mxu0 0.0
  %10343 = vmatpush1.msra.mxu0 %v10250
  %10344 = vmatprep.subr.mxu0 0.0
  %10345 = vmatpush1.msra.mxu0 0.0
  %10346 = vmatprep.subr.mxu0 0.0
  %10347 = vmatpush1.msra.mxu0 0.0
  %10348 = vmatprep.subr.mxu0 0.0
  %10349 = vmatpush1.msra.mxu0 0.0
  %10350 = vmatprep.subr.mxu0 0.0
  %10351 = vmatpush1.msra.mxu0 0.0
  %10352 = vmatprep.subr.mxu0 0.0
  %10353 = vmatpush1.msra.mxu0 0.0
  %10354 = vmatprep.subr.mxu0 0.0
  %10355 = vmatpush1.msra.mxu0 0.0
  %10356 = vmatprep.subr.mxu0 0.0
  %10357 = vmatpush1.msra.mxu0 0.0
  %10358 = vmatprep.subr.mxu0 0.0
  %10359 = vmatpush1.msra.mxu0 0.0
  %10360 = vmatprep.subr.mxu0 0.0
  %10361 = vmatpush1.msra.mxu0 0.0
  %10362 = vmatprep.subr.mxu0 0.0
  %10363 = vmatpush1.msra.mxu0 0.0
  %10364 = vmatprep.subr.mxu0 0.0
  %10365 = vmatpush1.msra.mxu0 0.0
  %10366 = vmatprep.subr.mxu0 0.0
  %10367 = vmatpush1.msra.mxu0 0.0
  %10368 = vmatprep.subr.mxu0 0.0
  %10369 = vmatpush1.msra.mxu0 0.0
  %10370 = vmatprep.subr.mxu0 0.0
  %10371 = vmatpush1.msra.mxu0 0.0
  %10372 = vmatprep.subr.mxu0 0.0
  %10373 = vmatpush1.msra.mxu0 0.0
  %10374 = vmatprep.subr.mxu0 0.0
  %10375 = vmatpush1.msra.mxu0 0.0
  %10376 = vmatprep.subr.mxu0 0.0
  %10377 = vmatpush1.msra.mxu0 0.0
  %10378 = vmatprep.subr.mxu0 0.0
  %10379 = vmatpush1.msra.mxu0 0.0
  %10380 = vmatprep.subr.mxu0 0.0
  %10381 = vmatpush1.msra.mxu0 0.0
  %10382 = vmatprep.subr.mxu0 0.0
  %10383 = vmatpush1.msra.mxu0 0.0
  %10384 = vmatprep.subr.mxu0 0.0
  %10385 = vmatpush1.msra.mxu0 0.0
  %10386 = vmatprep.subr.mxu0 0.0
  %10387 = vmatpush1.msra.mxu0 0.0
  %10388 = vmatprep.subr.mxu0 0.0
  %10389 = vmatpush1.msra.mxu0 0.0
  %10390 = vmatprep.subr.mxu0 0.0
  %10391 = vmatpush1.msra.mxu0 0.0
  %10392 = vmatprep.subr.mxu0 0.0
  %10393 = vmatpush1.msra.mxu0 0.0
  %10394 = vmatprep.subr.mxu0 0.0
  %10395 = vmatpush1.msra.mxu0 0.0
  %10396 = vmatprep.subr.mxu0 0.0
  %10397 = vmatpush1.msra.mxu0 0.0
  %10398 = vmatprep.subr.mxu0 0.0
  %10399 = vmatpush1.msra.mxu0 0.0
  %10400 = vmatprep.mubr.f32.mxu0 0.0
  %10401 = vmatmul.mubr.f32.gmra.mrb[0].mxu0 %v10334
  %v10402 = vpop.f32.mrb[0].mxu0
  %v10403 = vadd.f32 %v10327, %v10402
  %v10404 = vpop.f32.mrb[0].mxu0
  %10405 = vdwg.mxu0
  %v10406 = vld [vmem:[%s26] sm:$0x1]
  %v10407 = vadd.f32 %v10403, %v10406
  %vm10408 = vcmask 188416
  %10409 = vst.msk [vmem:[%s27] sm:$0x1] %vm10408, %v10407
  // Predicated region
  $region110: #{forward.1} parent=0 // pred_check
    _
  $region111: #{forward.1} parent=0 // pred_check_branch
    %10411 = sbr.rel (0) target = $region113
  $region112: #{forward.1} parent=0 // pred_region
    _
  $region113: #{forward.1} parent=0 // pred_fallthru
    _
  // Predicated region
  $region114: #{forward.1} parent=0 // pred_check
    _
  $region115: #{forward.1} parent=0 // pred_check_branch
    %10413 = sbr.rel (0) target = $region117
  $region116: #{forward.1} parent=0 // pred_region
    _
  $region117: #{forward.1} parent=0 // pred_fallthru
    _

</llo_original>
